<compile_context>
chip_gen: v7x
topology: tpu7x:2x2x1
jax: 0.10.0
libtpu: 0.0.40
codegen_flags: <defaults>
</compile_context>

<pallas_src>
import functools

import numpy as np
import jax
import jax.numpy as jnp
from jax import lax
from jax.experimental import pallas as pl
from jax.experimental.pallas import tpu as pltpu

LOG2 = float(np.log(2.0))


def _ssp(x):
    # shifted softplus: softplus(x) - log(2)   (numerically stable form, f32)
    return jnp.maximum(x, 0.0) + jnp.log(1.0 + jnp.exp(-jnp.abs(x))) - LOG2


# ----------------------------------------------------------------------------
# Pallas kernel: full SchNet forward for ONE block of batch_block molecules.
# ----------------------------------------------------------------------------
def schnet_kernel(pos_ref, x0_ref, nbh_ref, mask_ref, offs_ref,
                  wf1c_ref, bf1c_ref, wf2_ref, bf2_ref,
                  win2f_ref, wf2out_ref, bf2out_ref, wdense_ref, bdense_ref,
                  out_ref, *, n_interactions, cutoff, gauss_coeff):
    f32 = jnp.float32
    bf16 = jnp.bfloat16

    pos = pos_ref[...]            # (BBLK, N, 3)   f32 geometry
    x = x0_ref[...]               # (BBLK*N, F)    f32 embedded atomic numbers
    nbh = nbh_ref[...]            # (BBLK, PM, 1)  int32, molecule-local in [0, N)
    mask = mask_ref[...]          # (BBLK, PM, 1)  f32 neighbor mask
    offsets = offs_ref[...]       # (1, G)         gaussian centers

    BBLK, N, _ = pos.shape
    PM = nbh.shape[1]             # pairs per molecule = N * Nbh (slot-major)
    Nbh = PM // N
    G = offsets.shape[-1]
    Filt = wf2_ref.shape[-1]
    L = n_interactions

    # ---- block-diagonal gather one-hot, built in-register (no HBM one-hots) --
    col = lax.broadcasted_iota(jnp.int32, (BBLK, PM, N), 2)
    nbh_oh = (col == nbh).astype(f32)         # (BBLK, PM, N), exact 0/1
    nbh_oh_b = nbh_oh.astype(bf16)            # exact in bf16 -> feature gathers

    # ---- AtomDistances (non-PBC), geometry stays f32 --------------------------
    pos_j = jnp.einsum('bpn,bnc->bpc', nbh_oh, pos,
                       preferred_element_type=f32)                 # (BBLK, PM, 3)
    # slot-major pair ordering: pair p = k*N + q has center atom q, so pos_i is
    # just pos tiled Nbh times along the (8-aligned) pair axis.
    pos_i = jnp.concatenate([pos] * Nbh, axis=1)                   # (BBLK, PM, 3)
    dvec = pos_j - pos_i
    dx = dvec[:, :, 0:1]
    dy = dvec[:, :, 1:2]
    dz = dvec[:, :, 2:3]
    d2 = dx * dx + dy * dy + dz * dz                               # VPU, no XLU reduce
    valid = mask > 0.0
    # mask inside sqrt (grad-safe for fully-masked / coincident padded atoms)
    r_ij = jnp.where(valid, jnp.sqrt(jnp.where(valid, d2, 1.0)), 0.0)  # (BBLK, PM, 1)

    # ---- GaussianSmearing (f32, EUP) ------------------------------------------
    diff = r_ij - offsets.reshape(1, 1, G)
    f_ij = jnp.exp(gauss_coeff * diff * diff)                      # (BBLK, PM, G)
    f2d = f_ij.reshape(BBLK * PM, G)          # leading-collapse; PM % 8 == 0

    # ---- CosineCutoff with neighbor mask folded in ONCE (single select) -------
    C = 0.5 * (jnp.cos(r_ij * (np.pi / cutoff)) + 1.0)
    Cm = jnp.where(valid & (r_ij < cutoff), C, 0.0)                # (BBLK, PM, 1)

    # ---- cfconv filter Dense #1: loop-invariant, hoisted & lane-fused ---------
    h = _ssp(jnp.dot(f2d.astype(bf16), wf1c_ref[...],
                     preferred_element_type=f32) + bf1c_ref[...])  # (BBLK*PM, L*Filt)

    # ---- interaction blocks (SimpleAtomInteraction / CFConv) ------------------
    for i in range(L):
        # filter Dense #2 computed inside the loop (keeps the live set small)
        hi = h[:, i * Filt:(i + 1) * Filt]                          # static lane slice
        wi = jnp.dot(hi.astype(bf16), wf2_ref[i],
                     preferred_element_type=f32) + bf2_ref[i]       # (BBLK*PM, Filt)
        wi = wi.reshape(BBLK, PM, Filt) * Cm                        # cutoff*mask folded

        # in2f (no bias) -> block-diagonal neighbor gather -> filter weighting
        y = jnp.dot(x.astype(bf16), win2f_ref[i],
                    preferred_element_type=f32)                     # (BBLK*N, Filt)
        y3 = y.astype(bf16).reshape(BBLK, N, Filt)
        y_j = jnp.einsum('bpn,bnf->bpf', nbh_oh_b, y3,
                         preferred_element_type=f32)                # (BBLK, PM, Filt)
        y_j = y_j * wi

        # aggregation = segment sum over neighbor slots (slot-major -> the split
        # of PM into (Nbh, N) is 8-aligned; no agg one-hot matmul)
        v = y_j.reshape(BBLK, Nbh, N, Filt).sum(axis=1)             # (BBLK, N, Filt)
        v = v.reshape(BBLK * N, Filt)

        # f2out: Dense(Filt->F, ssp); then interaction output Dense(F->F)
        v = _ssp(jnp.dot(v.astype(bf16), wf2out_ref[i],
                         preferred_element_type=f32) + bf2out_ref[i])
        v = jnp.dot(v.astype(bf16), wdense_ref[i],
                    preferred_element_type=f32) + bdense_ref[i]

        # residual update (f32 accumulation)
        x = x + v

    out_ref[...] = x


# ----------------------------------------------------------------------------
# Wrapper
# ----------------------------------------------------------------------------
def schnet_forward_pallas(atomic_numbers, positions, neighbors, neighbor_mask,
                          params, *, cutoff, n_gaussians, n_interactions,
                          batch_block=2):
    B, N, _ = positions.shape
    Nbh = neighbors.shape[-1]
    F = params["emb"].shape[-1]
    Filt = params["win2f"].shape[-1]
    G = n_gaussians
    L = n_interactions

    assert B % batch_block == 0, "batch must be divisible by batch_block"
    assert N % 8 == 0, "N must be a multiple of 8 (sublane-aligned reshapes)"
    NB = B // batch_block          # grid steps (keep >= 4 so v7x's 2 TCs pipeline)
    NN = batch_block * N           # atoms per grid step
    PM = N * Nbh                   # pairs per molecule (slot-major, PM % 8 == 0)
    PP = batch_block * PM          # pairs per grid step

    # ---- glue: embedding lookup + reshapes (cheap XLA ops) --------------------
    x0 = params["emb"][atomic_numbers].astype(jnp.float32).reshape(NB, NN, F)
    pos = positions.astype(jnp.float32).reshape(NB, batch_block, N, 3)

    # neighbor-SLOT-major pair ordering: pair p = k*N + q  (slot k, center atom q)
    nbh_sm = jnp.transpose(neighbors.astype(jnp.int32), (0, 2, 1))      # (B, Nbh, N)
    nbh_sm = nbh_sm.reshape(NB, batch_block, PM, 1)
    mask_sm = jnp.transpose(neighbor_mask.astype(jnp.float32), (0, 2, 1))
    mask_sm = mask_sm.reshape(NB, batch_block, PM, 1)

    # Gaussian smearing constants
    offsets = jnp.linspace(0.0, cutoff, G, dtype=jnp.float32).reshape(1, G)
    width = cutoff / (G - 1)
    gauss_coeff = float(-0.5 / width ** 2)

    # fuse filter Dense #1 across interactions -> (G, L*Filt); weights in bf16
    wf1c = jnp.transpose(params["wf1"], (1, 0, 2)).reshape(G, L * Filt)
    bf1c = jnp.transpose(params["bf1"], (1, 0, 2)).reshape(1, L * Filt)

    bf16 = jnp.bfloat16
    wf1c_b = wf1c.astype(bf16)
    wf2_b = params["wf2"].astype(bf16)
    win2f_b = params["win2f"].astype(bf16)
    wf2out_b = params["wf2out"].astype(bf16)
    wdense_b = params["wdense"].astype(bf16)
    bf2, bf2out, bdense = params["bf2"], params["bf2out"], params["bdense"]

    # ---- explicit VMEM budget from the real per-step footprint ----------------
    stream_bytes = (batch_block * N * 3 * 4 + NN * F * 4
                    + batch_block * PM * 4 * 2)                   # pos, x0, nbh, mask
    const_bytes = (G * 4 + G * L * Filt * 2 + L * Filt * 4
                   + L * Filt * Filt * 2 + L * Filt * 4
                   + L * F * Filt * 2 + L * Filt * F * 2 + L * F * 4 * 2
                   + L * F * F * 2 + L * F * 4)
    out_bytes = NN * F * 4
    tmp_bytes = (PP * N * 6          # one-hots (f32 + bf16)
                 + PP * G * 4        # f_ij
                 + PP * L * Filt * 4  # fused filter activations h
                 + PP * Filt * 4 * 3  # wi, y_j, products
                 + NN * F * 4 * 4)   # x, y, v, dense temporaries
    est = 2 * (stream_bytes + out_bytes) + 2 * const_bytes + tmp_bytes
    # cap at 64 MiB so the setting is safe on v7x; v6e (128 MiB) can raise it.
    vmem_limit = int(min(max(2 * est, 32 * 1024 * 1024), 64 * 1024 * 1024))

    kern = functools.partial(schnet_kernel, n_interactions=L,
                             cutoff=float(cutoff), gauss_coeff=gauss_coeff)

    def _run(single_buffer_consts):
        def const_spec(shape):
            idx = lambda *_: (0,) * len(shape)
            if single_buffer_consts and hasattr(pl, "Buffered"):
                try:
                    # loop-invariant inputs: no need for double buffering
                    return pl.BlockSpec(shape, idx, pipeline_mode=pl.Buffered(1))
                except TypeError:
                    pass
            return pl.BlockSpec(shape, idx)

        in_specs = [
            pl.BlockSpec((None, batch_block, N, 3), lambda b: (b, 0, 0, 0)),   # pos
            pl.BlockSpec((None, NN, F), lambda b: (b, 0, 0)),                  # x0
            pl.BlockSpec((None, batch_block, PM, 1), lambda b: (b, 0, 0, 0)),  # nbh idx
            pl.BlockSpec((None, batch_block, PM, 1), lambda b: (b, 0, 0, 0)),  # mask
            const_spec((1, G)),              # gaussian offsets
            const_spec((G, L * Filt)),       # wf1 (lane-fused, bf16)
            const_spec((1, L * Filt)),       # bf1 (lane-fused, f32)
            const_spec((L, Filt, Filt)),     # wf2 (bf16)
            const_spec((L, 1, Filt)),        # bf2
            const_spec((L, F, Filt)),        # win2f (bf16)
            const_spec((L, Filt, F)),        # wf2out (bf16)
            const_spec((L, 1, F)),           # bf2out
            const_spec((L, F, F)),           # wdense (bf16)
            const_spec((L, 1, F)),           # bdense
        ]
        out = pl.pallas_call(
            kern,
            out_shape=jax.ShapeDtypeStruct((NB, NN, F), jnp.float32),
            grid=(NB,),
            in_specs=in_specs,
            out_specs=pl.BlockSpec((None, NN, F), lambda b: (b, 0, 0)),
            compiler_params=pltpu.CompilerParams(
                dimension_semantics=("parallel",),
                vmem_limit_bytes=vmem_limit),
        )(pos, x0, nbh_sm, mask_sm, offsets,
          wf1c_b, bf1c, wf2_b, bf2, win2f_b, wf2out_b, bf2out, wdense_b, bdense)
        return jax.block_until_ready(out)

    try:
        out = _run(True)
    except Exception:
        # pipeline_mode / Buffered(1) not supported on this jax build:
        # fall back to default (double-buffered) specs.
        out = _run(False)

    return out.reshape(B, N, F)


# ----------------------------------------------------------------------------
# Pure-JAX f32 reference (mirrors the PyTorch semantics) for verification.
# ----------------------------------------------------------------------------
def schnet_forward_ref(atomic_numbers, positions, neighbors, neighbor_mask,
                       params, *, cutoff, n_gaussians, n_interactions):
    B, N, _ = positions.shape
    x = params["emb"][atomic_numbers]                                  # (B, N, F)

    idx = jnp.arange(B)[:, None, None]
    pos_j = positions[idx, neighbors]                                  # (B, N, Nbh, 3)
    dvec = pos_j - positions[:, :, None, :]
    r_ij = jnp.sqrt(jnp.sum(dvec * dvec, axis=-1))
    r_ij = jnp.where(neighbor_mask > 0, r_ij, 0.0)

    offsets = jnp.linspace(0.0, cutoff, n_gaussians, dtype=jnp.float32)
    width = cutoff / (n_gaussians - 1)
    coeff = -0.5 / width ** 2
    f_ij = jnp.exp(coeff * (r_ij[..., None] - offsets) ** 2)

    C = 0.5 * (jnp.cos(r_ij * np.pi / cutoff) + 1.0)
    C = C * (r_ij < cutoff).astype(jnp.float32)

    mask = neighbor_mask.astype(jnp.float32)
    for i in range(n_interactions):
        w = _ssp(f_ij @ params["wf1"][i] + params["bf1"][i][0])
        w = w @ params["wf2"][i] + params["bf2"][i][0]
        w = w * C[..., None]
        y = x @ params["win2f"][i]                                     # (B, N, Filt)
        y_j = y[idx, neighbors]                                        # (B, N, Nbh, Filt)
        y_j = y_j * w * mask[..., None]
        v = jnp.sum(y_j, axis=2)                                       # (B, N, Filt)
        v = _ssp(v @ params["wf2out"][i] + params["bf2out"][i][0])
        v = v @ params["wdense"][i] + params["bdense"][i][0]
        x = x + v
    return x


# ----------------------------------------------------------------------------
# Deterministic parameter init (synthetic; shapes per SchNet.__init__).
# ----------------------------------------------------------------------------
def init_params(key, *, max_Z, F, Filt, G, L):
    ks = jax.random.split(key, 11)

    def w(k, fan_in, shape):
        return jax.random.normal(k, shape, jnp.float32) / np.sqrt(fan_in)

    emb = jax.random.normal(ks[0], (max_Z, F), jnp.float32) * 0.5
    emb = emb.at[0].set(0.0)                       # padding_idx=0
    return {
        "emb": emb,
        "wf1": w(ks[1], G, (L, G, Filt)),
        "bf1": 0.1 * jax.random.normal(ks[2], (L, 1, Filt), jnp.float32),
        "wf2": w(ks[3], Filt, (L, Filt, Filt)),
        "bf2": 0.1 * jax.random.normal(ks[4], (L, 1, Filt), jnp.float32),
        "win2f": w(ks[5], F, (L, F, Filt)),
        "wf2out": w(ks[6], Filt, (L, Filt, F)),
        "bf2out": 0.1 * jax.random.normal(ks[7], (L, 1, F), jnp.float32),
        "wdense": w(ks[8], F, (L, F, F)),
        "bdense": 0.1 * jax.random.normal(ks[9], (L, 1, F), jnp.float32),
    }


if __name__ == "__main__":
    # small, SchNet-consistent shapes
    B, N = 8, 8                      # batch of molecules, atoms per molecule
    Nbh = N - 1                      # full neighbor list
    F = 32                           # n_atom_embeddings
    Filt = 32                        # n_filters
    G = 16                           # n_gaussians
    L = 2                            # n_interactions
    max_Z = 18
    cutoff = 10.0
    batch_block = 2                  # molecules per grid step -> NB = 4 grid steps

    key = jax.random.PRNGKey(0)
    k_z, k_pos, k_p = jax.random.split(key, 3)

    atomic_numbers = jax.random.randint(k_z, (B, N), 1, max_Z, dtype=jnp.int32)
    positions = jax.random.uniform(k_pos, (B, N, 3), jnp.float32,
                                   minval=0.0, maxval=4.0)

    nbh_np = np.stack([[j for j in range(N) if j != i] for i in range(N)]
                      ).astype(np.int32)                       # (N, Nbh)
    neighbors = jnp.asarray(np.tile(nbh_np[None], (B, 1, 1)))  # (B, N, Nbh)

    mask_np = np.ones((B, N, Nbh), np.float32)
    mask_np[0, 0, :2] = 0.0
    mask_np[1, N - 1, 3:] = 0.0
    mask_np[2, 3, :] = 0.0
    mask_np[3, 5, 1:4] = 0.0
    mask_np[5, 2, ::2] = 0.0
    mask_np[7, 0, :] = 0.0
    neighbor_mask = jnp.asarray(mask_np)

    params = init_params(k_p, max_Z=max_Z, F=F, Filt=Filt, G=G, L=L)

    out = schnet_forward_pallas(atomic_numbers, positions, neighbors,
                                neighbor_mask, params,
                                cutoff=cutoff, n_gaussians=G, n_interactions=L,
                                batch_block=batch_block)
    out = jax.block_until_ready(out)

    ref = schnet_forward_ref(atomic_numbers, positions, neighbors,
                             neighbor_mask, params,
                             cutoff=cutoff, n_gaussians=G, n_interactions=L)
    ref = jax.block_until_ready(ref)

    # bf16 feature-path MXU operands (f32 accumulation) -> loosened tolerance
    np.testing.assert_allclose(np.asarray(out), np.asarray(ref),
                               rtol=5e-2, atol=5e-2)
    print("KERNEL_OK")
</pallas_src>

<mosaic_0001>
module attributes {stable_mosaic.version = 11 : i64} {
  func.func @schnet_kernel(%arg0: i32, %arg1: memref<1x2x8x3xf32, #tpu.memory_space<vmem>>, %arg2: memref<1x16x32xf32, #tpu.memory_space<vmem>>, %arg3: memref<1x2x56x1xi32, #tpu.memory_space<vmem>>, %arg4: memref<1x2x56x1xf32, #tpu.memory_space<vmem>>, %arg5: memref<1x16xf32, #tpu.memory_space<vmem>>, %arg6: memref<16x64xbf16, #tpu.memory_space<vmem>>, %arg7: memref<1x64xf32, #tpu.memory_space<vmem>>, %arg8: memref<2x32x32xbf16, #tpu.memory_space<vmem>>, %arg9: memref<2x1x32xf32, #tpu.memory_space<vmem>>, %arg10: memref<2x32x32xbf16, #tpu.memory_space<vmem>>, %arg11: memref<2x32x32xbf16, #tpu.memory_space<vmem>>, %arg12: memref<2x1x32xf32, #tpu.memory_space<vmem>>, %arg13: memref<2x32x32xbf16, #tpu.memory_space<vmem>>, %arg14: memref<2x1x32xf32, #tpu.memory_space<vmem>>, %arg15: memref<1x16x32xf32, #tpu.memory_space<vmem>>) attributes {dimension_semantics = [#tpu.dimension_semantics<parallel>], iteration_bounds = array<i64: 4>, scalar_prefetch = 0 : i64, scratch_operands = 0 : i64, tpu.core_type = #tpu.core_type<tc>, window_params = [{transform_indices = @transform_0, window_bounds = array<i64: 1, 2, 8, 3>}, {transform_indices = @transform_1, window_bounds = array<i64: 1, 16, 32>}, {transform_indices = @transform_2, window_bounds = array<i64: 1, 2, 56, 1>}, {transform_indices = @transform_3, window_bounds = array<i64: 1, 2, 56, 1>}, {pipeline_mode = #tpu.pipeline_mode<synchronous>, transform_indices = @transform_4, window_bounds = array<i64: 1, 16>}, {pipeline_mode = #tpu.pipeline_mode<synchronous>, transform_indices = @transform_5, window_bounds = array<i64: 16, 64>}, {pipeline_mode = #tpu.pipeline_mode<synchronous>, transform_indices = @transform_6, window_bounds = array<i64: 1, 64>}, {pipeline_mode = #tpu.pipeline_mode<synchronous>, transform_indices = @transform_7, window_bounds = array<i64: 2, 32, 32>}, {pipeline_mode = #tpu.pipeline_mode<synchronous>, transform_indices = @transform_8, window_bounds = array<i64: 2, 1, 32>}, {pipeline_mode = #tpu.pipeline_mode<synchronous>, transform_indices = @transform_9, window_bounds = array<i64: 2, 32, 32>}, {pipeline_mode = #tpu.pipeline_mode<synchronous>, transform_indices = @transform_10, window_bounds = array<i64: 2, 32, 32>}, {pipeline_mode = #tpu.pipeline_mode<synchronous>, transform_indices = @transform_11, window_bounds = array<i64: 2, 1, 32>}, {pipeline_mode = #tpu.pipeline_mode<synchronous>, transform_indices = @transform_12, window_bounds = array<i64: 2, 32, 32>}, {pipeline_mode = #tpu.pipeline_mode<synchronous>, transform_indices = @transform_13, window_bounds = array<i64: 2, 1, 32>}, {transform_indices = @transform_14, window_bounds = array<i64: 1, 16, 32>}]} {
    %c0 = arith.constant 0 : index
    %c0_0 = arith.constant 0 : index
    %c0_1 = arith.constant 0 : index
    %c0_2 = arith.constant 0 : index
    %0 = vector.load %arg1[%c0, %c0_0, %c0_1, %c0_2] : memref<1x2x8x3xf32, #tpu.memory_space<vmem>>, vector<1x2x8x3xf32>
    %1 = vector.shape_cast %0 : vector<1x2x8x3xf32> to vector<2x8x3xf32>
    %c0_3 = arith.constant 0 : index
    %c0_4 = arith.constant 0 : index
    %c0_5 = arith.constant 0 : index
    %2 = vector.load %arg2[%c0_3, %c0_4, %c0_5] : memref<1x16x32xf32, #tpu.memory_space<vmem>>, vector<1x16x32xf32>
    %3 = vector.shape_cast %2 : vector<1x16x32xf32> to vector<16x32xf32>
    %c0_6 = arith.constant 0 : index
    %c0_7 = arith.constant 0 : index
    %c0_8 = arith.constant 0 : index
    %c0_9 = arith.constant 0 : index
    %4 = vector.load %arg3[%c0_6, %c0_7, %c0_8, %c0_9] : memref<1x2x56x1xi32, #tpu.memory_space<vmem>>, vector<1x2x56x1xi32>
    %5 = vector.shape_cast %4 : vector<1x2x56x1xi32> to vector<2x56x1xi32>
    %c0_10 = arith.constant 0 : index
    %c0_11 = arith.constant 0 : index
    %c0_12 = arith.constant 0 : index
    %c0_13 = arith.constant 0 : index
    %6 = vector.load %arg4[%c0_10, %c0_11, %c0_12, %c0_13] : memref<1x2x56x1xf32, #tpu.memory_space<vmem>>, vector<1x2x56x1xf32>
    %7 = vector.shape_cast %6 : vector<1x2x56x1xf32> to vector<2x56x1xf32>
    %c0_14 = arith.constant 0 : index
    %c0_15 = arith.constant 0 : index
    %8 = vector.load %arg5[%c0_14, %c0_15] : memref<1x16xf32, #tpu.memory_space<vmem>>, vector<1x16xf32>
    %9 = tpu.iota {dimensions = array<i32: 2>} : vector<2x56x8xi32>
    %10 = vector.broadcast %5 : vector<2x56x1xi32> to vector<2x56x8xi32>
    %11 = arith.cmpi eq, %9, %10 : vector<2x56x8xi32>
    %12 = arith.extui %11 : vector<2x56x8xi1> to vector<2x56x8xi32>
    %13 = arith.sitofp %12 : vector<2x56x8xi32> to vector<2x56x8xf32>
    %14 = arith.truncf %13 : vector<2x56x8xf32> to vector<2x56x8xbf16>
    "tpu.trace_start"() <{level = 10 : i32, message = "bpn,bnc->bpc"}> : () -> ()
    %cst = arith.constant dense<0.000000e+00> : vector<2x56x3xf32>
    %15 = tpu.matmul %13, %1, %cst {dimension_numbers = #tpu.dot_dimension_numbers<[2], [1], [1], [2], [0, 0, 0, 1, 1, 2], [0], [0]>} : vector<2x56x8xf32>, vector<2x8x3xf32>, vector<2x56x3xf32> -> vector<2x56x3xf32>
    "tpu.trace_stop"() : () -> ()
    %16 = tpu.concatenate %1, %1, %1, %1, %1, %1, %1 in 1 : vector<2x8x3xf32>, vector<2x8x3xf32>, vector<2x8x3xf32>, vector<2x8x3xf32>, vector<2x8x3xf32>, vector<2x8x3xf32>, vector<2x8x3xf32> -> vector<2x56x3xf32>
    %17 = arith.subf %15, %16 : vector<2x56x3xf32>
    %18 = vector.extract_strided_slice %17 {offsets = [0, 0, 0], sizes = [2, 56, 1], strides = [1, 1, 1]} : vector<2x56x3xf32> to vector<2x56x1xf32>
    %19 = vector.extract_strided_slice %17 {offsets = [0, 0, 1], sizes = [2, 56, 1], strides = [1, 1, 1]} : vector<2x56x3xf32> to vector<2x56x1xf32>
    %20 = vector.extract_strided_slice %17 {offsets = [0, 0, 2], sizes = [2, 56, 1], strides = [1, 1, 1]} : vector<2x56x3xf32> to vector<2x56x1xf32>
    %21 = arith.mulf %18, %18 : vector<2x56x1xf32>
    %22 = arith.mulf %19, %19 : vector<2x56x1xf32>
    %23 = arith.addf %21, %22 : vector<2x56x1xf32>
    %24 = arith.mulf %20, %20 : vector<2x56x1xf32>
    %25 = arith.addf %23, %24 : vector<2x56x1xf32>
    %cst_16 = arith.constant 0.000000e+00 : f32
    %26 = vector.broadcast %cst_16 : f32 to vector<2x56x1xf32>
    %27 = arith.cmpf ogt, %7, %26 : vector<2x56x1xf32>
    %cst_17 = arith.constant 1.000000e+00 : f32
    %28 = vector.broadcast %cst_17 : f32 to vector<2x56x1xf32>
    %29 = arith.select %27, %25, %28 : vector<2x56x1xi1>, vector<2x56x1xf32>
    %30 = math.sqrt %29 : vector<2x56x1xf32>
    %cst_18 = arith.constant 0.000000e+00 : f32
    %31 = vector.broadcast %cst_18 : f32 to vector<2x56x1xf32>
    %32 = arith.select %27, %30, %31 : vector<2x56x1xi1>, vector<2x56x1xf32>
    %33 = vector.shape_cast %8 : vector<1x16xf32> to vector<1x1x16xf32>
    %34 = vector.broadcast %32 : vector<2x56x1xf32> to vector<2x56x16xf32>
    %35 = vector.broadcast %33 : vector<1x1x16xf32> to vector<2x56x16xf32>
    %36 = arith.subf %34, %35 : vector<2x56x16xf32>
    %cst_19 = arith.constant -1.125000e+00 : f32
    %37 = vector.broadcast %cst_19 : f32 to vector<2x56x16xf32>
    %38 = arith.mulf %37, %36 : vector<2x56x16xf32>
    %39 = arith.mulf %38, %36 : vector<2x56x16xf32>
    %40 = math.exp %39 : vector<2x56x16xf32>
    %41 = vector.shape_cast %40 : vector<2x56x16xf32> to vector<112x16xf32>
    %cst_20 = arith.constant 0.314159274 : f32
    %42 = vector.broadcast %cst_20 : f32 to vector<2x56x1xf32>
    %43 = arith.mulf %32, %42 : vector<2x56x1xf32>
    %44 = math.cos %43 : vector<2x56x1xf32>
    %cst_21 = arith.constant 1.000000e+00 : f32
    %45 = vector.broadcast %cst_21 : f32 to vector<2x56x1xf32>
    %46 = arith.addf %44, %45 : vector<2x56x1xf32>
    %cst_22 = arith.constant 5.000000e-01 : f32
    %47 = vector.broadcast %cst_22 : f32 to vector<2x56x1xf32>
    %48 = arith.mulf %47, %46 : vector<2x56x1xf32>
    %cst_23 = arith.constant 1.000000e+01 : f32
    %49 = vector.broadcast %cst_23 : f32 to vector<2x56x1xf32>
    %50 = arith.cmpf olt, %32, %49 : vector<2x56x1xf32>
    %51 = arith.andi %27, %50 : vector<2x56x1xi1>
    %cst_24 = arith.constant 0.000000e+00 : f32
    %52 = vector.broadcast %cst_24 : f32 to vector<2x56x1xf32>
    %53 = arith.select %51, %48, %52 : vector<2x56x1xi1>, vector<2x56x1xf32>
    %54 = arith.truncf %41 : vector<112x16xf32> to vector<112x16xbf16>
    %c0_25 = arith.constant 0 : index
    %c0_26 = arith.constant 0 : index
    %55 = vector.load %arg6[%c0_25, %c0_26] : memref<16x64xbf16, #tpu.memory_space<vmem>>, vector<16x64xbf16>
    %cst_27 = arith.constant dense<0.000000e+00> : vector<112x64xf32>
    %56 = tpu.matmul %54, %55, %cst_27 {dimension_numbers = #tpu.dot_dimension_numbers<[1], [0], [0], [1], [0, 0, 1, 1], [], []>} : vector<112x16xbf16>, vector<16x64xbf16>, vector<112x64xf32> -> vector<112x64xf32>
    %c0_28 = arith.constant 0 : index
    %c0_29 = arith.constant 0 : index
    %57 = vector.load %arg7[%c0_28, %c0_29] : memref<1x64xf32, #tpu.memory_space<vmem>>, vector<1x64xf32>
    %58 = vector.broadcast %57 : vector<1x64xf32> to vector<112x64xf32>
    %59 = arith.addf %56, %58 : vector<112x64xf32>
    %cst_30 = arith.constant 0.000000e+00 : f32
    %60 = vector.broadcast %cst_30 : f32 to vector<112x64xf32>
    %61 = arith.maximumf %59, %60 : vector<112x64xf32>
    %62 = math.absf %59 : vector<112x64xf32>
    %cst_31 = arith.constant 0.000000e+00 : f32
    %63 = vector.broadcast %cst_31 : f32 to vector<112x64xf32>
    %64 = arith.subf %63, %62 : vector<112x64xf32>
    %65 = math.exp %64 : vector<112x64xf32>
    %cst_32 = arith.constant 1.000000e+00 : f32
    %66 = vector.broadcast %cst_32 : f32 to vector<112x64xf32>
    %67 = arith.addf %66, %65 : vector<112x64xf32>
    %68 = math.log %67 : vector<112x64xf32>
    %69 = arith.addf %61, %68 : vector<112x64xf32>
    %cst_33 = arith.constant 0.693147182 : f32
    %70 = vector.broadcast %cst_33 : f32 to vector<112x64xf32>
    %71 = arith.subf %69, %70 : vector<112x64xf32>
    %72 = vector.extract_strided_slice %71 {offsets = [0, 0], sizes = [112, 32], strides = [1, 1]} : vector<112x64xf32> to vector<112x32xf32>
    %73 = arith.truncf %72 : vector<112x32xf32> to vector<112x32xbf16>
    %c0_34 = arith.constant 0 : index
    %c0_35 = arith.constant 0 : index
    %c0_36 = arith.constant 0 : index
    %74 = vector.load %arg8[%c0_34, %c0_35, %c0_36] : memref<2x32x32xbf16, #tpu.memory_space<vmem>>, vector<1x32x32xbf16>
    %75 = vector.shape_cast %74 : vector<1x32x32xbf16> to vector<32x32xbf16>
    %cst_37 = arith.constant dense<0.000000e+00> : vector<112x32xf32>
    %76 = tpu.matmul %73, %75, %cst_37 {dimension_numbers = #tpu.dot_dimension_numbers<[1], [0], [0], [1], [0, 0, 1, 1], [], []>} : vector<112x32xbf16>, vector<32x32xbf16>, vector<112x32xf32> -> vector<112x32xf32>
    %c0_38 = arith.constant 0 : index
    %c0_39 = arith.constant 0 : index
    %c0_40 = arith.constant 0 : index
    %77 = vector.load %arg9[%c0_38, %c0_39, %c0_40] : memref<2x1x32xf32, #tpu.memory_space<vmem>>, vector<1x1x32xf32>
    %78 = vector.shape_cast %77 : vector<1x1x32xf32> to vector<1x32xf32>
    %79 = vector.broadcast %78 : vector<1x32xf32> to vector<112x32xf32>
    %80 = arith.addf %76, %79 : vector<112x32xf32>
    %81 = vector.shape_cast %80 : vector<112x32xf32> to vector<2x56x32xf32>
    %82 = vector.broadcast %53 : vector<2x56x1xf32> to vector<2x56x32xf32>
    %83 = arith.mulf %81, %82 : vector<2x56x32xf32>
    %84 = arith.truncf %3 : vector<16x32xf32> to vector<16x32xbf16>
    %c0_41 = arith.constant 0 : index
    %c0_42 = arith.constant 0 : index
    %c0_43 = arith.constant 0 : index
    %85 = vector.load %arg10[%c0_41, %c0_42, %c0_43] : memref<2x32x32xbf16, #tpu.memory_space<vmem>>, vector<1x32x32xbf16>
    %86 = vector.shape_cast %85 : vector<1x32x32xbf16> to vector<32x32xbf16>
    %cst_44 = arith.constant dense<0.000000e+00> : vector<16x32xf32>
    %87 = tpu.matmul %84, %86, %cst_44 {dimension_numbers = #tpu.dot_dimension_numbers<[1], [0], [0], [1], [0, 0, 1, 1], [], []>} : vector<16x32xbf16>, vector<32x32xbf16>, vector<16x32xf32> -> vector<16x32xf32>
    %88 = arith.truncf %87 : vector<16x32xf32> to vector<16x32xbf16>
    %89 = vector.shape_cast %88 : vector<16x32xbf16> to vector<2x8x32xbf16>
    "tpu.trace_start"() <{level = 10 : i32, message = "bpn,bnf->bpf"}> : () -> ()
    %cst_45 = arith.constant dense<0.000000e+00> : vector<2x56x32xf32>
    %90 = tpu.matmul %14, %89, %cst_45 {dimension_numbers = #tpu.dot_dimension_numbers<[2], [1], [1], [2], [0, 0, 0, 1, 1, 2], [0], [0]>} : vector<2x56x8xbf16>, vector<2x8x32xbf16>, vector<2x56x32xf32> -> vector<2x56x32xf32>
    "tpu.trace_stop"() : () -> ()
    %91 = arith.mulf %90, %83 : vector<2x56x32xf32>
    %92 = vector.shape_cast %91 : vector<2x56x32xf32> to vector<2x7x8x32xf32>
    %cst_46 = arith.constant dense<0.000000e+00> : vector<2x8x32xf32>
    %93 = vector.multi_reduction <add>, %92, %cst_46 [1] : vector<2x7x8x32xf32> to vector<2x8x32xf32>
    %94 = vector.shape_cast %93 : vector<2x8x32xf32> to vector<16x32xf32>
    %95 = arith.truncf %94 : vector<16x32xf32> to vector<16x32xbf16>
    %c0_47 = arith.constant 0 : index
    %c0_48 = arith.constant 0 : index
    %c0_49 = arith.constant 0 : index
    %96 = vector.load %arg11[%c0_47, %c0_48, %c0_49] : memref<2x32x32xbf16, #tpu.memory_space<vmem>>, vector<1x32x32xbf16>
    %97 = vector.shape_cast %96 : vector<1x32x32xbf16> to vector<32x32xbf16>
    %cst_50 = arith.constant dense<0.000000e+00> : vector<16x32xf32>
    %98 = tpu.matmul %95, %97, %cst_50 {dimension_numbers = #tpu.dot_dimension_numbers<[1], [0], [0], [1], [0, 0, 1, 1], [], []>} : vector<16x32xbf16>, vector<32x32xbf16>, vector<16x32xf32> -> vector<16x32xf32>
    %c0_51 = arith.constant 0 : index
    %c0_52 = arith.constant 0 : index
    %c0_53 = arith.constant 0 : index
    %99 = vector.load %arg12[%c0_51, %c0_52, %c0_53] : memref<2x1x32xf32, #tpu.memory_space<vmem>>, vector<1x1x32xf32>
    %100 = vector.shape_cast %99 : vector<1x1x32xf32> to vector<1x32xf32>
    %101 = vector.broadcast %100 : vector<1x32xf32> to vector<16x32xf32>
    %102 = arith.addf %98, %101 : vector<16x32xf32>
    %cst_54 = arith.constant 0.000000e+00 : f32
    %103 = vector.broadcast %cst_54 : f32 to vector<16x32xf32>
    %104 = arith.maximumf %102, %103 : vector<16x32xf32>
    %105 = math.absf %102 : vector<16x32xf32>
    %cst_55 = arith.constant 0.000000e+00 : f32
    %106 = vector.broadcast %cst_55 : f32 to vector<16x32xf32>
    %107 = arith.subf %106, %105 : vector<16x32xf32>
    %108 = math.exp %107 : vector<16x32xf32>
    %cst_56 = arith.constant 1.000000e+00 : f32
    %109 = vector.broadcast %cst_56 : f32 to vector<16x32xf32>
    %110 = arith.addf %109, %108 : vector<16x32xf32>
    %111 = math.log %110 : vector<16x32xf32>
    %112 = arith.addf %104, %111 : vector<16x32xf32>
    %cst_57 = arith.constant 0.693147182 : f32
    %113 = vector.broadcast %cst_57 : f32 to vector<16x32xf32>
    %114 = arith.subf %112, %113 : vector<16x32xf32>
    %115 = arith.truncf %114 : vector<16x32xf32> to vector<16x32xbf16>
    %c0_58 = arith.constant 0 : index
    %c0_59 = arith.constant 0 : index
    %c0_60 = arith.constant 0 : index
    %116 = vector.load %arg13[%c0_58, %c0_59, %c0_60] : memref<2x32x32xbf16, #tpu.memory_space<vmem>>, vector<1x32x32xbf16>
    %117 = vector.shape_cast %116 : vector<1x32x32xbf16> to vector<32x32xbf16>
    %cst_61 = arith.constant dense<0.000000e+00> : vector<16x32xf32>
    %118 = tpu.matmul %115, %117, %cst_61 {dimension_numbers = #tpu.dot_dimension_numbers<[1], [0], [0], [1], [0, 0, 1, 1], [], []>} : vector<16x32xbf16>, vector<32x32xbf16>, vector<16x32xf32> -> vector<16x32xf32>
    %c0_62 = arith.constant 0 : index
    %c0_63 = arith.constant 0 : index
    %c0_64 = arith.constant 0 : index
    %119 = vector.load %arg14[%c0_62, %c0_63, %c0_64] : memref<2x1x32xf32, #tpu.memory_space<vmem>>, vector<1x1x32xf32>
    %120 = vector.shape_cast %119 : vector<1x1x32xf32> to vector<1x32xf32>
    %121 = vector.broadcast %120 : vector<1x32xf32> to vector<16x32xf32>
    %122 = arith.addf %118, %121 : vector<16x32xf32>
    %123 = arith.addf %3, %122 : vector<16x32xf32>
    %124 = vector.extract_strided_slice %71 {offsets = [0, 32], sizes = [112, 32], strides = [1, 1]} : vector<112x64xf32> to vector<112x32xf32>
    %125 = arith.truncf %124 : vector<112x32xf32> to vector<112x32xbf16>
    %c1 = arith.constant 1 : index
    %c0_65 = arith.constant 0 : index
    %c0_66 = arith.constant 0 : index
    %126 = vector.load %arg8[%c1, %c0_65, %c0_66] : memref<2x32x32xbf16, #tpu.memory_space<vmem>>, vector<1x32x32xbf16>
    %127 = vector.shape_cast %126 : vector<1x32x32xbf16> to vector<32x32xbf16>
    %cst_67 = arith.constant dense<0.000000e+00> : vector<112x32xf32>
    %128 = tpu.matmul %125, %127, %cst_67 {dimension_numbers = #tpu.dot_dimension_numbers<[1], [0], [0], [1], [0, 0, 1, 1], [], []>} : vector<112x32xbf16>, vector<32x32xbf16>, vector<112x32xf32> -> vector<112x32xf32>
    %c1_68 = arith.constant 1 : index
    %c0_69 = arith.constant 0 : index
    %c0_70 = arith.constant 0 : index
    %129 = vector.load %arg9[%c1_68, %c0_69, %c0_70] : memref<2x1x32xf32, #tpu.memory_space<vmem>>, vector<1x1x32xf32>
    %130 = vector.shape_cast %129 : vector<1x1x32xf32> to vector<1x32xf32>
    %131 = vector.broadcast %130 : vector<1x32xf32> to vector<112x32xf32>
    %132 = arith.addf %128, %131 : vector<112x32xf32>
    %133 = vector.shape_cast %132 : vector<112x32xf32> to vector<2x56x32xf32>
    %134 = vector.broadcast %53 : vector<2x56x1xf32> to vector<2x56x32xf32>
    %135 = arith.mulf %133, %134 : vector<2x56x32xf32>
    %136 = arith.truncf %123 : vector<16x32xf32> to vector<16x32xbf16>
    %c1_71 = arith.constant 1 : index
    %c0_72 = arith.constant 0 : index
    %c0_73 = arith.constant 0 : index
    %137 = vector.load %arg10[%c1_71, %c0_72, %c0_73] : memref<2x32x32xbf16, #tpu.memory_space<vmem>>, vector<1x32x32xbf16>
    %138 = vector.shape_cast %137 : vector<1x32x32xbf16> to vector<32x32xbf16>
    %cst_74 = arith.constant dense<0.000000e+00> : vector<16x32xf32>
    %139 = tpu.matmul %136, %138, %cst_74 {dimension_numbers = #tpu.dot_dimension_numbers<[1], [0], [0], [1], [0, 0, 1, 1], [], []>} : vector<16x32xbf16>, vector<32x32xbf16>, vector<16x32xf32> -> vector<16x32xf32>
    %140 = arith.truncf %139 : vector<16x32xf32> to vector<16x32xbf16>
    %141 = vector.shape_cast %140 : vector<16x32xbf16> to vector<2x8x32xbf16>
    "tpu.trace_start"() <{level = 10 : i32, message = "bpn,bnf->bpf"}> : () -> ()
    %cst_75 = arith.constant dense<0.000000e+00> : vector<2x56x32xf32>
    %142 = tpu.matmul %14, %141, %cst_75 {dimension_numbers = #tpu.dot_dimension_numbers<[2], [1], [1], [2], [0, 0, 0, 1, 1, 2], [0], [0]>} : vector<2x56x8xbf16>, vector<2x8x32xbf16>, vector<2x56x32xf32> -> vector<2x56x32xf32>
    "tpu.trace_stop"() : () -> ()
    %143 = arith.mulf %142, %135 : vector<2x56x32xf32>
    %144 = vector.shape_cast %143 : vector<2x56x32xf32> to vector<2x7x8x32xf32>
    %cst_76 = arith.constant dense<0.000000e+00> : vector<2x8x32xf32>
    %145 = vector.multi_reduction <add>, %144, %cst_76 [1] : vector<2x7x8x32xf32> to vector<2x8x32xf32>
    %146 = vector.shape_cast %145 : vector<2x8x32xf32> to vector<16x32xf32>
    %147 = arith.truncf %146 : vector<16x32xf32> to vector<16x32xbf16>
    %c1_77 = arith.constant 1 : index
    %c0_78 = arith.constant 0 : index
    %c0_79 = arith.constant 0 : index
    %148 = vector.load %arg11[%c1_77, %c0_78, %c0_79] : memref<2x32x32xbf16, #tpu.memory_space<vmem>>, vector<1x32x32xbf16>
    %149 = vector.shape_cast %148 : vector<1x32x32xbf16> to vector<32x32xbf16>
    %cst_80 = arith.constant dense<0.000000e+00> : vector<16x32xf32>
    %150 = tpu.matmul %147, %149, %cst_80 {dimension_numbers = #tpu.dot_dimension_numbers<[1], [0], [0], [1], [0, 0, 1, 1], [], []>} : vector<16x32xbf16>, vector<32x32xbf16>, vector<16x32xf32> -> vector<16x32xf32>
    %c1_81 = arith.constant 1 : index
    %c0_82 = arith.constant 0 : index
    %c0_83 = arith.constant 0 : index
    %151 = vector.load %arg12[%c1_81, %c0_82, %c0_83] : memref<2x1x32xf32, #tpu.memory_space<vmem>>, vector<1x1x32xf32>
    %152 = vector.shape_cast %151 : vector<1x1x32xf32> to vector<1x32xf32>
    %153 = vector.broadcast %152 : vector<1x32xf32> to vector<16x32xf32>
    %154 = arith.addf %150, %153 : vector<16x32xf32>
    %cst_84 = arith.constant 0.000000e+00 : f32
    %155 = vector.broadcast %cst_84 : f32 to vector<16x32xf32>
    %156 = arith.maximumf %154, %155 : vector<16x32xf32>
    %157 = math.absf %154 : vector<16x32xf32>
    %cst_85 = arith.constant 0.000000e+00 : f32
    %158 = vector.broadcast %cst_85 : f32 to vector<16x32xf32>
    %159 = arith.subf %158, %157 : vector<16x32xf32>
    %160 = math.exp %159 : vector<16x32xf32>
    %cst_86 = arith.constant 1.000000e+00 : f32
    %161 = vector.broadcast %cst_86 : f32 to vector<16x32xf32>
    %162 = arith.addf %161, %160 : vector<16x32xf32>
    %163 = math.log %162 : vector<16x32xf32>
    %164 = arith.addf %156, %163 : vector<16x32xf32>
    %cst_87 = arith.constant 0.693147182 : f32
    %165 = vector.broadcast %cst_87 : f32 to vector<16x32xf32>
    %166 = arith.subf %164, %165 : vector<16x32xf32>
    %167 = arith.truncf %166 : vector<16x32xf32> to vector<16x32xbf16>
    %c1_88 = arith.constant 1 : index
    %c0_89 = arith.constant 0 : index
    %c0_90 = arith.constant 0 : index
    %168 = vector.load %arg13[%c1_88, %c0_89, %c0_90] : memref<2x32x32xbf16, #tpu.memory_space<vmem>>, vector<1x32x32xbf16>
    %169 = vector.shape_cast %168 : vector<1x32x32xbf16> to vector<32x32xbf16>
    %cst_91 = arith.constant dense<0.000000e+00> : vector<16x32xf32>
    %170 = tpu.matmul %167, %169, %cst_91 {dimension_numbers = #tpu.dot_dimension_numbers<[1], [0], [0], [1], [0, 0, 1, 1], [], []>} : vector<16x32xbf16>, vector<32x32xbf16>, vector<16x32xf32> -> vector<16x32xf32>
    %c1_92 = arith.constant 1 : index
    %c0_93 = arith.constant 0 : index
    %c0_94 = arith.constant 0 : index
    %171 = vector.load %arg14[%c1_92, %c0_93, %c0_94] : memref<2x1x32xf32, #tpu.memory_space<vmem>>, vector<1x1x32xf32>
    %172 = vector.shape_cast %171 : vector<1x1x32xf32> to vector<1x32xf32>
    %173 = vector.broadcast %172 : vector<1x32xf32> to vector<16x32xf32>
    %174 = arith.addf %170, %173 : vector<16x32xf32>
    %175 = arith.addf %123, %174 : vector<16x32xf32>
    %c0_95 = arith.constant 0 : index
    %c0_96 = arith.constant 0 : index
    %c0_97 = arith.constant 0 : index
    %176 = vector.load %arg15[%c0_95, %c0_96, %c0_97] : memref<1x16x32xf32, #tpu.memory_space<vmem>>, vector<1x16x32xf32>
    %177 = vector.shape_cast %176 : vector<1x16x32xf32> to vector<16x32xf32>
    %178 = vector.shape_cast %175 : vector<16x32xf32> to vector<1x16x32xf32>
    tpu.vector_store %arg15[%c0_95, %c0_96, %c0_97], %178 {strides = array<i32>} : memref<1x16x32xf32, #tpu.memory_space<vmem>>, vector<1x16x32xf32>,
    return
  }
  func.func @transform_0(%arg0: i32) -> (i32, i32, i32, i32) {
    %c0_i32 = arith.constant 0 : i32
    %c0_i32_0 = arith.constant 0 : i32
    %c0_i32_1 = arith.constant 0 : i32
    %c0_i32_2 = arith.constant 0 : i32
    return %arg0, %c0_i32, %c0_i32_0, %c0_i32_1 : i32, i32, i32, i32
  }
  func.func @transform_1(%arg0: i32) -> (i32, i32, i32) {
    %c0_i32 = arith.constant 0 : i32
    %c0_i32_0 = arith.constant 0 : i32
    %c0_i32_1 = arith.constant 0 : i32
    return %arg0, %c0_i32, %c0_i32_0 : i32, i32, i32
  }
  func.func @transform_2(%arg0: i32) -> (i32, i32, i32, i32) {
    %c0_i32 = arith.constant 0 : i32
    %c0_i32_0 = arith.constant 0 : i32
    %c0_i32_1 = arith.constant 0 : i32
    %c0_i32_2 = arith.constant 0 : i32
    return %arg0, %c0_i32, %c0_i32_0, %c0_i32_1 : i32, i32, i32, i32
  }
  func.func @transform_3(%arg0: i32) -> (i32, i32, i32, i32) {
    %c0_i32 = arith.constant 0 : i32
    %c0_i32_0 = arith.constant 0 : i32
    %c0_i32_1 = arith.constant 0 : i32
    %c0_i32_2 = arith.constant 0 : i32
    return %arg0, %c0_i32, %c0_i32_0, %c0_i32_1 : i32, i32, i32, i32
  }
  func.func @transform_4(%arg0: i32) -> (i32, i32) {
    %c0_i32 = arith.constant 0 : i32
    %c0_i32_0 = arith.constant 0 : i32
    %c0_i32_1 = arith.constant 0 : i32
    return %c0_i32, %c0_i32_0 : i32, i32
  }
  func.func @transform_5(%arg0: i32) -> (i32, i32) {
    %c0_i32 = arith.constant 0 : i32
    %c0_i32_0 = arith.constant 0 : i32
    %c0_i32_1 = arith.constant 0 : i32
    return %c0_i32, %c0_i32_0 : i32, i32
  }
  func.func @transform_6(%arg0: i32) -> (i32, i32) {
    %c0_i32 = arith.constant 0 : i32
    %c0_i32_0 = arith.constant 0 : i32
    %c0_i32_1 = arith.constant 0 : i32
    return %c0_i32, %c0_i32_0 : i32, i32
  }
  func.func @transform_7(%arg0: i32) -> (i32, i32, i32) {
    %c0_i32 = arith.constant 0 : i32
    %c0_i32_0 = arith.constant 0 : i32
    %c0_i32_1 = arith.constant 0 : i32
    %c0_i32_2 = arith.constant 0 : i32
    return %c0_i32, %c0_i32_0, %c0_i32_1 : i32, i32, i32
  }
  func.func @transform_8(%arg0: i32) -> (i32, i32, i32) {
    %c0_i32 = arith.constant 0 : i32
    %c0_i32_0 = arith.constant 0 : i32
    %c0_i32_1 = arith.constant 0 : i32
    %c0_i32_2 = arith.constant 0 : i32
    return %c0_i32, %c0_i32_0, %c0_i32_1 : i32, i32, i32
  }
  func.func @transform_9(%arg0: i32) -> (i32, i32, i32) {
    %c0_i32 = arith.constant 0 : i32
    %c0_i32_0 = arith.constant 0 : i32
    %c0_i32_1 = arith.constant 0 : i32
    %c0_i32_2 = arith.constant 0 : i32
    return %c0_i32, %c0_i32_0, %c0_i32_1 : i32, i32, i32
  }
  func.func @transform_10(%arg0: i32) -> (i32, i32, i32) {
    %c0_i32 = arith.constant 0 : i32
    %c0_i32_0 = arith.constant 0 : i32
    %c0_i32_1 = arith.constant 0 : i32
    %c0_i32_2 = arith.constant 0 : i32
    return %c0_i32, %c0_i32_0, %c0_i32_1 : i32, i32, i32
  }
  func.func @transform_11(%arg0: i32) -> (i32, i32, i32) {
    %c0_i32 = arith.constant 0 : i32
    %c0_i32_0 = arith.constant 0 : i32
    %c0_i32_1 = arith.constant 0 : i32
    %c0_i32_2 = arith.constant 0 : i32
    return %c0_i32, %c0_i32_0, %c0_i32_1 : i32, i32, i32
  }
  func.func @transform_12(%arg0: i32) -> (i32, i32, i32) {
    %c0_i32 = arith.constant 0 : i32
    %c0_i32_0 = arith.constant 0 : i32
    %c0_i32_1 = arith.constant 0 : i32
    %c0_i32_2 = arith.constant 0 : i32
    return %c0_i32, %c0_i32_0, %c0_i32_1 : i32, i32, i32
  }
  func.func @transform_13(%arg0: i32) -> (i32, i32, i32) {
    %c0_i32 = arith.constant 0 : i32
    %c0_i32_0 = arith.constant 0 : i32
    %c0_i32_1 = arith.constant 0 : i32
    %c0_i32_2 = arith.constant 0 : i32
    return %c0_i32, %c0_i32_0, %c0_i32_1 : i32, i32, i32
  }
  func.func @transform_14(%arg0: i32) -> (i32, i32, i32) {
    %c0_i32 = arith.constant 0 : i32
    %c0_i32_0 = arith.constant 0 : i32
    %c0_i32_1 = arith.constant 0 : i32
    return %arg0, %c0_i32, %c0_i32_0 : i32, i32, i32
  }
}

module attributes {stable_mosaic.version = 11 : i64} {
  func.func @schnet_kernel(%arg0: i32, %arg1: memref<1x2x8x3xf32, #tpu.memory_space<vmem>>, %arg2: memref<1x16x32xf32, #tpu.memory_space<vmem>>, %arg3: memref<1x2x56x1xi32, #tpu.memory_space<vmem>>, %arg4: memref<1x2x56x1xf32, #tpu.memory_space<vmem>>, %arg5: memref<1x16xf32, #tpu.memory_space<vmem>>, %arg6: memref<16x64xbf16, #tpu.memory_space<vmem>>, %arg7: memref<1x64xf32, #tpu.memory_space<vmem>>, %arg8: memref<2x32x32xbf16, #tpu.memory_space<vmem>>, %arg9: memref<2x1x32xf32, #tpu.memory_space<vmem>>, %arg10: memref<2x32x32xbf16, #tpu.memory_space<vmem>>, %arg11: memref<2x32x32xbf16, #tpu.memory_space<vmem>>, %arg12: memref<2x1x32xf32, #tpu.memory_space<vmem>>, %arg13: memref<2x32x32xbf16, #tpu.memory_space<vmem>>, %arg14: memref<2x1x32xf32, #tpu.memory_space<vmem>>, %arg15: memref<1x16x32xf32, #tpu.memory_space<vmem>>) attributes {dimension_semantics = [#tpu.dimension_semantics<parallel>], iteration_bounds = array<i64: 4>, scalar_prefetch = 0 : i64, scratch_operands = 0 : i64, tpu.core_type = #tpu.core_type<tc>, window_params = [{transform_indices = @transform_0, window_bounds = array<i64: 1, 2, 8, 3>}, {transform_indices = @transform_1, window_bounds = array<i64: 1, 16, 32>}, {transform_indices = @transform_2, window_bounds = array<i64: 1, 2, 56, 1>}, {transform_indices = @transform_3, window_bounds = array<i64: 1, 2, 56, 1>}, {pipeline_mode = #tpu.pipeline_mode<synchronous>, transform_indices = @transform_4, window_bounds = array<i64: 1, 16>}, {pipeline_mode = #tpu.pipeline_mode<synchronous>, transform_indices = @transform_5, window_bounds = array<i64: 16, 64>}, {pipeline_mode = #tpu.pipeline_mode<synchronous>, transform_indices = @transform_6, window_bounds = array<i64: 1, 64>}, {pipeline_mode = #tpu.pipeline_mode<synchronous>, transform_indices = @transform_7, window_bounds = array<i64: 2, 32, 32>}, {pipeline_mode = #tpu.pipeline_mode<synchronous>, transform_indices = @transform_8, window_bounds = array<i64: 2, 1, 32>}, {pipeline_mode = #tpu.pipeline_mode<synchronous>, transform_indices = @transform_9, window_bounds = array<i64: 2, 32, 32>}, {pipeline_mode = #tpu.pipeline_mode<synchronous>, transform_indices = @transform_10, window_bounds = array<i64: 2, 32, 32>}, {pipeline_mode = #tpu.pipeline_mode<synchronous>, transform_indices = @transform_11, window_bounds = array<i64: 2, 1, 32>}, {pipeline_mode = #tpu.pipeline_mode<synchronous>, transform_indices = @transform_12, window_bounds = array<i64: 2, 32, 32>}, {pipeline_mode = #tpu.pipeline_mode<synchronous>, transform_indices = @transform_13, window_bounds = array<i64: 2, 1, 32>}, {transform_indices = @transform_14, window_bounds = array<i64: 1, 16, 32>}]} {
    %c0 = arith.constant 0 : index
    %c0_0 = arith.constant 0 : index
    %c0_1 = arith.constant 0 : index
    %c0_2 = arith.constant 0 : index
    %0 = vector.load %arg1[%c0, %c0_0, %c0_1, %c0_2] : memref<1x2x8x3xf32, #tpu.memory_space<vmem>>, vector<1x2x8x3xf32>
    %1 = vector.shape_cast %0 : vector<1x2x8x3xf32> to vector<2x8x3xf32>
    %c0_3 = arith.constant 0 : index
    %c0_4 = arith.constant 0 : index
    %c0_5 = arith.constant 0 : index
    %2 = vector.load %arg2[%c0_3, %c0_4, %c0_5] : memref<1x16x32xf32, #tpu.memory_space<vmem>>, vector<1x16x32xf32>
    %3 = vector.shape_cast %2 : vector<1x16x32xf32> to vector<16x32xf32>
    %c0_6 = arith.constant 0 : index
    %c0_7 = arith.constant 0 : index
    %c0_8 = arith.constant 0 : index
    %c0_9 = arith.constant 0 : index
    %4 = vector.load %arg3[%c0_6, %c0_7, %c0_8, %c0_9] : memref<1x2x56x1xi32, #tpu.memory_space<vmem>>, vector<1x2x56x1xi32>
    %5 = vector.shape_cast %4 : vector<1x2x56x1xi32> to vector<2x56x1xi32>
    %c0_10 = arith.constant 0 : index
    %c0_11 = arith.constant 0 : index
    %c0_12 = arith.constant 0 : index
    %c0_13 = arith.constant 0 : index
    %6 = vector.load %arg4[%c0_10, %c0_11, %c0_12, %c0_13] : memref<1x2x56x1xf32, #tpu.memory_space<vmem>>, vector<1x2x56x1xf32>
    %7 = vector.shape_cast %6 : vector<1x2x56x1xf32> to vector<2x56x1xf32>
    %c0_14 = arith.constant 0 : index
    %c0_15 = arith.constant 0 : index
    %8 = vector.load %arg5[%c0_14, %c0_15] : memref<1x16xf32, #tpu.memory_space<vmem>>, vector<1x16xf32>
    %9 = tpu.iota {dimensions = array<i32: 2>} : vector<2x56x8xi32>
    %10 = vector.broadcast %5 : vector<2x56x1xi32> to vector<2x56x8xi32>
    %11 = arith.cmpi eq, %9, %10 : vector<2x56x8xi32>
    %12 = arith.extui %11 : vector<2x56x8xi1> to vector<2x56x8xi32>
    %13 = arith.sitofp %12 : vector<2x56x8xi32> to vector<2x56x8xf32>
    %14 = arith.truncf %13 : vector<2x56x8xf32> to vector<2x56x8xbf16>
    "tpu.trace_start"() <{level = 10 : i32, message = "bpn,bnc->bpc"}> : () -> ()
    %cst = arith.constant dense<0.000000e+00> : vector<2x56x3xf32>
    %15 = tpu.matmul %13, %1, %cst {dimension_numbers = #tpu.dot_dimension_numbers<[2], [1], [1], [2], [0, 0, 0, 1, 1, 2], [0], [0]>} : vector<2x56x8xf32>, vector<2x8x3xf32>, vector<2x56x3xf32> -> vector<2x56x3xf32>
    "tpu.trace_stop"() : () -> ()
    %16 = tpu.concatenate %1, %1, %1, %1, %1, %1, %1 in 1 : vector<2x8x3xf32>, vector<2x8x3xf32>, vector<2x8x3xf32>, vector<2x8x3xf32>, vector<2x8x3xf32>, vector<2x8x3xf32>, vector<2x8x3xf32> -> vector<2x56x3xf32>
    %17 = arith.subf %15, %16 : vector<2x56x3xf32>
    %18 = vector.extract_strided_slice %17 {offsets = [0, 0, 0], sizes = [2, 56, 1], strides = [1, 1, 1]} : vector<2x56x3xf32> to vector<2x56x1xf32>
    %19 = vector.extract_strided_slice %17 {offsets = [0, 0, 1], sizes = [2, 56, 1], strides = [1, 1, 1]} : vector<2x56x3xf32> to vector<2x56x1xf32>
    %20 = vector.extract_strided_slice %17 {offsets = [0, 0, 2], sizes = [2, 56, 1], strides = [1, 1, 1]} : vector<2x56x3xf32> to vector<2x56x1xf32>
    %21 = arith.mulf %18, %18 : vector<2x56x1xf32>
    %22 = arith.mulf %19, %19 : vector<2x56x1xf32>
    %23 = arith.addf %21, %22 : vector<2x56x1xf32>
    %24 = arith.mulf %20, %20 : vector<2x56x1xf32>
    %25 = arith.addf %23, %24 : vector<2x56x1xf32>
    %cst_16 = arith.constant 0.000000e+00 : f32
    %26 = vector.broadcast %cst_16 : f32 to vector<2x56x1xf32>
    %27 = arith.cmpf ogt, %7, %26 : vector<2x56x1xf32>
    %cst_17 = arith.constant 1.000000e+00 : f32
    %28 = vector.broadcast %cst_17 : f32 to vector<2x56x1xf32>
    %29 = arith.select %27, %25, %28 : vector<2x56x1xi1>, vector<2x56x1xf32>
    %30 = math.sqrt %29 : vector<2x56x1xf32>
    %cst_18 = arith.constant 0.000000e+00 : f32
    %31 = vector.broadcast %cst_18 : f32 to vector<2x56x1xf32>
    %32 = arith.select %27, %30, %31 : vector<2x56x1xi1>, vector<2x56x1xf32>
    %33 = vector.shape_cast %8 : vector<1x16xf32> to vector<1x1x16xf32>
    %34 = vector.broadcast %32 : vector<2x56x1xf32> to vector<2x56x16xf32>
    %35 = vector.broadcast %33 : vector<1x1x16xf32> to vector<2x56x16xf32>
    %36 = arith.subf %34, %35 : vector<2x56x16xf32>
    %cst_19 = arith.constant -1.125000e+00 : f32
    %37 = vector.broadcast %cst_19 : f32 to vector<2x56x16xf32>
    %38 = arith.mulf %37, %36 : vector<2x56x16xf32>
    %39 = arith.mulf %38, %36 : vector<2x56x16xf32>
    %40 = math.exp %39 : vector<2x56x16xf32>
    %41 = vector.shape_cast %40 : vector<2x56x16xf32> to vector<112x16xf32>
    %cst_20 = arith.constant 0.314159274 : f32
    %42 = vector.broadcast %cst_20 : f32 to vector<2x56x1xf32>
    %43 = arith.mulf %32, %42 : vector<2x56x1xf32>
    %44 = math.cos %43 : vector<2x56x1xf32>
    %cst_21 = arith.constant 1.000000e+00 : f32
    %45 = vector.broadcast %cst_21 : f32 to vector<2x56x1xf32>
    %46 = arith.addf %44, %45 : vector<2x56x1xf32>
    %cst_22 = arith.constant 5.000000e-01 : f32
    %47 = vector.broadcast %cst_22 : f32 to vector<2x56x1xf32>
    %48 = arith.mulf %47, %46 : vector<2x56x1xf32>
    %cst_23 = arith.constant 1.000000e+01 : f32
    %49 = vector.broadcast %cst_23 : f32 to vector<2x56x1xf32>
    %50 = arith.cmpf olt, %32, %49 : vector<2x56x1xf32>
    %51 = arith.andi %27, %50 : vector<2x56x1xi1>
    %cst_24 = arith.constant 0.000000e+00 : f32
    %52 = vector.broadcast %cst_24 : f32 to vector<2x56x1xf32>
    %53 = arith.select %51, %48, %52 : vector<2x56x1xi1>, vector<2x56x1xf32>
    %54 = arith.truncf %41 : vector<112x16xf32> to vector<112x16xbf16>
    %c0_25 = arith.constant 0 : index
    %c0_26 = arith.constant 0 : index
    %55 = vector.load %arg6[%c0_25, %c0_26] : memref<16x64xbf16, #tpu.memory_space<vmem>>, vector<16x64xbf16>
    %cst_27 = arith.constant dense<0.000000e+00> : vector<112x64xf32>
    %56 = tpu.matmul %54, %55, %cst_27 {dimension_numbers = #tpu.dot_dimension_numbers<[1], [0], [0], [1], [0, 0, 1, 1], [], []>} : vector<112x16xbf16>, vector<16x64xbf16>, vector<112x64xf32> -> vector<112x64xf32>
    %c0_28 = arith.constant 0 : index
    %c0_29 = arith.constant 0 : index
    %57 = vector.load %arg7[%c0_28, %c0_29] : memref<1x64xf32, #tpu.memory_space<vmem>>, vector<1x64xf32>
    %58 = vector.broadcast %57 : vector<1x64xf32> to vector<112x64xf32>
    %59 = arith.addf %56, %58 : vector<112x64xf32>
    %cst_30 = arith.constant 0.000000e+00 : f32
    %60 = vector.broadcast %cst_30 : f32 to vector<112x64xf32>
    %61 = arith.maximumf %59, %60 : vector<112x64xf32>
    %62 = math.absf %59 : vector<112x64xf32>
    %cst_31 = arith.constant 0.000000e+00 : f32
    %63 = vector.broadcast %cst_31 : f32 to vector<112x64xf32>
    %64 = arith.subf %63, %62 : vector<112x64xf32>
    %65 = math.exp %64 : vector<112x64xf32>
    %cst_32 = arith.constant 1.000000e+00 : f32
    %66 = vector.broadcast %cst_32 : f32 to vector<112x64xf32>
    %67 = arith.addf %66, %65 : vector<112x64xf32>
    %68 = math.log %67 : vector<112x64xf32>
    %69 = arith.addf %61, %68 : vector<112x64xf32>
    %cst_33 = arith.constant 0.693147182 : f32
    %70 = vector.broadcast %cst_33 : f32 to vector<112x64xf32>
    %71 = arith.subf %69, %70 : vector<112x64xf32>
    %72 = vector.extract_strided_slice %71 {offsets = [0, 0], sizes = [112, 32], strides = [1, 1]} : vector<112x64xf32> to vector<112x32xf32>
    %73 = arith.truncf %72 : vector<112x32xf32> to vector<112x32xbf16>
    %c0_34 = arith.constant 0 : index
    %c0_35 = arith.constant 0 : index
    %c0_36 = arith.constant 0 : index
    %74 = vector.load %arg8[%c0_34, %c0_35, %c0_36] : memref<2x32x32xbf16, #tpu.memory_space<vmem>>, vector<1x32x32xbf16>
    %75 = vector.shape_cast %74 : vector<1x32x32xbf16> to vector<32x32xbf16>
    %cst_37 = arith.constant dense<0.000000e+00> : vector<112x32xf32>
    %76 = tpu.matmul %73, %75, %cst_37 {dimension_numbers = #tpu.dot_dimension_numbers<[1], [0], [0], [1], [0, 0, 1, 1], [], []>} : vector<112x32xbf16>, vector<32x32xbf16>, vector<112x32xf32> -> vector<112x32xf32>
    %c0_38 = arith.constant 0 : index
    %c0_39 = arith.constant 0 : index
    %c0_40 = arith.constant 0 : index
    %77 = vector.load %arg9[%c0_38, %c0_39, %c0_40] : memref<2x1x32xf32, #tpu.memory_space<vmem>>, vector<1x1x32xf32>
    %78 = vector.shape_cast %77 : vector<1x1x32xf32> to vector<1x32xf32>
    %79 = vector.broadcast %78 : vector<1x32xf32> to vector<112x32xf32>
    %80 = arith.addf %76, %79 : vector<112x32xf32>
    %81 = vector.shape_cast %80 : vector<112x32xf32> to vector<2x56x32xf32>
    %82 = vector.broadcast %53 : vector<2x56x1xf32> to vector<2x56x32xf32>
    %83 = arith.mulf %81, %82 : vector<2x56x32xf32>
    %84 = arith.truncf %3 : vector<16x32xf32> to vector<16x32xbf16>
    %c0_41 = arith.constant 0 : index
    %c0_42 = arith.constant 0 : index
    %c0_43 = arith.constant 0 : index
    %85 = vector.load %arg10[%c0_41, %c0_42, %c0_43] : memref<2x32x32xbf16, #tpu.memory_space<vmem>>, vector<1x32x32xbf16>
    %86 = vector.shape_cast %85 : vector<1x32x32xbf16> to vector<32x32xbf16>
    %cst_44 = arith.constant dense<0.000000e+00> : vector<16x32xf32>
    %87 = tpu.matmul %84, %86, %cst_44 {dimension_numbers = #tpu.dot_dimension_numbers<[1], [0], [0], [1], [0, 0, 1, 1], [], []>} : vector<16x32xbf16>, vector<32x32xbf16>, vector<16x32xf32> -> vector<16x32xf32>
    %88 = arith.truncf %87 : vector<16x32xf32> to vector<16x32xbf16>
    %89 = vector.shape_cast %88 : vector<16x32xbf16> to vector<2x8x32xbf16>
    "tpu.trace_start"() <{level = 10 : i32, message = "bpn,bnf->bpf"}> : () -> ()
    %cst_45 = arith.constant dense<0.000000e+00> : vector<2x56x32xf32>
    %90 = tpu.matmul %14, %89, %cst_45 {dimension_numbers = #tpu.dot_dimension_numbers<[2], [1], [1], [2], [0, 0, 0, 1, 1, 2], [0], [0]>} : vector<2x56x8xbf16>, vector<2x8x32xbf16>, vector<2x56x32xf32> -> vector<2x56x32xf32>
    "tpu.trace_stop"() : () -> ()
    %91 = arith.mulf %90, %83 : vector<2x56x32xf32>
    %92 = vector.shape_cast %91 : vector<2x56x32xf32> to vector<2x7x8x32xf32>
    %cst_46 = arith.constant dense<0.000000e+00> : vector<2x8x32xf32>
    %93 = vector.multi_reduction <add>, %92, %cst_46 [1] : vector<2x7x8x32xf32> to vector<2x8x32xf32>
    %94 = vector.shape_cast %93 : vector<2x8x32xf32> to vector<16x32xf32>
    %95 = arith.truncf %94 : vector<16x32xf32> to vector<16x32xbf16>
    %c0_47 = arith.constant 0 : index
    %c0_48 = arith.constant 0 : index
    %c0_49 = arith.constant 0 : index
    %96 = vector.load %arg11[%c0_47, %c0_48, %c0_49] : memref<2x32x32xbf16, #tpu.memory_space<vmem>>, vector<1x32x32xbf16>
    %97 = vector.shape_cast %96 : vector<1x32x32xbf16> to vector<32x32xbf16>
    %cst_50 = arith.constant dense<0.000000e+00> : vector<16x32xf32>
    %98 = tpu.matmul %95, %97, %cst_50 {dimension_numbers = #tpu.dot_dimension_numbers<[1], [0], [0], [1], [0, 0, 1, 1], [], []>} : vector<16x32xbf16>, vector<32x32xbf16>, vector<16x32xf32> -> vector<16x32xf32>
    %c0_51 = arith.constant 0 : index
    %c0_52 = arith.constant 0 : index
    %c0_53 = arith.constant 0 : index
    %99 = vector.load %arg12[%c0_51, %c0_52, %c0_53] : memref<2x1x32xf32, #tpu.memory_space<vmem>>, vector<1x1x32xf32>
    %100 = vector.shape_cast %99 : vector<1x1x32xf32> to vector<1x32xf32>
    %101 = vector.broadcast %100 : vector<1x32xf32> to vector<16x32xf32>
    %102 = arith.addf %98, %101 : vector<16x32xf32>
    %cst_54 = arith.constant 0.000000e+00 : f32
    %103 = vector.broadcast %cst_54 : f32 to vector<16x32xf32>
    %104 = arith.maximumf %102, %103 : vector<16x32xf32>
    %105 = math.absf %102 : vector<16x32xf32>
    %cst_55 = arith.constant 0.000000e+00 : f32
    %106 = vector.broadcast %cst_55 : f32 to vector<16x32xf32>
    %107 = arith.subf %106, %105 : vector<16x32xf32>
    %108 = math.exp %107 : vector<16x32xf32>
    %cst_56 = arith.constant 1.000000e+00 : f32
    %109 = vector.broadcast %cst_56 : f32 to vector<16x32xf32>
    %110 = arith.addf %109, %108 : vector<16x32xf32>
    %111 = math.log %110 : vector<16x32xf32>
    %112 = arith.addf %104, %111 : vector<16x32xf32>
    %cst_57 = arith.constant 0.693147182 : f32
    %113 = vector.broadcast %cst_57 : f32 to vector<16x32xf32>
    %114 = arith.subf %112, %113 : vector<16x32xf32>
    %115 = arith.truncf %114 : vector<16x32xf32> to vector<16x32xbf16>
    %c0_58 = arith.constant 0 : index
    %c0_59 = arith.constant 0 : index
    %c0_60 = arith.constant 0 : index
    %116 = vector.load %arg13[%c0_58, %c0_59, %c0_60] : memref<2x32x32xbf16, #tpu.memory_space<vmem>>, vector<1x32x32xbf16>
    %117 = vector.shape_cast %116 : vector<1x32x32xbf16> to vector<32x32xbf16>
    %cst_61 = arith.constant dense<0.000000e+00> : vector<16x32xf32>
    %118 = tpu.matmul %115, %117, %cst_61 {dimension_numbers = #tpu.dot_dimension_numbers<[1], [0], [0], [1], [0, 0, 1, 1], [], []>} : vector<16x32xbf16>, vector<32x32xbf16>, vector<16x32xf32> -> vector<16x32xf32>
    %c0_62 = arith.constant 0 : index
    %c0_63 = arith.constant 0 : index
    %c0_64 = arith.constant 0 : index
    %119 = vector.load %arg14[%c0_62, %c0_63, %c0_64] : memref<2x1x32xf32, #tpu.memory_space<vmem>>, vector<1x1x32xf32>
    %120 = vector.shape_cast %119 : vector<1x1x32xf32> to vector<1x32xf32>
    %121 = vector.broadcast %120 : vector<1x32xf32> to vector<16x32xf32>
    %122 = arith.addf %118, %121 : vector<16x32xf32>
    %123 = arith.addf %3, %122 : vector<16x32xf32>
    %124 = vector.extract_strided_slice %71 {offsets = [0, 32], sizes = [112, 32], strides = [1, 1]} : vector<112x64xf32> to vector<112x32xf32>
    %125 = arith.truncf %124 : vector<112x32xf32> to vector<112x32xbf16>
    %c1 = arith.constant 1 : index
    %c0_65 = arith.constant 0 : index
    %c0_66 = arith.constant 0 : index
    %126 = vector.load %arg8[%c1, %c0_65, %c0_66] : memref<2x32x32xbf16, #tpu.memory_space<vmem>>, vector<1x32x32xbf16>
    %127 = vector.shape_cast %126 : vector<1x32x32xbf16> to vector<32x32xbf16>
    %cst_67 = arith.constant dense<0.000000e+00> : vector<112x32xf32>
    %128 = tpu.matmul %125, %127, %cst_67 {dimension_numbers = #tpu.dot_dimension_numbers<[1], [0], [0], [1], [0, 0, 1, 1], [], []>} : vector<112x32xbf16>, vector<32x32xbf16>, vector<112x32xf32> -> vector<112x32xf32>
    %c1_68 = arith.constant 1 : index
    %c0_69 = arith.constant 0 : index
    %c0_70 = arith.constant 0 : index
    %129 = vector.load %arg9[%c1_68, %c0_69, %c0_70] : memref<2x1x32xf32, #tpu.memory_space<vmem>>, vector<1x1x32xf32>
    %130 = vector.shape_cast %129 : vector<1x1x32xf32> to vector<1x32xf32>
    %131 = vector.broadcast %130 : vector<1x32xf32> to vector<112x32xf32>
    %132 = arith.addf %128, %131 : vector<112x32xf32>
    %133 = vector.shape_cast %132 : vector<112x32xf32> to vector<2x56x32xf32>
    %134 = vector.broadcast %53 : vector<2x56x1xf32> to vector<2x56x32xf32>
    %135 = arith.mulf %133, %134 : vector<2x56x32xf32>
    %136 = arith.truncf %123 : vector<16x32xf32> to vector<16x32xbf16>
    %c1_71 = arith.constant 1 : index
    %c0_72 = arith.constant 0 : index
    %c0_73 = arith.constant 0 : index
    %137 = vector.load %arg10[%c1_71, %c0_72, %c0_73] : memref<2x32x32xbf16, #tpu.memory_space<vmem>>, vector<1x32x32xbf16>
    %138 = vector.shape_cast %137 : vector<1x32x32xbf16> to vector<32x32xbf16>
    %cst_74 = arith.constant dense<0.000000e+00> : vector<16x32xf32>
    %139 = tpu.matmul %136, %138, %cst_74 {dimension_numbers = #tpu.dot_dimension_numbers<[1], [0], [0], [1], [0, 0, 1, 1], [], []>} : vector<16x32xbf16>, vector<32x32xbf16>, vector<16x32xf32> -> vector<16x32xf32>
    %140 = arith.truncf %139 : vector<16x32xf32> to vector<16x32xbf16>
    %141 = vector.shape_cast %140 : vector<16x32xbf16> to vector<2x8x32xbf16>
    "tpu.trace_start"() <{level = 10 : i32, message = "bpn,bnf->bpf"}> : () -> ()
    %cst_75 = arith.constant dense<0.000000e+00> : vector<2x56x32xf32>
    %142 = tpu.matmul %14, %141, %cst_75 {dimension_numbers = #tpu.dot_dimension_numbers<[2], [1], [1], [2], [0, 0, 0, 1, 1, 2], [0], [0]>} : vector<2x56x8xbf16>, vector<2x8x32xbf16>, vector<2x56x32xf32> -> vector<2x56x32xf32>
    "tpu.trace_stop"() : () -> ()
    %143 = arith.mulf %142, %135 : vector<2x56x32xf32>
    %144 = vector.shape_cast %143 : vector<2x56x32xf32> to vector<2x7x8x32xf32>
    %cst_76 = arith.constant dense<0.000000e+00> : vector<2x8x32xf32>
    %145 = vector.multi_reduction <add>, %144, %cst_76 [1] : vector<2x7x8x32xf32> to vector<2x8x32xf32>
    %146 = vector.shape_cast %145 : vector<2x8x32xf32> to vector<16x32xf32>
    %147 = arith.truncf %146 : vector<16x32xf32> to vector<16x32xbf16>
    %c1_77 = arith.constant 1 : index
    %c0_78 = arith.constant 0 : index
    %c0_79 = arith.constant 0 : index
    %148 = vector.load %arg11[%c1_77, %c0_78, %c0_79] : memref<2x32x32xbf16, #tpu.memory_space<vmem>>, vector<1x32x32xbf16>
    %149 = vector.shape_cast %148 : vector<1x32x32xbf16> to vector<32x32xbf16>
    %cst_80 = arith.constant dense<0.000000e+00> : vector<16x32xf32>
    %150 = tpu.matmul %147, %149, %cst_80 {dimension_numbers = #tpu.dot_dimension_numbers<[1], [0], [0], [1], [0, 0, 1, 1], [], []>} : vector<16x32xbf16>, vector<32x32xbf16>, vector<16x32xf32> -> vector<16x32xf32>
    %c1_81 = arith.constant 1 : index
    %c0_82 = arith.constant 0 : index
    %c0_83 = arith.constant 0 : index
    %151 = vector.load %arg12[%c1_81, %c0_82, %c0_83] : memref<2x1x32xf32, #tpu.memory_space<vmem>>, vector<1x1x32xf32>
    %152 = vector.shape_cast %151 : vector<1x1x32xf32> to vector<1x32xf32>
    %153 = vector.broadcast %152 : vector<1x32xf32> to vector<16x32xf32>
    %154 = arith.addf %150, %153 : vector<16x32xf32>
    %cst_84 = arith.constant 0.000000e+00 : f32
    %155 = vector.broadcast %cst_84 : f32 to vector<16x32xf32>
    %156 = arith.maximumf %154, %155 : vector<16x32xf32>
    %157 = math.absf %154 : vector<16x32xf32>
    %cst_85 = arith.constant 0.000000e+00 : f32
    %158 = vector.broadcast %cst_85 : f32 to vector<16x32xf32>
    %159 = arith.subf %158, %157 : vector<16x32xf32>
    %160 = math.exp %159 : vector<16x32xf32>
    %cst_86 = arith.constant 1.000000e+00 : f32
    %161 = vector.broadcast %cst_86 : f32 to vector<16x32xf32>
    %162 = arith.addf %161, %160 : vector<16x32xf32>
    %163 = math.log %162 : vector<16x32xf32>
    %164 = arith.addf %156, %163 : vector<16x32xf32>
    %cst_87 = arith.constant 0.693147182 : f32
    %165 = vector.broadcast %cst_87 : f32 to vector<16x32xf32>
    %166 = arith.subf %164, %165 : vector<16x32xf32>
    %167 = arith.truncf %166 : vector<16x32xf32> to vector<16x32xbf16>
    %c1_88 = arith.constant 1 : index
    %c0_89 = arith.constant 0 : index
    %c0_90 = arith.constant 0 : index
    %168 = vector.load %arg13[%c1_88, %c0_89, %c0_90] : memref<2x32x32xbf16, #tpu.memory_space<vmem>>, vector<1x32x32xbf16>
    %169 = vector.shape_cast %168 : vector<1x32x32xbf16> to vector<32x32xbf16>
    %cst_91 = arith.constant dense<0.000000e+00> : vector<16x32xf32>
    %170 = tpu.matmul %167, %169, %cst_91 {dimension_numbers = #tpu.dot_dimension_numbers<[1], [0], [0], [1], [0, 0, 1, 1], [], []>} : vector<16x32xbf16>, vector<32x32xbf16>, vector<16x32xf32> -> vector<16x32xf32>
    %c1_92 = arith.constant 1 : index
    %c0_93 = arith.constant 0 : index
    %c0_94 = arith.constant 0 : index
    %171 = vector.load %arg14[%c1_92, %c0_93, %c0_94] : memref<2x1x32xf32, #tpu.memory_space<vmem>>, vector<1x1x32xf32>
    %172 = vector.shape_cast %171 : vector<1x1x32xf32> to vector<1x32xf32>
    %173 = vector.broadcast %172 : vector<1x32xf32> to vector<16x32xf32>
    %174 = arith.addf %170, %173 : vector<16x32xf32>
    %175 = arith.addf %123, %174 : vector<16x32xf32>
    %c0_95 = arith.constant 0 : index
    %c0_96 = arith.constant 0 : index
    %c0_97 = arith.constant 0 : index
    %176 = vector.load %arg15[%c0_95, %c0_96, %c0_97] : memref<1x16x32xf32, #tpu.memory_space<vmem>>, vector<1x16x32xf32>
    %177 = vector.shape_cast %176 : vector<1x16x32xf32> to vector<16x32xf32>
    %178 = vector.shape_cast %175 : vector<16x32xf32> to vector<1x16x32xf32>
    tpu.vector_store %arg15[%c0_95, %c0_96, %c0_97], %178 {strides = array<i32>} : memref<1x16x32xf32, #tpu.memory_space<vmem>>, vector<1x16x32xf32>,
    return
  }
  func.func @transform_0(%arg0: i32) -> (i32, i32, i32, i32) {
    %c0_i32 = arith.constant 0 : i32
    %c0_i32_0 = arith.constant 0 : i32
    %c0_i32_1 = arith.constant 0 : i32
    %c0_i32_2 = arith.constant 0 : i32
    return %arg0, %c0_i32, %c0_i32_0, %c0_i32_1 : i32, i32, i32, i32
  }
  func.func @transform_1(%arg0: i32) -> (i32, i32, i32) {
    %c0_i32 = arith.constant 0 : i32
    %c0_i32_0 = arith.constant 0 : i32
    %c0_i32_1 = arith.constant 0 : i32
    return %arg0, %c0_i32, %c0_i32_0 : i32, i32, i32
  }
  func.func @transform_2(%arg0: i32) -> (i32, i32, i32, i32) {
    %c0_i32 = arith.constant 0 : i32
    %c0_i32_0 = arith.constant 0 : i32
    %c0_i32_1 = arith.constant 0 : i32
    %c0_i32_2 = arith.constant 0 : i32
    return %arg0, %c0_i32, %c0_i32_0, %c0_i32_1 : i32, i32, i32, i32
  }
  func.func @transform_3(%arg0: i32) -> (i32, i32, i32, i32) {
    %c0_i32 = arith.constant 0 : i32
    %c0_i32_0 = arith.constant 0 : i32
    %c0_i32_1 = arith.constant 0 : i32
    %c0_i32_2 = arith.constant 0 : i32
    return %arg0, %c0_i32, %c0_i32_0, %c0_i32_1 : i32, i32, i32, i32
  }
  func.func @transform_4(%arg0: i32) -> (i32, i32) {
    %c0_i32 = arith.constant 0 : i32
    %c0_i32_0 = arith.constant 0 : i32
    %c0_i32_1 = arith.constant 0 : i32
    return %c0_i32, %c0_i32_0 : i32, i32
  }
  func.func @transform_5(%arg0: i32) -> (i32, i32) {
    %c0_i32 = arith.constant 0 : i32
    %c0_i32_0 = arith.constant 0 : i32
    %c0_i32_1 = arith.constant 0 : i32
    return %c0_i32, %c0_i32_0 : i32, i32
  }
  func.func @transform_6(%arg0: i32) -> (i32, i32) {
    %c0_i32 = arith.constant 0 : i32
    %c0_i32_0 = arith.constant 0 : i32
    %c0_i32_1 = arith.constant 0 : i32
    return %c0_i32, %c0_i32_0 : i32, i32
  }
  func.func @transform_7(%arg0: i32) -> (i32, i32, i32) {
    %c0_i32 = arith.constant 0 : i32
    %c0_i32_0 = arith.constant 0 : i32
    %c0_i32_1 = arith.constant 0 : i32
    %c0_i32_2 = arith.constant 0 : i32
    return %c0_i32, %c0_i32_0, %c0_i32_1 : i32, i32, i32
  }
  func.func @transform_8(%arg0: i32) -> (i32, i32, i32) {
    %c0_i32 = arith.constant 0 : i32
    %c0_i32_0 = arith.constant 0 : i32
    %c0_i32_1 = arith.constant 0 : i32
    %c0_i32_2 = arith.constant 0 : i32
    return %c0_i32, %c0_i32_0, %c0_i32_1 : i32, i32, i32
  }
  func.func @transform_9(%arg0: i32) -> (i32, i32, i32) {
    %c0_i32 = arith.constant 0 : i32
    %c0_i32_0 = arith.constant 0 : i32
    %c0_i32_1 = arith.constant 0 : i32
    %c0_i32_2 = arith.constant 0 : i32
    return %c0_i32, %c0_i32_0, %c0_i32_1 : i32, i32, i32
  }
  func.func @transform_10(%arg0: i32) -> (i32, i32, i32) {
    %c0_i32 = arith.constant 0 : i32
    %c0_i32_0 = arith.constant 0 : i32
    %c0_i32_1 = arith.constant 0 : i32
    %c0_i32_2 = arith.constant 0 : i32
    return %c0_i32, %c0_i32_0, %c0_i32_1 : i32, i32, i32
  }
  func.func @transform_11(%arg0: i32) -> (i32, i32, i32) {
    %c0_i32 = arith.constant 0 : i32
    %c0_i32_0 = arith.constant 0 : i32
    %c0_i32_1 = arith.constant 0 : i32
    %c0_i32_2 = arith.constant 0 : i32
    return %c0_i32, %c0_i32_0, %c0_i32_1 : i32, i32, i32
  }
  func.func @transform_12(%arg0: i32) -> (i32, i32, i32) {
    %c0_i32 = arith.constant 0 : i32
    %c0_i32_0 = arith.constant 0 : i32
    %c0_i32_1 = arith.constant 0 : i32
    %c0_i32_2 = arith.constant 0 : i32
    return %c0_i32, %c0_i32_0, %c0_i32_1 : i32, i32, i32
  }
  func.func @transform_13(%arg0: i32) -> (i32, i32, i32) {
    %c0_i32 = arith.constant 0 : i32
    %c0_i32_0 = arith.constant 0 : i32
    %c0_i32_1 = arith.constant 0 : i32
    %c0_i32_2 = arith.constant 0 : i32
    return %c0_i32, %c0_i32_0, %c0_i32_1 : i32, i32, i32
  }
  func.func @transform_14(%arg0: i32) -> (i32, i32, i32) {
    %c0_i32 = arith.constant 0 : i32
    %c0_i32_0 = arith.constant 0 : i32
    %c0_i32_1 = arith.constant 0 : i32
    return %arg0, %c0_i32, %c0_i32_0 : i32, i32, i32
  }
}

</mosaic_0001>

<llo_original>
// kernel: tpu_custom_call.1
$region0: #{tpu_custom_call.1}
  #allocation0 [shape = 'u32[]', space=smem, size = 0x4, offset = 0x4, fixed_abs, tag = 'smem constant byte address 0x4 - core index']
  #allocation1 [shape = 'u32[144,128]{1,0:T(1,128)}', space=vmem, size = 0x12000, scoped, tag = 'internal scratch']
  %s0 = inlined_call_operand.vmem [shape: f32[4,2,8,3], index: 0, kind: input, shape index: {}]
  %s1 = inlined_call_operand.vmem [shape: f32[4,16,32], index: 1, kind: input, shape index: {}]
  %s2 = inlined_call_operand.vmem [shape: s32[4,2,56,1], index: 2, kind: input, shape index: {}]
  %s3 = inlined_call_operand.vmem [shape: f32[4,2,56,1], index: 3, kind: input, shape index: {}]
  %s4 = inlined_call_operand.vmem [shape: f32[1,16], index: 4, kind: input, shape index: {}]
  %s5 = inlined_call_operand.vmem [shape: bf16[16,64], index: 5, kind: input, shape index: {}]
  %s6 = inlined_call_operand.vmem [shape: f32[1,64], index: 6, kind: input, shape index: {}]
  %s7 = inlined_call_operand.vmem [shape: bf16[2,32,32], index: 7, kind: input, shape index: {}]
  %s8 = inlined_call_operand.vmem [shape: f32[2,1,32], index: 8, kind: input, shape index: {}]
  %s9 = inlined_call_operand.vmem [shape: bf16[2,32,32], index: 9, kind: input, shape index: {}]
  %s10 = inlined_call_operand.vmem [shape: bf16[2,32,32], index: 10, kind: input, shape index: {}]
  %s11 = inlined_call_operand.vmem [shape: f32[2,1,32], index: 11, kind: input, shape index: {}]
  %s12 = inlined_call_operand.vmem [shape: bf16[2,32,32], index: 12, kind: input, shape index: {}]
  %s13 = inlined_call_operand.vmem [shape: f32[2,1,32], index: 13, kind: input, shape index: {}]
  %s14 = inlined_call_operand.hbm [shape: f32[4,16,32], index: 14, kind: output, shape index: {}]
  %s15 = sld [smem:[#allocation0]]
  $region89: #{tpu_custom_call.1} parent=0
    _
  %s17 = ssub.s32 1, %s15
  %s18 = scalar_select 0, %s17, %s15
  $region1: #{tpu_custom_call.1} parent=0
    #allocation2 [shape = 'u8[16384]{0}', space=vmem, size = 0x4000, scoped, tag = 'output window, operand 0']
    #allocation3 [shape = 's32[2]{0}', space=sflag, size = 0x8, scoped, tag = 'scoped memory for tpu_custom_call.1']
    %19 = vsyncpa [#allocation3], 0
    %s20 = scalar_lea.sflag [#allocation3], 1
    %21 = vsyncpa %s20, 0
    loop: start=0, step=1, limit=6
    $region2: #{tpu_custom_call.1} parent=1 // loop_pre_header
      _
    $region3: #{tpu_custom_call.1} parent=1 // loop_header
      %s23 = sphi 0, %s27
      %p24 = scmp.ge.s32.totalorder %s23, 6
      %s33 = sphi 0, %s35
      %s36 = sphi 0, %s33
      %s37 = sphi 0, %s36
      %s53 = sphi 0, %s37
      %s59 = sphi 0, %s61
      %s62 = sphi 0, %s59
      %s63 = sphi 0, %s62
      %s79 = sphi 0, %s63
      %s85 = sphi 0, %s87
      %s88 = sphi 0, %s85
      %s89 = sphi 0, %s88
      %s105 = sphi 0, %s89
      %s111 = sphi 0, %s113
      %s114 = sphi 0, %s111
      %s115 = sphi 0, %s114
      %s131 = sphi 0, %s115
      %s135 = sphi 0, %s135
      %s137 = sphi 0, %s135
      %s138 = sphi 0, %s137
      %s152 = sphi 0, %s138
      %s156 = sphi 0, %s156
      %s158 = sphi 0, %s156
      %s159 = sphi 0, %s158
      %s173 = sphi 0, %s159
      %s177 = sphi 0, %s177
      %s179 = sphi 0, %s177
      %s180 = sphi 0, %s179
      %s194 = sphi 0, %s180
      %s198 = sphi 0, %s198
      %s200 = sphi 0, %s198
      %s201 = sphi 0, %s200
      %s215 = sphi 0, %s201
      %s219 = sphi 0, %s219
      %s221 = sphi 0, %s219
      %s222 = sphi 0, %s221
      %s236 = sphi 0, %s222
      %s240 = sphi 0, %s240
      %s242 = sphi 0, %s240
      %s243 = sphi 0, %s242
      %s257 = sphi 0, %s243
      %s261 = sphi 0, %s261
      %s263 = sphi 0, %s261
      %s264 = sphi 0, %s263
      %s278 = sphi 0, %s264
      %s282 = sphi 0, %s282
      %s284 = sphi 0, %s282
      %s285 = sphi 0, %s284
      %s299 = sphi 0, %s285
      %s303 = sphi 0, %s303
      %s305 = sphi 0, %s303
      %s306 = sphi 0, %s305
      %s320 = sphi 0, %s306
      %s324 = sphi 0, %s324
      %s326 = sphi 0, %s324
      %s327 = sphi 0, %s326
      %s341 = sphi 0, %s327
      %s347 = sphi 0, %s349
      %s350 = sphi 0, %s347
      %s351 = sphi 0, %s350
      %s367 = sphi 0, %s351
    $region4: #{tpu_custom_call.1} parent=1 // loop_header_branch
      %26 = sbr.rel (%p24) target = $region8
    $region5: #{tpu_custom_call.1} parent=1 // loop_body
      %s28 = ssub.s32 %s23, 1
      %s29 = ssub.s32 %s23, 2
      %s30 = sadd.s32 %s23, 1
      %s31 = ssub.s32 %s23, %s30
      %p32 = scmp.eq.s32.totalorder %s31, 0
      %s34 = sadd.s32 %s33, 1
      %s35 = scalar_select %p32, %s33, %s34
      %p38 = pneg %p32
      %p39 = scmp.eq.s32.totalorder %s23, 3
      %p40 = por %p38, %p39
      %p41 = scmp.ne.s32.totalorder %s33, %s36
      %p42 = scmp.eq.s32.totalorder %s23, 0
      %p43 = por %p41, %p42
      %p44 = scmp.ne.s32.totalorder %s33, %s36
      %p45 = scmp.eq.s32.totalorder %s28, 3
      %p46 = por %p44, %p45
      %p47 = scmp.ne.s32.totalorder %s36, %s37
      %p48 = scmp.eq.s32.totalorder %s28, 0
      %p49 = por %p47, %p48
      %p50 = scmp.ne.s32.totalorder %s36, %s37
      %p51 = scmp.eq.s32.totalorder %s29, 3
      %p52 = por %p50, %p51
      %p54 = scmp.ne.s32.totalorder %s37, %s53
      %p55 = scmp.eq.s32.totalorder %s29, 0
      %p56 = por %p54, %p55
      %s57 = ssub.s32 %s23, %s30
      %p58 = scmp.eq.s32.totalorder %s57, 0
      %s60 = sadd.s32 %s59, 1
      %s61 = scalar_select %p58, %s59, %s60
      %p64 = pneg %p58
      %p65 = scmp.eq.s32.totalorder %s23, 3
      %p66 = por %p64, %p65
      %p67 = scmp.ne.s32.totalorder %s59, %s62
      %p68 = scmp.eq.s32.totalorder %s23, 0
      %p69 = por %p67, %p68
      %p70 = scmp.ne.s32.totalorder %s59, %s62
      %p71 = scmp.eq.s32.totalorder %s28, 3
      %p72 = por %p70, %p71
      %p73 = scmp.ne.s32.totalorder %s62, %s63
      %p74 = scmp.eq.s32.totalorder %s28, 0
      %p75 = por %p73, %p74
      %p76 = scmp.ne.s32.totalorder %s62, %s63
      %p77 = scmp.eq.s32.totalorder %s29, 3
      %p78 = por %p76, %p77
      %p80 = scmp.ne.s32.totalorder %s63, %s79
      %p81 = scmp.eq.s32.totalorder %s29, 0
      %p82 = por %p80, %p81
      %s83 = ssub.s32 %s23, %s30
      %p84 = scmp.eq.s32.totalorder %s83, 0
      %s86 = sadd.s32 %s85, 1
      %s87 = scalar_select %p84, %s85, %s86
      %p90 = pneg %p84
      %p91 = scmp.eq.s32.totalorder %s23, 3
      %p92 = por %p90, %p91
      %p93 = scmp.ne.s32.totalorder %s85, %s88
      %p94 = scmp.eq.s32.totalorder %s23, 0
      %p95 = por %p93, %p94
      %p96 = scmp.ne.s32.totalorder %s85, %s88
      %p97 = scmp.eq.s32.totalorder %s28, 3
      %p98 = por %p96, %p97
      %p99 = scmp.ne.s32.totalorder %s88, %s89
      %p100 = scmp.eq.s32.totalorder %s28, 0
      %p101 = por %p99, %p100
      %p102 = scmp.ne.s32.totalorder %s88, %s89
      %p103 = scmp.eq.s32.totalorder %s29, 3
      %p104 = por %p102, %p103
      %p106 = scmp.ne.s32.totalorder %s89, %s105
      %p107 = scmp.eq.s32.totalorder %s29, 0
      %p108 = por %p106, %p107
      %s109 = ssub.s32 %s23, %s30
      %p110 = scmp.eq.s32.totalorder %s109, 0
      %s112 = sadd.s32 %s111, 1
      %s113 = scalar_select %p110, %s111, %s112
      %p116 = pneg %p110
      %p117 = scmp.eq.s32.totalorder %s23, 3
      %p118 = por %p116, %p117
      %p119 = scmp.ne.s32.totalorder %s111, %s114
      %p120 = scmp.eq.s32.totalorder %s23, 0
      %p121 = por %p119, %p120
      %p122 = scmp.ne.s32.totalorder %s111, %s114
      %p123 = scmp.eq.s32.totalorder %s28, 3
      %p124 = por %p122, %p123
      %p125 = scmp.ne.s32.totalorder %s114, %s115
      %p126 = scmp.eq.s32.totalorder %s28, 0
      %p127 = por %p125, %p126
      %p128 = scmp.ne.s32.totalorder %s114, %s115
      %p129 = scmp.eq.s32.totalorder %s29, 3
      %p130 = por %p128, %p129
      %p132 = scmp.ne.s32.totalorder %s115, %s131
      %p133 = scmp.eq.s32.totalorder %s29, 0
      %p134 = por %p132, %p133
      %s136 = sadd.s32 %s135, 1
      %p139 = scmp.eq.s32.totalorder %s23, 3
      %p140 = scmp.ne.s32.totalorder %s135, %s137
      %p141 = scmp.eq.s32.totalorder %s23, 0
      %p142 = por %p140, %p141
      %p143 = scmp.ne.s32.totalorder %s135, %s137
      %p144 = scmp.eq.s32.totalorder %s28, 3
      %p145 = por %p143, %p144
      %p146 = scmp.ne.s32.totalorder %s137, %s138
      %p147 = scmp.eq.s32.totalorder %s28, 0
      %p148 = por %p146, %p147
      %p149 = scmp.ne.s32.totalorder %s137, %s138
      %p150 = scmp.eq.s32.totalorder %s29, 3
      %p151 = por %p149, %p150
      %p153 = scmp.ne.s32.totalorder %s138, %s152
      %p154 = scmp.eq.s32.totalorder %s29, 0
      %p155 = por %p153, %p154
      %s157 = sadd.s32 %s156, 1
      %p160 = scmp.eq.s32.totalorder %s23, 3
      %p161 = scmp.ne.s32.totalorder %s156, %s158
      %p162 = scmp.eq.s32.totalorder %s23, 0
      %p163 = por %p161, %p162
      %p164 = scmp.ne.s32.totalorder %s156, %s158
      %p165 = scmp.eq.s32.totalorder %s28, 3
      %p166 = por %p164, %p165
      %p167 = scmp.ne.s32.totalorder %s158, %s159
      %p168 = scmp.eq.s32.totalorder %s28, 0
      %p169 = por %p167, %p168
      %p170 = scmp.ne.s32.totalorder %s158, %s159
      %p171 = scmp.eq.s32.totalorder %s29, 3
      %p172 = por %p170, %p171
      %p174 = scmp.ne.s32.totalorder %s159, %s173
      %p175 = scmp.eq.s32.totalorder %s29, 0
      %p176 = por %p174, %p175
      %s178 = sadd.s32 %s177, 1
      %p181 = scmp.eq.s32.totalorder %s23, 3
      %p182 = scmp.ne.s32.totalorder %s177, %s179
      %p183 = scmp.eq.s32.totalorder %s23, 0
      %p184 = por %p182, %p183
      %p185 = scmp.ne.s32.totalorder %s177, %s179
      %p186 = scmp.eq.s32.totalorder %s28, 3
      %p187 = por %p185, %p186
      %p188 = scmp.ne.s32.totalorder %s179, %s180
      %p189 = scmp.eq.s32.totalorder %s28, 0
      %p190 = por %p188, %p189
      %p191 = scmp.ne.s32.totalorder %s179, %s180
      %p192 = scmp.eq.s32.totalorder %s29, 3
      %p193 = por %p191, %p192
      %p195 = scmp.ne.s32.totalorder %s180, %s194
      %p196 = scmp.eq.s32.totalorder %s29, 0
      %p197 = por %p195, %p196
      %s199 = sadd.s32 %s198, 1
      %p202 = scmp.eq.s32.totalorder %s23, 3
      %p203 = scmp.ne.s32.totalorder %s198, %s200
      %p204 = scmp.eq.s32.totalorder %s23, 0
      %p205 = por %p203, %p204
      %p206 = scmp.ne.s32.totalorder %s198, %s200
      %p207 = scmp.eq.s32.totalorder %s28, 3
      %p208 = por %p206, %p207
      %p209 = scmp.ne.s32.totalorder %s200, %s201
      %p210 = scmp.eq.s32.totalorder %s28, 0
      %p211 = por %p209, %p210
      %p212 = scmp.ne.s32.totalorder %s200, %s201
      %p213 = scmp.eq.s32.totalorder %s29, 3
      %p214 = por %p212, %p213
      %p216 = scmp.ne.s32.totalorder %s201, %s215
      %p217 = scmp.eq.s32.totalorder %s29, 0
      %p218 = por %p216, %p217
      %s220 = sadd.s32 %s219, 1
      %p223 = scmp.eq.s32.totalorder %s23, 3
      %p224 = scmp.ne.s32.totalorder %s219, %s221
      %p225 = scmp.eq.s32.totalorder %s23, 0
      %p226 = por %p224, %p225
      %p227 = scmp.ne.s32.totalorder %s219, %s221
      %p228 = scmp.eq.s32.totalorder %s28, 3
      %p229 = por %p227, %p228
      %p230 = scmp.ne.s32.totalorder %s221, %s222
      %p231 = scmp.eq.s32.totalorder %s28, 0
      %p232 = por %p230, %p231
      %p233 = scmp.ne.s32.totalorder %s221, %s222
      %p234 = scmp.eq.s32.totalorder %s29, 3
      %p235 = por %p233, %p234
      %p237 = scmp.ne.s32.totalorder %s222, %s236
      %p238 = scmp.eq.s32.totalorder %s29, 0
      %p239 = por %p237, %p238
      %s241 = sadd.s32 %s240, 1
      %p244 = scmp.eq.s32.totalorder %s23, 3
      %p245 = scmp.ne.s32.totalorder %s240, %s242
      %p246 = scmp.eq.s32.totalorder %s23, 0
      %p247 = por %p245, %p246
      %p248 = scmp.ne.s32.totalorder %s240, %s242
      %p249 = scmp.eq.s32.totalorder %s28, 3
      %p250 = por %p248, %p249
      %p251 = scmp.ne.s32.totalorder %s242, %s243
      %p252 = scmp.eq.s32.totalorder %s28, 0
      %p253 = por %p251, %p252
      %p254 = scmp.ne.s32.totalorder %s242, %s243
      %p255 = scmp.eq.s32.totalorder %s29, 3
      %p256 = por %p254, %p255
      %p258 = scmp.ne.s32.totalorder %s243, %s257
      %p259 = scmp.eq.s32.totalorder %s29, 0
      %p260 = por %p258, %p259
      %s262 = sadd.s32 %s261, 1
      %p265 = scmp.eq.s32.totalorder %s23, 3
      %p266 = scmp.ne.s32.totalorder %s261, %s263
      %p267 = scmp.eq.s32.totalorder %s23, 0
      %p268 = por %p266, %p267
      %p269 = scmp.ne.s32.totalorder %s261, %s263
      %p270 = scmp.eq.s32.totalorder %s28, 3
      %p271 = por %p269, %p270
      %p272 = scmp.ne.s32.totalorder %s263, %s264
      %p273 = scmp.eq.s32.totalorder %s28, 0
      %p274 = por %p272, %p273
      %p275 = scmp.ne.s32.totalorder %s263, %s264
      %p276 = scmp.eq.s32.totalorder %s29, 3
      %p277 = por %p275, %p276
      %p279 = scmp.ne.s32.totalorder %s264, %s278
      %p280 = scmp.eq.s32.totalorder %s29, 0
      %p281 = por %p279, %p280
      %s283 = sadd.s32 %s282, 1
      %p286 = scmp.eq.s32.totalorder %s23, 3
      %p287 = scmp.ne.s32.totalorder %s282, %s284
      %p288 = scmp.eq.s32.totalorder %s23, 0
      %p289 = por %p287, %p288
      %p290 = scmp.ne.s32.totalorder %s282, %s284
      %p291 = scmp.eq.s32.totalorder %s28, 3
      %p292 = por %p290, %p291
      %p293 = scmp.ne.s32.totalorder %s284, %s285
      %p294 = scmp.eq.s32.totalorder %s28, 0
      %p295 = por %p293, %p294
      %p296 = scmp.ne.s32.totalorder %s284, %s285
      %p297 = scmp.eq.s32.totalorder %s29, 3
      %p298 = por %p296, %p297
      %p300 = scmp.ne.s32.totalorder %s285, %s299
      %p301 = scmp.eq.s32.totalorder %s29, 0
      %p302 = por %p300, %p301
      %s304 = sadd.s32 %s303, 1
      %p307 = scmp.eq.s32.totalorder %s23, 3
      %p308 = scmp.ne.s32.totalorder %s303, %s305
      %p309 = scmp.eq.s32.totalorder %s23, 0
      %p310 = por %p308, %p309
      %p311 = scmp.ne.s32.totalorder %s303, %s305
      %p312 = scmp.eq.s32.totalorder %s28, 3
      %p313 = por %p311, %p312
      %p314 = scmp.ne.s32.totalorder %s305, %s306
      %p315 = scmp.eq.s32.totalorder %s28, 0
      %p316 = por %p314, %p315
      %p317 = scmp.ne.s32.totalorder %s305, %s306
      %p318 = scmp.eq.s32.totalorder %s29, 3
      %p319 = por %p317, %p318
      %p321 = scmp.ne.s32.totalorder %s306, %s320
      %p322 = scmp.eq.s32.totalorder %s29, 0
      %p323 = por %p321, %p322
      %s325 = sadd.s32 %s324, 1
      %p328 = scmp.eq.s32.totalorder %s23, 3
      %p329 = scmp.ne.s32.totalorder %s324, %s326
      %p330 = scmp.eq.s32.totalorder %s23, 0
      %p331 = por %p329, %p330
      %p332 = scmp.ne.s32.totalorder %s324, %s326
      %p333 = scmp.eq.s32.totalorder %s28, 3
      %p334 = por %p332, %p333
      %p335 = scmp.ne.s32.totalorder %s326, %s327
      %p336 = scmp.eq.s32.totalorder %s28, 0
      %p337 = por %p335, %p336
      %p338 = scmp.ne.s32.totalorder %s326, %s327
      %p339 = scmp.eq.s32.totalorder %s29, 3
      %p340 = por %p338, %p339
      %p342 = scmp.ne.s32.totalorder %s327, %s341
      %p343 = scmp.eq.s32.totalorder %s29, 0
      %p344 = por %p342, %p343
      %s345 = ssub.s32 %s23, %s30
      %p346 = scmp.eq.s32.totalorder %s345, 0
      %s348 = sadd.s32 %s347, 1
      %s349 = scalar_select %p346, %s347, %s348
      %p352 = pneg %p346
      %p353 = scmp.eq.s32.totalorder %s23, 3
      %p354 = por %p352, %p353
      %p355 = scmp.ne.s32.totalorder %s347, %s350
      %p356 = scmp.eq.s32.totalorder %s23, 0
      %p357 = por %p355, %p356
      %p358 = scmp.ne.s32.totalorder %s347, %s350
      %p359 = scmp.eq.s32.totalorder %s28, 3
      %p360 = por %p358, %p359
      %p361 = scmp.ne.s32.totalorder %s350, %s351
      %p362 = scmp.eq.s32.totalorder %s28, 0
      %p363 = por %p361, %p362
      %p364 = scmp.ne.s32.totalorder %s350, %s351
      %p365 = scmp.eq.s32.totalorder %s29, 3
      %p366 = por %p364, %p365
      %p368 = scmp.ne.s32.totalorder %s351, %s367
      %p369 = scmp.eq.s32.totalorder %s29, 0
      %p370 = por %p368, %p369
      %p371 = scmp.le.s32.totalorder 1, %s23
      %p372 = scmp.lt.s32.totalorder %s23, 5
      %p373 = pnand %p371, %p372
      %p374 = pneg %p373
      // Predicated region
      $region9: #{tpu_custom_call.1} parent=5 // pred_check
        _
      $region10: #{tpu_custom_call.1} parent=5 // pred_check_branch
        %376 = sbr.rel (%p373) target = $region12
      $region11: #{tpu_custom_call.1} parent=5 // pred_region
        %s377 = ssub.s32 %s23, 1
        // Predicated region
        $region13: #{tpu_custom_call.1} parent=11 // pred_check
          %p378 = pneg %p148
        $region14: #{tpu_custom_call.1} parent=11 // pred_check_branch
          %380 = sbr.rel (%p378) target = $region16
        $region15: #{tpu_custom_call.1} parent=11 // pred_region
          _
        $region16: #{tpu_custom_call.1} parent=11 // pred_fallthru
          _
        // Predicated region
        $region17: #{tpu_custom_call.1} parent=11 // pred_check
          %p381 = pneg %p169
        $region18: #{tpu_custom_call.1} parent=11 // pred_check_branch
          %383 = sbr.rel (%p381) target = $region20
        $region19: #{tpu_custom_call.1} parent=11 // pred_region
          _
        $region20: #{tpu_custom_call.1} parent=11 // pred_fallthru
          _
        // Predicated region
        $region21: #{tpu_custom_call.1} parent=11 // pred_check
          %p384 = pneg %p190
        $region22: #{tpu_custom_call.1} parent=11 // pred_check_branch
          %386 = sbr.rel (%p384) target = $region24
        $region23: #{tpu_custom_call.1} parent=11 // pred_region
          _
        $region24: #{tpu_custom_call.1} parent=11 // pred_fallthru
          _
        // Predicated region
        $region25: #{tpu_custom_call.1} parent=11 // pred_check
          %p387 = pneg %p211
        $region26: #{tpu_custom_call.1} parent=11 // pred_check_branch
          %389 = sbr.rel (%p387) target = $region28
        $region27: #{tpu_custom_call.1} parent=11 // pred_region
          _
        $region28: #{tpu_custom_call.1} parent=11 // pred_fallthru
          _
        // Predicated region
        $region29: #{tpu_custom_call.1} parent=11 // pred_check
          %p390 = pneg %p232
        $region30: #{tpu_custom_call.1} parent=11 // pred_check_branch
          %392 = sbr.rel (%p390) target = $region32
        $region31: #{tpu_custom_call.1} parent=11 // pred_region
          _
        $region32: #{tpu_custom_call.1} parent=11 // pred_fallthru
          _
        // Predicated region
        $region33: #{tpu_custom_call.1} parent=11 // pred_check
          %p393 = pneg %p253
        $region34: #{tpu_custom_call.1} parent=11 // pred_check_branch
          %395 = sbr.rel (%p393) target = $region36
        $region35: #{tpu_custom_call.1} parent=11 // pred_region
          _
        $region36: #{tpu_custom_call.1} parent=11 // pred_fallthru
          _
        // Predicated region
        $region37: #{tpu_custom_call.1} parent=11 // pred_check
          %p396 = pneg %p274
        $region38: #{tpu_custom_call.1} parent=11 // pred_check_branch
          %398 = sbr.rel (%p396) target = $region40
        $region39: #{tpu_custom_call.1} parent=11 // pred_region
          _
        $region40: #{tpu_custom_call.1} parent=11 // pred_fallthru
          _
        // Predicated region
        $region41: #{tpu_custom_call.1} parent=11 // pred_check
          %p399 = pneg %p295
        $region42: #{tpu_custom_call.1} parent=11 // pred_check_branch
          %401 = sbr.rel (%p399) target = $region44
        $region43: #{tpu_custom_call.1} parent=11 // pred_region
          _
        $region44: #{tpu_custom_call.1} parent=11 // pred_fallthru
          _
        // Predicated region
        $region45: #{tpu_custom_call.1} parent=11 // pred_check
          %p402 = pneg %p316
        $region46: #{tpu_custom_call.1} parent=11 // pred_check_branch
          %404 = sbr.rel (%p402) target = $region48
        $region47: #{tpu_custom_call.1} parent=11 // pred_region
          _
        $region48: #{tpu_custom_call.1} parent=11 // pred_fallthru
          _
        // Predicated region
        $region49: #{tpu_custom_call.1} parent=11 // pred_check
          %p405 = pneg %p337
        $region50: #{tpu_custom_call.1} parent=11 // pred_check_branch
          %407 = sbr.rel (%p405) target = $region52
        $region51: #{tpu_custom_call.1} parent=11 // pred_region
          _
        $region52: #{tpu_custom_call.1} parent=11 // pred_fallthru
          _
      $region12: #{tpu_custom_call.1} parent=5 // pred_fallthru
        _
      %p408 = scmp.lt.s32.totalorder %s23, 4
      // Predicated region
      $region53: #{tpu_custom_call.1} parent=5 // pred_check
        %p409 = pneg %p408
      $region54: #{tpu_custom_call.1} parent=5 // pred_check_branch
        %411 = sbr.rel (%p409) target = $region56
      $region55: #{tpu_custom_call.1} parent=5 // pred_region
        // Predicated region
        $region57: #{tpu_custom_call.1} parent=55 // pred_check
          %p412 = pneg %p43
        $region58: #{tpu_custom_call.1} parent=55 // pred_check_branch
          %414 = sbr.rel (%p412) target = $region60
        $region59: #{tpu_custom_call.1} parent=55 // pred_region
          %p415 = scmp.lt.s32.totalorder %s23, 3
          %s416 = scalar_select %p415, %s23, 3
          %s417 = smul.addr %s416, 2
          %s418 = smul.addr %s417, 8
          %s419 = scalar_lea.vmem %s0, %s418
        $region60: #{tpu_custom_call.1} parent=55 // pred_fallthru
          _
        // Predicated region
        $region61: #{tpu_custom_call.1} parent=55 // pred_check
          %p420 = pneg %p69
        $region62: #{tpu_custom_call.1} parent=55 // pred_check_branch
          %422 = sbr.rel (%p420) target = $region64
        $region63: #{tpu_custom_call.1} parent=55 // pred_region
          %p423 = scmp.lt.s32.totalorder %s23, 3
          %s424 = scalar_select %p423, %s23, 3
          %s425 = smul.addr %s424, 2
          %s426 = smul.addr %s425, 8
          %s427 = scalar_lea.vmem %s1, %s426
        $region64: #{tpu_custom_call.1} parent=55 // pred_fallthru
          _
        // Predicated region
        $region65: #{tpu_custom_call.1} parent=55 // pred_check
          %p428 = pneg %p95
        $region66: #{tpu_custom_call.1} parent=55 // pred_check_branch
          %430 = sbr.rel (%p428) target = $region68
        $region67: #{tpu_custom_call.1} parent=55 // pred_region
          %p431 = scmp.lt.s32.totalorder %s23, 3
          %s432 = scalar_select %p431, %s23, 3
          %s433 = smul.addr %s432, 14
          %s434 = smul.addr %s433, 8
          %s435 = scalar_lea.vmem %s2, %s434
        $region68: #{tpu_custom_call.1} parent=55 // pred_fallthru
          _
        // Predicated region
        $region69: #{tpu_custom_call.1} parent=55 // pred_check
          %p436 = pneg %p121
        $region70: #{tpu_custom_call.1} parent=55 // pred_check_branch
          %438 = sbr.rel (%p436) target = $region72
        $region71: #{tpu_custom_call.1} parent=55 // pred_region
          %p439 = scmp.lt.s32.totalorder %s23, 3
          %s440 = scalar_select %p439, %s23, 3
          %s441 = smul.addr %s440, 14
          %s442 = smul.addr %s441, 8
          %s443 = scalar_lea.vmem %s3, %s442
        $region72: #{tpu_custom_call.1} parent=55 // pred_fallthru
          _
      $region56: #{tpu_custom_call.1} parent=5 // pred_fallthru
        _
      %p444 = scmp.le.s32.totalorder 1, %s23
      %p445 = scmp.lt.s32.totalorder %s23, 5
      %p446 = pnand %p444, %p445
      %p447 = pneg %p446
      // Predicated region
      $region73: #{tpu_custom_call.1} parent=5 // pred_check
        _
      $region74: #{tpu_custom_call.1} parent=5 // pred_check_branch
        %449 = sbr.rel (%p446) target = $region76
      $region75: #{tpu_custom_call.1} parent=5 // pred_region
        %s450 = ssub.s32 %s23, 1
        %p451 = scmp.lt.s32.totalorder %s28, 3
        %s452 = scalar_select %p451, %s28, 3
        %s453 = smul.addr %s452, 2
        %s454 = smul.addr %s453, 8
        %s455 = scalar_lea.vmem %s0, %s454
        %p456 = pneg %p49
        %p457 = pneg %p46
        %p458 = scmp.lt.s32.totalorder %s28, 3
        %s459 = scalar_select %p458, %s28, 3
        %s460 = smul.addr %s459, 2
        %s461 = smul.addr %s460, 8
        %s462 = scalar_lea.vmem %s1, %s461
        %p463 = pneg %p75
        %p464 = pneg %p72
        %p465 = scmp.lt.s32.totalorder %s28, 3
        %s466 = scalar_select %p465, %s28, 3
        %s467 = smul.addr %s466, 14
        %s468 = smul.addr %s467, 8
        %s469 = scalar_lea.vmem %s2, %s468
        %p470 = pneg %p101
        %p471 = pneg %p98
        %p472 = scmp.lt.s32.totalorder %s28, 3
        %s473 = scalar_select %p472, %s28, 3
        %s474 = smul.addr %s473, 14
        %s475 = smul.addr %s474, 8
        %s476 = scalar_lea.vmem %s3, %s475
        %p477 = pneg %p127
        %p478 = pneg %p124
        %p479 = pneg %p148
        %p480 = pneg %p145
        %p481 = pneg %p169
        %p482 = pneg %p166
        %p483 = pneg %p190
        %p484 = pneg %p187
        %p485 = pneg %p211
        %p486 = pneg %p208
        %p487 = pneg %p232
        %p488 = pneg %p229
        %p489 = pneg %p253
        %p490 = pneg %p250
        %p491 = pneg %p274
        %p492 = pneg %p271
        %p493 = pneg %p295
        %p494 = pneg %p292
        %p495 = pneg %p316
        %p496 = pneg %p313
        %p497 = pneg %p337
        %p498 = pneg %p334
        %p499 = pneg %p363
        %p500 = pneg %p360
        %s501 = sand.u32 %s350, 1
        %s502 = scalar_lea.sflag [#allocation3], %s501
        %s503 = sand.u32 %s350, 1
        %s504 = smul.addr %s503, 16
        %s505 = scalar_lea.vmem [#allocation2], %s504
        %p506 = scmp.lt.s32.totalorder %s28, 3
        %s507 = scalar_select %p506, %s28, 3
        %s508 = smul.addr %s507, 2
        %s509 = smul.addr %s508, 8
        %s510 = scalar_lea.vmem %s0, %s509
        %p511 = scmp.lt.s32.totalorder %s28, 3
        %s512 = scalar_select %p511, %s28, 3
        %s513 = smul.addr %s512, 2
        %s514 = smul.addr %s513, 8
        %s515 = scalar_lea.vmem %s1, %s514
        %p516 = scmp.lt.s32.totalorder %s28, 3
        %s517 = scalar_select %p516, %s28, 3
        %s518 = smul.addr %s517, 14
        %s519 = smul.addr %s518, 8
        %s520 = scalar_lea.vmem %s2, %s519
        %p521 = scmp.lt.s32.totalorder %s28, 3
        %s522 = scalar_select %p521, %s28, 3
        %s523 = smul.addr %s522, 14
        %s524 = smul.addr %s523, 8
        %s525 = scalar_lea.vmem %s3, %s524
        %v527 = vld [vmem:[%s510] sm:$0xff]
        %v528 = vld [vmem:[%s510 + $0x8] sm:$0xff]
        %v529 = vld [vmem:[%s515] sm:$0xff]
        %v530 = vld [vmem:[%s515 + $0x8] sm:$0xff]
        %v531 = vld [vmem:[%s520] sm:$0xff]
        %v532 = vld [vmem:[%s520 + $0x8] sm:$0xff]
        %v533 = vld [vmem:[%s520 + $0x10] sm:$0xff]
        %v534 = vld [vmem:[%s520 + $0x18] sm:$0xff]
        %v535 = vld [vmem:[%s520 + $0x20] sm:$0xff]
        %v536 = vld [vmem:[%s520 + $0x28] sm:$0xff]
        %v537 = vld [vmem:[%s520 + $0x30] sm:$0xff]
        %v538 = vld [vmem:[%s520 + $0x38] sm:$0xff]
        %v539 = vld [vmem:[%s520 + $0x40] sm:$0xff]
        %v540 = vld [vmem:[%s520 + $0x48] sm:$0xff]
        %v541 = vld [vmem:[%s520 + $0x50] sm:$0xff]
        %v542 = vld [vmem:[%s520 + $0x58] sm:$0xff]
        %v543 = vld [vmem:[%s520 + $0x60] sm:$0xff]
        %v544 = vld [vmem:[%s520 + $0x68] sm:$0xff]
        %v545 = vld [vmem:[%s525] sm:$0xff]
        %v546 = vld [vmem:[%s525 + $0x8] sm:$0xff]
        %v547 = vld [vmem:[%s525 + $0x10] sm:$0xff]
        %v548 = vld [vmem:[%s525 + $0x18] sm:$0xff]
        %v549 = vld [vmem:[%s525 + $0x20] sm:$0xff]
        %v550 = vld [vmem:[%s525 + $0x28] sm:$0xff]
        %v551 = vld [vmem:[%s525 + $0x30] sm:$0xff]
        %v552 = vld [vmem:[%s525 + $0x38] sm:$0xff]
        %v553 = vld [vmem:[%s525 + $0x40] sm:$0xff]
        %v554 = vld [vmem:[%s525 + $0x48] sm:$0xff]
        %v555 = vld [vmem:[%s525 + $0x50] sm:$0xff]
        %v556 = vld [vmem:[%s525 + $0x58] sm:$0xff]
        %v557 = vld [vmem:[%s525 + $0x60] sm:$0xff]
        %v558 = vld [vmem:[%s525 + $0x68] sm:$0xff]
        %v559 = vld [vmem:[%s4] sm:$0x1]
        %v560 = vlaneseq
        %v561 = vand.u32 %v560, 127
        %562 = vset.pattern.permute.xlu0 0
        %563 = vperm.xlu0 %562, %v531
        %v564 = vpop.permute.xlu0 %563
        %565 = vset.pattern.permute.xlu0 0
        %566 = vperm.xlu0 %565, %v532
        %v567 = vpop.permute.xlu0 %566
        %568 = vset.pattern.permute.xlu0 0
        %569 = vperm.xlu0 %568, %v533
        %v570 = vpop.permute.xlu0 %569
        %571 = vset.pattern.permute.xlu0 0
        %572 = vperm.xlu0 %571, %v534
        %v573 = vpop.permute.xlu0 %572
        %574 = vset.pattern.permute.xlu0 0
        %575 = vperm.xlu0 %574, %v535
        %v576 = vpop.permute.xlu0 %575
        %577 = vset.pattern.permute.xlu0 0
        %578 = vperm.xlu0 %577, %v536
        %v579 = vpop.permute.xlu0 %578
        %580 = vset.pattern.permute.xlu0 0
        %581 = vperm.xlu0 %580, %v537
        %v582 = vpop.permute.xlu0 %581
        %583 = vset.pattern.permute.xlu0 0
        %584 = vperm.xlu0 %583, %v538
        %v585 = vpop.permute.xlu0 %584
        %586 = vset.pattern.permute.xlu0 0
        %587 = vperm.xlu0 %586, %v539
        %v588 = vpop.permute.xlu0 %587
        %589 = vset.pattern.permute.xlu0 0
        %590 = vperm.xlu0 %589, %v540
        %v591 = vpop.permute.xlu0 %590
        %592 = vset.pattern.permute.xlu0 0
        %593 = vperm.xlu0 %592, %v541
        %v594 = vpop.permute.xlu0 %593
        %595 = vset.pattern.permute.xlu0 0
        %596 = vperm.xlu0 %595, %v542
        %v597 = vpop.permute.xlu0 %596
        %598 = vset.pattern.permute.xlu0 0
        %599 = vperm.xlu0 %598, %v543
        %v600 = vpop.permute.xlu0 %599
        %601 = vset.pattern.permute.xlu0 0
        %602 = vperm.xlu0 %601, %v544
        %v603 = vpop.permute.xlu0 %602
        %vm604 = vcmp.eq.s32.totalorder %v561, %v564
        %vm605 = vcmp.eq.s32.totalorder %v561, %v567
        %vm606 = vcmp.eq.s32.totalorder %v561, %v570
        %vm607 = vcmp.eq.s32.totalorder %v561, %v573
        %vm608 = vcmp.eq.s32.totalorder %v561, %v576
        %vm609 = vcmp.eq.s32.totalorder %v561, %v579
        %vm610 = vcmp.eq.s32.totalorder %v561, %v582
        %vm611 = vcmp.eq.s32.totalorder %v561, %v585
        %vm612 = vcmp.eq.s32.totalorder %v561, %v588
        %vm613 = vcmp.eq.s32.totalorder %v561, %v591
        %vm614 = vcmp.eq.s32.totalorder %v561, %v594
        %vm615 = vcmp.eq.s32.totalorder %v561, %v597
        %vm616 = vcmp.eq.s32.totalorder %v561, %v600
        %vm617 = vcmp.eq.s32.totalorder %v561, %v603
        %v618 = vsel %vm604, 1, 0
        %v619 = vsel %vm605, 1, 0
        %v620 = vsel %vm606, 1, 0
        %v621 = vsel %vm607, 1, 0
        %v622 = vsel %vm608, 1, 0
        %v623 = vsel %vm609, 1, 0
        %v624 = vsel %vm610, 1, 0
        %v625 = vsel %vm611, 1, 0
        %v626 = vsel %vm612, 1, 0
        %v627 = vsel %vm613, 1, 0
        %v628 = vsel %vm614, 1, 0
        %v629 = vsel %vm615, 1, 0
        %v630 = vsel %vm616, 1, 0
        %v631 = vsel %vm617, 1, 0
        %v632 = vcvt.s32.f32 %v618
        %v633 = vcvt.s32.f32 %v619
        %v634 = vcvt.s32.f32 %v620
        %v635 = vcvt.s32.f32 %v621
        %v636 = vcvt.s32.f32 %v622
        %v637 = vcvt.s32.f32 %v623
        %v638 = vcvt.s32.f32 %v624
        %v639 = vcvt.s32.f32 %v625
        %v640 = vcvt.s32.f32 %v626
        %v641 = vcvt.s32.f32 %v627
        %v642 = vcvt.s32.f32 %v628
        %v643 = vcvt.s32.f32 %v629
        %v644 = vcvt.s32.f32 %v630
        %v645 = vcvt.s32.f32 %v631
        %v646 = vpack.c.bf16 %v633, %v632
        %v647 = vpack.c.bf16 %v635, %v634
        %v648 = vpack.c.bf16 %v637, %v636
        %v649 = vpack.c.bf16 %v638, %v638
        %v650 = vpack.c.bf16 %v640, %v639
        %v651 = vpack.c.bf16 %v642, %v641
        %v652 = vpack.c.bf16 %v644, %v643
        %v653 = vpack.c.bf16 %v645, %v645
        %vm654 = vcmask 64512
        %v656 = vsel %vm654, %v632, 0
        %v659 = vsel %vm654, %v633, 0
        %v662 = vsel %vm654, %v634, 0
        %v665 = vsel %vm654, %v635, 0
        %v668 = vsel %vm654, %v636, 0
        %v671 = vsel %vm654, %v637, 0
        %v674 = vsel %vm654, %v638, 0
        %676 = vmatprep.subr.mxu0 0.0
        %677 = vmatpush1.msra.mxu0 %v527
        %678 = vmatprep.subr.mxu0 0.0
        %679 = vmatpush1.msra.mxu0 0.0
        %680 = vmatprep.subr.mxu0 0.0
        %681 = vmatpush1.msra.mxu0 0.0
        %682 = vmatprep.subr.mxu0 0.0
        %683 = vmatpush1.msra.mxu0 0.0
        %684 = vmatprep.subr.mxu0 0.0
        %685 = vmatpush1.msra.mxu0 0.0
        %686 = vmatprep.subr.mxu0 0.0
        %687 = vmatpush1.msra.mxu0 0.0
        %688 = vmatprep.subr.mxu0 0.0
        %689 = vmatpush1.msra.mxu0 0.0
        %690 = vmatprep.subr.mxu0 0.0
        %691 = vmatpush1.msra.mxu0 0.0
        %692 = vmatprep.subr.mxu0 0.0
        %693 = vmatpush1.msra.mxu0 0.0
        %694 = vmatprep.subr.mxu0 0.0
        %695 = vmatpush1.msra.mxu0 0.0
        %696 = vmatprep.subr.mxu0 0.0
        %697 = vmatpush1.msra.mxu0 0.0
        %698 = vmatprep.subr.mxu0 0.0
        %699 = vmatpush1.msra.mxu0 0.0
        %700 = vmatprep.subr.mxu0 0.0
        %701 = vmatpush1.msra.mxu0 0.0
        %702 = vmatprep.subr.mxu0 0.0
        %703 = vmatpush1.msra.mxu0 0.0
        %704 = vmatprep.subr.mxu0 0.0
        %705 = vmatpush1.msra.mxu0 0.0
        %706 = vmatprep.subr.mxu0 0.0
        %707 = vmatpush1.msra.mxu0 0.0
        %708 = vmatprep.subr.mxu0 0.0
        %709 = vmatpush1.msra.mxu0 0.0
        %710 = vmatprep.subr.mxu0 0.0
        %711 = vmatpush1.msra.mxu0 0.0
        %712 = vmatprep.subr.mxu0 0.0
        %713 = vmatpush1.msra.mxu0 0.0
        %714 = vmatprep.subr.mxu0 0.0
        %715 = vmatpush1.msra.mxu0 0.0
        %716 = vmatprep.subr.mxu0 0.0
        %717 = vmatpush1.msra.mxu0 0.0
        %718 = vmatprep.subr.mxu0 0.0
        %719 = vmatpush1.msra.mxu0 0.0
        %720 = vmatprep.subr.mxu0 0.0
        %721 = vmatpush1.msra.mxu0 0.0
        %722 = vmatprep.subr.mxu0 0.0
        %723 = vmatpush1.msra.mxu0 0.0
        %724 = vmatprep.subr.mxu0 0.0
        %725 = vmatpush1.msra.mxu0 0.0
        %726 = vmatprep.subr.mxu0 0.0
        %727 = vmatpush1.msra.mxu0 0.0
        %728 = vmatprep.subr.mxu0 0.0
        %729 = vmatpush1.msra.mxu0 0.0
        %730 = vmatprep.subr.mxu0 0.0
        %731 = vmatpush1.msra.mxu0 0.0
        %732 = vmatprep.subr.mxu0 0.0
        %733 = vmatpush1.msra.mxu0 0.0
        %734 = vmatprep.subr.mxu0 0.0
        %735 = vmatpush1.msra.mxu0 0.0
        %736 = vmatprep.subr.mxu0 0.0
        %737 = vmatpush1.msra.mxu0 0.0
        %738 = vmatprep.subr.mxu0 0.0
        %739 = vmatpush1.msra.mxu0 0.0
        %740 = vmatprep.mubr.f32.mxu0 0.0
        %741 = vmatmul.mubr.f32.gmra.mrb[0].mxu0 %v656
        %v742 = vpop.f32.mrb[0].mxu0
        %v743 = vadd.f32 0.0, %v742
        %v744 = vpop.f32.mrb[0].mxu0
        %745 = vmatprep.mubr.f32.mxu0 0.0
        %746 = vmatmul.mubr.f32.gmra.mrb[0].mxu0 %v659
        %v747 = vpop.f32.mrb[0].mxu0
        %v748 = vadd.f32 0.0, %v747
        %v749 = vpop.f32.mrb[0].mxu0
        %750 = vmatprep.mubr.f32.mxu0 0.0
        %751 = vmatmul.mubr.f32.gmra.mrb[0].mxu0 %v662
        %v752 = vpop.f32.mrb[0].mxu0
        %v753 = vadd.f32 0.0, %v752
        %v754 = vpop.f32.mrb[0].mxu0
        %755 = vmatprep.mubr.f32.mxu0 0.0
        %756 = vmatmul.mubr.f32.gmra.mrb[0].mxu0 %v665
        %v757 = vpop.f32.mrb[0].mxu0
        %v758 = vadd.f32 0.0, %v757
        %v759 = vpop.f32.mrb[0].mxu0
        %760 = vmatprep.mubr.f32.mxu0 0.0
        %761 = vmatmul.mubr.f32.gmra.mrb[0].mxu0 %v668
        %v762 = vpop.f32.mrb[0].mxu0
        %v763 = vadd.f32 0.0, %v762
        %v764 = vpop.f32.mrb[0].mxu0
        %765 = vmatprep.mubr.f32.mxu0 0.0
        %766 = vmatmul.mubr.f32.gmra.mrb[0].mxu0 %v671
        %v767 = vpop.f32.mrb[0].mxu0
        %v768 = vadd.f32 0.0, %v767
        %v769 = vpop.f32.mrb[0].mxu0
        %770 = vmatprep.mubr.f32.mxu0 0.0
        %771 = vmatmul.mubr.f32.gmra.mrb[0].mxu0 %v674
        %v772 = vpop.f32.mrb[0].mxu0
        %v773 = vadd.f32 0.0, %v772
        %v774 = vpop.f32.mrb[0].mxu0
        %775 = vdwg.mxu0
        %v777 = vsel %vm654, %v639, 0
        %v780 = vsel %vm654, %v640, 0
        %v783 = vsel %vm654, %v641, 0
        %v786 = vsel %vm654, %v642, 0
        %v789 = vsel %vm654, %v643, 0
        %v792 = vsel %vm654, %v644, 0
        %v795 = vsel %vm654, %v645, 0
        %797 = vmatprep.subr.mxu0 0.0
        %798 = vmatpush1.msra.mxu0 %v528
        %799 = vmatprep.subr.mxu0 0.0
        %800 = vmatpush1.msra.mxu0 0.0
        %801 = vmatprep.subr.mxu0 0.0
        %802 = vmatpush1.msra.mxu0 0.0
        %803 = vmatprep.subr.mxu0 0.0
        %804 = vmatpush1.msra.mxu0 0.0
        %805 = vmatprep.subr.mxu0 0.0
        %806 = vmatpush1.msra.mxu0 0.0
        %807 = vmatprep.subr.mxu0 0.0
        %808 = vmatpush1.msra.mxu0 0.0
        %809 = vmatprep.subr.mxu0 0.0
        %810 = vmatpush1.msra.mxu0 0.0
        %811 = vmatprep.subr.mxu0 0.0
        %812 = vmatpush1.msra.mxu0 0.0
        %813 = vmatprep.subr.mxu0 0.0
        %814 = vmatpush1.msra.mxu0 0.0
        %815 = vmatprep.subr.mxu0 0.0
        %816 = vmatpush1.msra.mxu0 0.0
        %817 = vmatprep.subr.mxu0 0.0
        %818 = vmatpush1.msra.mxu0 0.0
        %819 = vmatprep.subr.mxu0 0.0
        %820 = vmatpush1.msra.mxu0 0.0
        %821 = vmatprep.subr.mxu0 0.0
        %822 = vmatpush1.msra.mxu0 0.0
        %823 = vmatprep.subr.mxu0 0.0
        %824 = vmatpush1.msra.mxu0 0.0
        %825 = vmatprep.subr.mxu0 0.0
        %826 = vmatpush1.msra.mxu0 0.0
        %827 = vmatprep.subr.mxu0 0.0
        %828 = vmatpush1.msra.mxu0 0.0
        %829 = vmatprep.subr.mxu0 0.0
        %830 = vmatpush1.msra.mxu0 0.0
        %831 = vmatprep.subr.mxu0 0.0
        %832 = vmatpush1.msra.mxu0 0.0
        %833 = vmatprep.subr.mxu0 0.0
        %834 = vmatpush1.msra.mxu0 0.0
        %835 = vmatprep.subr.mxu0 0.0
        %836 = vmatpush1.msra.mxu0 0.0
        %837 = vmatprep.subr.mxu0 0.0
        %838 = vmatpush1.msra.mxu0 0.0
        %839 = vmatprep.subr.mxu0 0.0
        %840 = vmatpush1.msra.mxu0 0.0
        %841 = vmatprep.subr.mxu0 0.0
        %842 = vmatpush1.msra.mxu0 0.0
        %843 = vmatprep.subr.mxu0 0.0
        %844 = vmatpush1.msra.mxu0 0.0
        %845 = vmatprep.subr.mxu0 0.0
        %846 = vmatpush1.msra.mxu0 0.0
        %847 = vmatprep.subr.mxu0 0.0
        %848 = vmatpush1.msra.mxu0 0.0
        %849 = vmatprep.subr.mxu0 0.0
        %850 = vmatpush1.msra.mxu0 0.0
        %851 = vmatprep.subr.mxu0 0.0
        %852 = vmatpush1.msra.mxu0 0.0
        %853 = vmatprep.subr.mxu0 0.0
        %854 = vmatpush1.msra.mxu0 0.0
        %855 = vmatprep.subr.mxu0 0.0
        %856 = vmatpush1.msra.mxu0 0.0
        %857 = vmatprep.subr.mxu0 0.0
        %858 = vmatpush1.msra.mxu0 0.0
        %859 = vmatprep.subr.mxu0 0.0
        %860 = vmatpush1.msra.mxu0 0.0
        %861 = vmatprep.mubr.f32.mxu0 0.0
        %862 = vmatmul.mubr.f32.gmra.mrb[0].mxu0 %v777
        %v863 = vpop.f32.mrb[0].mxu0
        %v864 = vadd.f32 0.0, %v863
        %v865 = vpop.f32.mrb[0].mxu0
        %866 = vmatprep.mubr.f32.mxu0 0.0
        %867 = vmatmul.mubr.f32.gmra.mrb[0].mxu0 %v780
        %v868 = vpop.f32.mrb[0].mxu0
        %v869 = vadd.f32 0.0, %v868
        %v870 = vpop.f32.mrb[0].mxu0
        %871 = vmatprep.mubr.f32.mxu0 0.0
        %872 = vmatmul.mubr.f32.gmra.mrb[0].mxu0 %v783
        %v873 = vpop.f32.mrb[0].mxu0
        %v874 = vadd.f32 0.0, %v873
        %v875 = vpop.f32.mrb[0].mxu0
        %876 = vmatprep.mubr.f32.mxu0 0.0
        %877 = vmatmul.mubr.f32.gmra.mrb[0].mxu0 %v786
        %v878 = vpop.f32.mrb[0].mxu0
        %v879 = vadd.f32 0.0, %v878
        %v880 = vpop.f32.mrb[0].mxu0
        %881 = vmatprep.mubr.f32.mxu0 0.0
        %882 = vmatmul.mubr.f32.gmra.mrb[0].mxu0 %v789
        %v883 = vpop.f32.mrb[0].mxu0
        %v884 = vadd.f32 0.0, %v883
        %v885 = vpop.f32.mrb[0].mxu0
        %886 = vmatprep.mubr.f32.mxu0 0.0
        %887 = vmatmul.mubr.f32.gmra.mrb[0].mxu0 %v792
        %v888 = vpop.f32.mrb[0].mxu0
        %v889 = vadd.f32 0.0, %v888
        %v890 = vpop.f32.mrb[0].mxu0
        %891 = vmatprep.mubr.f32.mxu0 0.0
        %892 = vmatmul.mubr.f32.gmra.mrb[0].mxu0 %v795
        %v893 = vpop.f32.mrb[0].mxu0
        %v894 = vadd.f32 0.0, %v893
        %v895 = vpop.f32.mrb[0].mxu0
        %896 = vdwg.mxu0
        %v897 = vsub.f32 %v743, %v527
        %v898 = vsub.f32 %v748, %v527
        %v899 = vsub.f32 %v753, %v527
        %v900 = vsub.f32 %v758, %v527
        %v901 = vsub.f32 %v763, %v527
        %v902 = vsub.f32 %v768, %v527
        %v903 = vsub.f32 %v773, %v527
        %v904 = vsub.f32 %v864, %v528
        %v905 = vsub.f32 %v869, %v528
        %v906 = vsub.f32 %v874, %v528
        %v907 = vsub.f32 %v879, %v528
        %v908 = vsub.f32 %v884, %v528
        %v909 = vsub.f32 %v889, %v528
        %v910 = vsub.f32 %v894, %v528
        %v911 = vmul.f32 %v897, %v897
        %v912 = vmul.f32 %v898, %v898
        %v913 = vmul.f32 %v899, %v899
        %v914 = vmul.f32 %v900, %v900
        %v915 = vmul.f32 %v901, %v901
        %v916 = vmul.f32 %v902, %v902
        %v917 = vmul.f32 %v903, %v903
        %v918 = vmul.f32 %v904, %v904
        %v919 = vmul.f32 %v905, %v905
        %v920 = vmul.f32 %v906, %v906
        %v921 = vmul.f32 %v907, %v907
        %v922 = vmul.f32 %v908, %v908
        %v923 = vmul.f32 %v909, %v909
        %v924 = vmul.f32 %v910, %v910
        %939 = vrot.lane.b32.xlu0 %v911, 127
        %v940 = vpop.permute.xlu0 %939
        %941 = vrot.lane.b32.xlu0 %v912, 127
        %v942 = vpop.permute.xlu0 %941
        %943 = vrot.lane.b32.xlu0 %v913, 127
        %v944 = vpop.permute.xlu0 %943
        %945 = vrot.lane.b32.xlu0 %v914, 127
        %v946 = vpop.permute.xlu0 %945
        %947 = vrot.lane.b32.xlu0 %v915, 127
        %v948 = vpop.permute.xlu0 %947
        %949 = vrot.lane.b32.xlu0 %v916, 127
        %v950 = vpop.permute.xlu0 %949
        %951 = vrot.lane.b32.xlu0 %v917, 127
        %v952 = vpop.permute.xlu0 %951
        %953 = vrot.lane.b32.xlu0 %v918, 127
        %v954 = vpop.permute.xlu0 %953
        %955 = vrot.lane.b32.xlu0 %v919, 127
        %v956 = vpop.permute.xlu0 %955
        %957 = vrot.lane.b32.xlu0 %v920, 127
        %v958 = vpop.permute.xlu0 %957
        %959 = vrot.lane.b32.xlu0 %v921, 127
        %v960 = vpop.permute.xlu0 %959
        %961 = vrot.lane.b32.xlu0 %v922, 127
        %v962 = vpop.permute.xlu0 %961
        %963 = vrot.lane.b32.xlu0 %v923, 127
        %v964 = vpop.permute.xlu0 %963
        %965 = vrot.lane.b32.xlu0 %v924, 127
        %v966 = vpop.permute.xlu0 %965
        %v981 = vadd.f32 %v911, %v940
        %v982 = vadd.f32 %v912, %v942
        %v983 = vadd.f32 %v913, %v944
        %v984 = vadd.f32 %v914, %v946
        %v985 = vadd.f32 %v915, %v948
        %v986 = vadd.f32 %v916, %v950
        %v987 = vadd.f32 %v917, %v952
        %v988 = vadd.f32 %v918, %v954
        %v989 = vadd.f32 %v919, %v956
        %v990 = vadd.f32 %v920, %v958
        %v991 = vadd.f32 %v921, %v960
        %v992 = vadd.f32 %v922, %v962
        %v993 = vadd.f32 %v923, %v964
        %v994 = vadd.f32 %v924, %v966
        %995 = vrot.lane.b32.xlu0 %v911, 126
        %v996 = vpop.permute.xlu0 %995
        %997 = vrot.lane.b32.xlu0 %v912, 126
        %v998 = vpop.permute.xlu0 %997
        %999 = vrot.lane.b32.xlu0 %v913, 126
        %v1000 = vpop.permute.xlu0 %999
        %1001 = vrot.lane.b32.xlu0 %v914, 126
        %v1002 = vpop.permute.xlu0 %1001
        %1003 = vrot.lane.b32.xlu0 %v915, 126
        %v1004 = vpop.permute.xlu0 %1003
        %1005 = vrot.lane.b32.xlu0 %v916, 126
        %v1006 = vpop.permute.xlu0 %1005
        %1007 = vrot.lane.b32.xlu0 %v917, 126
        %v1008 = vpop.permute.xlu0 %1007
        %1009 = vrot.lane.b32.xlu0 %v918, 126
        %v1010 = vpop.permute.xlu0 %1009
        %1011 = vrot.lane.b32.xlu0 %v919, 126
        %v1012 = vpop.permute.xlu0 %1011
        %1013 = vrot.lane.b32.xlu0 %v920, 126
        %v1014 = vpop.permute.xlu0 %1013
        %1015 = vrot.lane.b32.xlu0 %v921, 126
        %v1016 = vpop.permute.xlu0 %1015
        %1017 = vrot.lane.b32.xlu0 %v922, 126
        %v1018 = vpop.permute.xlu0 %1017
        %1019 = vrot.lane.b32.xlu0 %v923, 126
        %v1020 = vpop.permute.xlu0 %1019
        %1021 = vrot.lane.b32.xlu0 %v924, 126
        %v1022 = vpop.permute.xlu0 %1021
        %v1037 = vadd.f32 %v981, %v996
        %v1038 = vadd.f32 %v982, %v998
        %v1039 = vadd.f32 %v983, %v1000
        %v1040 = vadd.f32 %v984, %v1002
        %v1041 = vadd.f32 %v985, %v1004
        %v1042 = vadd.f32 %v986, %v1006
        %v1043 = vadd.f32 %v987, %v1008
        %v1044 = vadd.f32 %v988, %v1010
        %v1045 = vadd.f32 %v989, %v1012
        %v1046 = vadd.f32 %v990, %v1014
        %v1047 = vadd.f32 %v991, %v1016
        %v1048 = vadd.f32 %v992, %v1018
        %v1049 = vadd.f32 %v993, %v1020
        %v1050 = vadd.f32 %v994, %v1022
        %vm1051 = vcmp.gt.f32.partialorder %v545, 0.0
        %vm1052 = vcmp.gt.f32.partialorder %v546, 0.0
        %vm1053 = vcmp.gt.f32.partialorder %v547, 0.0
        %vm1054 = vcmp.gt.f32.partialorder %v548, 0.0
        %vm1055 = vcmp.gt.f32.partialorder %v549, 0.0
        %vm1056 = vcmp.gt.f32.partialorder %v550, 0.0
        %vm1057 = vcmp.gt.f32.partialorder %v551, 0.0
        %vm1058 = vcmp.gt.f32.partialorder %v552, 0.0
        %vm1059 = vcmp.gt.f32.partialorder %v553, 0.0
        %vm1060 = vcmp.gt.f32.partialorder %v554, 0.0
        %vm1061 = vcmp.gt.f32.partialorder %v555, 0.0
        %vm1062 = vcmp.gt.f32.partialorder %v556, 0.0
        %vm1063 = vcmp.gt.f32.partialorder %v557, 0.0
        %vm1064 = vcmp.gt.f32.partialorder %v558, 0.0
        %v1065 = vsel %vm1051, %v1037, 1.0
        %v1066 = vsel %vm1052, %v1038, 1.0
        %v1067 = vsel %vm1053, %v1039, 1.0
        %v1068 = vsel %vm1054, %v1040, 1.0
        %v1069 = vsel %vm1055, %v1041, 1.0
        %v1070 = vsel %vm1056, %v1042, 1.0
        %v1071 = vsel %vm1057, %v1043, 1.0
        %v1072 = vsel %vm1058, %v1044, 1.0
        %v1073 = vsel %vm1059, %v1045, 1.0
        %v1074 = vsel %vm1060, %v1046, 1.0
        %v1075 = vsel %vm1061, %v1047, 1.0
        %v1076 = vsel %vm1062, %v1048, 1.0
        %v1077 = vsel %vm1063, %v1049, 1.0
        %v1078 = vsel %vm1064, %v1050, 1.0
        %v1079 = vrsqrt.pop %v1065
        %v1080 = vmul.f32 %v1065, %v1079
        %vm1081 = vcmp.eq.f32.partialorder %v1065, inf
        %v1082 = vsel %vm1081, %v1065, %v1080
        %vm1083 = vcmp.eq.f32.partialorder %v1065, 0.0
        %v1084 = vand.u32 %v1065, 2147483648
        %v1085 = vsel %vm1083, %v1084, %v1082
        %v1086 = vrsqrt.pop %v1066
        %v1087 = vmul.f32 %v1066, %v1086
        %vm1088 = vcmp.eq.f32.partialorder %v1066, inf
        %v1089 = vsel %vm1088, %v1066, %v1087
        %vm1090 = vcmp.eq.f32.partialorder %v1066, 0.0
        %v1091 = vand.u32 %v1066, 2147483648
        %v1092 = vsel %vm1090, %v1091, %v1089
        %v1093 = vrsqrt.pop %v1067
        %v1094 = vmul.f32 %v1067, %v1093
        %vm1095 = vcmp.eq.f32.partialorder %v1067, inf
        %v1096 = vsel %vm1095, %v1067, %v1094
        %vm1097 = vcmp.eq.f32.partialorder %v1067, 0.0
        %v1098 = vand.u32 %v1067, 2147483648
        %v1099 = vsel %vm1097, %v1098, %v1096
        %v1100 = vrsqrt.pop %v1068
        %v1101 = vmul.f32 %v1068, %v1100
        %vm1102 = vcmp.eq.f32.partialorder %v1068, inf
        %v1103 = vsel %vm1102, %v1068, %v1101
        %vm1104 = vcmp.eq.f32.partialorder %v1068, 0.0
        %v1105 = vand.u32 %v1068, 2147483648
        %v1106 = vsel %vm1104, %v1105, %v1103
        %v1107 = vrsqrt.pop %v1069
        %v1108 = vmul.f32 %v1069, %v1107
        %vm1109 = vcmp.eq.f32.partialorder %v1069, inf
        %v1110 = vsel %vm1109, %v1069, %v1108
        %vm1111 = vcmp.eq.f32.partialorder %v1069, 0.0
        %v1112 = vand.u32 %v1069, 2147483648
        %v1113 = vsel %vm1111, %v1112, %v1110
        %v1114 = vrsqrt.pop %v1070
        %v1115 = vmul.f32 %v1070, %v1114
        %vm1116 = vcmp.eq.f32.partialorder %v1070, inf
        %v1117 = vsel %vm1116, %v1070, %v1115
        %vm1118 = vcmp.eq.f32.partialorder %v1070, 0.0
        %v1119 = vand.u32 %v1070, 2147483648
        %v1120 = vsel %vm1118, %v1119, %v1117
        %v1121 = vrsqrt.pop %v1071
        %v1122 = vmul.f32 %v1071, %v1121
        %vm1123 = vcmp.eq.f32.partialorder %v1071, inf
        %v1124 = vsel %vm1123, %v1071, %v1122
        %vm1125 = vcmp.eq.f32.partialorder %v1071, 0.0
        %v1126 = vand.u32 %v1071, 2147483648
        %v1127 = vsel %vm1125, %v1126, %v1124
        %v1128 = vrsqrt.pop %v1072
        %v1129 = vmul.f32 %v1072, %v1128
        %vm1130 = vcmp.eq.f32.partialorder %v1072, inf
        %v1131 = vsel %vm1130, %v1072, %v1129
        %vm1132 = vcmp.eq.f32.partialorder %v1072, 0.0
        %v1133 = vand.u32 %v1072, 2147483648
        %v1134 = vsel %vm1132, %v1133, %v1131
        %v1135 = vrsqrt.pop %v1073
        %v1136 = vmul.f32 %v1073, %v1135
        %vm1137 = vcmp.eq.f32.partialorder %v1073, inf
        %v1138 = vsel %vm1137, %v1073, %v1136
        %vm1139 = vcmp.eq.f32.partialorder %v1073, 0.0
        %v1140 = vand.u32 %v1073, 2147483648
        %v1141 = vsel %vm1139, %v1140, %v1138
        %v1142 = vrsqrt.pop %v1074
        %v1143 = vmul.f32 %v1074, %v1142
        %vm1144 = vcmp.eq.f32.partialorder %v1074, inf
        %v1145 = vsel %vm1144, %v1074, %v1143
        %vm1146 = vcmp.eq.f32.partialorder %v1074, 0.0
        %v1147 = vand.u32 %v1074, 2147483648
        %v1148 = vsel %vm1146, %v1147, %v1145
        %v1149 = vrsqrt.pop %v1075
        %v1150 = vmul.f32 %v1075, %v1149
        %vm1151 = vcmp.eq.f32.partialorder %v1075, inf
        %v1152 = vsel %vm1151, %v1075, %v1150
        %vm1153 = vcmp.eq.f32.partialorder %v1075, 0.0
        %v1154 = vand.u32 %v1075, 2147483648
        %v1155 = vsel %vm1153, %v1154, %v1152
        %v1156 = vrsqrt.pop %v1076
        %v1157 = vmul.f32 %v1076, %v1156
        %vm1158 = vcmp.eq.f32.partialorder %v1076, inf
        %v1159 = vsel %vm1158, %v1076, %v1157
        %vm1160 = vcmp.eq.f32.partialorder %v1076, 0.0
        %v1161 = vand.u32 %v1076, 2147483648
        %v1162 = vsel %vm1160, %v1161, %v1159
        %v1163 = vrsqrt.pop %v1077
        %v1164 = vmul.f32 %v1077, %v1163
        %vm1165 = vcmp.eq.f32.partialorder %v1077, inf
        %v1166 = vsel %vm1165, %v1077, %v1164
        %vm1167 = vcmp.eq.f32.partialorder %v1077, 0.0
        %v1168 = vand.u32 %v1077, 2147483648
        %v1169 = vsel %vm1167, %v1168, %v1166
        %v1170 = vrsqrt.pop %v1078
        %v1171 = vmul.f32 %v1078, %v1170
        %vm1172 = vcmp.eq.f32.partialorder %v1078, inf
        %v1173 = vsel %vm1172, %v1078, %v1171
        %vm1174 = vcmp.eq.f32.partialorder %v1078, 0.0
        %v1175 = vand.u32 %v1078, 2147483648
        %v1176 = vsel %vm1174, %v1175, %v1173
        %v1177 = vsel %vm1051, %v1085, 0.0
        %v1178 = vsel %vm1052, %v1092, 0.0
        %v1179 = vsel %vm1053, %v1099, 0.0
        %v1180 = vsel %vm1054, %v1106, 0.0
        %v1181 = vsel %vm1055, %v1113, 0.0
        %v1182 = vsel %vm1056, %v1120, 0.0
        %v1183 = vsel %vm1057, %v1127, 0.0
        %v1184 = vsel %vm1058, %v1134, 0.0
        %v1185 = vsel %vm1059, %v1141, 0.0
        %v1186 = vsel %vm1060, %v1148, 0.0
        %v1187 = vsel %vm1061, %v1155, 0.0
        %v1188 = vsel %vm1062, %v1162, 0.0
        %v1189 = vsel %vm1063, %v1169, 0.0
        %v1190 = vsel %vm1064, %v1176, 0.0
        %1192 = vset.pattern.permute.xlu0 0
        %1193 = vperm.xlu0 %1192, %v1177
        %v1194 = vpop.permute.xlu0 %1193
        %1197 = vset.pattern.permute.xlu0 0
        %1198 = vperm.xlu0 %1197, %v1178
        %v1199 = vpop.permute.xlu0 %1198
        %1202 = vset.pattern.permute.xlu0 0
        %1203 = vperm.xlu0 %1202, %v1179
        %v1204 = vpop.permute.xlu0 %1203
        %1207 = vset.pattern.permute.xlu0 0
        %1208 = vperm.xlu0 %1207, %v1180
        %v1209 = vpop.permute.xlu0 %1208
        %1212 = vset.pattern.permute.xlu0 0
        %1213 = vperm.xlu0 %1212, %v1181
        %v1214 = vpop.permute.xlu0 %1213
        %1217 = vset.pattern.permute.xlu0 0
        %1218 = vperm.xlu0 %1217, %v1182
        %v1219 = vpop.permute.xlu0 %1218
        %1222 = vset.pattern.permute.xlu0 0
        %1223 = vperm.xlu0 %1222, %v1183
        %v1224 = vpop.permute.xlu0 %1223
        %1227 = vset.pattern.permute.xlu0 0
        %1228 = vperm.xlu0 %1227, %v1184
        %v1229 = vpop.permute.xlu0 %1228
        %1232 = vset.pattern.permute.xlu0 0
        %1233 = vperm.xlu0 %1232, %v1185
        %v1234 = vpop.permute.xlu0 %1233
        %1237 = vset.pattern.permute.xlu0 0
        %1238 = vperm.xlu0 %1237, %v1186
        %v1239 = vpop.permute.xlu0 %1238
        %1242 = vset.pattern.permute.xlu0 0
        %1243 = vperm.xlu0 %1242, %v1187
        %v1244 = vpop.permute.xlu0 %1243
        %1247 = vset.pattern.permute.xlu0 0
        %1248 = vperm.xlu0 %1247, %v1188
        %v1249 = vpop.permute.xlu0 %1248
        %1252 = vset.pattern.permute.xlu0 0
        %1253 = vperm.xlu0 %1252, %v1189
        %v1254 = vpop.permute.xlu0 %1253
        %1257 = vset.pattern.permute.xlu0 0
        %1258 = vperm.xlu0 %1257, %v1190
        %v1259 = vpop.permute.xlu0 %1258
        %v1262 = vlaneseq
        %v1263 = vshrl.u32 %v1262, 7
        %v1264 = vsub.s32 0, %v1263
        %v1265 = vrot.slane %v559, %v1264
        %v1267 = vsub.f32 %v1194, %v1265
        %v1268 = vsub.f32 %v1199, %v1265
        %v1269 = vsub.f32 %v1204, %v1265
        %v1270 = vsub.f32 %v1209, %v1265
        %v1271 = vsub.f32 %v1214, %v1265
        %v1272 = vsub.f32 %v1219, %v1265
        %v1273 = vsub.f32 %v1224, %v1265
        %v1274 = vsub.f32 %v1229, %v1265
        %v1275 = vsub.f32 %v1234, %v1265
        %v1276 = vsub.f32 %v1239, %v1265
        %v1277 = vsub.f32 %v1244, %v1265
        %v1278 = vsub.f32 %v1249, %v1265
        %v1279 = vsub.f32 %v1254, %v1265
        %v1280 = vsub.f32 %v1259, %v1265
        %v1281 = vmul.f32 %v1267, -1.125
        %v1282 = vmul.f32 %v1268, -1.125
        %v1283 = vmul.f32 %v1269, -1.125
        %v1284 = vmul.f32 %v1270, -1.125
        %v1285 = vmul.f32 %v1271, -1.125
        %v1286 = vmul.f32 %v1272, -1.125
        %v1287 = vmul.f32 %v1273, -1.125
        %v1288 = vmul.f32 %v1274, -1.125
        %v1289 = vmul.f32 %v1275, -1.125
        %v1290 = vmul.f32 %v1276, -1.125
        %v1291 = vmul.f32 %v1277, -1.125
        %v1292 = vmul.f32 %v1278, -1.125
        %v1293 = vmul.f32 %v1279, -1.125
        %v1294 = vmul.f32 %v1280, -1.125
        %v1295 = vmul.f32 %v1281, %v1267
        %v1296 = vmul.f32 %v1282, %v1268
        %v1297 = vmul.f32 %v1283, %v1269
        %v1298 = vmul.f32 %v1284, %v1270
        %v1299 = vmul.f32 %v1285, %v1271
        %v1300 = vmul.f32 %v1286, %v1272
        %v1301 = vmul.f32 %v1287, %v1273
        %v1302 = vmul.f32 %v1288, %v1274
        %v1303 = vmul.f32 %v1289, %v1275
        %v1304 = vmul.f32 %v1290, %v1276
        %v1305 = vmul.f32 %v1291, %v1277
        %v1306 = vmul.f32 %v1292, %v1278
        %v1307 = vmul.f32 %v1293, %v1279
        %v1308 = vmul.f32 %v1294, %v1280
        %v1309 = vmul.f32 %v1295, 1.442695
        %v1310 = vpow.pop %v1309
        %v1311 = vmul.f32 %v1296, 1.442695
        %v1312 = vpow.pop %v1311
        %v1313 = vmul.f32 %v1297, 1.442695
        %v1314 = vpow.pop %v1313
        %v1315 = vmul.f32 %v1298, 1.442695
        %v1316 = vpow.pop %v1315
        %v1317 = vmul.f32 %v1299, 1.442695
        %v1318 = vpow.pop %v1317
        %v1319 = vmul.f32 %v1300, 1.442695
        %v1320 = vpow.pop %v1319
        %v1321 = vmul.f32 %v1301, 1.442695
        %v1322 = vpow.pop %v1321
        %v1323 = vmul.f32 %v1302, 1.442695
        %v1324 = vpow.pop %v1323
        %v1325 = vmul.f32 %v1303, 1.442695
        %v1326 = vpow.pop %v1325
        %v1327 = vmul.f32 %v1304, 1.442695
        %v1328 = vpow.pop %v1327
        %v1329 = vmul.f32 %v1305, 1.442695
        %v1330 = vpow.pop %v1329
        %v1331 = vmul.f32 %v1306, 1.442695
        %v1332 = vpow.pop %v1331
        %v1333 = vmul.f32 %v1307, 1.442695
        %v1334 = vpow.pop %v1333
        %v1335 = vmul.f32 %v1308, 1.442695
        %v1336 = vpow.pop %v1335
        %v1337 = vmul.f32 %v1177, 0.31415927
        %v1338 = vmul.f32 %v1178, 0.31415927
        %v1339 = vmul.f32 %v1179, 0.31415927
        %v1340 = vmul.f32 %v1180, 0.31415927
        %v1341 = vmul.f32 %v1181, 0.31415927
        %v1342 = vmul.f32 %v1182, 0.31415927
        %v1343 = vmul.f32 %v1183, 0.31415927
        %v1344 = vmul.f32 %v1184, 0.31415927
        %v1345 = vmul.f32 %v1185, 0.31415927
        %v1346 = vmul.f32 %v1186, 0.31415927
        %v1347 = vmul.f32 %v1187, 0.31415927
        %v1348 = vmul.f32 %v1188, 0.31415927
        %v1349 = vmul.f32 %v1189, 0.31415927
        %v1350 = vmul.f32 %v1190, 0.31415927
        %v1351 = vand.u32 2147483647, %v1337
        %vm1352 = vcmp.le.f32.partialorder %v1351, 0.7853982
        %vm1353 = vcmp.lt.s32.totalorder %v1337, 0
        %v1354 = vand.u32 %v1337, 2139095040
        %v1355 = vshrl.u32 %v1354, 23
        %v1356 = vsub.s32 %v1355, 127
        %v1357 = vand.u32 2147483647, %v1337
        %v1358 = vand.u32 %v1357, 8388607
        %v1359 = vor.u32 %v1358, 8388608
        %v1360 = vsub.s32 0, %v1359
        %v1361 = vadd.s32 %v1356, 1
        %vm1362 = vcmp.gt.s32.totalorder %v1361, 0
        %v1363 = vsel %vm1362, %v1361, 0
        %v1364 = vshrl.u32 %v1363, 5
        %v1365 = vand.u32 %v1363, 31
        %v1366 = vsub.s32 32, %v1365
        %v1367 = vshrl.u32 683565275, %v1366
        %v1368 = vshll.u32 683565275, %v1365
        %v1369 = vshrl.u32 2475754826, %v1366
        %v1370 = vor.u32 %v1368, %v1369
        %v1371 = vshll.u32 2475754826, %v1365
        %v1372 = vshrl.u32 2131351028, %v1366
        %v1373 = vor.u32 %v1371, %v1372
        %v1374 = vshll.u32 2131351028, %v1365
        %v1375 = vshrl.u32 2102212464, %v1366
        %v1376 = vor.u32 %v1374, %v1375
        %v1377 = vshll.u32 2102212464, %v1365
        %v1378 = vshrl.u32 920167782, %v1366
        %v1379 = vor.u32 %v1377, %v1378
        %v1380 = vshll.u32 920167782, %v1365
        %v1381 = vshrl.u32 1326507024, %v1366
        %v1382 = vor.u32 %v1380, %v1381
        %vm1383 = vcmp.lt.s32.totalorder %v1364, 1
        %vm1384 = vcmp.lt.s32.totalorder %v1364, 2
        %vm1385 = vcmp.lt.s32.totalorder %v1364, 3
        %vm1386 = vcmp.lt.s32.totalorder %v1364, 4
        %v1387 = vsel %vm1383, %v1367, %v1370
        %v1388 = vsel %vm1386, %v1376, 2102212464
        %v1389 = vsel %vm1385, %v1373, %v1388
        %v1390 = vsel %vm1384, %v1387, %v1389
        %v1391 = vsel %vm1383, %v1370, %v1373
        %v1392 = vsel %vm1386, %v1379, 920167782
        %v1393 = vsel %vm1385, %v1376, %v1392
        %v1394 = vsel %vm1384, %v1391, %v1393
        %v1395 = vsel %vm1383, %v1373, %v1376
        %v1396 = vsel %vm1386, %v1382, 1326507024
        %v1397 = vsel %vm1385, %v1379, %v1396
        %v1398 = vsel %vm1384, %v1395, %v1397
        %v1399 = vshll.u32 %v1359, 8
        %v1400 = vmul.u32.u64.compose %v1399, %v1398
        %v1401 = vextract.low.u32 %v1400
        %v1402 = vextract.high.u32 %v1400
        %v1403 = vmul.u32.u64.compose %v1399, %v1394
        %v1404 = vextract.low.u32 %v1403
        %v1405 = vextract.high.u32 %v1403
        %v1406 = vmul.u32 %v1399, %v1390
        %v1407 = vadd.s32 %v1402, %v1404
        %vm1408 = vc.u32 %v1402, %v1404
        %v1409 = vadd.s32 %v1405, 1
        %v1410 = vsel %vm1408, %v1409, %v1405
        %v1411 = vadd.s32 %v1406, %v1410
        %v1412 = vadd.s32 %v1411, 536870912
        %v1413 = vshrl.u32 %v1412, 30
        %v1414 = vshll.u32 %v1413, 30
        %v1415 = vsub.s32 %v1411, %v1414
        %vm1416 = vcmp.lt.s32.totalorder %v1415, 0
        %v1417 = vsub.s32 0, %v1415
        %v1418 = vsel %vm1416, %v1417, %v1415
        %v1419 = vclz %v1418
        %v1420 = vsub.s32 %v1419, 2
        %vm1421 = vcmp.gt.s32.totalorder 0, %v1420
        %v1422 = vsel %vm1421, 0, %v1420
        %v1423 = vsub.s32 32, %v1422
        %v1424 = vshll.u32 %v1415, %v1422
        %v1425 = vshrl.u32 %v1407, %v1423
        %v1426 = vor.u32 %v1424, %v1425
        %v1427 = vsub.s32 4294967266, %v1422
        %v1428 = vadd.s32 %v1427, 127
        %v1429 = vshll.u32 %v1428, 23
        %v1430 = vor.u32 4788187, %v1429
        %v1431 = vand.u32 2147483647, %v1430
        %v1433 = vcvt.s32.f32 %v1426
        %v1434 = vmul.f32 %v1433, %v1431
        %v1435 = vxor.u32 %v1434, 2147483648
        %v1436 = vsel %vm1353, %v1435, %v1434
        %v1437 = vsub.s32 4, %v1413
        %v1438 = vsel %vm1353, %v1437, %v1413
        %v1439 = vsel %vm1352, %v1337, %v1436
        %v1440 = vsel %vm1352, 0, %v1438
        %v1441 = vcosq.f32.pop %v1439
        %v1442 = vsinq.f32.pop %v1439
        %vm1443 = vweird.f32 %v1337
        %v1444 = vand.u32 %v1440, 3
        %vm1445 = vcmp.lt.s32.totalorder %v1444, 2
        %vm1446 = vcmp.eq.s32.totalorder %v1444, 0
        %v1447 = vxor.u32 %v1442, 2147483648
        %v1448 = vsel %vm1446, %v1441, %v1447
        %vm1449 = vcmp.eq.s32.totalorder %v1444, 2
        %v1450 = vxor.u32 %v1441, 2147483648
        %v1451 = vsel %vm1449, %v1450, %v1442
        %v1452 = vsel %vm1445, %v1448, %v1451
        %v1453 = vsel %vm1443, nan, %v1452
        %v1454 = vand.u32 2147483647, %v1338
        %vm1455 = vcmp.le.f32.partialorder %v1454, 0.7853982
        %vm1456 = vcmp.lt.s32.totalorder %v1338, 0
        %v1457 = vand.u32 %v1338, 2139095040
        %v1458 = vshrl.u32 %v1457, 23
        %v1459 = vsub.s32 %v1458, 127
        %v1460 = vand.u32 2147483647, %v1338
        %v1461 = vand.u32 %v1460, 8388607
        %v1462 = vor.u32 %v1461, 8388608
        %v1463 = vsub.s32 0, %v1462
        %v1464 = vadd.s32 %v1459, 1
        %vm1465 = vcmp.gt.s32.totalorder %v1464, 0
        %v1466 = vsel %vm1465, %v1464, 0
        %v1467 = vshrl.u32 %v1466, 5
        %v1468 = vand.u32 %v1466, 31
        %v1469 = vsub.s32 32, %v1468
        %v1470 = vshrl.u32 683565275, %v1469
        %v1471 = vshll.u32 683565275, %v1468
        %v1472 = vshrl.u32 2475754826, %v1469
        %v1473 = vor.u32 %v1471, %v1472
        %v1474 = vshll.u32 2475754826, %v1468
        %v1475 = vshrl.u32 2131351028, %v1469
        %v1476 = vor.u32 %v1474, %v1475
        %v1477 = vshll.u32 2131351028, %v1468
        %v1478 = vshrl.u32 2102212464, %v1469
        %v1479 = vor.u32 %v1477, %v1478
        %v1480 = vshll.u32 2102212464, %v1468
        %v1481 = vshrl.u32 920167782, %v1469
        %v1482 = vor.u32 %v1480, %v1481
        %v1483 = vshll.u32 920167782, %v1468
        %v1484 = vshrl.u32 1326507024, %v1469
        %v1485 = vor.u32 %v1483, %v1484
        %vm1486 = vcmp.lt.s32.totalorder %v1467, 1
        %vm1487 = vcmp.lt.s32.totalorder %v1467, 2
        %vm1488 = vcmp.lt.s32.totalorder %v1467, 3
        %vm1489 = vcmp.lt.s32.totalorder %v1467, 4
        %v1490 = vsel %vm1486, %v1470, %v1473
        %v1491 = vsel %vm1489, %v1479, 2102212464
        %v1492 = vsel %vm1488, %v1476, %v1491
        %v1493 = vsel %vm1487, %v1490, %v1492
        %v1494 = vsel %vm1486, %v1473, %v1476
        %v1495 = vsel %vm1489, %v1482, 920167782
        %v1496 = vsel %vm1488, %v1479, %v1495
        %v1497 = vsel %vm1487, %v1494, %v1496
        %v1498 = vsel %vm1486, %v1476, %v1479
        %v1499 = vsel %vm1489, %v1485, 1326507024
        %v1500 = vsel %vm1488, %v1482, %v1499
        %v1501 = vsel %vm1487, %v1498, %v1500
        %v1502 = vshll.u32 %v1462, 8
        %v1503 = vmul.u32.u64.compose %v1502, %v1501
        %v1504 = vextract.low.u32 %v1503
        %v1505 = vextract.high.u32 %v1503
        %v1506 = vmul.u32.u64.compose %v1502, %v1497
        %v1507 = vextract.low.u32 %v1506
        %v1508 = vextract.high.u32 %v1506
        %v1509 = vmul.u32 %v1502, %v1493
        %v1510 = vadd.s32 %v1505, %v1507
        %vm1511 = vc.u32 %v1505, %v1507
        %v1512 = vadd.s32 %v1508, 1
        %v1513 = vsel %vm1511, %v1512, %v1508
        %v1514 = vadd.s32 %v1509, %v1513
        %v1515 = vadd.s32 %v1514, 536870912
        %v1516 = vshrl.u32 %v1515, 30
        %v1517 = vshll.u32 %v1516, 30
        %v1518 = vsub.s32 %v1514, %v1517
        %vm1519 = vcmp.lt.s32.totalorder %v1518, 0
        %v1520 = vsub.s32 0, %v1518
        %v1521 = vsel %vm1519, %v1520, %v1518
        %v1522 = vclz %v1521
        %v1523 = vsub.s32 %v1522, 2
        %vm1524 = vcmp.gt.s32.totalorder 0, %v1523
        %v1525 = vsel %vm1524, 0, %v1523
        %v1526 = vsub.s32 32, %v1525
        %v1527 = vshll.u32 %v1518, %v1525
        %v1528 = vshrl.u32 %v1510, %v1526
        %v1529 = vor.u32 %v1527, %v1528
        %v1530 = vsub.s32 4294967266, %v1525
        %v1531 = vadd.s32 %v1530, 127
        %v1532 = vshll.u32 %v1531, 23
        %v1533 = vor.u32 4788187, %v1532
        %v1534 = vand.u32 2147483647, %v1533
        %v1536 = vcvt.s32.f32 %v1529
        %v1537 = vmul.f32 %v1536, %v1534
        %v1538 = vxor.u32 %v1537, 2147483648
        %v1539 = vsel %vm1456, %v1538, %v1537
        %v1540 = vsub.s32 4, %v1516
        %v1541 = vsel %vm1456, %v1540, %v1516
        %v1542 = vsel %vm1455, %v1338, %v1539
        %v1543 = vsel %vm1455, 0, %v1541
        %v1544 = vcosq.f32.pop %v1542
        %v1545 = vsinq.f32.pop %v1542
        %vm1546 = vweird.f32 %v1338
        %v1547 = vand.u32 %v1543, 3
        %vm1548 = vcmp.lt.s32.totalorder %v1547, 2
        %vm1549 = vcmp.eq.s32.totalorder %v1547, 0
        %v1550 = vxor.u32 %v1545, 2147483648
        %v1551 = vsel %vm1549, %v1544, %v1550
        %vm1552 = vcmp.eq.s32.totalorder %v1547, 2
        %v1553 = vxor.u32 %v1544, 2147483648
        %v1554 = vsel %vm1552, %v1553, %v1545
        %v1555 = vsel %vm1548, %v1551, %v1554
        %v1556 = vsel %vm1546, nan, %v1555
        %v1557 = vand.u32 2147483647, %v1339
        %vm1558 = vcmp.le.f32.partialorder %v1557, 0.7853982
        %vm1559 = vcmp.lt.s32.totalorder %v1339, 0
        %v1560 = vand.u32 %v1339, 2139095040
        %v1561 = vshrl.u32 %v1560, 23
        %v1562 = vsub.s32 %v1561, 127
        %v1563 = vand.u32 2147483647, %v1339
        %v1564 = vand.u32 %v1563, 8388607
        %v1565 = vor.u32 %v1564, 8388608
        %v1566 = vsub.s32 0, %v1565
        %v1567 = vadd.s32 %v1562, 1
        %vm1568 = vcmp.gt.s32.totalorder %v1567, 0
        %v1569 = vsel %vm1568, %v1567, 0
        %v1570 = vshrl.u32 %v1569, 5
        %v1571 = vand.u32 %v1569, 31
        %v1572 = vsub.s32 32, %v1571
        %v1573 = vshrl.u32 683565275, %v1572
        %v1574 = vshll.u32 683565275, %v1571
        %v1575 = vshrl.u32 2475754826, %v1572
        %v1576 = vor.u32 %v1574, %v1575
        %v1577 = vshll.u32 2475754826, %v1571
        %v1578 = vshrl.u32 2131351028, %v1572
        %v1579 = vor.u32 %v1577, %v1578
        %v1580 = vshll.u32 2131351028, %v1571
        %v1581 = vshrl.u32 2102212464, %v1572
        %v1582 = vor.u32 %v1580, %v1581
        %v1583 = vshll.u32 2102212464, %v1571
        %v1584 = vshrl.u32 920167782, %v1572
        %v1585 = vor.u32 %v1583, %v1584
        %v1586 = vshll.u32 920167782, %v1571
        %v1587 = vshrl.u32 1326507024, %v1572
        %v1588 = vor.u32 %v1586, %v1587
        %vm1589 = vcmp.lt.s32.totalorder %v1570, 1
        %vm1590 = vcmp.lt.s32.totalorder %v1570, 2
        %vm1591 = vcmp.lt.s32.totalorder %v1570, 3
        %vm1592 = vcmp.lt.s32.totalorder %v1570, 4
        %v1593 = vsel %vm1589, %v1573, %v1576
        %v1594 = vsel %vm1592, %v1582, 2102212464
        %v1595 = vsel %vm1591, %v1579, %v1594
        %v1596 = vsel %vm1590, %v1593, %v1595
        %v1597 = vsel %vm1589, %v1576, %v1579
        %v1598 = vsel %vm1592, %v1585, 920167782
        %v1599 = vsel %vm1591, %v1582, %v1598
        %v1600 = vsel %vm1590, %v1597, %v1599
        %v1601 = vsel %vm1589, %v1579, %v1582
        %v1602 = vsel %vm1592, %v1588, 1326507024
        %v1603 = vsel %vm1591, %v1585, %v1602
        %v1604 = vsel %vm1590, %v1601, %v1603
        %v1605 = vshll.u32 %v1565, 8
        %v1606 = vmul.u32.u64.compose %v1605, %v1604
        %v1607 = vextract.low.u32 %v1606
        %v1608 = vextract.high.u32 %v1606
        %v1609 = vmul.u32.u64.compose %v1605, %v1600
        %v1610 = vextract.low.u32 %v1609
        %v1611 = vextract.high.u32 %v1609
        %v1612 = vmul.u32 %v1605, %v1596
        %v1613 = vadd.s32 %v1608, %v1610
        %vm1614 = vc.u32 %v1608, %v1610
        %v1615 = vadd.s32 %v1611, 1
        %v1616 = vsel %vm1614, %v1615, %v1611
        %v1617 = vadd.s32 %v1612, %v1616
        %v1618 = vadd.s32 %v1617, 536870912
        %v1619 = vshrl.u32 %v1618, 30
        %v1620 = vshll.u32 %v1619, 30
        %v1621 = vsub.s32 %v1617, %v1620
        %vm1622 = vcmp.lt.s32.totalorder %v1621, 0
        %v1623 = vsub.s32 0, %v1621
        %v1624 = vsel %vm1622, %v1623, %v1621
        %v1625 = vclz %v1624
        %v1626 = vsub.s32 %v1625, 2
        %vm1627 = vcmp.gt.s32.totalorder 0, %v1626
        %v1628 = vsel %vm1627, 0, %v1626
        %v1629 = vsub.s32 32, %v1628
        %v1630 = vshll.u32 %v1621, %v1628
        %v1631 = vshrl.u32 %v1613, %v1629
        %v1632 = vor.u32 %v1630, %v1631
        %v1633 = vsub.s32 4294967266, %v1628
        %v1634 = vadd.s32 %v1633, 127
        %v1635 = vshll.u32 %v1634, 23
        %v1636 = vor.u32 4788187, %v1635
        %v1637 = vand.u32 2147483647, %v1636
        %v1639 = vcvt.s32.f32 %v1632
        %v1640 = vmul.f32 %v1639, %v1637
        %v1641 = vxor.u32 %v1640, 2147483648
        %v1642 = vsel %vm1559, %v1641, %v1640
        %v1643 = vsub.s32 4, %v1619
        %v1644 = vsel %vm1559, %v1643, %v1619
        %v1645 = vsel %vm1558, %v1339, %v1642
        %v1646 = vsel %vm1558, 0, %v1644
        %v1647 = vcosq.f32.pop %v1645
        %v1648 = vsinq.f32.pop %v1645
        %vm1649 = vweird.f32 %v1339
        %v1650 = vand.u32 %v1646, 3
        %vm1651 = vcmp.lt.s32.totalorder %v1650, 2
        %vm1652 = vcmp.eq.s32.totalorder %v1650, 0
        %v1653 = vxor.u32 %v1648, 2147483648
        %v1654 = vsel %vm1652, %v1647, %v1653
        %vm1655 = vcmp.eq.s32.totalorder %v1650, 2
        %v1656 = vxor.u32 %v1647, 2147483648
        %v1657 = vsel %vm1655, %v1656, %v1648
        %v1658 = vsel %vm1651, %v1654, %v1657
        %v1659 = vsel %vm1649, nan, %v1658
        %v1660 = vand.u32 2147483647, %v1340
        %vm1661 = vcmp.le.f32.partialorder %v1660, 0.7853982
        %vm1662 = vcmp.lt.s32.totalorder %v1340, 0
        %v1663 = vand.u32 %v1340, 2139095040
        %v1664 = vshrl.u32 %v1663, 23
        %v1665 = vsub.s32 %v1664, 127
        %v1666 = vand.u32 2147483647, %v1340
        %v1667 = vand.u32 %v1666, 8388607
        %v1668 = vor.u32 %v1667, 8388608
        %v1669 = vsub.s32 0, %v1668
        %v1670 = vadd.s32 %v1665, 1
        %vm1671 = vcmp.gt.s32.totalorder %v1670, 0
        %v1672 = vsel %vm1671, %v1670, 0
        %v1673 = vshrl.u32 %v1672, 5
        %v1674 = vand.u32 %v1672, 31
        %v1675 = vsub.s32 32, %v1674
        %v1676 = vshrl.u32 683565275, %v1675
        %v1677 = vshll.u32 683565275, %v1674
        %v1678 = vshrl.u32 2475754826, %v1675
        %v1679 = vor.u32 %v1677, %v1678
        %v1680 = vshll.u32 2475754826, %v1674
        %v1681 = vshrl.u32 2131351028, %v1675
        %v1682 = vor.u32 %v1680, %v1681
        %v1683 = vshll.u32 2131351028, %v1674
        %v1684 = vshrl.u32 2102212464, %v1675
        %v1685 = vor.u32 %v1683, %v1684
        %v1686 = vshll.u32 2102212464, %v1674
        %v1687 = vshrl.u32 920167782, %v1675
        %v1688 = vor.u32 %v1686, %v1687
        %v1689 = vshll.u32 920167782, %v1674
        %v1690 = vshrl.u32 1326507024, %v1675
        %v1691 = vor.u32 %v1689, %v1690
        %vm1692 = vcmp.lt.s32.totalorder %v1673, 1
        %vm1693 = vcmp.lt.s32.totalorder %v1673, 2
        %vm1694 = vcmp.lt.s32.totalorder %v1673, 3
        %vm1695 = vcmp.lt.s32.totalorder %v1673, 4
        %v1696 = vsel %vm1692, %v1676, %v1679
        %v1697 = vsel %vm1695, %v1685, 2102212464
        %v1698 = vsel %vm1694, %v1682, %v1697
        %v1699 = vsel %vm1693, %v1696, %v1698
        %v1700 = vsel %vm1692, %v1679, %v1682
        %v1701 = vsel %vm1695, %v1688, 920167782
        %v1702 = vsel %vm1694, %v1685, %v1701
        %v1703 = vsel %vm1693, %v1700, %v1702
        %v1704 = vsel %vm1692, %v1682, %v1685
        %v1705 = vsel %vm1695, %v1691, 1326507024
        %v1706 = vsel %vm1694, %v1688, %v1705
        %v1707 = vsel %vm1693, %v1704, %v1706
        %v1708 = vshll.u32 %v1668, 8
        %v1709 = vmul.u32.u64.compose %v1708, %v1707
        %v1710 = vextract.low.u32 %v1709
        %v1711 = vextract.high.u32 %v1709
        %v1712 = vmul.u32.u64.compose %v1708, %v1703
        %v1713 = vextract.low.u32 %v1712
        %v1714 = vextract.high.u32 %v1712
        %v1715 = vmul.u32 %v1708, %v1699
        %v1716 = vadd.s32 %v1711, %v1713
        %vm1717 = vc.u32 %v1711, %v1713
        %v1718 = vadd.s32 %v1714, 1
        %v1719 = vsel %vm1717, %v1718, %v1714
        %v1720 = vadd.s32 %v1715, %v1719
        %v1721 = vadd.s32 %v1720, 536870912
        %v1722 = vshrl.u32 %v1721, 30
        %v1723 = vshll.u32 %v1722, 30
        %v1724 = vsub.s32 %v1720, %v1723
        %vm1725 = vcmp.lt.s32.totalorder %v1724, 0
        %v1726 = vsub.s32 0, %v1724
        %v1727 = vsel %vm1725, %v1726, %v1724
        %v1728 = vclz %v1727
        %v1729 = vsub.s32 %v1728, 2
        %vm1730 = vcmp.gt.s32.totalorder 0, %v1729
        %v1731 = vsel %vm1730, 0, %v1729
        %v1732 = vsub.s32 32, %v1731
        %v1733 = vshll.u32 %v1724, %v1731
        %v1734 = vshrl.u32 %v1716, %v1732
        %v1735 = vor.u32 %v1733, %v1734
        %v1736 = vsub.s32 4294967266, %v1731
        %v1737 = vadd.s32 %v1736, 127
        %v1738 = vshll.u32 %v1737, 23
        %v1739 = vor.u32 4788187, %v1738
        %v1740 = vand.u32 2147483647, %v1739
        %v1742 = vcvt.s32.f32 %v1735
        %v1743 = vmul.f32 %v1742, %v1740
        %v1744 = vxor.u32 %v1743, 2147483648
        %v1745 = vsel %vm1662, %v1744, %v1743
        %v1746 = vsub.s32 4, %v1722
        %v1747 = vsel %vm1662, %v1746, %v1722
        %v1748 = vsel %vm1661, %v1340, %v1745
        %v1749 = vsel %vm1661, 0, %v1747
        %v1750 = vcosq.f32.pop %v1748
        %v1751 = vsinq.f32.pop %v1748
        %vm1752 = vweird.f32 %v1340
        %v1753 = vand.u32 %v1749, 3
        %vm1754 = vcmp.lt.s32.totalorder %v1753, 2
        %vm1755 = vcmp.eq.s32.totalorder %v1753, 0
        %v1756 = vxor.u32 %v1751, 2147483648
        %v1757 = vsel %vm1755, %v1750, %v1756
        %vm1758 = vcmp.eq.s32.totalorder %v1753, 2
        %v1759 = vxor.u32 %v1750, 2147483648
        %v1760 = vsel %vm1758, %v1759, %v1751
        %v1761 = vsel %vm1754, %v1757, %v1760
        %v1762 = vsel %vm1752, nan, %v1761
        %v1763 = vand.u32 2147483647, %v1341
        %vm1764 = vcmp.le.f32.partialorder %v1763, 0.7853982
        %vm1765 = vcmp.lt.s32.totalorder %v1341, 0
        %v1766 = vand.u32 %v1341, 2139095040
        %v1767 = vshrl.u32 %v1766, 23
        %v1768 = vsub.s32 %v1767, 127
        %v1769 = vand.u32 2147483647, %v1341
        %v1770 = vand.u32 %v1769, 8388607
        %v1771 = vor.u32 %v1770, 8388608
        %v1772 = vsub.s32 0, %v1771
        %v1773 = vadd.s32 %v1768, 1
        %vm1774 = vcmp.gt.s32.totalorder %v1773, 0
        %v1775 = vsel %vm1774, %v1773, 0
        %v1776 = vshrl.u32 %v1775, 5
        %v1777 = vand.u32 %v1775, 31
        %v1778 = vsub.s32 32, %v1777
        %v1779 = vshrl.u32 683565275, %v1778
        %v1780 = vshll.u32 683565275, %v1777
        %v1781 = vshrl.u32 2475754826, %v1778
        %v1782 = vor.u32 %v1780, %v1781
        %v1783 = vshll.u32 2475754826, %v1777
        %v1784 = vshrl.u32 2131351028, %v1778
        %v1785 = vor.u32 %v1783, %v1784
        %v1786 = vshll.u32 2131351028, %v1777
        %v1787 = vshrl.u32 2102212464, %v1778
        %v1788 = vor.u32 %v1786, %v1787
        %v1789 = vshll.u32 2102212464, %v1777
        %v1790 = vshrl.u32 920167782, %v1778
        %v1791 = vor.u32 %v1789, %v1790
        %v1792 = vshll.u32 920167782, %v1777
        %v1793 = vshrl.u32 1326507024, %v1778
        %v1794 = vor.u32 %v1792, %v1793
        %vm1795 = vcmp.lt.s32.totalorder %v1776, 1
        %vm1796 = vcmp.lt.s32.totalorder %v1776, 2
        %vm1797 = vcmp.lt.s32.totalorder %v1776, 3
        %vm1798 = vcmp.lt.s32.totalorder %v1776, 4
        %v1799 = vsel %vm1795, %v1779, %v1782
        %v1800 = vsel %vm1798, %v1788, 2102212464
        %v1801 = vsel %vm1797, %v1785, %v1800
        %v1802 = vsel %vm1796, %v1799, %v1801
        %v1803 = vsel %vm1795, %v1782, %v1785
        %v1804 = vsel %vm1798, %v1791, 920167782
        %v1805 = vsel %vm1797, %v1788, %v1804
        %v1806 = vsel %vm1796, %v1803, %v1805
        %v1807 = vsel %vm1795, %v1785, %v1788
        %v1808 = vsel %vm1798, %v1794, 1326507024
        %v1809 = vsel %vm1797, %v1791, %v1808
        %v1810 = vsel %vm1796, %v1807, %v1809
        %v1811 = vshll.u32 %v1771, 8
        %v1812 = vmul.u32.u64.compose %v1811, %v1810
        %v1813 = vextract.low.u32 %v1812
        %v1814 = vextract.high.u32 %v1812
        %v1815 = vmul.u32.u64.compose %v1811, %v1806
        %v1816 = vextract.low.u32 %v1815
        %v1817 = vextract.high.u32 %v1815
        %v1818 = vmul.u32 %v1811, %v1802
        %v1819 = vadd.s32 %v1814, %v1816
        %vm1820 = vc.u32 %v1814, %v1816
        %v1821 = vadd.s32 %v1817, 1
        %v1822 = vsel %vm1820, %v1821, %v1817
        %v1823 = vadd.s32 %v1818, %v1822
        %v1824 = vadd.s32 %v1823, 536870912
        %v1825 = vshrl.u32 %v1824, 30
        %v1826 = vshll.u32 %v1825, 30
        %v1827 = vsub.s32 %v1823, %v1826
        %vm1828 = vcmp.lt.s32.totalorder %v1827, 0
        %v1829 = vsub.s32 0, %v1827
        %v1830 = vsel %vm1828, %v1829, %v1827
        %v1831 = vclz %v1830
        %v1832 = vsub.s32 %v1831, 2
        %vm1833 = vcmp.gt.s32.totalorder 0, %v1832
        %v1834 = vsel %vm1833, 0, %v1832
        %v1835 = vsub.s32 32, %v1834
        %v1836 = vshll.u32 %v1827, %v1834
        %v1837 = vshrl.u32 %v1819, %v1835
        %v1838 = vor.u32 %v1836, %v1837
        %v1839 = vsub.s32 4294967266, %v1834
        %v1840 = vadd.s32 %v1839, 127
        %v1841 = vshll.u32 %v1840, 23
        %v1842 = vor.u32 4788187, %v1841
        %v1843 = vand.u32 2147483647, %v1842
        %v1845 = vcvt.s32.f32 %v1838
        %v1846 = vmul.f32 %v1845, %v1843
        %v1847 = vxor.u32 %v1846, 2147483648
        %v1848 = vsel %vm1765, %v1847, %v1846
        %v1849 = vsub.s32 4, %v1825
        %v1850 = vsel %vm1765, %v1849, %v1825
        %v1851 = vsel %vm1764, %v1341, %v1848
        %v1852 = vsel %vm1764, 0, %v1850
        %v1853 = vcosq.f32.pop %v1851
        %v1854 = vsinq.f32.pop %v1851
        %vm1855 = vweird.f32 %v1341
        %v1856 = vand.u32 %v1852, 3
        %vm1857 = vcmp.lt.s32.totalorder %v1856, 2
        %vm1858 = vcmp.eq.s32.totalorder %v1856, 0
        %v1859 = vxor.u32 %v1854, 2147483648
        %v1860 = vsel %vm1858, %v1853, %v1859
        %vm1861 = vcmp.eq.s32.totalorder %v1856, 2
        %v1862 = vxor.u32 %v1853, 2147483648
        %v1863 = vsel %vm1861, %v1862, %v1854
        %v1864 = vsel %vm1857, %v1860, %v1863
        %v1865 = vsel %vm1855, nan, %v1864
        %v1866 = vand.u32 2147483647, %v1342
        %vm1867 = vcmp.le.f32.partialorder %v1866, 0.7853982
        %vm1868 = vcmp.lt.s32.totalorder %v1342, 0
        %v1869 = vand.u32 %v1342, 2139095040
        %v1870 = vshrl.u32 %v1869, 23
        %v1871 = vsub.s32 %v1870, 127
        %v1872 = vand.u32 2147483647, %v1342
        %v1873 = vand.u32 %v1872, 8388607
        %v1874 = vor.u32 %v1873, 8388608
        %v1875 = vsub.s32 0, %v1874
        %v1876 = vadd.s32 %v1871, 1
        %vm1877 = vcmp.gt.s32.totalorder %v1876, 0
        %v1878 = vsel %vm1877, %v1876, 0
        %v1879 = vshrl.u32 %v1878, 5
        %v1880 = vand.u32 %v1878, 31
        %v1881 = vsub.s32 32, %v1880
        %v1882 = vshrl.u32 683565275, %v1881
        %v1883 = vshll.u32 683565275, %v1880
        %v1884 = vshrl.u32 2475754826, %v1881
        %v1885 = vor.u32 %v1883, %v1884
        %v1886 = vshll.u32 2475754826, %v1880
        %v1887 = vshrl.u32 2131351028, %v1881
        %v1888 = vor.u32 %v1886, %v1887
        %v1889 = vshll.u32 2131351028, %v1880
        %v1890 = vshrl.u32 2102212464, %v1881
        %v1891 = vor.u32 %v1889, %v1890
        %v1892 = vshll.u32 2102212464, %v1880
        %v1893 = vshrl.u32 920167782, %v1881
        %v1894 = vor.u32 %v1892, %v1893
        %v1895 = vshll.u32 920167782, %v1880
        %v1896 = vshrl.u32 1326507024, %v1881
        %v1897 = vor.u32 %v1895, %v1896
        %vm1898 = vcmp.lt.s32.totalorder %v1879, 1
        %vm1899 = vcmp.lt.s32.totalorder %v1879, 2
        %vm1900 = vcmp.lt.s32.totalorder %v1879, 3
        %vm1901 = vcmp.lt.s32.totalorder %v1879, 4
        %v1902 = vsel %vm1898, %v1882, %v1885
        %v1903 = vsel %vm1901, %v1891, 2102212464
        %v1904 = vsel %vm1900, %v1888, %v1903
        %v1905 = vsel %vm1899, %v1902, %v1904
        %v1906 = vsel %vm1898, %v1885, %v1888
        %v1907 = vsel %vm1901, %v1894, 920167782
        %v1908 = vsel %vm1900, %v1891, %v1907
        %v1909 = vsel %vm1899, %v1906, %v1908
        %v1910 = vsel %vm1898, %v1888, %v1891
        %v1911 = vsel %vm1901, %v1897, 1326507024
        %v1912 = vsel %vm1900, %v1894, %v1911
        %v1913 = vsel %vm1899, %v1910, %v1912
        %v1914 = vshll.u32 %v1874, 8
        %v1915 = vmul.u32.u64.compose %v1914, %v1913
        %v1916 = vextract.low.u32 %v1915
        %v1917 = vextract.high.u32 %v1915
        %v1918 = vmul.u32.u64.compose %v1914, %v1909
        %v1919 = vextract.low.u32 %v1918
        %v1920 = vextract.high.u32 %v1918
        %v1921 = vmul.u32 %v1914, %v1905
        %v1922 = vadd.s32 %v1917, %v1919
        %vm1923 = vc.u32 %v1917, %v1919
        %v1924 = vadd.s32 %v1920, 1
        %v1925 = vsel %vm1923, %v1924, %v1920
        %v1926 = vadd.s32 %v1921, %v1925
        %v1927 = vadd.s32 %v1926, 536870912
        %v1928 = vshrl.u32 %v1927, 30
        %v1929 = vshll.u32 %v1928, 30
        %v1930 = vsub.s32 %v1926, %v1929
        %vm1931 = vcmp.lt.s32.totalorder %v1930, 0
        %v1932 = vsub.s32 0, %v1930
        %v1933 = vsel %vm1931, %v1932, %v1930
        %v1934 = vclz %v1933
        %v1935 = vsub.s32 %v1934, 2
        %vm1936 = vcmp.gt.s32.totalorder 0, %v1935
        %v1937 = vsel %vm1936, 0, %v1935
        %v1938 = vsub.s32 32, %v1937
        %v1939 = vshll.u32 %v1930, %v1937
        %v1940 = vshrl.u32 %v1922, %v1938
        %v1941 = vor.u32 %v1939, %v1940
        %v1942 = vsub.s32 4294967266, %v1937
        %v1943 = vadd.s32 %v1942, 127
        %v1944 = vshll.u32 %v1943, 23
        %v1945 = vor.u32 4788187, %v1944
        %v1946 = vand.u32 2147483647, %v1945
        %v1948 = vcvt.s32.f32 %v1941
        %v1949 = vmul.f32 %v1948, %v1946
        %v1950 = vxor.u32 %v1949, 2147483648
        %v1951 = vsel %vm1868, %v1950, %v1949
        %v1952 = vsub.s32 4, %v1928
        %v1953 = vsel %vm1868, %v1952, %v1928
        %v1954 = vsel %vm1867, %v1342, %v1951
        %v1955 = vsel %vm1867, 0, %v1953
        %v1956 = vcosq.f32.pop %v1954
        %v1957 = vsinq.f32.pop %v1954
        %vm1958 = vweird.f32 %v1342
        %v1959 = vand.u32 %v1955, 3
        %vm1960 = vcmp.lt.s32.totalorder %v1959, 2
        %vm1961 = vcmp.eq.s32.totalorder %v1959, 0
        %v1962 = vxor.u32 %v1957, 2147483648
        %v1963 = vsel %vm1961, %v1956, %v1962
        %vm1964 = vcmp.eq.s32.totalorder %v1959, 2
        %v1965 = vxor.u32 %v1956, 2147483648
        %v1966 = vsel %vm1964, %v1965, %v1957
        %v1967 = vsel %vm1960, %v1963, %v1966
        %v1968 = vsel %vm1958, nan, %v1967
        %v1969 = vand.u32 2147483647, %v1343
        %vm1970 = vcmp.le.f32.partialorder %v1969, 0.7853982
        %vm1971 = vcmp.lt.s32.totalorder %v1343, 0
        %v1972 = vand.u32 %v1343, 2139095040
        %v1973 = vshrl.u32 %v1972, 23
        %v1974 = vsub.s32 %v1973, 127
        %v1975 = vand.u32 2147483647, %v1343
        %v1976 = vand.u32 %v1975, 8388607
        %v1977 = vor.u32 %v1976, 8388608
        %v1978 = vsub.s32 0, %v1977
        %v1979 = vadd.s32 %v1974, 1
        %vm1980 = vcmp.gt.s32.totalorder %v1979, 0
        %v1981 = vsel %vm1980, %v1979, 0
        %v1982 = vshrl.u32 %v1981, 5
        %v1983 = vand.u32 %v1981, 31
        %v1984 = vsub.s32 32, %v1983
        %v1985 = vshrl.u32 683565275, %v1984
        %v1986 = vshll.u32 683565275, %v1983
        %v1987 = vshrl.u32 2475754826, %v1984
        %v1988 = vor.u32 %v1986, %v1987
        %v1989 = vshll.u32 2475754826, %v1983
        %v1990 = vshrl.u32 2131351028, %v1984
        %v1991 = vor.u32 %v1989, %v1990
        %v1992 = vshll.u32 2131351028, %v1983
        %v1993 = vshrl.u32 2102212464, %v1984
        %v1994 = vor.u32 %v1992, %v1993
        %v1995 = vshll.u32 2102212464, %v1983
        %v1996 = vshrl.u32 920167782, %v1984
        %v1997 = vor.u32 %v1995, %v1996
        %v1998 = vshll.u32 920167782, %v1983
        %v1999 = vshrl.u32 1326507024, %v1984
        %v2000 = vor.u32 %v1998, %v1999
        %vm2001 = vcmp.lt.s32.totalorder %v1982, 1
        %vm2002 = vcmp.lt.s32.totalorder %v1982, 2
        %vm2003 = vcmp.lt.s32.totalorder %v1982, 3
        %vm2004 = vcmp.lt.s32.totalorder %v1982, 4
        %v2005 = vsel %vm2001, %v1985, %v1988
        %v2006 = vsel %vm2004, %v1994, 2102212464
        %v2007 = vsel %vm2003, %v1991, %v2006
        %v2008 = vsel %vm2002, %v2005, %v2007
        %v2009 = vsel %vm2001, %v1988, %v1991
        %v2010 = vsel %vm2004, %v1997, 920167782
        %v2011 = vsel %vm2003, %v1994, %v2010
        %v2012 = vsel %vm2002, %v2009, %v2011
        %v2013 = vsel %vm2001, %v1991, %v1994
        %v2014 = vsel %vm2004, %v2000, 1326507024
        %v2015 = vsel %vm2003, %v1997, %v2014
        %v2016 = vsel %vm2002, %v2013, %v2015
        %v2017 = vshll.u32 %v1977, 8
        %v2018 = vmul.u32.u64.compose %v2017, %v2016
        %v2019 = vextract.low.u32 %v2018
        %v2020 = vextract.high.u32 %v2018
        %v2021 = vmul.u32.u64.compose %v2017, %v2012
        %v2022 = vextract.low.u32 %v2021
        %v2023 = vextract.high.u32 %v2021
        %v2024 = vmul.u32 %v2017, %v2008
        %v2025 = vadd.s32 %v2020, %v2022
        %vm2026 = vc.u32 %v2020, %v2022
        %v2027 = vadd.s32 %v2023, 1
        %v2028 = vsel %vm2026, %v2027, %v2023
        %v2029 = vadd.s32 %v2024, %v2028
        %v2030 = vadd.s32 %v2029, 536870912
        %v2031 = vshrl.u32 %v2030, 30
        %v2032 = vshll.u32 %v2031, 30
        %v2033 = vsub.s32 %v2029, %v2032
        %vm2034 = vcmp.lt.s32.totalorder %v2033, 0
        %v2035 = vsub.s32 0, %v2033
        %v2036 = vsel %vm2034, %v2035, %v2033
        %v2037 = vclz %v2036
        %v2038 = vsub.s32 %v2037, 2
        %vm2039 = vcmp.gt.s32.totalorder 0, %v2038
        %v2040 = vsel %vm2039, 0, %v2038
        %v2041 = vsub.s32 32, %v2040
        %v2042 = vshll.u32 %v2033, %v2040
        %v2043 = vshrl.u32 %v2025, %v2041
        %v2044 = vor.u32 %v2042, %v2043
        %v2045 = vsub.s32 4294967266, %v2040
        %v2046 = vadd.s32 %v2045, 127
        %v2047 = vshll.u32 %v2046, 23
        %v2048 = vor.u32 4788187, %v2047
        %v2049 = vand.u32 2147483647, %v2048
        %v2051 = vcvt.s32.f32 %v2044
        %v2052 = vmul.f32 %v2051, %v2049
        %v2053 = vxor.u32 %v2052, 2147483648
        %v2054 = vsel %vm1971, %v2053, %v2052
        %v2055 = vsub.s32 4, %v2031
        %v2056 = vsel %vm1971, %v2055, %v2031
        %v2057 = vsel %vm1970, %v1343, %v2054
        %v2058 = vsel %vm1970, 0, %v2056
        %v2059 = vcosq.f32.pop %v2057
        %v2060 = vsinq.f32.pop %v2057
        %vm2061 = vweird.f32 %v1343
        %v2062 = vand.u32 %v2058, 3
        %vm2063 = vcmp.lt.s32.totalorder %v2062, 2
        %vm2064 = vcmp.eq.s32.totalorder %v2062, 0
        %v2065 = vxor.u32 %v2060, 2147483648
        %v2066 = vsel %vm2064, %v2059, %v2065
        %vm2067 = vcmp.eq.s32.totalorder %v2062, 2
        %v2068 = vxor.u32 %v2059, 2147483648
        %v2069 = vsel %vm2067, %v2068, %v2060
        %v2070 = vsel %vm2063, %v2066, %v2069
        %v2071 = vsel %vm2061, nan, %v2070
        %v2072 = vand.u32 2147483647, %v1344
        %vm2073 = vcmp.le.f32.partialorder %v2072, 0.7853982
        %vm2074 = vcmp.lt.s32.totalorder %v1344, 0
        %v2075 = vand.u32 %v1344, 2139095040
        %v2076 = vshrl.u32 %v2075, 23
        %v2077 = vsub.s32 %v2076, 127
        %v2078 = vand.u32 2147483647, %v1344
        %v2079 = vand.u32 %v2078, 8388607
        %v2080 = vor.u32 %v2079, 8388608
        %v2081 = vsub.s32 0, %v2080
        %v2082 = vadd.s32 %v2077, 1
        %vm2083 = vcmp.gt.s32.totalorder %v2082, 0
        %v2084 = vsel %vm2083, %v2082, 0
        %v2085 = vshrl.u32 %v2084, 5
        %v2086 = vand.u32 %v2084, 31
        %v2087 = vsub.s32 32, %v2086
        %v2088 = vshrl.u32 683565275, %v2087
        %v2089 = vshll.u32 683565275, %v2086
        %v2090 = vshrl.u32 2475754826, %v2087
        %v2091 = vor.u32 %v2089, %v2090
        %v2092 = vshll.u32 2475754826, %v2086
        %v2093 = vshrl.u32 2131351028, %v2087
        %v2094 = vor.u32 %v2092, %v2093
        %v2095 = vshll.u32 2131351028, %v2086
        %v2096 = vshrl.u32 2102212464, %v2087
        %v2097 = vor.u32 %v2095, %v2096
        %v2098 = vshll.u32 2102212464, %v2086
        %v2099 = vshrl.u32 920167782, %v2087
        %v2100 = vor.u32 %v2098, %v2099
        %v2101 = vshll.u32 920167782, %v2086
        %v2102 = vshrl.u32 1326507024, %v2087
        %v2103 = vor.u32 %v2101, %v2102
        %vm2104 = vcmp.lt.s32.totalorder %v2085, 1
        %vm2105 = vcmp.lt.s32.totalorder %v2085, 2
        %vm2106 = vcmp.lt.s32.totalorder %v2085, 3
        %vm2107 = vcmp.lt.s32.totalorder %v2085, 4
        %v2108 = vsel %vm2104, %v2088, %v2091
        %v2109 = vsel %vm2107, %v2097, 2102212464
        %v2110 = vsel %vm2106, %v2094, %v2109
        %v2111 = vsel %vm2105, %v2108, %v2110
        %v2112 = vsel %vm2104, %v2091, %v2094
        %v2113 = vsel %vm2107, %v2100, 920167782
        %v2114 = vsel %vm2106, %v2097, %v2113
        %v2115 = vsel %vm2105, %v2112, %v2114
        %v2116 = vsel %vm2104, %v2094, %v2097
        %v2117 = vsel %vm2107, %v2103, 1326507024
        %v2118 = vsel %vm2106, %v2100, %v2117
        %v2119 = vsel %vm2105, %v2116, %v2118
        %v2120 = vshll.u32 %v2080, 8
        %v2121 = vmul.u32.u64.compose %v2120, %v2119
        %v2122 = vextract.low.u32 %v2121
        %v2123 = vextract.high.u32 %v2121
        %v2124 = vmul.u32.u64.compose %v2120, %v2115
        %v2125 = vextract.low.u32 %v2124
        %v2126 = vextract.high.u32 %v2124
        %v2127 = vmul.u32 %v2120, %v2111
        %v2128 = vadd.s32 %v2123, %v2125
        %vm2129 = vc.u32 %v2123, %v2125
        %v2130 = vadd.s32 %v2126, 1
        %v2131 = vsel %vm2129, %v2130, %v2126
        %v2132 = vadd.s32 %v2127, %v2131
        %v2133 = vadd.s32 %v2132, 536870912
        %v2134 = vshrl.u32 %v2133, 30
        %v2135 = vshll.u32 %v2134, 30
        %v2136 = vsub.s32 %v2132, %v2135
        %vm2137 = vcmp.lt.s32.totalorder %v2136, 0
        %v2138 = vsub.s32 0, %v2136
        %v2139 = vsel %vm2137, %v2138, %v2136
        %v2140 = vclz %v2139
        %v2141 = vsub.s32 %v2140, 2
        %vm2142 = vcmp.gt.s32.totalorder 0, %v2141
        %v2143 = vsel %vm2142, 0, %v2141
        %v2144 = vsub.s32 32, %v2143
        %v2145 = vshll.u32 %v2136, %v2143
        %v2146 = vshrl.u32 %v2128, %v2144
        %v2147 = vor.u32 %v2145, %v2146
        %v2148 = vsub.s32 4294967266, %v2143
        %v2149 = vadd.s32 %v2148, 127
        %v2150 = vshll.u32 %v2149, 23
        %v2151 = vor.u32 4788187, %v2150
        %v2152 = vand.u32 2147483647, %v2151
        %v2154 = vcvt.s32.f32 %v2147
        %v2155 = vmul.f32 %v2154, %v2152
        %v2156 = vxor.u32 %v2155, 2147483648
        %v2157 = vsel %vm2074, %v2156, %v2155
        %v2158 = vsub.s32 4, %v2134
        %v2159 = vsel %vm2074, %v2158, %v2134
        %v2160 = vsel %vm2073, %v1344, %v2157
        %v2161 = vsel %vm2073, 0, %v2159
        %v2162 = vcosq.f32.pop %v2160
        %v2163 = vsinq.f32.pop %v2160
        %vm2164 = vweird.f32 %v1344
        %v2165 = vand.u32 %v2161, 3
        %vm2166 = vcmp.lt.s32.totalorder %v2165, 2
        %vm2167 = vcmp.eq.s32.totalorder %v2165, 0
        %v2168 = vxor.u32 %v2163, 2147483648
        %v2169 = vsel %vm2167, %v2162, %v2168
        %vm2170 = vcmp.eq.s32.totalorder %v2165, 2
        %v2171 = vxor.u32 %v2162, 2147483648
        %v2172 = vsel %vm2170, %v2171, %v2163
        %v2173 = vsel %vm2166, %v2169, %v2172
        %v2174 = vsel %vm2164, nan, %v2173
        %v2175 = vand.u32 2147483647, %v1345
        %vm2176 = vcmp.le.f32.partialorder %v2175, 0.7853982
        %vm2177 = vcmp.lt.s32.totalorder %v1345, 0
        %v2178 = vand.u32 %v1345, 2139095040
        %v2179 = vshrl.u32 %v2178, 23
        %v2180 = vsub.s32 %v2179, 127
        %v2181 = vand.u32 2147483647, %v1345
        %v2182 = vand.u32 %v2181, 8388607
        %v2183 = vor.u32 %v2182, 8388608
        %v2184 = vsub.s32 0, %v2183
        %v2185 = vadd.s32 %v2180, 1
        %vm2186 = vcmp.gt.s32.totalorder %v2185, 0
        %v2187 = vsel %vm2186, %v2185, 0
        %v2188 = vshrl.u32 %v2187, 5
        %v2189 = vand.u32 %v2187, 31
        %v2190 = vsub.s32 32, %v2189
        %v2191 = vshrl.u32 683565275, %v2190
        %v2192 = vshll.u32 683565275, %v2189
        %v2193 = vshrl.u32 2475754826, %v2190
        %v2194 = vor.u32 %v2192, %v2193
        %v2195 = vshll.u32 2475754826, %v2189
        %v2196 = vshrl.u32 2131351028, %v2190
        %v2197 = vor.u32 %v2195, %v2196
        %v2198 = vshll.u32 2131351028, %v2189
        %v2199 = vshrl.u32 2102212464, %v2190
        %v2200 = vor.u32 %v2198, %v2199
        %v2201 = vshll.u32 2102212464, %v2189
        %v2202 = vshrl.u32 920167782, %v2190
        %v2203 = vor.u32 %v2201, %v2202
        %v2204 = vshll.u32 920167782, %v2189
        %v2205 = vshrl.u32 1326507024, %v2190
        %v2206 = vor.u32 %v2204, %v2205
        %vm2207 = vcmp.lt.s32.totalorder %v2188, 1
        %vm2208 = vcmp.lt.s32.totalorder %v2188, 2
        %vm2209 = vcmp.lt.s32.totalorder %v2188, 3
        %vm2210 = vcmp.lt.s32.totalorder %v2188, 4
        %v2211 = vsel %vm2207, %v2191, %v2194
        %v2212 = vsel %vm2210, %v2200, 2102212464
        %v2213 = vsel %vm2209, %v2197, %v2212
        %v2214 = vsel %vm2208, %v2211, %v2213
        %v2215 = vsel %vm2207, %v2194, %v2197
        %v2216 = vsel %vm2210, %v2203, 920167782
        %v2217 = vsel %vm2209, %v2200, %v2216
        %v2218 = vsel %vm2208, %v2215, %v2217
        %v2219 = vsel %vm2207, %v2197, %v2200
        %v2220 = vsel %vm2210, %v2206, 1326507024
        %v2221 = vsel %vm2209, %v2203, %v2220
        %v2222 = vsel %vm2208, %v2219, %v2221
        %v2223 = vshll.u32 %v2183, 8
        %v2224 = vmul.u32.u64.compose %v2223, %v2222
        %v2225 = vextract.low.u32 %v2224
        %v2226 = vextract.high.u32 %v2224
        %v2227 = vmul.u32.u64.compose %v2223, %v2218
        %v2228 = vextract.low.u32 %v2227
        %v2229 = vextract.high.u32 %v2227
        %v2230 = vmul.u32 %v2223, %v2214
        %v2231 = vadd.s32 %v2226, %v2228
        %vm2232 = vc.u32 %v2226, %v2228
        %v2233 = vadd.s32 %v2229, 1
        %v2234 = vsel %vm2232, %v2233, %v2229
        %v2235 = vadd.s32 %v2230, %v2234
        %v2236 = vadd.s32 %v2235, 536870912
        %v2237 = vshrl.u32 %v2236, 30
        %v2238 = vshll.u32 %v2237, 30
        %v2239 = vsub.s32 %v2235, %v2238
        %vm2240 = vcmp.lt.s32.totalorder %v2239, 0
        %v2241 = vsub.s32 0, %v2239
        %v2242 = vsel %vm2240, %v2241, %v2239
        %v2243 = vclz %v2242
        %v2244 = vsub.s32 %v2243, 2
        %vm2245 = vcmp.gt.s32.totalorder 0, %v2244
        %v2246 = vsel %vm2245, 0, %v2244
        %v2247 = vsub.s32 32, %v2246
        %v2248 = vshll.u32 %v2239, %v2246
        %v2249 = vshrl.u32 %v2231, %v2247
        %v2250 = vor.u32 %v2248, %v2249
        %v2251 = vsub.s32 4294967266, %v2246
        %v2252 = vadd.s32 %v2251, 127
        %v2253 = vshll.u32 %v2252, 23
        %v2254 = vor.u32 4788187, %v2253
        %v2255 = vand.u32 2147483647, %v2254
        %v2257 = vcvt.s32.f32 %v2250
        %v2258 = vmul.f32 %v2257, %v2255
        %v2259 = vxor.u32 %v2258, 2147483648
        %v2260 = vsel %vm2177, %v2259, %v2258
        %v2261 = vsub.s32 4, %v2237
        %v2262 = vsel %vm2177, %v2261, %v2237
        %v2263 = vsel %vm2176, %v1345, %v2260
        %v2264 = vsel %vm2176, 0, %v2262
        %v2265 = vcosq.f32.pop %v2263
        %v2266 = vsinq.f32.pop %v2263
        %vm2267 = vweird.f32 %v1345
        %v2268 = vand.u32 %v2264, 3
        %vm2269 = vcmp.lt.s32.totalorder %v2268, 2
        %vm2270 = vcmp.eq.s32.totalorder %v2268, 0
        %v2271 = vxor.u32 %v2266, 2147483648
        %v2272 = vsel %vm2270, %v2265, %v2271
        %vm2273 = vcmp.eq.s32.totalorder %v2268, 2
        %v2274 = vxor.u32 %v2265, 2147483648
        %v2275 = vsel %vm2273, %v2274, %v2266
        %v2276 = vsel %vm2269, %v2272, %v2275
        %v2277 = vsel %vm2267, nan, %v2276
        %v2278 = vand.u32 2147483647, %v1346
        %vm2279 = vcmp.le.f32.partialorder %v2278, 0.7853982
        %vm2280 = vcmp.lt.s32.totalorder %v1346, 0
        %v2281 = vand.u32 %v1346, 2139095040
        %v2282 = vshrl.u32 %v2281, 23
        %v2283 = vsub.s32 %v2282, 127
        %v2284 = vand.u32 2147483647, %v1346
        %v2285 = vand.u32 %v2284, 8388607
        %v2286 = vor.u32 %v2285, 8388608
        %v2287 = vsub.s32 0, %v2286
        %v2288 = vadd.s32 %v2283, 1
        %vm2289 = vcmp.gt.s32.totalorder %v2288, 0
        %v2290 = vsel %vm2289, %v2288, 0
        %v2291 = vshrl.u32 %v2290, 5
        %v2292 = vand.u32 %v2290, 31
        %v2293 = vsub.s32 32, %v2292
        %v2294 = vshrl.u32 683565275, %v2293
        %v2295 = vshll.u32 683565275, %v2292
        %v2296 = vshrl.u32 2475754826, %v2293
        %v2297 = vor.u32 %v2295, %v2296
        %v2298 = vshll.u32 2475754826, %v2292
        %v2299 = vshrl.u32 2131351028, %v2293
        %v2300 = vor.u32 %v2298, %v2299
        %v2301 = vshll.u32 2131351028, %v2292
        %v2302 = vshrl.u32 2102212464, %v2293
        %v2303 = vor.u32 %v2301, %v2302
        %v2304 = vshll.u32 2102212464, %v2292
        %v2305 = vshrl.u32 920167782, %v2293
        %v2306 = vor.u32 %v2304, %v2305
        %v2307 = vshll.u32 920167782, %v2292
        %v2308 = vshrl.u32 1326507024, %v2293
        %v2309 = vor.u32 %v2307, %v2308
        %vm2310 = vcmp.lt.s32.totalorder %v2291, 1
        %vm2311 = vcmp.lt.s32.totalorder %v2291, 2
        %vm2312 = vcmp.lt.s32.totalorder %v2291, 3
        %vm2313 = vcmp.lt.s32.totalorder %v2291, 4
        %v2314 = vsel %vm2310, %v2294, %v2297
        %v2315 = vsel %vm2313, %v2303, 2102212464
        %v2316 = vsel %vm2312, %v2300, %v2315
        %v2317 = vsel %vm2311, %v2314, %v2316
        %v2318 = vsel %vm2310, %v2297, %v2300
        %v2319 = vsel %vm2313, %v2306, 920167782
        %v2320 = vsel %vm2312, %v2303, %v2319
        %v2321 = vsel %vm2311, %v2318, %v2320
        %v2322 = vsel %vm2310, %v2300, %v2303
        %v2323 = vsel %vm2313, %v2309, 1326507024
        %v2324 = vsel %vm2312, %v2306, %v2323
        %v2325 = vsel %vm2311, %v2322, %v2324
        %v2326 = vshll.u32 %v2286, 8
        %v2327 = vmul.u32.u64.compose %v2326, %v2325
        %v2328 = vextract.low.u32 %v2327
        %v2329 = vextract.high.u32 %v2327
        %v2330 = vmul.u32.u64.compose %v2326, %v2321
        %v2331 = vextract.low.u32 %v2330
        %v2332 = vextract.high.u32 %v2330
        %v2333 = vmul.u32 %v2326, %v2317
        %v2334 = vadd.s32 %v2329, %v2331
        %vm2335 = vc.u32 %v2329, %v2331
        %v2336 = vadd.s32 %v2332, 1
        %v2337 = vsel %vm2335, %v2336, %v2332
        %v2338 = vadd.s32 %v2333, %v2337
        %v2339 = vadd.s32 %v2338, 536870912
        %v2340 = vshrl.u32 %v2339, 30
        %v2341 = vshll.u32 %v2340, 30
        %v2342 = vsub.s32 %v2338, %v2341
        %vm2343 = vcmp.lt.s32.totalorder %v2342, 0
        %v2344 = vsub.s32 0, %v2342
        %v2345 = vsel %vm2343, %v2344, %v2342
        %v2346 = vclz %v2345
        %v2347 = vsub.s32 %v2346, 2
        %vm2348 = vcmp.gt.s32.totalorder 0, %v2347
        %v2349 = vsel %vm2348, 0, %v2347
        %v2350 = vsub.s32 32, %v2349
        %v2351 = vshll.u32 %v2342, %v2349
        %v2352 = vshrl.u32 %v2334, %v2350
        %v2353 = vor.u32 %v2351, %v2352
        %v2354 = vsub.s32 4294967266, %v2349
        %v2355 = vadd.s32 %v2354, 127
        %v2356 = vshll.u32 %v2355, 23
        %v2357 = vor.u32 4788187, %v2356
        %v2358 = vand.u32 2147483647, %v2357
        %v2360 = vcvt.s32.f32 %v2353
        %v2361 = vmul.f32 %v2360, %v2358
        %v2362 = vxor.u32 %v2361, 2147483648
        %v2363 = vsel %vm2280, %v2362, %v2361
        %v2364 = vsub.s32 4, %v2340
        %v2365 = vsel %vm2280, %v2364, %v2340
        %v2366 = vsel %vm2279, %v1346, %v2363
        %v2367 = vsel %vm2279, 0, %v2365
        %v2368 = vcosq.f32.pop %v2366
        %v2369 = vsinq.f32.pop %v2366
        %vm2370 = vweird.f32 %v1346
        %v2371 = vand.u32 %v2367, 3
        %vm2372 = vcmp.lt.s32.totalorder %v2371, 2
        %vm2373 = vcmp.eq.s32.totalorder %v2371, 0
        %v2374 = vxor.u32 %v2369, 2147483648
        %v2375 = vsel %vm2373, %v2368, %v2374
        %vm2376 = vcmp.eq.s32.totalorder %v2371, 2
        %v2377 = vxor.u32 %v2368, 2147483648
        %v2378 = vsel %vm2376, %v2377, %v2369
        %v2379 = vsel %vm2372, %v2375, %v2378
        %v2380 = vsel %vm2370, nan, %v2379
        %v2381 = vand.u32 2147483647, %v1347
        %vm2382 = vcmp.le.f32.partialorder %v2381, 0.7853982
        %vm2383 = vcmp.lt.s32.totalorder %v1347, 0
        %v2384 = vand.u32 %v1347, 2139095040
        %v2385 = vshrl.u32 %v2384, 23
        %v2386 = vsub.s32 %v2385, 127
        %v2387 = vand.u32 2147483647, %v1347
        %v2388 = vand.u32 %v2387, 8388607
        %v2389 = vor.u32 %v2388, 8388608
        %v2390 = vsub.s32 0, %v2389
        %v2391 = vadd.s32 %v2386, 1
        %vm2392 = vcmp.gt.s32.totalorder %v2391, 0
        %v2393 = vsel %vm2392, %v2391, 0
        %v2394 = vshrl.u32 %v2393, 5
        %v2395 = vand.u32 %v2393, 31
        %v2396 = vsub.s32 32, %v2395
        %v2397 = vshrl.u32 683565275, %v2396
        %v2398 = vshll.u32 683565275, %v2395
        %v2399 = vshrl.u32 2475754826, %v2396
        %v2400 = vor.u32 %v2398, %v2399
        %v2401 = vshll.u32 2475754826, %v2395
        %v2402 = vshrl.u32 2131351028, %v2396
        %v2403 = vor.u32 %v2401, %v2402
        %v2404 = vshll.u32 2131351028, %v2395
        %v2405 = vshrl.u32 2102212464, %v2396
        %v2406 = vor.u32 %v2404, %v2405
        %v2407 = vshll.u32 2102212464, %v2395
        %v2408 = vshrl.u32 920167782, %v2396
        %v2409 = vor.u32 %v2407, %v2408
        %v2410 = vshll.u32 920167782, %v2395
        %v2411 = vshrl.u32 1326507024, %v2396
        %v2412 = vor.u32 %v2410, %v2411
        %vm2413 = vcmp.lt.s32.totalorder %v2394, 1
        %vm2414 = vcmp.lt.s32.totalorder %v2394, 2
        %vm2415 = vcmp.lt.s32.totalorder %v2394, 3
        %vm2416 = vcmp.lt.s32.totalorder %v2394, 4
        %v2417 = vsel %vm2413, %v2397, %v2400
        %v2418 = vsel %vm2416, %v2406, 2102212464
        %v2419 = vsel %vm2415, %v2403, %v2418
        %v2420 = vsel %vm2414, %v2417, %v2419
        %v2421 = vsel %vm2413, %v2400, %v2403
        %v2422 = vsel %vm2416, %v2409, 920167782
        %v2423 = vsel %vm2415, %v2406, %v2422
        %v2424 = vsel %vm2414, %v2421, %v2423
        %v2425 = vsel %vm2413, %v2403, %v2406
        %v2426 = vsel %vm2416, %v2412, 1326507024
        %v2427 = vsel %vm2415, %v2409, %v2426
        %v2428 = vsel %vm2414, %v2425, %v2427
        %v2429 = vshll.u32 %v2389, 8
        %v2430 = vmul.u32.u64.compose %v2429, %v2428
        %v2431 = vextract.low.u32 %v2430
        %v2432 = vextract.high.u32 %v2430
        %v2433 = vmul.u32.u64.compose %v2429, %v2424
        %v2434 = vextract.low.u32 %v2433
        %v2435 = vextract.high.u32 %v2433
        %v2436 = vmul.u32 %v2429, %v2420
        %v2437 = vadd.s32 %v2432, %v2434
        %vm2438 = vc.u32 %v2432, %v2434
        %v2439 = vadd.s32 %v2435, 1
        %v2440 = vsel %vm2438, %v2439, %v2435
        %v2441 = vadd.s32 %v2436, %v2440
        %v2442 = vadd.s32 %v2441, 536870912
        %v2443 = vshrl.u32 %v2442, 30
        %v2444 = vshll.u32 %v2443, 30
        %v2445 = vsub.s32 %v2441, %v2444
        %vm2446 = vcmp.lt.s32.totalorder %v2445, 0
        %v2447 = vsub.s32 0, %v2445
        %v2448 = vsel %vm2446, %v2447, %v2445
        %v2449 = vclz %v2448
        %v2450 = vsub.s32 %v2449, 2
        %vm2451 = vcmp.gt.s32.totalorder 0, %v2450
        %v2452 = vsel %vm2451, 0, %v2450
        %v2453 = vsub.s32 32, %v2452
        %v2454 = vshll.u32 %v2445, %v2452
        %v2455 = vshrl.u32 %v2437, %v2453
        %v2456 = vor.u32 %v2454, %v2455
        %v2457 = vsub.s32 4294967266, %v2452
        %v2458 = vadd.s32 %v2457, 127
        %v2459 = vshll.u32 %v2458, 23
        %v2460 = vor.u32 4788187, %v2459
        %v2461 = vand.u32 2147483647, %v2460
        %v2463 = vcvt.s32.f32 %v2456
        %v2464 = vmul.f32 %v2463, %v2461
        %v2465 = vxor.u32 %v2464, 2147483648
        %v2466 = vsel %vm2383, %v2465, %v2464
        %v2467 = vsub.s32 4, %v2443
        %v2468 = vsel %vm2383, %v2467, %v2443
        %v2469 = vsel %vm2382, %v1347, %v2466
        %v2470 = vsel %vm2382, 0, %v2468
        %v2471 = vcosq.f32.pop %v2469
        %v2472 = vsinq.f32.pop %v2469
        %vm2473 = vweird.f32 %v1347
        %v2474 = vand.u32 %v2470, 3
        %vm2475 = vcmp.lt.s32.totalorder %v2474, 2
        %vm2476 = vcmp.eq.s32.totalorder %v2474, 0
        %v2477 = vxor.u32 %v2472, 2147483648
        %v2478 = vsel %vm2476, %v2471, %v2477
        %vm2479 = vcmp.eq.s32.totalorder %v2474, 2
        %v2480 = vxor.u32 %v2471, 2147483648
        %v2481 = vsel %vm2479, %v2480, %v2472
        %v2482 = vsel %vm2475, %v2478, %v2481
        %v2483 = vsel %vm2473, nan, %v2482
        %v2484 = vand.u32 2147483647, %v1348
        %vm2485 = vcmp.le.f32.partialorder %v2484, 0.7853982
        %vm2486 = vcmp.lt.s32.totalorder %v1348, 0
        %v2487 = vand.u32 %v1348, 2139095040
        %v2488 = vshrl.u32 %v2487, 23
        %v2489 = vsub.s32 %v2488, 127
        %v2490 = vand.u32 2147483647, %v1348
        %v2491 = vand.u32 %v2490, 8388607
        %v2492 = vor.u32 %v2491, 8388608
        %v2493 = vsub.s32 0, %v2492
        %v2494 = vadd.s32 %v2489, 1
        %vm2495 = vcmp.gt.s32.totalorder %v2494, 0
        %v2496 = vsel %vm2495, %v2494, 0
        %v2497 = vshrl.u32 %v2496, 5
        %v2498 = vand.u32 %v2496, 31
        %v2499 = vsub.s32 32, %v2498
        %v2500 = vshrl.u32 683565275, %v2499
        %v2501 = vshll.u32 683565275, %v2498
        %v2502 = vshrl.u32 2475754826, %v2499
        %v2503 = vor.u32 %v2501, %v2502
        %v2504 = vshll.u32 2475754826, %v2498
        %v2505 = vshrl.u32 2131351028, %v2499
        %v2506 = vor.u32 %v2504, %v2505
        %v2507 = vshll.u32 2131351028, %v2498
        %v2508 = vshrl.u32 2102212464, %v2499
        %v2509 = vor.u32 %v2507, %v2508
        %v2510 = vshll.u32 2102212464, %v2498
        %v2511 = vshrl.u32 920167782, %v2499
        %v2512 = vor.u32 %v2510, %v2511
        %v2513 = vshll.u32 920167782, %v2498
        %v2514 = vshrl.u32 1326507024, %v2499
        %v2515 = vor.u32 %v2513, %v2514
        %vm2516 = vcmp.lt.s32.totalorder %v2497, 1
        %vm2517 = vcmp.lt.s32.totalorder %v2497, 2
        %vm2518 = vcmp.lt.s32.totalorder %v2497, 3
        %vm2519 = vcmp.lt.s32.totalorder %v2497, 4
        %v2520 = vsel %vm2516, %v2500, %v2503
        %v2521 = vsel %vm2519, %v2509, 2102212464
        %v2522 = vsel %vm2518, %v2506, %v2521
        %v2523 = vsel %vm2517, %v2520, %v2522
        %v2524 = vsel %vm2516, %v2503, %v2506
        %v2525 = vsel %vm2519, %v2512, 920167782
        %v2526 = vsel %vm2518, %v2509, %v2525
        %v2527 = vsel %vm2517, %v2524, %v2526
        %v2528 = vsel %vm2516, %v2506, %v2509
        %v2529 = vsel %vm2519, %v2515, 1326507024
        %v2530 = vsel %vm2518, %v2512, %v2529
        %v2531 = vsel %vm2517, %v2528, %v2530
        %v2532 = vshll.u32 %v2492, 8
        %v2533 = vmul.u32.u64.compose %v2532, %v2531
        %v2534 = vextract.low.u32 %v2533
        %v2535 = vextract.high.u32 %v2533
        %v2536 = vmul.u32.u64.compose %v2532, %v2527
        %v2537 = vextract.low.u32 %v2536
        %v2538 = vextract.high.u32 %v2536
        %v2539 = vmul.u32 %v2532, %v2523
        %v2540 = vadd.s32 %v2535, %v2537
        %vm2541 = vc.u32 %v2535, %v2537
        %v2542 = vadd.s32 %v2538, 1
        %v2543 = vsel %vm2541, %v2542, %v2538
        %v2544 = vadd.s32 %v2539, %v2543
        %v2545 = vadd.s32 %v2544, 536870912
        %v2546 = vshrl.u32 %v2545, 30
        %v2547 = vshll.u32 %v2546, 30
        %v2548 = vsub.s32 %v2544, %v2547
        %vm2549 = vcmp.lt.s32.totalorder %v2548, 0
        %v2550 = vsub.s32 0, %v2548
        %v2551 = vsel %vm2549, %v2550, %v2548
        %v2552 = vclz %v2551
        %v2553 = vsub.s32 %v2552, 2
        %vm2554 = vcmp.gt.s32.totalorder 0, %v2553
        %v2555 = vsel %vm2554, 0, %v2553
        %v2556 = vsub.s32 32, %v2555
        %v2557 = vshll.u32 %v2548, %v2555
        %v2558 = vshrl.u32 %v2540, %v2556
        %v2559 = vor.u32 %v2557, %v2558
        %v2560 = vsub.s32 4294967266, %v2555
        %v2561 = vadd.s32 %v2560, 127
        %v2562 = vshll.u32 %v2561, 23
        %v2563 = vor.u32 4788187, %v2562
        %v2564 = vand.u32 2147483647, %v2563
        %v2566 = vcvt.s32.f32 %v2559
        %v2567 = vmul.f32 %v2566, %v2564
        %v2568 = vxor.u32 %v2567, 2147483648
        %v2569 = vsel %vm2486, %v2568, %v2567
        %v2570 = vsub.s32 4, %v2546
        %v2571 = vsel %vm2486, %v2570, %v2546
        %v2572 = vsel %vm2485, %v1348, %v2569
        %v2573 = vsel %vm2485, 0, %v2571
        %v2574 = vcosq.f32.pop %v2572
        %v2575 = vsinq.f32.pop %v2572
        %vm2576 = vweird.f32 %v1348
        %v2577 = vand.u32 %v2573, 3
        %vm2578 = vcmp.lt.s32.totalorder %v2577, 2
        %vm2579 = vcmp.eq.s32.totalorder %v2577, 0
        %v2580 = vxor.u32 %v2575, 2147483648
        %v2581 = vsel %vm2579, %v2574, %v2580
        %vm2582 = vcmp.eq.s32.totalorder %v2577, 2
        %v2583 = vxor.u32 %v2574, 2147483648
        %v2584 = vsel %vm2582, %v2583, %v2575
        %v2585 = vsel %vm2578, %v2581, %v2584
        %v2586 = vsel %vm2576, nan, %v2585
        %v2587 = vand.u32 2147483647, %v1349
        %vm2588 = vcmp.le.f32.partialorder %v2587, 0.7853982
        %vm2589 = vcmp.lt.s32.totalorder %v1349, 0
        %v2590 = vand.u32 %v1349, 2139095040
        %v2591 = vshrl.u32 %v2590, 23
        %v2592 = vsub.s32 %v2591, 127
        %v2593 = vand.u32 2147483647, %v1349
        %v2594 = vand.u32 %v2593, 8388607
        %v2595 = vor.u32 %v2594, 8388608
        %v2596 = vsub.s32 0, %v2595
        %v2597 = vadd.s32 %v2592, 1
        %vm2598 = vcmp.gt.s32.totalorder %v2597, 0
        %v2599 = vsel %vm2598, %v2597, 0
        %v2600 = vshrl.u32 %v2599, 5
        %v2601 = vand.u32 %v2599, 31
        %v2602 = vsub.s32 32, %v2601
        %v2603 = vshrl.u32 683565275, %v2602
        %v2604 = vshll.u32 683565275, %v2601
        %v2605 = vshrl.u32 2475754826, %v2602
        %v2606 = vor.u32 %v2604, %v2605
        %v2607 = vshll.u32 2475754826, %v2601
        %v2608 = vshrl.u32 2131351028, %v2602
        %v2609 = vor.u32 %v2607, %v2608
        %v2610 = vshll.u32 2131351028, %v2601
        %v2611 = vshrl.u32 2102212464, %v2602
        %v2612 = vor.u32 %v2610, %v2611
        %v2613 = vshll.u32 2102212464, %v2601
        %v2614 = vshrl.u32 920167782, %v2602
        %v2615 = vor.u32 %v2613, %v2614
        %v2616 = vshll.u32 920167782, %v2601
        %v2617 = vshrl.u32 1326507024, %v2602
        %v2618 = vor.u32 %v2616, %v2617
        %vm2619 = vcmp.lt.s32.totalorder %v2600, 1
        %vm2620 = vcmp.lt.s32.totalorder %v2600, 2
        %vm2621 = vcmp.lt.s32.totalorder %v2600, 3
        %vm2622 = vcmp.lt.s32.totalorder %v2600, 4
        %v2623 = vsel %vm2619, %v2603, %v2606
        %v2624 = vsel %vm2622, %v2612, 2102212464
        %v2625 = vsel %vm2621, %v2609, %v2624
        %v2626 = vsel %vm2620, %v2623, %v2625
        %v2627 = vsel %vm2619, %v2606, %v2609
        %v2628 = vsel %vm2622, %v2615, 920167782
        %v2629 = vsel %vm2621, %v2612, %v2628
        %v2630 = vsel %vm2620, %v2627, %v2629
        %v2631 = vsel %vm2619, %v2609, %v2612
        %v2632 = vsel %vm2622, %v2618, 1326507024
        %v2633 = vsel %vm2621, %v2615, %v2632
        %v2634 = vsel %vm2620, %v2631, %v2633
        %v2635 = vshll.u32 %v2595, 8
        %v2636 = vmul.u32.u64.compose %v2635, %v2634
        %v2637 = vextract.low.u32 %v2636
        %v2638 = vextract.high.u32 %v2636
        %v2639 = vmul.u32.u64.compose %v2635, %v2630
        %v2640 = vextract.low.u32 %v2639
        %v2641 = vextract.high.u32 %v2639
        %v2642 = vmul.u32 %v2635, %v2626
        %v2643 = vadd.s32 %v2638, %v2640
        %vm2644 = vc.u32 %v2638, %v2640
        %v2645 = vadd.s32 %v2641, 1
        %v2646 = vsel %vm2644, %v2645, %v2641
        %v2647 = vadd.s32 %v2642, %v2646
        %v2648 = vadd.s32 %v2647, 536870912
        %v2649 = vshrl.u32 %v2648, 30
        %v2650 = vshll.u32 %v2649, 30
        %v2651 = vsub.s32 %v2647, %v2650
        %vm2652 = vcmp.lt.s32.totalorder %v2651, 0
        %v2653 = vsub.s32 0, %v2651
        %v2654 = vsel %vm2652, %v2653, %v2651
        %v2655 = vclz %v2654
        %v2656 = vsub.s32 %v2655, 2
        %vm2657 = vcmp.gt.s32.totalorder 0, %v2656
        %v2658 = vsel %vm2657, 0, %v2656
        %v2659 = vsub.s32 32, %v2658
        %v2660 = vshll.u32 %v2651, %v2658
        %v2661 = vshrl.u32 %v2643, %v2659
        %v2662 = vor.u32 %v2660, %v2661
        %v2663 = vsub.s32 4294967266, %v2658
        %v2664 = vadd.s32 %v2663, 127
        %v2665 = vshll.u32 %v2664, 23
        %v2666 = vor.u32 4788187, %v2665
        %v2667 = vand.u32 2147483647, %v2666
        %v2669 = vcvt.s32.f32 %v2662
        %v2670 = vmul.f32 %v2669, %v2667
        %v2671 = vxor.u32 %v2670, 2147483648
        %v2672 = vsel %vm2589, %v2671, %v2670
        %v2673 = vsub.s32 4, %v2649
        %v2674 = vsel %vm2589, %v2673, %v2649
        %v2675 = vsel %vm2588, %v1349, %v2672
        %v2676 = vsel %vm2588, 0, %v2674
        %v2677 = vcosq.f32.pop %v2675
        %v2678 = vsinq.f32.pop %v2675
        %vm2679 = vweird.f32 %v1349
        %v2680 = vand.u32 %v2676, 3
        %vm2681 = vcmp.lt.s32.totalorder %v2680, 2
        %vm2682 = vcmp.eq.s32.totalorder %v2680, 0
        %v2683 = vxor.u32 %v2678, 2147483648
        %v2684 = vsel %vm2682, %v2677, %v2683
        %vm2685 = vcmp.eq.s32.totalorder %v2680, 2
        %v2686 = vxor.u32 %v2677, 2147483648
        %v2687 = vsel %vm2685, %v2686, %v2678
        %v2688 = vsel %vm2681, %v2684, %v2687
        %v2689 = vsel %vm2679, nan, %v2688
        %v2690 = vand.u32 2147483647, %v1350
        %vm2691 = vcmp.le.f32.partialorder %v2690, 0.7853982
        %vm2692 = vcmp.lt.s32.totalorder %v1350, 0
        %v2693 = vand.u32 %v1350, 2139095040
        %v2694 = vshrl.u32 %v2693, 23
        %v2695 = vsub.s32 %v2694, 127
        %v2696 = vand.u32 2147483647, %v1350
        %v2697 = vand.u32 %v2696, 8388607
        %v2698 = vor.u32 %v2697, 8388608
        %v2699 = vsub.s32 0, %v2698
        %v2700 = vadd.s32 %v2695, 1
        %vm2701 = vcmp.gt.s32.totalorder %v2700, 0
        %v2702 = vsel %vm2701, %v2700, 0
        %v2703 = vshrl.u32 %v2702, 5
        %v2704 = vand.u32 %v2702, 31
        %v2705 = vsub.s32 32, %v2704
        %v2706 = vshrl.u32 683565275, %v2705
        %v2707 = vshll.u32 683565275, %v2704
        %v2708 = vshrl.u32 2475754826, %v2705
        %v2709 = vor.u32 %v2707, %v2708
        %v2710 = vshll.u32 2475754826, %v2704
        %v2711 = vshrl.u32 2131351028, %v2705
        %v2712 = vor.u32 %v2710, %v2711
        %v2713 = vshll.u32 2131351028, %v2704
        %v2714 = vshrl.u32 2102212464, %v2705
        %v2715 = vor.u32 %v2713, %v2714
        %v2716 = vshll.u32 2102212464, %v2704
        %v2717 = vshrl.u32 920167782, %v2705
        %v2718 = vor.u32 %v2716, %v2717
        %v2719 = vshll.u32 920167782, %v2704
        %v2720 = vshrl.u32 1326507024, %v2705
        %v2721 = vor.u32 %v2719, %v2720
        %vm2722 = vcmp.lt.s32.totalorder %v2703, 1
        %vm2723 = vcmp.lt.s32.totalorder %v2703, 2
        %vm2724 = vcmp.lt.s32.totalorder %v2703, 3
        %vm2725 = vcmp.lt.s32.totalorder %v2703, 4
        %v2726 = vsel %vm2722, %v2706, %v2709
        %v2727 = vsel %vm2725, %v2715, 2102212464
        %v2728 = vsel %vm2724, %v2712, %v2727
        %v2729 = vsel %vm2723, %v2726, %v2728
        %v2730 = vsel %vm2722, %v2709, %v2712
        %v2731 = vsel %vm2725, %v2718, 920167782
        %v2732 = vsel %vm2724, %v2715, %v2731
        %v2733 = vsel %vm2723, %v2730, %v2732
        %v2734 = vsel %vm2722, %v2712, %v2715
        %v2735 = vsel %vm2725, %v2721, 1326507024
        %v2736 = vsel %vm2724, %v2718, %v2735
        %v2737 = vsel %vm2723, %v2734, %v2736
        %v2738 = vshll.u32 %v2698, 8
        %v2739 = vmul.u32.u64.compose %v2738, %v2737
        %v2740 = vextract.low.u32 %v2739
        %v2741 = vextract.high.u32 %v2739
        %v2742 = vmul.u32.u64.compose %v2738, %v2733
        %v2743 = vextract.low.u32 %v2742
        %v2744 = vextract.high.u32 %v2742
        %v2745 = vmul.u32 %v2738, %v2729
        %v2746 = vadd.s32 %v2741, %v2743
        %vm2747 = vc.u32 %v2741, %v2743
        %v2748 = vadd.s32 %v2744, 1
        %v2749 = vsel %vm2747, %v2748, %v2744
        %v2750 = vadd.s32 %v2745, %v2749
        %v2751 = vadd.s32 %v2750, 536870912
        %v2752 = vshrl.u32 %v2751, 30
        %v2753 = vshll.u32 %v2752, 30
        %v2754 = vsub.s32 %v2750, %v2753
        %vm2755 = vcmp.lt.s32.totalorder %v2754, 0
        %v2756 = vsub.s32 0, %v2754
        %v2757 = vsel %vm2755, %v2756, %v2754
        %v2758 = vclz %v2757
        %v2759 = vsub.s32 %v2758, 2
        %vm2760 = vcmp.gt.s32.totalorder 0, %v2759
        %v2761 = vsel %vm2760, 0, %v2759
        %v2762 = vsub.s32 32, %v2761
        %v2763 = vshll.u32 %v2754, %v2761
        %v2764 = vshrl.u32 %v2746, %v2762
        %v2765 = vor.u32 %v2763, %v2764
        %v2766 = vsub.s32 4294967266, %v2761
        %v2767 = vadd.s32 %v2766, 127
        %v2768 = vshll.u32 %v2767, 23
        %v2769 = vor.u32 4788187, %v2768
        %v2770 = vand.u32 2147483647, %v2769
        %v2772 = vcvt.s32.f32 %v2765
        %v2773 = vmul.f32 %v2772, %v2770
        %v2774 = vxor.u32 %v2773, 2147483648
        %v2775 = vsel %vm2692, %v2774, %v2773
        %v2776 = vsub.s32 4, %v2752
        %v2777 = vsel %vm2692, %v2776, %v2752
        %v2778 = vsel %vm2691, %v1350, %v2775
        %v2779 = vsel %vm2691, 0, %v2777
        %v2780 = vcosq.f32.pop %v2778
        %v2781 = vsinq.f32.pop %v2778
        %vm2782 = vweird.f32 %v1350
        %v2783 = vand.u32 %v2779, 3
        %vm2784 = vcmp.lt.s32.totalorder %v2783, 2
        %vm2785 = vcmp.eq.s32.totalorder %v2783, 0
        %v2786 = vxor.u32 %v2781, 2147483648
        %v2787 = vsel %vm2785, %v2780, %v2786
        %vm2788 = vcmp.eq.s32.totalorder %v2783, 2
        %v2789 = vxor.u32 %v2780, 2147483648
        %v2790 = vsel %vm2788, %v2789, %v2781
        %v2791 = vsel %vm2784, %v2787, %v2790
        %v2792 = vsel %vm2782, nan, %v2791
        %v2793 = vadd.f32 %v1453, 1.0
        %v2794 = vadd.f32 %v1556, 1.0
        %v2795 = vadd.f32 %v1659, 1.0
        %v2796 = vadd.f32 %v1762, 1.0
        %v2797 = vadd.f32 %v1865, 1.0
        %v2798 = vadd.f32 %v1968, 1.0
        %v2799 = vadd.f32 %v2071, 1.0
        %v2800 = vadd.f32 %v2174, 1.0
        %v2801 = vadd.f32 %v2277, 1.0
        %v2802 = vadd.f32 %v2380, 1.0
        %v2803 = vadd.f32 %v2483, 1.0
        %v2804 = vadd.f32 %v2586, 1.0
        %v2805 = vadd.f32 %v2689, 1.0
        %v2806 = vadd.f32 %v2792, 1.0
        %v2807 = vmul.f32 %v2793, 0.5
        %v2808 = vmul.f32 %v2794, 0.5
        %v2809 = vmul.f32 %v2795, 0.5
        %v2810 = vmul.f32 %v2796, 0.5
        %v2811 = vmul.f32 %v2797, 0.5
        %v2812 = vmul.f32 %v2798, 0.5
        %v2813 = vmul.f32 %v2799, 0.5
        %v2814 = vmul.f32 %v2800, 0.5
        %v2815 = vmul.f32 %v2801, 0.5
        %v2816 = vmul.f32 %v2802, 0.5
        %v2817 = vmul.f32 %v2803, 0.5
        %v2818 = vmul.f32 %v2804, 0.5
        %v2819 = vmul.f32 %v2805, 0.5
        %v2820 = vmul.f32 %v2806, 0.5
        %vm2821 = vcmp.lt.f32.partialorder %v1177, 10.0
        %vm2822 = vcmp.lt.f32.partialorder %v1178, 10.0
        %vm2823 = vcmp.lt.f32.partialorder %v1179, 10.0
        %vm2824 = vcmp.lt.f32.partialorder %v1180, 10.0
        %vm2825 = vcmp.lt.f32.partialorder %v1181, 10.0
        %vm2826 = vcmp.lt.f32.partialorder %v1182, 10.0
        %vm2827 = vcmp.lt.f32.partialorder %v1183, 10.0
        %vm2828 = vcmp.lt.f32.partialorder %v1184, 10.0
        %vm2829 = vcmp.lt.f32.partialorder %v1185, 10.0
        %vm2830 = vcmp.lt.f32.partialorder %v1186, 10.0
        %vm2831 = vcmp.lt.f32.partialorder %v1187, 10.0
        %vm2832 = vcmp.lt.f32.partialorder %v1188, 10.0
        %vm2833 = vcmp.lt.f32.partialorder %v1189, 10.0
        %vm2834 = vcmp.lt.f32.partialorder %v1190, 10.0
        %vm2835 = vmand %vm1051, %vm2821
        %vm2836 = vmand %vm1052, %vm2822
        %vm2837 = vmand %vm1053, %vm2823
        %vm2838 = vmand %vm1054, %vm2824
        %vm2839 = vmand %vm1055, %vm2825
        %vm2840 = vmand %vm1056, %vm2826
        %vm2841 = vmand %vm1057, %vm2827
        %vm2842 = vmand %vm1058, %vm2828
        %vm2843 = vmand %vm1059, %vm2829
        %vm2844 = vmand %vm1060, %vm2830
        %vm2845 = vmand %vm1061, %vm2831
        %vm2846 = vmand %vm1062, %vm2832
        %vm2847 = vmand %vm1063, %vm2833
        %vm2848 = vmand %vm1064, %vm2834
        %v2849 = vsel %vm2835, %v2807, 0.0
        %v2850 = vsel %vm2836, %v2808, 0.0
        %v2851 = vsel %vm2837, %v2809, 0.0
        %v2852 = vsel %vm2838, %v2810, 0.0
        %v2853 = vsel %vm2839, %v2811, 0.0
        %v2854 = vsel %vm2840, %v2812, 0.0
        %v2855 = vsel %vm2841, %v2813, 0.0
        %v2856 = vsel %vm2842, %v2814, 0.0
        %v2857 = vsel %vm2843, %v2815, 0.0
        %v2858 = vsel %vm2844, %v2816, 0.0
        %v2859 = vsel %vm2845, %v2817, 0.0
        %v2860 = vsel %vm2846, %v2818, 0.0
        %v2861 = vsel %vm2847, %v2819, 0.0
        %v2862 = vsel %vm2848, %v2820, 0.0
        %v2863 = vpack.c.bf16 %v1312, %v1310
        %v2864 = vpack.c.bf16 %v1316, %v1314
        %v2865 = vpack.c.bf16 %v1320, %v1318
        %v2866 = vpack.c.bf16 %v1324, %v1322
        %v2867 = vpack.c.bf16 %v1328, %v1326
        %v2868 = vpack.c.bf16 %v1332, %v1330
        %v2869 = vpack.c.bf16 %v1336, %v1334
        %v2870 = vld [vmem:[%s5] sm:$0xf]
        %v2871 = vld [vmem:[%s5 + $0x4] sm:$0xf]
        %v2872 = vld [vmem:[%s6] sm:$0x1]
        %v2874 = vlaneseq
        %v2875 = vshrl.u32 %v2874, 7
        %v2876 = vsub.s32 0, %v2875
        %v2877 = vrot.slane %v2872, %v2876
        %v2881 = vunpack.c.l.b16 %v2870
        %v2882 = vunpack.c.l.b16 %v2871
        %v2883 = vpack.c.b16 %v2882, %v2881
        %vm2885 = vcmask 130048
        %v2887 = vsel %vm2885, %v2863, 0
        %v2890 = vsel %vm2885, %v2864, 0
        %v2893 = vsel %vm2885, %v2865, 0
        %v2896 = vsel %vm2885, %v2866, 0
        %v2899 = vsel %vm2885, %v2867, 0
        %v2902 = vsel %vm2885, %v2868, 0
        %v2905 = vsel %vm2885, %v2869, 0
        %2907 = vmatprep.subr.bf16.mxu0 0
        %2908 = vmatpush1.bf16.msra.mxu0 %v2883
        %2909 = vmatprep.subr.bf16.mxu0 0
        %2910 = vmatpush1.bf16.msra.mxu0 0
        %2911 = vmatprep.subr.bf16.mxu0 0
        %2912 = vmatpush1.bf16.msra.mxu0 0
        %2913 = vmatprep.subr.bf16.mxu0 0
        %2914 = vmatpush1.bf16.msra.mxu0 0
        %2915 = vmatprep.subr.bf16.mxu0 0
        %2916 = vmatpush1.bf16.msra.mxu0 0
        %2917 = vmatprep.subr.bf16.mxu0 0
        %2918 = vmatpush1.bf16.msra.mxu0 0
        %2919 = vmatprep.subr.bf16.mxu0 0
        %2920 = vmatpush1.bf16.msra.mxu0 0
        %2921 = vmatprep.subr.bf16.mxu0 0
        %2922 = vmatpush1.bf16.msra.mxu0 0
        %2923 = vmatprep.subr.bf16.mxu0 0
        %2924 = vmatpush1.bf16.msra.mxu0 0
        %2925 = vmatprep.subr.bf16.mxu0 0
        %2926 = vmatpush1.bf16.msra.mxu0 0
        %2927 = vmatprep.subr.bf16.mxu0 0
        %2928 = vmatpush1.bf16.msra.mxu0 0
        %2929 = vmatprep.subr.bf16.mxu0 0
        %2930 = vmatpush1.bf16.msra.mxu0 0
        %2931 = vmatprep.subr.bf16.mxu0 0
        %2932 = vmatpush1.bf16.msra.mxu0 0
        %2933 = vmatprep.subr.bf16.mxu0 0
        %2934 = vmatpush1.bf16.msra.mxu0 0
        %2935 = vmatprep.subr.bf16.mxu0 0
        %2936 = vmatpush1.bf16.msra.mxu0 0
        %2937 = vmatprep.subr.bf16.mxu0 0
        %2938 = vmatpush1.bf16.msra.mxu0 0
        %2939 = vmatprep.mubr.bf16.mxu0 0
        %2940 = vmatmul.mubr.bf16.gmra.mrb[0].mxu0 %v2887
        %v2941 = vpop.f32.mrb[0].mxu0
        %v2942 = vadd.f32 %v2877, %v2941
        %v2943 = vpop.f32.mrb[0].mxu0
        %v2944 = vpop.f32.mrb[0].mxu0
        %v2945 = vadd.f32 %v2877, %v2944
        %v2946 = vpop.f32.mrb[0].mxu0
        %2947 = vmatprep.mubr.bf16.mxu0 0
        %2948 = vmatmul.mubr.bf16.gmra.mrb[0].mxu0 %v2890
        %v2949 = vpop.f32.mrb[0].mxu0
        %v2950 = vadd.f32 %v2877, %v2949
        %v2951 = vpop.f32.mrb[0].mxu0
        %v2952 = vpop.f32.mrb[0].mxu0
        %v2953 = vadd.f32 %v2877, %v2952
        %v2954 = vpop.f32.mrb[0].mxu0
        %2955 = vmatprep.mubr.bf16.mxu0 0
        %2956 = vmatmul.mubr.bf16.gmra.mrb[0].mxu0 %v2893
        %v2957 = vpop.f32.mrb[0].mxu0
        %v2958 = vadd.f32 %v2877, %v2957
        %v2959 = vpop.f32.mrb[0].mxu0
        %v2960 = vpop.f32.mrb[0].mxu0
        %v2961 = vadd.f32 %v2877, %v2960
        %v2962 = vpop.f32.mrb[0].mxu0
        %2963 = vmatprep.mubr.bf16.mxu0 0
        %2964 = vmatmul.mubr.bf16.gmra.mrb[0].mxu0 %v2896
        %v2965 = vpop.f32.mrb[0].mxu0
        %v2966 = vadd.f32 %v2877, %v2965
        %v2967 = vpop.f32.mrb[0].mxu0
        %v2968 = vpop.f32.mrb[0].mxu0
        %v2969 = vadd.f32 %v2877, %v2968
        %v2970 = vpop.f32.mrb[0].mxu0
        %2971 = vmatprep.mubr.bf16.mxu0 0
        %2972 = vmatmul.mubr.bf16.gmra.mrb[0].mxu0 %v2899
        %v2973 = vpop.f32.mrb[0].mxu0
        %v2974 = vadd.f32 %v2877, %v2973
        %v2975 = vpop.f32.mrb[0].mxu0
        %v2976 = vpop.f32.mrb[0].mxu0
        %v2977 = vadd.f32 %v2877, %v2976
        %v2978 = vpop.f32.mrb[0].mxu0
        %2979 = vmatprep.mubr.bf16.mxu0 0
        %2980 = vmatmul.mubr.bf16.gmra.mrb[0].mxu0 %v2902
        %v2981 = vpop.f32.mrb[0].mxu0
        %v2982 = vadd.f32 %v2877, %v2981
        %v2983 = vpop.f32.mrb[0].mxu0
        %v2984 = vpop.f32.mrb[0].mxu0
        %v2985 = vadd.f32 %v2877, %v2984
        %v2986 = vpop.f32.mrb[0].mxu0
        %2987 = vmatprep.mubr.bf16.mxu0 0
        %2988 = vmatmul.mubr.bf16.gmra.mrb[0].mxu0 %v2905
        %v2989 = vpop.f32.mrb[0].mxu0
        %v2990 = vadd.f32 %v2877, %v2989
        %v2991 = vpop.f32.mrb[0].mxu0
        %v2992 = vpop.f32.mrb[0].mxu0
        %v2993 = vadd.f32 %v2877, %v2992
        %v2994 = vpop.f32.mrb[0].mxu0
        %2995 = vdwg.mxu0
        %v2996 = vmax.f32 %v2942, 0.0
        %v2997 = vmax.f32 %v2945, 0.0
        %v2998 = vmax.f32 %v2950, 0.0
        %v2999 = vmax.f32 %v2953, 0.0
        %v3000 = vmax.f32 %v2958, 0.0
        %v3001 = vmax.f32 %v2961, 0.0
        %v3002 = vmax.f32 %v2966, 0.0
        %v3003 = vmax.f32 %v2969, 0.0
        %v3004 = vmax.f32 %v2974, 0.0
        %v3005 = vmax.f32 %v2977, 0.0
        %v3006 = vmax.f32 %v2982, 0.0
        %v3007 = vmax.f32 %v2985, 0.0
        %v3008 = vmax.f32 %v2990, 0.0
        %v3009 = vmax.f32 %v2993, 0.0
        %v3010 = vand.u32 2147483647, %v2942
        %v3011 = vand.u32 2147483647, %v2945
        %v3012 = vand.u32 2147483647, %v2950
        %v3013 = vand.u32 2147483647, %v2953
        %v3014 = vand.u32 2147483647, %v2958
        %v3015 = vand.u32 2147483647, %v2961
        %v3016 = vand.u32 2147483647, %v2966
        %v3017 = vand.u32 2147483647, %v2969
        %v3018 = vand.u32 2147483647, %v2974
        %v3019 = vand.u32 2147483647, %v2977
        %v3020 = vand.u32 2147483647, %v2982
        %v3021 = vand.u32 2147483647, %v2985
        %v3022 = vand.u32 2147483647, %v2990
        %v3023 = vand.u32 2147483647, %v2993
        %v3024 = vsub.f32 0.0, %v3010
        %v3025 = vsub.f32 0.0, %v3011
        %v3026 = vsub.f32 0.0, %v3012
        %v3027 = vsub.f32 0.0, %v3013
        %v3028 = vsub.f32 0.0, %v3014
        %v3029 = vsub.f32 0.0, %v3015
        %v3030 = vsub.f32 0.0, %v3016
        %v3031 = vsub.f32 0.0, %v3017
        %v3032 = vsub.f32 0.0, %v3018
        %v3033 = vsub.f32 0.0, %v3019
        %v3034 = vsub.f32 0.0, %v3020
        %v3035 = vsub.f32 0.0, %v3021
        %v3036 = vsub.f32 0.0, %v3022
        %v3037 = vsub.f32 0.0, %v3023
        %v3038 = vmul.f32 %v3024, 1.442695
        %v3039 = vpow.pop %v3038
        %v3040 = vmul.f32 %v3025, 1.442695
        %v3041 = vpow.pop %v3040
        %v3042 = vmul.f32 %v3026, 1.442695
        %v3043 = vpow.pop %v3042
        %v3044 = vmul.f32 %v3027, 1.442695
        %v3045 = vpow.pop %v3044
        %v3046 = vmul.f32 %v3028, 1.442695
        %v3047 = vpow.pop %v3046
        %v3048 = vmul.f32 %v3029, 1.442695
        %v3049 = vpow.pop %v3048
        %v3050 = vmul.f32 %v3030, 1.442695
        %v3051 = vpow.pop %v3050
        %v3052 = vmul.f32 %v3031, 1.442695
        %v3053 = vpow.pop %v3052
        %v3054 = vmul.f32 %v3032, 1.442695
        %v3055 = vpow.pop %v3054
        %v3056 = vmul.f32 %v3033, 1.442695
        %v3057 = vpow.pop %v3056
        %v3058 = vmul.f32 %v3034, 1.442695
        %v3059 = vpow.pop %v3058
        %v3060 = vmul.f32 %v3035, 1.442695
        %v3061 = vpow.pop %v3060
        %v3062 = vmul.f32 %v3036, 1.442695
        %v3063 = vpow.pop %v3062
        %v3064 = vmul.f32 %v3037, 1.442695
        %v3065 = vpow.pop %v3064
        %v3066 = vadd.f32 %v3039, 1.0
        %v3067 = vadd.f32 %v3041, 1.0
        %v3068 = vadd.f32 %v3043, 1.0
        %v3069 = vadd.f32 %v3045, 1.0
        %v3070 = vadd.f32 %v3047, 1.0
        %v3071 = vadd.f32 %v3049, 1.0
        %v3072 = vadd.f32 %v3051, 1.0
        %v3073 = vadd.f32 %v3053, 1.0
        %v3074 = vadd.f32 %v3055, 1.0
        %v3075 = vadd.f32 %v3057, 1.0
        %v3076 = vadd.f32 %v3059, 1.0
        %v3077 = vadd.f32 %v3061, 1.0
        %v3078 = vadd.f32 %v3063, 1.0
        %v3079 = vadd.f32 %v3065, 1.0
        %v3080 = vlog2.pop %v3066
        %v3081 = vmul.f32 %v3080, 0.6931472
        %v3082 = vlog2.pop %v3067
        %v3083 = vmul.f32 %v3082, 0.6931472
        %v3084 = vlog2.pop %v3068
        %v3085 = vmul.f32 %v3084, 0.6931472
        %v3086 = vlog2.pop %v3069
        %v3087 = vmul.f32 %v3086, 0.6931472
        %v3088 = vlog2.pop %v3070
        %v3089 = vmul.f32 %v3088, 0.6931472
        %v3090 = vlog2.pop %v3071
        %v3091 = vmul.f32 %v3090, 0.6931472
        %v3092 = vlog2.pop %v3072
        %v3093 = vmul.f32 %v3092, 0.6931472
        %v3094 = vlog2.pop %v3073
        %v3095 = vmul.f32 %v3094, 0.6931472
        %v3096 = vlog2.pop %v3074
        %v3097 = vmul.f32 %v3096, 0.6931472
        %v3098 = vlog2.pop %v3075
        %v3099 = vmul.f32 %v3098, 0.6931472
        %v3100 = vlog2.pop %v3076
        %v3101 = vmul.f32 %v3100, 0.6931472
        %v3102 = vlog2.pop %v3077
        %v3103 = vmul.f32 %v3102, 0.6931472
        %v3104 = vlog2.pop %v3078
        %v3105 = vmul.f32 %v3104, 0.6931472
        %v3106 = vlog2.pop %v3079
        %v3107 = vmul.f32 %v3106, 0.6931472
        %v3108 = vadd.f32 %v2996, %v3081
        %v3109 = vadd.f32 %v2997, %v3083
        %v3110 = vadd.f32 %v2998, %v3085
        %v3111 = vadd.f32 %v2999, %v3087
        %v3112 = vadd.f32 %v3000, %v3089
        %v3113 = vadd.f32 %v3001, %v3091
        %v3114 = vadd.f32 %v3002, %v3093
        %v3115 = vadd.f32 %v3003, %v3095
        %v3116 = vadd.f32 %v3004, %v3097
        %v3117 = vadd.f32 %v3005, %v3099
        %v3118 = vadd.f32 %v3006, %v3101
        %v3119 = vadd.f32 %v3007, %v3103
        %v3120 = vadd.f32 %v3008, %v3105
        %v3121 = vadd.f32 %v3009, %v3107
        %v3122 = vsub.f32 %v3108, 0.6931472
        %v3123 = vsub.f32 %v3109, 0.6931472
        %v3124 = vsub.f32 %v3110, 0.6931472
        %v3125 = vsub.f32 %v3111, 0.6931472
        %v3126 = vsub.f32 %v3112, 0.6931472
        %v3127 = vsub.f32 %v3113, 0.6931472
        %v3128 = vsub.f32 %v3114, 0.6931472
        %v3129 = vsub.f32 %v3115, 0.6931472
        %v3130 = vsub.f32 %v3116, 0.6931472
        %v3131 = vsub.f32 %v3117, 0.6931472
        %v3132 = vsub.f32 %v3118, 0.6931472
        %v3133 = vsub.f32 %v3119, 0.6931472
        %v3134 = vsub.f32 %v3120, 0.6931472
        %v3135 = vsub.f32 %v3121, 0.6931472
        %v3136 = vpack.c.bf16 %v3123, %v3122
        %v3137 = vpack.c.bf16 %v3125, %v3124
        %v3138 = vpack.c.bf16 %v3127, %v3126
        %v3139 = vpack.c.bf16 %v3129, %v3128
        %v3140 = vpack.c.bf16 %v3131, %v3130
        %v3141 = vpack.c.bf16 %v3133, %v3132
        %v3142 = vpack.c.bf16 %v3135, %v3134
        %v3143 = vld [vmem:[%s7] sm:$0xf]
        %v3144 = vld [vmem:[%s7 + $0x4] sm:$0xf]
        %v3145 = vld [vmem:[%s7 + $0x8] sm:$0xf]
        %v3146 = vld [vmem:[%s7 + $0xc] sm:$0xf]
        %v3147 = vld [vmem:[%s8] sm:$0x1]
        %v3149 = vlaneseq
        %v3150 = vshrl.u32 %v3149, 7
        %v3151 = vsub.s32 0, %v3150
        %v3152 = vrot.slane %v3147, %v3151
        %v3158 = vunpack.c.l.b16 %v3143
        %v3159 = vunpack.c.l.b16 %v3144
        %v3160 = vunpack.c.l.b16 %v3145
        %v3161 = vunpack.c.l.b16 %v3146
        %v3162 = vpack.c.b16 %v3159, %v3158
        %v3163 = vpack.c.b16 %v3161, %v3160
        %vm3166 = vcmask 261120
        %v3168 = vsel %vm3166, %v3136, 0
        %v3171 = vsel %vm3166, %v3137, 0
        %v3174 = vsel %vm3166, %v3138, 0
        %v3177 = vsel %vm3166, %v3139, 0
        %v3180 = vsel %vm3166, %v3140, 0
        %v3183 = vsel %vm3166, %v3141, 0
        %v3186 = vsel %vm3166, %v3142, 0
        %3188 = vmatprep.subr.bf16.mxu0 0
        %3189 = vmatpush1.bf16.msra.mxu0 %v3162
        %3190 = vmatprep.subr.bf16.mxu0 0
        %3191 = vmatpush1.bf16.msra.mxu0 %v3163
        %3192 = vmatprep.subr.bf16.mxu0 0
        %3193 = vmatpush1.bf16.msra.mxu0 0
        %3194 = vmatprep.subr.bf16.mxu0 0
        %3195 = vmatpush1.bf16.msra.mxu0 0
        %3196 = vmatprep.subr.bf16.mxu0 0
        %3197 = vmatpush1.bf16.msra.mxu0 0
        %3198 = vmatprep.subr.bf16.mxu0 0
        %3199 = vmatpush1.bf16.msra.mxu0 0
        %3200 = vmatprep.subr.bf16.mxu0 0
        %3201 = vmatpush1.bf16.msra.mxu0 0
        %3202 = vmatprep.subr.bf16.mxu0 0
        %3203 = vmatpush1.bf16.msra.mxu0 0
        %3204 = vmatprep.subr.bf16.mxu0 0
        %3205 = vmatpush1.bf16.msra.mxu0 0
        %3206 = vmatprep.subr.bf16.mxu0 0
        %3207 = vmatpush1.bf16.msra.mxu0 0
        %3208 = vmatprep.subr.bf16.mxu0 0
        %3209 = vmatpush1.bf16.msra.mxu0 0
        %3210 = vmatprep.subr.bf16.mxu0 0
        %3211 = vmatpush1.bf16.msra.mxu0 0
        %3212 = vmatprep.subr.bf16.mxu0 0
        %3213 = vmatpush1.bf16.msra.mxu0 0
        %3214 = vmatprep.subr.bf16.mxu0 0
        %3215 = vmatpush1.bf16.msra.mxu0 0
        %3216 = vmatprep.subr.bf16.mxu0 0
        %3217 = vmatpush1.bf16.msra.mxu0 0
        %3218 = vmatprep.subr.bf16.mxu0 0
        %3219 = vmatpush1.bf16.msra.mxu0 0
        %3220 = vmatprep.mubr.bf16.mxu0 0
        %3221 = vmatmul.mubr.bf16.gmra.mrb[0].mxu0 %v3168
        %v3222 = vpop.f32.mrb[0].mxu0
        %v3223 = vadd.f32 %v3152, %v3222
        %v3224 = vpop.f32.mrb[0].mxu0
        %v3225 = vpop.f32.mrb[0].mxu0
        %v3226 = vadd.f32 %v3152, %v3225
        %v3227 = vpop.f32.mrb[0].mxu0
        %3228 = vmatprep.mubr.bf16.mxu0 0
        %3229 = vmatmul.mubr.bf16.gmra.mrb[0].mxu0 %v3171
        %v3230 = vpop.f32.mrb[0].mxu0
        %v3231 = vadd.f32 %v3152, %v3230
        %v3232 = vpop.f32.mrb[0].mxu0
        %v3233 = vpop.f32.mrb[0].mxu0
        %v3234 = vadd.f32 %v3152, %v3233
        %v3235 = vpop.f32.mrb[0].mxu0
        %3236 = vmatprep.mubr.bf16.mxu0 0
        %3237 = vmatmul.mubr.bf16.gmra.mrb[0].mxu0 %v3174
        %v3238 = vpop.f32.mrb[0].mxu0
        %v3239 = vadd.f32 %v3152, %v3238
        %v3240 = vpop.f32.mrb[0].mxu0
        %v3241 = vpop.f32.mrb[0].mxu0
        %v3242 = vadd.f32 %v3152, %v3241
        %v3243 = vpop.f32.mrb[0].mxu0
        %3244 = vmatprep.mubr.bf16.mxu0 0
        %3245 = vmatmul.mubr.bf16.gmra.mrb[0].mxu0 %v3177
        %v3246 = vpop.f32.mrb[0].mxu0
        %v3247 = vadd.f32 %v3152, %v3246
        %v3248 = vpop.f32.mrb[0].mxu0
        %v3249 = vpop.f32.mrb[0].mxu0
        %v3250 = vadd.f32 %v3152, %v3249
        %v3251 = vpop.f32.mrb[0].mxu0
        %3252 = vmatprep.mubr.bf16.mxu0 0
        %3253 = vmatmul.mubr.bf16.gmra.mrb[0].mxu0 %v3180
        %v3254 = vpop.f32.mrb[0].mxu0
        %v3255 = vadd.f32 %v3152, %v3254
        %v3256 = vpop.f32.mrb[0].mxu0
        %v3257 = vpop.f32.mrb[0].mxu0
        %v3258 = vadd.f32 %v3152, %v3257
        %v3259 = vpop.f32.mrb[0].mxu0
        %3260 = vmatprep.mubr.bf16.mxu0 0
        %3261 = vmatmul.mubr.bf16.gmra.mrb[0].mxu0 %v3183
        %v3262 = vpop.f32.mrb[0].mxu0
        %v3263 = vadd.f32 %v3152, %v3262
        %v3264 = vpop.f32.mrb[0].mxu0
        %v3265 = vpop.f32.mrb[0].mxu0
        %v3266 = vadd.f32 %v3152, %v3265
        %v3267 = vpop.f32.mrb[0].mxu0
        %3268 = vmatprep.mubr.bf16.mxu0 0
        %3269 = vmatmul.mubr.bf16.gmra.mrb[0].mxu0 %v3186
        %v3270 = vpop.f32.mrb[0].mxu0
        %v3271 = vadd.f32 %v3152, %v3270
        %v3272 = vpop.f32.mrb[0].mxu0
        %v3273 = vpop.f32.mrb[0].mxu0
        %v3274 = vadd.f32 %v3152, %v3273
        %v3275 = vpop.f32.mrb[0].mxu0
        %3276 = vdwg.mxu0
        %3278 = vset.pattern.permute.xlu0 0
        %3279 = vperm.xlu0 %3278, %v2849
        %v3280 = vpop.permute.xlu0 %3279
        %3283 = vset.pattern.permute.xlu0 0
        %3284 = vperm.xlu0 %3283, %v2850
        %v3285 = vpop.permute.xlu0 %3284
        %3288 = vset.pattern.permute.xlu0 0
        %3289 = vperm.xlu0 %3288, %v2851
        %v3290 = vpop.permute.xlu0 %3289
        %3293 = vset.pattern.permute.xlu0 0
        %3294 = vperm.xlu0 %3293, %v2852
        %v3295 = vpop.permute.xlu0 %3294
        %3298 = vset.pattern.permute.xlu0 0
        %3299 = vperm.xlu0 %3298, %v2853
        %v3300 = vpop.permute.xlu0 %3299
        %3303 = vset.pattern.permute.xlu0 0
        %3304 = vperm.xlu0 %3303, %v2854
        %v3305 = vpop.permute.xlu0 %3304
        %3308 = vset.pattern.permute.xlu0 0
        %3309 = vperm.xlu0 %3308, %v2855
        %v3310 = vpop.permute.xlu0 %3309
        %3313 = vset.pattern.permute.xlu0 0
        %3314 = vperm.xlu0 %3313, %v2856
        %v3315 = vpop.permute.xlu0 %3314
        %3318 = vset.pattern.permute.xlu0 0
        %3319 = vperm.xlu0 %3318, %v2857
        %v3320 = vpop.permute.xlu0 %3319
        %3323 = vset.pattern.permute.xlu0 0
        %3324 = vperm.xlu0 %3323, %v2858
        %v3325 = vpop.permute.xlu0 %3324
        %3328 = vset.pattern.permute.xlu0 0
        %3329 = vperm.xlu0 %3328, %v2859
        %v3330 = vpop.permute.xlu0 %3329
        %3333 = vset.pattern.permute.xlu0 0
        %3334 = vperm.xlu0 %3333, %v2860
        %v3335 = vpop.permute.xlu0 %3334
        %3338 = vset.pattern.permute.xlu0 0
        %3339 = vperm.xlu0 %3338, %v2861
        %v3340 = vpop.permute.xlu0 %3339
        %3343 = vset.pattern.permute.xlu0 0
        %3344 = vperm.xlu0 %3343, %v2862
        %v3345 = vpop.permute.xlu0 %3344
        %v3347 = vmul.f32 %v3223, %v3280
        %v3348 = vmul.f32 %v3226, %v3285
        %v3349 = vmul.f32 %v3231, %v3290
        %v3350 = vmul.f32 %v3234, %v3295
        %v3351 = vmul.f32 %v3239, %v3300
        %v3352 = vmul.f32 %v3242, %v3305
        %v3353 = vmul.f32 %v3247, %v3310
        %v3354 = vmul.f32 %v3250, %v3315
        %v3355 = vmul.f32 %v3255, %v3320
        %v3356 = vmul.f32 %v3258, %v3325
        %v3357 = vmul.f32 %v3263, %v3330
        %v3358 = vmul.f32 %v3266, %v3335
        %v3359 = vmul.f32 %v3271, %v3340
        %v3360 = vmul.f32 %v3274, %v3345
        %v3361 = vpack.c.bf16 %v530, %v529
        %v3362 = vld [vmem:[%s9] sm:$0xf]
        %v3363 = vld [vmem:[%s9 + $0x4] sm:$0xf]
        %v3364 = vld [vmem:[%s9 + $0x8] sm:$0xf]
        %v3365 = vld [vmem:[%s9 + $0xc] sm:$0xf]
        %v3370 = vunpack.c.l.b16 %v3362
        %v3371 = vunpack.c.l.b16 %v3363
        %v3372 = vunpack.c.l.b16 %v3364
        %v3373 = vunpack.c.l.b16 %v3365
        %v3374 = vpack.c.b16 %v3371, %v3370
        %v3375 = vpack.c.b16 %v3373, %v3372
        %v3379 = vsel %vm3166, %v3361, 0
        %3381 = vmatprep.subr.bf16.mxu0 0
        %3382 = vmatpush1.bf16.msra.mxu0 %v3374
        %3383 = vmatprep.subr.bf16.mxu0 0
        %3384 = vmatpush1.bf16.msra.mxu0 %v3375
        %3385 = vmatprep.subr.bf16.mxu0 0
        %3386 = vmatpush1.bf16.msra.mxu0 0
        %3387 = vmatprep.subr.bf16.mxu0 0
        %3388 = vmatpush1.bf16.msra.mxu0 0
        %3389 = vmatprep.subr.bf16.mxu0 0
        %3390 = vmatpush1.bf16.msra.mxu0 0
        %3391 = vmatprep.subr.bf16.mxu0 0
        %3392 = vmatpush1.bf16.msra.mxu0 0
        %3393 = vmatprep.subr.bf16.mxu0 0
        %3394 = vmatpush1.bf16.msra.mxu0 0
        %3395 = vmatprep.subr.bf16.mxu0 0
        %3396 = vmatpush1.bf16.msra.mxu0 0
        %3397 = vmatprep.subr.bf16.mxu0 0
        %3398 = vmatpush1.bf16.msra.mxu0 0
        %3399 = vmatprep.subr.bf16.mxu0 0
        %3400 = vmatpush1.bf16.msra.mxu0 0
        %3401 = vmatprep.subr.bf16.mxu0 0
        %3402 = vmatpush1.bf16.msra.mxu0 0
        %3403 = vmatprep.subr.bf16.mxu0 0
        %3404 = vmatpush1.bf16.msra.mxu0 0
        %3405 = vmatprep.subr.bf16.mxu0 0
        %3406 = vmatpush1.bf16.msra.mxu0 0
        %3407 = vmatprep.subr.bf16.mxu0 0
        %3408 = vmatpush1.bf16.msra.mxu0 0
        %3409 = vmatprep.subr.bf16.mxu0 0
        %3410 = vmatpush1.bf16.msra.mxu0 0
        %3411 = vmatprep.subr.bf16.mxu0 0
        %3412 = vmatpush1.bf16.msra.mxu0 0
        %3413 = vmatprep.mubr.bf16.mxu0 0
        %3414 = vmatmul.mubr.bf16.gmra.mrb[0].mxu0 %v3379
        %v3415 = vpop.f32.mrb[0].mxu0
        %v3416 = vadd.f32 0.0, %v3415
        %v3417 = vpop.f32.mrb[0].mxu0
        %v3418 = vpop.f32.mrb[0].mxu0
        %v3419 = vadd.f32 0.0, %v3418
        %v3420 = vpop.f32.mrb[0].mxu0
        %3421 = vdwg.mxu0
        %v3422 = vpack.c.bf16 %v3419, %v3416
        %v3424 = vunpack.c.l.b16 %v3422
        %v3425 = vunpack.c.h.b16 %v3422
        %v3426 = vpack.c.b16 %v3424, %v3424
        %v3427 = vpack.c.b16 %v3425, %v3425
        %v3429 = vsel %vm654, %v646, 0
        %v3432 = vsel %vm654, %v647, 0
        %v3435 = vsel %vm654, %v648, 0
        %v3438 = vsel %vm654, %v649, 0
        %vm3440 = vcmask 1043456
        %v3442 = vsel %vm3440, %v3426, 0
        %3444 = vmatprep.subr.bf16.mxu0 0
        %3445 = vmatpush1.bf16.msra.mxu0 %v3442
        %3446 = vmatprep.subr.bf16.mxu0 0
        %3447 = vmatpush1.bf16.msra.mxu0 0
        %3448 = vmatprep.subr.bf16.mxu0 0
        %3449 = vmatpush1.bf16.msra.mxu0 0
        %3450 = vmatprep.subr.bf16.mxu0 0
        %3451 = vmatpush1.bf16.msra.mxu0 0
        %3452 = vmatprep.subr.bf16.mxu0 0
        %3453 = vmatpush1.bf16.msra.mxu0 0
        %3454 = vmatprep.subr.bf16.mxu0 0
        %3455 = vmatpush1.bf16.msra.mxu0 0
        %3456 = vmatprep.subr.bf16.mxu0 0
        %3457 = vmatpush1.bf16.msra.mxu0 0
        %3458 = vmatprep.subr.bf16.mxu0 0
        %3459 = vmatpush1.bf16.msra.mxu0 0
        %3460 = vmatprep.subr.bf16.mxu0 0
        %3461 = vmatpush1.bf16.msra.mxu0 0
        %3462 = vmatprep.subr.bf16.mxu0 0
        %3463 = vmatpush1.bf16.msra.mxu0 0
        %3464 = vmatprep.subr.bf16.mxu0 0
        %3465 = vmatpush1.bf16.msra.mxu0 0
        %3466 = vmatprep.subr.bf16.mxu0 0
        %3467 = vmatpush1.bf16.msra.mxu0 0
        %3468 = vmatprep.subr.bf16.mxu0 0
        %3469 = vmatpush1.bf16.msra.mxu0 0
        %3470 = vmatprep.subr.bf16.mxu0 0
        %3471 = vmatpush1.bf16.msra.mxu0 0
        %3472 = vmatprep.subr.bf16.mxu0 0
        %3473 = vmatpush1.bf16.msra.mxu0 0
        %3474 = vmatprep.subr.bf16.mxu0 0
        %3475 = vmatpush1.bf16.msra.mxu0 0
        %3476 = vmatprep.mubr.bf16.mxu0 0
        %3477 = vmatmul.mubr.bf16.gmra.mrb[0].mxu0 %v3429
        %v3478 = vpop.f32.mrb[0].mxu0
        %v3479 = vadd.f32 0.0, %v3478
        %v3480 = vpop.f32.mrb[0].mxu0
        %v3481 = vpop.f32.mrb[0].mxu0
        %v3482 = vadd.f32 0.0, %v3481
        %v3483 = vpop.f32.mrb[0].mxu0
        %3484 = vmatprep.mubr.bf16.mxu0 0
        %3485 = vmatmul.mubr.bf16.gmra.mrb[0].mxu0 %v3432
        %v3486 = vpop.f32.mrb[0].mxu0
        %v3487 = vadd.f32 0.0, %v3486
        %v3488 = vpop.f32.mrb[0].mxu0
        %v3489 = vpop.f32.mrb[0].mxu0
        %v3490 = vadd.f32 0.0, %v3489
        %v3491 = vpop.f32.mrb[0].mxu0
        %3492 = vmatprep.mubr.bf16.mxu0 0
        %3493 = vmatmul.mubr.bf16.gmra.mrb[0].mxu0 %v3435
        %v3494 = vpop.f32.mrb[0].mxu0
        %v3495 = vadd.f32 0.0, %v3494
        %v3496 = vpop.f32.mrb[0].mxu0
        %v3497 = vpop.f32.mrb[0].mxu0
        %v3498 = vadd.f32 0.0, %v3497
        %v3499 = vpop.f32.mrb[0].mxu0
        %3500 = vmatprep.mubr.bf16.mxu0 0
        %3501 = vmatmul.mubr.bf16.gmra.mrb[0].mxu0 %v3438
        %v3502 = vpop.f32.mrb[0].mxu0
        %v3503 = vadd.f32 0.0, %v3502
        %v3504 = vpop.f32.mrb[0].mxu0
        %v3505 = vpop.f32.mrb[0].mxu0
        %v3506 = vpop.f32.mrb[0].mxu0
        %3507 = vdwg.mxu0
        %v3509 = vsel %vm654, %v650, 0
        %v3512 = vsel %vm654, %v651, 0
        %v3515 = vsel %vm654, %v652, 0
        %v3518 = vsel %vm654, %v653, 0
        %v3521 = vsel %vm3440, %v3427, 0
        %3523 = vmatprep.subr.bf16.mxu0 0
        %3524 = vmatpush1.bf16.msra.mxu0 %v3521
        %3525 = vmatprep.subr.bf16.mxu0 0
        %3526 = vmatpush1.bf16.msra.mxu0 0
        %3527 = vmatprep.subr.bf16.mxu0 0
        %3528 = vmatpush1.bf16.msra.mxu0 0
        %3529 = vmatprep.subr.bf16.mxu0 0
        %3530 = vmatpush1.bf16.msra.mxu0 0
        %3531 = vmatprep.subr.bf16.mxu0 0
        %3532 = vmatpush1.bf16.msra.mxu0 0
        %3533 = vmatprep.subr.bf16.mxu0 0
        %3534 = vmatpush1.bf16.msra.mxu0 0
        %3535 = vmatprep.subr.bf16.mxu0 0
        %3536 = vmatpush1.bf16.msra.mxu0 0
        %3537 = vmatprep.subr.bf16.mxu0 0
        %3538 = vmatpush1.bf16.msra.mxu0 0
        %3539 = vmatprep.subr.bf16.mxu0 0
        %3540 = vmatpush1.bf16.msra.mxu0 0
        %3541 = vmatprep.subr.bf16.mxu0 0
        %3542 = vmatpush1.bf16.msra.mxu0 0
        %3543 = vmatprep.subr.bf16.mxu0 0
        %3544 = vmatpush1.bf16.msra.mxu0 0
        %3545 = vmatprep.subr.bf16.mxu0 0
        %3546 = vmatpush1.bf16.msra.mxu0 0
        %3547 = vmatprep.subr.bf16.mxu0 0
        %3548 = vmatpush1.bf16.msra.mxu0 0
        %3549 = vmatprep.subr.bf16.mxu0 0
        %3550 = vmatpush1.bf16.msra.mxu0 0
        %3551 = vmatprep.subr.bf16.mxu0 0
        %3552 = vmatpush1.bf16.msra.mxu0 0
        %3553 = vmatprep.subr.bf16.mxu0 0
        %3554 = vmatpush1.bf16.msra.mxu0 0
        %3555 = vmatprep.mubr.bf16.mxu0 0
        %3556 = vmatmul.mubr.bf16.gmra.mrb[0].mxu0 %v3509
        %v3557 = vpop.f32.mrb[0].mxu0
        %v3558 = vadd.f32 0.0, %v3557
        %v3559 = vpop.f32.mrb[0].mxu0
        %v3560 = vpop.f32.mrb[0].mxu0
        %v3561 = vadd.f32 0.0, %v3560
        %v3562 = vpop.f32.mrb[0].mxu0
        %3563 = vmatprep.mubr.bf16.mxu0 0
        %3564 = vmatmul.mubr.bf16.gmra.mrb[0].mxu0 %v3512
        %v3565 = vpop.f32.mrb[0].mxu0
        %v3566 = vadd.f32 0.0, %v3565
        %v3567 = vpop.f32.mrb[0].mxu0
        %v3568 = vpop.f32.mrb[0].mxu0
        %v3569 = vadd.f32 0.0, %v3568
        %v3570 = vpop.f32.mrb[0].mxu0
        %3571 = vmatprep.mubr.bf16.mxu0 0
        %3572 = vmatmul.mubr.bf16.gmra.mrb[0].mxu0 %v3515
        %v3573 = vpop.f32.mrb[0].mxu0
        %v3574 = vadd.f32 0.0, %v3573
        %v3575 = vpop.f32.mrb[0].mxu0
        %v3576 = vpop.f32.mrb[0].mxu0
        %v3577 = vadd.f32 0.0, %v3576
        %v3578 = vpop.f32.mrb[0].mxu0
        %3579 = vmatprep.mubr.bf16.mxu0 0
        %3580 = vmatmul.mubr.bf16.gmra.mrb[0].mxu0 %v3518
        %v3581 = vpop.f32.mrb[0].mxu0
        %v3582 = vadd.f32 0.0, %v3581
        %v3583 = vpop.f32.mrb[0].mxu0
        %v3584 = vpop.f32.mrb[0].mxu0
        %v3585 = vpop.f32.mrb[0].mxu0
        %3586 = vdwg.mxu0
        %v3587 = vmul.f32 %v3479, %v3347
        %v3588 = vmul.f32 %v3482, %v3348
        %v3589 = vmul.f32 %v3487, %v3349
        %v3590 = vmul.f32 %v3490, %v3350
        %v3591 = vmul.f32 %v3495, %v3351
        %v3592 = vmul.f32 %v3498, %v3352
        %v3593 = vmul.f32 %v3503, %v3353
        %v3594 = vmul.f32 %v3558, %v3354
        %v3595 = vmul.f32 %v3561, %v3355
        %v3596 = vmul.f32 %v3566, %v3356
        %v3597 = vmul.f32 %v3569, %v3357
        %v3598 = vmul.f32 %v3574, %v3358
        %v3599 = vmul.f32 %v3577, %v3359
        %v3600 = vmul.f32 %v3582, %v3360
        %v3601 = vsel %vm3166, %v3587, 0.0
        %v3602 = vsel %vm3166, %v3588, 0.0
        %v3603 = vadd.f32 %v3601, %v3602
        %v3604 = vsel %vm3166, %v3589, 0.0
        %v3605 = vadd.f32 %v3603, %v3604
        %v3606 = vsel %vm3166, %v3590, 0.0
        %v3607 = vadd.f32 %v3605, %v3606
        %v3608 = vsel %vm3166, %v3591, 0.0
        %v3609 = vadd.f32 %v3607, %v3608
        %v3610 = vsel %vm3166, %v3592, 0.0
        %v3611 = vadd.f32 %v3609, %v3610
        %v3612 = vsel %vm3166, %v3593, 0.0
        %v3613 = vadd.f32 %v3611, %v3612
        %v3614 = vsel %vm3166, %v3594, 0.0
        %v3615 = vsel %vm3166, %v3595, 0.0
        %v3616 = vadd.f32 %v3614, %v3615
        %v3617 = vsel %vm3166, %v3596, 0.0
        %v3618 = vadd.f32 %v3616, %v3617
        %v3619 = vsel %vm3166, %v3597, 0.0
        %v3620 = vadd.f32 %v3618, %v3619
        %v3621 = vsel %vm3166, %v3598, 0.0
        %v3622 = vadd.f32 %v3620, %v3621
        %v3623 = vsel %vm3166, %v3599, 0.0
        %v3624 = vadd.f32 %v3622, %v3623
        %v3625 = vsel %vm3166, %v3600, 0.0
        %v3626 = vadd.f32 %v3624, %v3625
        %v3627 = vpack.c.bf16 %v3626, %v3613
        %v3628 = vld [vmem:[%s10] sm:$0xf]
        %v3629 = vld [vmem:[%s10 + $0x4] sm:$0xf]
        %v3630 = vld [vmem:[%s10 + $0x8] sm:$0xf]
        %v3631 = vld [vmem:[%s10 + $0xc] sm:$0xf]
        %v3632 = vld [vmem:[%s11] sm:$0x1]
        %v3634 = vlaneseq
        %v3635 = vshrl.u32 %v3634, 7
        %v3636 = vsub.s32 0, %v3635
        %v3637 = vrot.slane %v3632, %v3636
        %v3643 = vunpack.c.l.b16 %v3628
        %v3644 = vunpack.c.l.b16 %v3629
        %v3645 = vunpack.c.l.b16 %v3630
        %v3646 = vunpack.c.l.b16 %v3631
        %v3647 = vpack.c.b16 %v3644, %v3643
        %v3648 = vpack.c.b16 %v3646, %v3645
        %v3652 = vsel %vm3166, %v3627, 0
        %3654 = vmatprep.subr.bf16.mxu0 0
        %3655 = vmatpush1.bf16.msra.mxu0 %v3647
        %3656 = vmatprep.subr.bf16.mxu0 0
        %3657 = vmatpush1.bf16.msra.mxu0 %v3648
        %3658 = vmatprep.subr.bf16.mxu0 0
        %3659 = vmatpush1.bf16.msra.mxu0 0
        %3660 = vmatprep.subr.bf16.mxu0 0
        %3661 = vmatpush1.bf16.msra.mxu0 0
        %3662 = vmatprep.subr.bf16.mxu0 0
        %3663 = vmatpush1.bf16.msra.mxu0 0
        %3664 = vmatprep.subr.bf16.mxu0 0
        %3665 = vmatpush1.bf16.msra.mxu0 0
        %3666 = vmatprep.subr.bf16.mxu0 0
        %3667 = vmatpush1.bf16.msra.mxu0 0
        %3668 = vmatprep.subr.bf16.mxu0 0
        %3669 = vmatpush1.bf16.msra.mxu0 0
        %3670 = vmatprep.subr.bf16.mxu0 0
        %3671 = vmatpush1.bf16.msra.mxu0 0
        %3672 = vmatprep.subr.bf16.mxu0 0
        %3673 = vmatpush1.bf16.msra.mxu0 0
        %3674 = vmatprep.subr.bf16.mxu0 0
        %3675 = vmatpush1.bf16.msra.mxu0 0
        %3676 = vmatprep.subr.bf16.mxu0 0
        %3677 = vmatpush1.bf16.msra.mxu0 0
        %3678 = vmatprep.subr.bf16.mxu0 0
        %3679 = vmatpush1.bf16.msra.mxu0 0
        %3680 = vmatprep.subr.bf16.mxu0 0
        %3681 = vmatpush1.bf16.msra.mxu0 0
        %3682 = vmatprep.subr.bf16.mxu0 0
        %3683 = vmatpush1.bf16.msra.mxu0 0
        %3684 = vmatprep.subr.bf16.mxu0 0
        %3685 = vmatpush1.bf16.msra.mxu0 0
        %3686 = vmatprep.mubr.bf16.mxu0 0
        %3687 = vmatmul.mubr.bf16.gmra.mrb[0].mxu0 %v3652
        %v3688 = vpop.f32.mrb[0].mxu0
        %v3689 = vadd.f32 %v3637, %v3688
        %v3690 = vpop.f32.mrb[0].mxu0
        %v3691 = vpop.f32.mrb[0].mxu0
        %v3692 = vadd.f32 %v3637, %v3691
        %v3693 = vpop.f32.mrb[0].mxu0
        %3694 = vdwg.mxu0
        %v3695 = vmax.f32 %v3689, 0.0
        %v3696 = vmax.f32 %v3692, 0.0
        %v3697 = vand.u32 2147483647, %v3689
        %v3698 = vand.u32 2147483647, %v3692
        %v3699 = vsub.f32 0.0, %v3697
        %v3700 = vsub.f32 0.0, %v3698
        %v3701 = vmul.f32 %v3699, 1.442695
        %v3702 = vpow.pop %v3701
        %v3703 = vmul.f32 %v3700, 1.442695
        %v3704 = vpow.pop %v3703
        %v3705 = vadd.f32 %v3702, 1.0
        %v3706 = vadd.f32 %v3704, 1.0
        %v3707 = vlog2.pop %v3705
        %v3708 = vmul.f32 %v3707, 0.6931472
        %v3709 = vlog2.pop %v3706
        %v3710 = vmul.f32 %v3709, 0.6931472
        %v3711 = vadd.f32 %v3695, %v3708
        %v3712 = vadd.f32 %v3696, %v3710
        %v3713 = vsub.f32 %v3711, 0.6931472
        %v3714 = vsub.f32 %v3712, 0.6931472
        %v3715 = vpack.c.bf16 %v3714, %v3713
        %v3716 = vld [vmem:[%s12] sm:$0xf]
        %v3717 = vld [vmem:[%s12 + $0x4] sm:$0xf]
        %v3718 = vld [vmem:[%s12 + $0x8] sm:$0xf]
        %v3719 = vld [vmem:[%s12 + $0xc] sm:$0xf]
        %v3720 = vld [vmem:[%s13] sm:$0x1]
        %v3722 = vlaneseq
        %v3723 = vshrl.u32 %v3722, 7
        %v3724 = vsub.s32 0, %v3723
        %v3725 = vrot.slane %v3720, %v3724
        %v3731 = vunpack.c.l.b16 %v3716
        %v3732 = vunpack.c.l.b16 %v3717
        %v3733 = vunpack.c.l.b16 %v3718
        %v3734 = vunpack.c.l.b16 %v3719
        %v3735 = vpack.c.b16 %v3732, %v3731
        %v3736 = vpack.c.b16 %v3734, %v3733
        %v3740 = vsel %vm3166, %v3715, 0
        %3742 = vmatprep.subr.bf16.mxu0 0
        %3743 = vmatpush1.bf16.msra.mxu0 %v3735
        %3744 = vmatprep.subr.bf16.mxu0 0
        %3745 = vmatpush1.bf16.msra.mxu0 %v3736
        %3746 = vmatprep.subr.bf16.mxu0 0
        %3747 = vmatpush1.bf16.msra.mxu0 0
        %3748 = vmatprep.subr.bf16.mxu0 0
        %3749 = vmatpush1.bf16.msra.mxu0 0
        %3750 = vmatprep.subr.bf16.mxu0 0
        %3751 = vmatpush1.bf16.msra.mxu0 0
        %3752 = vmatprep.subr.bf16.mxu0 0
        %3753 = vmatpush1.bf16.msra.mxu0 0
        %3754 = vmatprep.subr.bf16.mxu0 0
        %3755 = vmatpush1.bf16.msra.mxu0 0
        %3756 = vmatprep.subr.bf16.mxu0 0
        %3757 = vmatpush1.bf16.msra.mxu0 0
        %3758 = vmatprep.subr.bf16.mxu0 0
        %3759 = vmatpush1.bf16.msra.mxu0 0
        %3760 = vmatprep.subr.bf16.mxu0 0
        %3761 = vmatpush1.bf16.msra.mxu0 0
        %3762 = vmatprep.subr.bf16.mxu0 0
        %3763 = vmatpush1.bf16.msra.mxu0 0
        %3764 = vmatprep.subr.bf16.mxu0 0
        %3765 = vmatpush1.bf16.msra.mxu0 0
        %3766 = vmatprep.subr.bf16.mxu0 0
        %3767 = vmatpush1.bf16.msra.mxu0 0
        %3768 = vmatprep.subr.bf16.mxu0 0
        %3769 = vmatpush1.bf16.msra.mxu0 0
        %3770 = vmatprep.subr.bf16.mxu0 0
        %3771 = vmatpush1.bf16.msra.mxu0 0
        %3772 = vmatprep.subr.bf16.mxu0 0
        %3773 = vmatpush1.bf16.msra.mxu0 0
        %3774 = vmatprep.mubr.bf16.mxu0 0
        %3775 = vmatmul.mubr.bf16.gmra.mrb[0].mxu0 %v3740
        %v3776 = vpop.f32.mrb[0].mxu0
        %v3777 = vadd.f32 %v3725, %v3776
        %v3778 = vpop.f32.mrb[0].mxu0
        %v3779 = vpop.f32.mrb[0].mxu0
        %v3780 = vadd.f32 %v3725, %v3779
        %v3781 = vpop.f32.mrb[0].mxu0
        %3782 = vdwg.mxu0
        %v3783 = vadd.f32 %v529, %v3777
        %v3784 = vadd.f32 %v530, %v3780
        %s3785 = scalar_lea.vmem %s7, 16
        %v3786 = vld [vmem:[%s3785] sm:$0xf]
        %v3787 = vld [vmem:[%s3785 + $0x4] sm:$0xf]
        %v3788 = vld [vmem:[%s3785 + $0x8] sm:$0xf]
        %v3789 = vld [vmem:[%s3785 + $0xc] sm:$0xf]
        %s3790 = scalar_lea.vmem %s8, 1
        %v3791 = vld [vmem:[%s3790] sm:$0x1]
        %v3793 = vlaneseq
        %v3794 = vshrl.u32 %v3793, 7
        %v3795 = vsub.s32 0, %v3794
        %v3796 = vrot.slane %v3791, %v3795
        %3805 = vrot.lane.b32.xlu0 %v3136, 96
        %v3806 = vpop.permute.xlu0 %3805
        %3807 = vrot.lane.b32.xlu0 %v3137, 96
        %v3808 = vpop.permute.xlu0 %3807
        %3809 = vrot.lane.b32.xlu0 %v3138, 96
        %v3810 = vpop.permute.xlu0 %3809
        %3811 = vrot.lane.b32.xlu0 %v3139, 96
        %v3812 = vpop.permute.xlu0 %3811
        %3813 = vrot.lane.b32.xlu0 %v3140, 96
        %v3814 = vpop.permute.xlu0 %3813
        %3815 = vrot.lane.b32.xlu0 %v3141, 96
        %v3816 = vpop.permute.xlu0 %3815
        %3817 = vrot.lane.b32.xlu0 %v3142, 96
        %v3818 = vpop.permute.xlu0 %3817
        %v3823 = vunpack.c.l.b16 %v3786
        %v3824 = vunpack.c.l.b16 %v3787
        %v3825 = vunpack.c.l.b16 %v3788
        %v3826 = vunpack.c.l.b16 %v3789
        %v3827 = vpack.c.b16 %v3824, %v3823
        %v3828 = vpack.c.b16 %v3826, %v3825
        %v3832 = vsel %vm3166, %v3806, 0
        %v3835 = vsel %vm3166, %v3808, 0
        %v3838 = vsel %vm3166, %v3810, 0
        %v3841 = vsel %vm3166, %v3812, 0
        %v3844 = vsel %vm3166, %v3814, 0
        %v3847 = vsel %vm3166, %v3816, 0
        %v3850 = vsel %vm3166, %v3818, 0
        %3852 = vmatprep.subr.bf16.mxu0 0
        %3853 = vmatpush1.bf16.msra.mxu0 %v3827
        %3854 = vmatprep.subr.bf16.mxu0 0
        %3855 = vmatpush1.bf16.msra.mxu0 %v3828
        %3856 = vmatprep.subr.bf16.mxu0 0
        %3857 = vmatpush1.bf16.msra.mxu0 0
        %3858 = vmatprep.subr.bf16.mxu0 0
        %3859 = vmatpush1.bf16.msra.mxu0 0
        %3860 = vmatprep.subr.bf16.mxu0 0
        %3861 = vmatpush1.bf16.msra.mxu0 0
        %3862 = vmatprep.subr.bf16.mxu0 0
        %3863 = vmatpush1.bf16.msra.mxu0 0
        %3864 = vmatprep.subr.bf16.mxu0 0
        %3865 = vmatpush1.bf16.msra.mxu0 0
        %3866 = vmatprep.subr.bf16.mxu0 0
        %3867 = vmatpush1.bf16.msra.mxu0 0
        %3868 = vmatprep.subr.bf16.mxu0 0
        %3869 = vmatpush1.bf16.msra.mxu0 0
        %3870 = vmatprep.subr.bf16.mxu0 0
        %3871 = vmatpush1.bf16.msra.mxu0 0
        %3872 = vmatprep.subr.bf16.mxu0 0
        %3873 = vmatpush1.bf16.msra.mxu0 0
        %3874 = vmatprep.subr.bf16.mxu0 0
        %3875 = vmatpush1.bf16.msra.mxu0 0
        %3876 = vmatprep.subr.bf16.mxu0 0
        %3877 = vmatpush1.bf16.msra.mxu0 0
        %3878 = vmatprep.subr.bf16.mxu0 0
        %3879 = vmatpush1.bf16.msra.mxu0 0
        %3880 = vmatprep.subr.bf16.mxu0 0
        %3881 = vmatpush1.bf16.msra.mxu0 0
        %3882 = vmatprep.subr.bf16.mxu0 0
        %3883 = vmatpush1.bf16.msra.mxu0 0
        %3884 = vmatprep.mubr.bf16.mxu0 0
        %3885 = vmatmul.mubr.bf16.gmra.mrb[0].mxu0 %v3832
        %v3886 = vpop.f32.mrb[0].mxu0
        %v3887 = vadd.f32 %v3796, %v3886
        %v3888 = vpop.f32.mrb[0].mxu0
        %v3889 = vpop.f32.mrb[0].mxu0
        %v3890 = vadd.f32 %v3796, %v3889
        %v3891 = vpop.f32.mrb[0].mxu0
        %3892 = vmatprep.mubr.bf16.mxu0 0
        %3893 = vmatmul.mubr.bf16.gmra.mrb[0].mxu0 %v3835
        %v3894 = vpop.f32.mrb[0].mxu0
        %v3895 = vadd.f32 %v3796, %v3894
        %v3896 = vpop.f32.mrb[0].mxu0
        %v3897 = vpop.f32.mrb[0].mxu0
        %v3898 = vadd.f32 %v3796, %v3897
        %v3899 = vpop.f32.mrb[0].mxu0
        %3900 = vmatprep.mubr.bf16.mxu0 0
        %3901 = vmatmul.mubr.bf16.gmra.mrb[0].mxu0 %v3838
        %v3902 = vpop.f32.mrb[0].mxu0
        %v3903 = vadd.f32 %v3796, %v3902
        %v3904 = vpop.f32.mrb[0].mxu0
        %v3905 = vpop.f32.mrb[0].mxu0
        %v3906 = vadd.f32 %v3796, %v3905
        %v3907 = vpop.f32.mrb[0].mxu0
        %3908 = vmatprep.mubr.bf16.mxu0 0
        %3909 = vmatmul.mubr.bf16.gmra.mrb[0].mxu0 %v3841
        %v3910 = vpop.f32.mrb[0].mxu0
        %v3911 = vadd.f32 %v3796, %v3910
        %v3912 = vpop.f32.mrb[0].mxu0
        %v3913 = vpop.f32.mrb[0].mxu0
        %v3914 = vadd.f32 %v3796, %v3913
        %v3915 = vpop.f32.mrb[0].mxu0
        %3916 = vmatprep.mubr.bf16.mxu0 0
        %3917 = vmatmul.mubr.bf16.gmra.mrb[0].mxu0 %v3844
        %v3918 = vpop.f32.mrb[0].mxu0
        %v3919 = vadd.f32 %v3796, %v3918
        %v3920 = vpop.f32.mrb[0].mxu0
        %v3921 = vpop.f32.mrb[0].mxu0
        %v3922 = vadd.f32 %v3796, %v3921
        %v3923 = vpop.f32.mrb[0].mxu0
        %3924 = vmatprep.mubr.bf16.mxu0 0
        %3925 = vmatmul.mubr.bf16.gmra.mrb[0].mxu0 %v3847
        %v3926 = vpop.f32.mrb[0].mxu0
        %v3927 = vadd.f32 %v3796, %v3926
        %v3928 = vpop.f32.mrb[0].mxu0
        %v3929 = vpop.f32.mrb[0].mxu0
        %v3930 = vadd.f32 %v3796, %v3929
        %v3931 = vpop.f32.mrb[0].mxu0
        %3932 = vmatprep.mubr.bf16.mxu0 0
        %3933 = vmatmul.mubr.bf16.gmra.mrb[0].mxu0 %v3850
        %v3934 = vpop.f32.mrb[0].mxu0
        %v3935 = vadd.f32 %v3796, %v3934
        %v3936 = vpop.f32.mrb[0].mxu0
        %v3937 = vpop.f32.mrb[0].mxu0
        %v3938 = vadd.f32 %v3796, %v3937
        %v3939 = vpop.f32.mrb[0].mxu0
        %3940 = vdwg.mxu0
        %v3941 = vmul.f32 %v3887, %v3280
        %v3942 = vmul.f32 %v3890, %v3285
        %v3943 = vmul.f32 %v3895, %v3290
        %v3944 = vmul.f32 %v3898, %v3295
        %v3945 = vmul.f32 %v3903, %v3300
        %v3946 = vmul.f32 %v3906, %v3305
        %v3947 = vmul.f32 %v3911, %v3310
        %v3948 = vmul.f32 %v3914, %v3315
        %v3949 = vmul.f32 %v3919, %v3320
        %v3950 = vmul.f32 %v3922, %v3325
        %v3951 = vmul.f32 %v3927, %v3330
        %v3952 = vmul.f32 %v3930, %v3335
        %v3953 = vmul.f32 %v3935, %v3340
        %v3954 = vmul.f32 %v3938, %v3345
        %v3955 = vpack.c.bf16 %v3784, %v3783
        %s3956 = scalar_lea.vmem %s9, 16
        %v3957 = vld [vmem:[%s3956] sm:$0xf]
        %v3958 = vld [vmem:[%s3956 + $0x4] sm:$0xf]
        %v3959 = vld [vmem:[%s3956 + $0x8] sm:$0xf]
        %v3960 = vld [vmem:[%s3956 + $0xc] sm:$0xf]
        %v3965 = vunpack.c.l.b16 %v3957
        %v3966 = vunpack.c.l.b16 %v3958
        %v3967 = vunpack.c.l.b16 %v3959
        %v3968 = vunpack.c.l.b16 %v3960
        %v3969 = vpack.c.b16 %v3966, %v3965
        %v3970 = vpack.c.b16 %v3968, %v3967
        %v3974 = vsel %vm3166, %v3955, 0
        %3976 = vmatprep.subr.bf16.mxu0 0
        %3977 = vmatpush1.bf16.msra.mxu0 %v3969
        %3978 = vmatprep.subr.bf16.mxu0 0
        %3979 = vmatpush1.bf16.msra.mxu0 %v3970
        %3980 = vmatprep.subr.bf16.mxu0 0
        %3981 = vmatpush1.bf16.msra.mxu0 0
        %3982 = vmatprep.subr.bf16.mxu0 0
        %3983 = vmatpush1.bf16.msra.mxu0 0
        %3984 = vmatprep.subr.bf16.mxu0 0
        %3985 = vmatpush1.bf16.msra.mxu0 0
        %3986 = vmatprep.subr.bf16.mxu0 0
        %3987 = vmatpush1.bf16.msra.mxu0 0
        %3988 = vmatprep.subr.bf16.mxu0 0
        %3989 = vmatpush1.bf16.msra.mxu0 0
        %3990 = vmatprep.subr.bf16.mxu0 0
        %3991 = vmatpush1.bf16.msra.mxu0 0
        %3992 = vmatprep.subr.bf16.mxu0 0
        %3993 = vmatpush1.bf16.msra.mxu0 0
        %3994 = vmatprep.subr.bf16.mxu0 0
        %3995 = vmatpush1.bf16.msra.mxu0 0
        %3996 = vmatprep.subr.bf16.mxu0 0
        %3997 = vmatpush1.bf16.msra.mxu0 0
        %3998 = vmatprep.subr.bf16.mxu0 0
        %3999 = vmatpush1.bf16.msra.mxu0 0
        %4000 = vmatprep.subr.bf16.mxu0 0
        %4001 = vmatpush1.bf16.msra.mxu0 0
        %4002 = vmatprep.subr.bf16.mxu0 0
        %4003 = vmatpush1.bf16.msra.mxu0 0
        %4004 = vmatprep.subr.bf16.mxu0 0
        %4005 = vmatpush1.bf16.msra.mxu0 0
        %4006 = vmatprep.subr.bf16.mxu0 0
        %4007 = vmatpush1.bf16.msra.mxu0 0
        %4008 = vmatprep.mubr.bf16.mxu0 0
        %4009 = vmatmul.mubr.bf16.gmra.mrb[0].mxu0 %v3974
        %v4010 = vpop.f32.mrb[0].mxu0
        %v4011 = vadd.f32 0.0, %v4010
        %v4012 = vpop.f32.mrb[0].mxu0
        %v4013 = vpop.f32.mrb[0].mxu0
        %v4014 = vadd.f32 0.0, %v4013
        %v4015 = vpop.f32.mrb[0].mxu0
        %4016 = vdwg.mxu0
        %v4017 = vpack.c.bf16 %v4014, %v4011
        %v4019 = vunpack.c.l.b16 %v4017
        %v4020 = vunpack.c.h.b16 %v4017
        %v4021 = vpack.c.b16 %v4019, %v4019
        %v4022 = vpack.c.b16 %v4020, %v4020
        %v4024 = vsel %vm3440, %v4021, 0
        %4026 = vmatprep.subr.bf16.mxu0 0
        %4027 = vmatpush1.bf16.msra.mxu0 %v4024
        %4028 = vmatprep.subr.bf16.mxu0 0
        %4029 = vmatpush1.bf16.msra.mxu0 0
        %4030 = vmatprep.subr.bf16.mxu0 0
        %4031 = vmatpush1.bf16.msra.mxu0 0
        %4032 = vmatprep.subr.bf16.mxu0 0
        %4033 = vmatpush1.bf16.msra.mxu0 0
        %4034 = vmatprep.subr.bf16.mxu0 0
        %4035 = vmatpush1.bf16.msra.mxu0 0
        %4036 = vmatprep.subr.bf16.mxu0 0
        %4037 = vmatpush1.bf16.msra.mxu0 0
        %4038 = vmatprep.subr.bf16.mxu0 0
        %4039 = vmatpush1.bf16.msra.mxu0 0
        %4040 = vmatprep.subr.bf16.mxu0 0
        %4041 = vmatpush1.bf16.msra.mxu0 0
        %4042 = vmatprep.subr.bf16.mxu0 0
        %4043 = vmatpush1.bf16.msra.mxu0 0
        %4044 = vmatprep.subr.bf16.mxu0 0
        %4045 = vmatpush1.bf16.msra.mxu0 0
        %4046 = vmatprep.subr.bf16.mxu0 0
        %4047 = vmatpush1.bf16.msra.mxu0 0
        %4048 = vmatprep.subr.bf16.mxu0 0
        %4049 = vmatpush1.bf16.msra.mxu0 0
        %4050 = vmatprep.subr.bf16.mxu0 0
        %4051 = vmatpush1.bf16.msra.mxu0 0
        %4052 = vmatprep.subr.bf16.mxu0 0
        %4053 = vmatpush1.bf16.msra.mxu0 0
        %4054 = vmatprep.subr.bf16.mxu0 0
        %4055 = vmatpush1.bf16.msra.mxu0 0
        %4056 = vmatprep.subr.bf16.mxu0 0
        %4057 = vmatpush1.bf16.msra.mxu0 0
        %4058 = vmatprep.mubr.bf16.mxu0 0
        %4059 = vmatmul.mubr.bf16.gmra.mrb[0].mxu0 %v3429
        %v4060 = vpop.f32.mrb[0].mxu0
        %v4061 = vadd.f32 0.0, %v4060
        %v4062 = vpop.f32.mrb[0].mxu0
        %v4063 = vpop.f32.mrb[0].mxu0
        %v4064 = vadd.f32 0.0, %v4063
        %v4065 = vpop.f32.mrb[0].mxu0
        %4066 = vmatprep.mubr.bf16.mxu0 0
        %4067 = vmatmul.mubr.bf16.gmra.mrb[0].mxu0 %v3432
        %v4068 = vpop.f32.mrb[0].mxu0
        %v4069 = vadd.f32 0.0, %v4068
        %v4070 = vpop.f32.mrb[0].mxu0
        %v4071 = vpop.f32.mrb[0].mxu0
        %v4072 = vadd.f32 0.0, %v4071
        %v4073 = vpop.f32.mrb[0].mxu0
        %4074 = vmatprep.mubr.bf16.mxu0 0
        %4075 = vmatmul.mubr.bf16.gmra.mrb[0].mxu0 %v3435
        %v4076 = vpop.f32.mrb[0].mxu0
        %v4077 = vadd.f32 0.0, %v4076
        %v4078 = vpop.f32.mrb[0].mxu0
        %v4079 = vpop.f32.mrb[0].mxu0
        %v4080 = vadd.f32 0.0, %v4079
        %v4081 = vpop.f32.mrb[0].mxu0
        %4082 = vmatprep.mubr.bf16.mxu0 0
        %4083 = vmatmul.mubr.bf16.gmra.mrb[0].mxu0 %v3438
        %v4084 = vpop.f32.mrb[0].mxu0
        %v4085 = vadd.f32 0.0, %v4084
        %v4086 = vpop.f32.mrb[0].mxu0
        %v4087 = vpop.f32.mrb[0].mxu0
        %v4088 = vpop.f32.mrb[0].mxu0
        %4089 = vdwg.mxu0
        %v4091 = vsel %vm3440, %v4022, 0
        %4093 = vmatprep.subr.bf16.mxu0 0
        %4094 = vmatpush1.bf16.msra.mxu0 %v4091
        %4095 = vmatprep.subr.bf16.mxu0 0
        %4096 = vmatpush1.bf16.msra.mxu0 0
        %4097 = vmatprep.subr.bf16.mxu0 0
        %4098 = vmatpush1.bf16.msra.mxu0 0
        %4099 = vmatprep.subr.bf16.mxu0 0
        %4100 = vmatpush1.bf16.msra.mxu0 0
        %4101 = vmatprep.subr.bf16.mxu0 0
        %4102 = vmatpush1.bf16.msra.mxu0 0
        %4103 = vmatprep.subr.bf16.mxu0 0
        %4104 = vmatpush1.bf16.msra.mxu0 0
        %4105 = vmatprep.subr.bf16.mxu0 0
        %4106 = vmatpush1.bf16.msra.mxu0 0
        %4107 = vmatprep.subr.bf16.mxu0 0
        %4108 = vmatpush1.bf16.msra.mxu0 0
        %4109 = vmatprep.subr.bf16.mxu0 0
        %4110 = vmatpush1.bf16.msra.mxu0 0
        %4111 = vmatprep.subr.bf16.mxu0 0
        %4112 = vmatpush1.bf16.msra.mxu0 0
        %4113 = vmatprep.subr.bf16.mxu0 0
        %4114 = vmatpush1.bf16.msra.mxu0 0
        %4115 = vmatprep.subr.bf16.mxu0 0
        %4116 = vmatpush1.bf16.msra.mxu0 0
        %4117 = vmatprep.subr.bf16.mxu0 0
        %4118 = vmatpush1.bf16.msra.mxu0 0
        %4119 = vmatprep.subr.bf16.mxu0 0
        %4120 = vmatpush1.bf16.msra.mxu0 0
        %4121 = vmatprep.subr.bf16.mxu0 0
        %4122 = vmatpush1.bf16.msra.mxu0 0
        %4123 = vmatprep.subr.bf16.mxu0 0
        %4124 = vmatpush1.bf16.msra.mxu0 0
        %4125 = vmatprep.mubr.bf16.mxu0 0
        %4126 = vmatmul.mubr.bf16.gmra.mrb[0].mxu0 %v3509
        %v4127 = vpop.f32.mrb[0].mxu0
        %v4128 = vadd.f32 0.0, %v4127
        %v4129 = vpop.f32.mrb[0].mxu0
        %v4130 = vpop.f32.mrb[0].mxu0
        %v4131 = vadd.f32 0.0, %v4130
        %v4132 = vpop.f32.mrb[0].mxu0
        %4133 = vmatprep.mubr.bf16.mxu0 0
        %4134 = vmatmul.mubr.bf16.gmra.mrb[0].mxu0 %v3512
        %v4135 = vpop.f32.mrb[0].mxu0
        %v4136 = vadd.f32 0.0, %v4135
        %v4137 = vpop.f32.mrb[0].mxu0
        %v4138 = vpop.f32.mrb[0].mxu0
        %v4139 = vadd.f32 0.0, %v4138
        %v4140 = vpop.f32.mrb[0].mxu0
        %4141 = vmatprep.mubr.bf16.mxu0 0
        %4142 = vmatmul.mubr.bf16.gmra.mrb[0].mxu0 %v3515
        %v4143 = vpop.f32.mrb[0].mxu0
        %v4144 = vadd.f32 0.0, %v4143
        %v4145 = vpop.f32.mrb[0].mxu0
        %v4146 = vpop.f32.mrb[0].mxu0
        %v4147 = vadd.f32 0.0, %v4146
        %v4148 = vpop.f32.mrb[0].mxu0
        %4149 = vmatprep.mubr.bf16.mxu0 0
        %4150 = vmatmul.mubr.bf16.gmra.mrb[0].mxu0 %v3518
        %v4151 = vpop.f32.mrb[0].mxu0
        %v4152 = vadd.f32 0.0, %v4151
        %v4153 = vpop.f32.mrb[0].mxu0
        %v4154 = vpop.f32.mrb[0].mxu0
        %v4155 = vpop.f32.mrb[0].mxu0
        %4156 = vdwg.mxu0
        %v4157 = vmul.f32 %v4061, %v3941
        %v4158 = vmul.f32 %v4064, %v3942
        %v4159 = vmul.f32 %v4069, %v3943
        %v4160 = vmul.f32 %v4072, %v3944
        %v4161 = vmul.f32 %v4077, %v3945
        %v4162 = vmul.f32 %v4080, %v3946
        %v4163 = vmul.f32 %v4085, %v3947
        %v4164 = vmul.f32 %v4128, %v3948
        %v4165 = vmul.f32 %v4131, %v3949
        %v4166 = vmul.f32 %v4136, %v3950
        %v4167 = vmul.f32 %v4139, %v3951
        %v4168 = vmul.f32 %v4144, %v3952
        %v4169 = vmul.f32 %v4147, %v3953
        %v4170 = vmul.f32 %v4152, %v3954
        %v4171 = vsel %vm3166, %v4157, 0.0
        %v4172 = vsel %vm3166, %v4158, 0.0
        %v4173 = vadd.f32 %v4171, %v4172
        %v4174 = vsel %vm3166, %v4159, 0.0
        %v4175 = vadd.f32 %v4173, %v4174
        %v4176 = vsel %vm3166, %v4160, 0.0
        %v4177 = vadd.f32 %v4175, %v4176
        %v4178 = vsel %vm3166, %v4161, 0.0
        %v4179 = vadd.f32 %v4177, %v4178
        %v4180 = vsel %vm3166, %v4162, 0.0
        %v4181 = vadd.f32 %v4179, %v4180
        %v4182 = vsel %vm3166, %v4163, 0.0
        %v4183 = vadd.f32 %v4181, %v4182
        %v4184 = vsel %vm3166, %v4164, 0.0
        %v4185 = vsel %vm3166, %v4165, 0.0
        %v4186 = vadd.f32 %v4184, %v4185
        %v4187 = vsel %vm3166, %v4166, 0.0
        %v4188 = vadd.f32 %v4186, %v4187
        %v4189 = vsel %vm3166, %v4167, 0.0
        %v4190 = vadd.f32 %v4188, %v4189
        %v4191 = vsel %vm3166, %v4168, 0.0
        %v4192 = vadd.f32 %v4190, %v4191
        %v4193 = vsel %vm3166, %v4169, 0.0
        %v4194 = vadd.f32 %v4192, %v4193
        %v4195 = vsel %vm3166, %v4170, 0.0
        %v4196 = vadd.f32 %v4194, %v4195
        %v4197 = vpack.c.bf16 %v4196, %v4183
        %s4198 = scalar_lea.vmem %s10, 16
        %v4199 = vld [vmem:[%s4198] sm:$0xf]
        %v4200 = vld [vmem:[%s4198 + $0x4] sm:$0xf]
        %v4201 = vld [vmem:[%s4198 + $0x8] sm:$0xf]
        %v4202 = vld [vmem:[%s4198 + $0xc] sm:$0xf]
        %s4203 = scalar_lea.vmem %s11, 1
        %v4204 = vld [vmem:[%s4203] sm:$0x1]
        %v4206 = vlaneseq
        %v4207 = vshrl.u32 %v4206, 7
        %v4208 = vsub.s32 0, %v4207
        %v4209 = vrot.slane %v4204, %v4208
        %v4215 = vunpack.c.l.b16 %v4199
        %v4216 = vunpack.c.l.b16 %v4200
        %v4217 = vunpack.c.l.b16 %v4201
        %v4218 = vunpack.c.l.b16 %v4202
        %v4219 = vpack.c.b16 %v4216, %v4215
        %v4220 = vpack.c.b16 %v4218, %v4217
        %v4224 = vsel %vm3166, %v4197, 0
        %4226 = vmatprep.subr.bf16.mxu0 0
        %4227 = vmatpush1.bf16.msra.mxu0 %v4219
        %4228 = vmatprep.subr.bf16.mxu0 0
        %4229 = vmatpush1.bf16.msra.mxu0 %v4220
        %4230 = vmatprep.subr.bf16.mxu0 0
        %4231 = vmatpush1.bf16.msra.mxu0 0
        %4232 = vmatprep.subr.bf16.mxu0 0
        %4233 = vmatpush1.bf16.msra.mxu0 0
        %4234 = vmatprep.subr.bf16.mxu0 0
        %4235 = vmatpush1.bf16.msra.mxu0 0
        %4236 = vmatprep.subr.bf16.mxu0 0
        %4237 = vmatpush1.bf16.msra.mxu0 0
        %4238 = vmatprep.subr.bf16.mxu0 0
        %4239 = vmatpush1.bf16.msra.mxu0 0
        %4240 = vmatprep.subr.bf16.mxu0 0
        %4241 = vmatpush1.bf16.msra.mxu0 0
        %4242 = vmatprep.subr.bf16.mxu0 0
        %4243 = vmatpush1.bf16.msra.mxu0 0
        %4244 = vmatprep.subr.bf16.mxu0 0
        %4245 = vmatpush1.bf16.msra.mxu0 0
        %4246 = vmatprep.subr.bf16.mxu0 0
        %4247 = vmatpush1.bf16.msra.mxu0 0
        %4248 = vmatprep.subr.bf16.mxu0 0
        %4249 = vmatpush1.bf16.msra.mxu0 0
        %4250 = vmatprep.subr.bf16.mxu0 0
        %4251 = vmatpush1.bf16.msra.mxu0 0
        %4252 = vmatprep.subr.bf16.mxu0 0
        %4253 = vmatpush1.bf16.msra.mxu0 0
        %4254 = vmatprep.subr.bf16.mxu0 0
        %4255 = vmatpush1.bf16.msra.mxu0 0
        %4256 = vmatprep.subr.bf16.mxu0 0
        %4257 = vmatpush1.bf16.msra.mxu0 0
        %4258 = vmatprep.mubr.bf16.mxu0 0
        %4259 = vmatmul.mubr.bf16.gmra.mrb[0].mxu0 %v4224
        %v4260 = vpop.f32.mrb[0].mxu0
        %v4261 = vadd.f32 %v4209, %v4260
        %v4262 = vpop.f32.mrb[0].mxu0
        %v4263 = vpop.f32.mrb[0].mxu0
        %v4264 = vadd.f32 %v4209, %v4263
        %v4265 = vpop.f32.mrb[0].mxu0
        %4266 = vdwg.mxu0
        %v4267 = vmax.f32 %v4261, 0.0
        %v4268 = vmax.f32 %v4264, 0.0
        %v4269 = vand.u32 2147483647, %v4261
        %v4270 = vand.u32 2147483647, %v4264
        %v4271 = vsub.f32 0.0, %v4269
        %v4272 = vsub.f32 0.0, %v4270
        %v4273 = vmul.f32 %v4271, 1.442695
        %v4274 = vpow.pop %v4273
        %v4275 = vmul.f32 %v4272, 1.442695
        %v4276 = vpow.pop %v4275
        %v4277 = vadd.f32 %v4274, 1.0
        %v4278 = vadd.f32 %v4276, 1.0
        %v4279 = vlog2.pop %v4277
        %v4280 = vmul.f32 %v4279, 0.6931472
        %v4281 = vlog2.pop %v4278
        %v4282 = vmul.f32 %v4281, 0.6931472
        %v4283 = vadd.f32 %v4267, %v4280
        %v4284 = vadd.f32 %v4268, %v4282
        %v4285 = vsub.f32 %v4283, 0.6931472
        %v4286 = vsub.f32 %v4284, 0.6931472
        %v4287 = vpack.c.bf16 %v4286, %v4285
        %s4288 = scalar_lea.vmem %s12, 16
        %v4289 = vld [vmem:[%s4288] sm:$0xf]
        %v4290 = vld [vmem:[%s4288 + $0x4] sm:$0xf]
        %v4291 = vld [vmem:[%s4288 + $0x8] sm:$0xf]
        %v4292 = vld [vmem:[%s4288 + $0xc] sm:$0xf]
        %s4293 = scalar_lea.vmem %s13, 1
        %v4294 = vld [vmem:[%s4293] sm:$0x1]
        %v4296 = vlaneseq
        %v4297 = vshrl.u32 %v4296, 7
        %v4298 = vsub.s32 0, %v4297
        %v4299 = vrot.slane %v4294, %v4298
        %v4305 = vunpack.c.l.b16 %v4289
        %v4306 = vunpack.c.l.b16 %v4290
        %v4307 = vunpack.c.l.b16 %v4291
        %v4308 = vunpack.c.l.b16 %v4292
        %v4309 = vpack.c.b16 %v4306, %v4305
        %v4310 = vpack.c.b16 %v4308, %v4307
        %v4314 = vsel %vm3166, %v4287, 0
        %4316 = vmatprep.subr.bf16.mxu0 0
        %4317 = vmatpush1.bf16.msra.mxu0 %v4309
        %4318 = vmatprep.subr.bf16.mxu0 0
        %4319 = vmatpush1.bf16.msra.mxu0 %v4310
        %4320 = vmatprep.subr.bf16.mxu0 0
        %4321 = vmatpush1.bf16.msra.mxu0 0
        %4322 = vmatprep.subr.bf16.mxu0 0
        %4323 = vmatpush1.bf16.msra.mxu0 0
        %4324 = vmatprep.subr.bf16.mxu0 0
        %4325 = vmatpush1.bf16.msra.mxu0 0
        %4326 = vmatprep.subr.bf16.mxu0 0
        %4327 = vmatpush1.bf16.msra.mxu0 0
        %4328 = vmatprep.subr.bf16.mxu0 0
        %4329 = vmatpush1.bf16.msra.mxu0 0
        %4330 = vmatprep.subr.bf16.mxu0 0
        %4331 = vmatpush1.bf16.msra.mxu0 0
        %4332 = vmatprep.subr.bf16.mxu0 0
        %4333 = vmatpush1.bf16.msra.mxu0 0
        %4334 = vmatprep.subr.bf16.mxu0 0
        %4335 = vmatpush1.bf16.msra.mxu0 0
        %4336 = vmatprep.subr.bf16.mxu0 0
        %4337 = vmatpush1.bf16.msra.mxu0 0
        %4338 = vmatprep.subr.bf16.mxu0 0
        %4339 = vmatpush1.bf16.msra.mxu0 0
        %4340 = vmatprep.subr.bf16.mxu0 0
        %4341 = vmatpush1.bf16.msra.mxu0 0
        %4342 = vmatprep.subr.bf16.mxu0 0
        %4343 = vmatpush1.bf16.msra.mxu0 0
        %4344 = vmatprep.subr.bf16.mxu0 0
        %4345 = vmatpush1.bf16.msra.mxu0 0
        %4346 = vmatprep.subr.bf16.mxu0 0
        %4347 = vmatpush1.bf16.msra.mxu0 0
        %4348 = vmatprep.mubr.bf16.mxu0 0
        %4349 = vmatmul.mubr.bf16.gmra.mrb[0].mxu0 %v4314
        %v4350 = vpop.f32.mrb[0].mxu0
        %v4351 = vadd.f32 %v4299, %v4350
        %v4352 = vpop.f32.mrb[0].mxu0
        %v4353 = vpop.f32.mrb[0].mxu0
        %v4354 = vadd.f32 %v4299, %v4353
        %v4355 = vpop.f32.mrb[0].mxu0
        %4356 = vdwg.mxu0
        %v4357 = vadd.f32 %v3783, %v4351
        %v4358 = vadd.f32 %v3784, %v4354
        %4359 = vst.msk [vmem:[%s505] sm:$0xff] %vm3166, %v4357
        %4360 = vst.msk [vmem:[%s505 + $0x8] sm:$0xff] %vm3166, %v4358
        %s4361 = sand.u32 %s350, 1
        %s4362 = scalar_lea.sflag [#allocation3], %s4361
        %s4363 = sand.u32 %s350, 1
        %s4364 = smul.addr %s4363, 16
        %s4365 = scalar_lea.vmem [#allocation2], %s4364
        // Predicated region
        $region77: #{tpu_custom_call.1} parent=75 // pred_check
          %p4366 = pneg %p360
        $region78: #{tpu_custom_call.1} parent=75 // pred_check_branch
          %4368 = sbr.rel (%p4366) target = $region80
        $region79: #{tpu_custom_call.1} parent=75 // pred_region
          %s4370 = ssub.s32 256, 256
          %4371 = vsyncadd %s4362, %s4370
          %s4372 = smul.addr %s28, 2
          %s4373 = smul.addr %s4372, 128
          %s4374 = scalar_lea.hbm %s14, %s4373
          %s4375 = sshll.u32 %s4365, 4
          %s4376 = int_to_ptr.vmem [resolvable:$true] %s4375
          %4381 = dma.vmem_to_hbm [thread:$0]  %s4376, 256, %s4374, %s4362, 128, 128, 8
        $region80: #{tpu_custom_call.1} parent=75 // pred_fallthru
          _
      $region76: #{tpu_custom_call.1} parent=5 // pred_fallthru
        _
      %p4382 = scmp.le.s32.totalorder 2, %s23
      // Predicated region
      $region81: #{tpu_custom_call.1} parent=5 // pred_check
        %p4383 = pneg %p4382
      $region82: #{tpu_custom_call.1} parent=5 // pred_check_branch
        %4385 = sbr.rel (%p4383) target = $region84
      $region83: #{tpu_custom_call.1} parent=5 // pred_region
        %s4386 = ssub.s32 %s23, 2
        // Predicated region
        $region85: #{tpu_custom_call.1} parent=83 // pred_check
          %p4387 = pneg %p366
        $region86: #{tpu_custom_call.1} parent=83 // pred_check_branch
          %4389 = sbr.rel (%p4387) target = $region88
        $region87: #{tpu_custom_call.1} parent=83 // pred_region
          %s4390 = sand.u32 %s351, 1
          %s4391 = scalar_lea.sflag [#allocation3], %s4390
          %s4392 = sand.u32 %s351, 1
          %s4393 = smul.addr %s4392, 16
          %s4394 = scalar_lea.vmem [#allocation2], %s4393
          %4395 = dma.done %s4391, 256
        $region88: #{tpu_custom_call.1} parent=83 // pred_fallthru
          _
      $region84: #{tpu_custom_call.1} parent=5 // pred_fallthru
        _
    $region6: #{tpu_custom_call.1} parent=1 // loop_footer
      %s27 = sadd.s32 1, %s23
    $region7: #{tpu_custom_call.1} parent=1 // loop_footer_branch
      %22 = sbr.rel target = $region3
    $region8: #{tpu_custom_call.1} parent=1 // loop_exit
      _
    %4396 = vsyncpa [#allocation3], 1
    %s4397 = scalar_lea.sflag [#allocation3], 1
    %4398 = vsyncpa %s4397, 1

// kernel: tpu_custom_call.1
$region0: #{tpu_custom_call.1}
  #allocation0 [shape = 'u32[]', space=smem, size = 0x4, offset = 0x4, fixed_abs, tag = 'smem constant byte address 0x4 - core index']
  #allocation1 [shape = 'u32[144,128]{1,0:T(1,128)}', space=vmem, size = 0x12000, scoped, tag = 'internal scratch']
  %s0 = inlined_call_operand.vmem [shape: f32[4,2,8,3], index: 0, kind: input, shape index: {}]
  %s1 = inlined_call_operand.vmem [shape: f32[4,16,32], index: 1, kind: input, shape index: {}]
  %s2 = inlined_call_operand.vmem [shape: s32[4,2,56,1], index: 2, kind: input, shape index: {}]
  %s3 = inlined_call_operand.vmem [shape: f32[4,2,56,1], index: 3, kind: input, shape index: {}]
  %s4 = inlined_call_operand.vmem [shape: f32[1,16], index: 4, kind: input, shape index: {}]
  %s5 = inlined_call_operand.vmem [shape: bf16[16,64], index: 5, kind: input, shape index: {}]
  %s6 = inlined_call_operand.vmem [shape: f32[1,64], index: 6, kind: input, shape index: {}]
  %s7 = inlined_call_operand.vmem [shape: bf16[2,32,32], index: 7, kind: input, shape index: {}]
  %s8 = inlined_call_operand.vmem [shape: f32[2,1,32], index: 8, kind: input, shape index: {}]
  %s9 = inlined_call_operand.vmem [shape: bf16[2,32,32], index: 9, kind: input, shape index: {}]
  %s10 = inlined_call_operand.vmem [shape: bf16[2,32,32], index: 10, kind: input, shape index: {}]
  %s11 = inlined_call_operand.vmem [shape: f32[2,1,32], index: 11, kind: input, shape index: {}]
  %s12 = inlined_call_operand.vmem [shape: bf16[2,32,32], index: 12, kind: input, shape index: {}]
  %s13 = inlined_call_operand.vmem [shape: f32[2,1,32], index: 13, kind: input, shape index: {}]
  %s14 = inlined_call_operand.hbm [shape: f32[4,16,32], index: 14, kind: output, shape index: {}]
  %s15 = sld [smem:[#allocation0]]
  $region89: #{tpu_custom_call.1} parent=0
    _
  %s17 = ssub.s32 1, %s15
  %s18 = scalar_select 0, %s17, %s15
  $region1: #{tpu_custom_call.1} parent=0
    #allocation2 [shape = 'u8[16384]{0}', space=vmem, size = 0x4000, scoped, tag = 'output window, operand 0']
    #allocation3 [shape = 's32[2]{0}', space=sflag, size = 0x8, scoped, tag = 'scoped memory for tpu_custom_call.1']
    %19 = vsyncpa [#allocation3], 0
    %s20 = scalar_lea.sflag [#allocation3], 1
    %21 = vsyncpa %s20, 0
    loop: start=0, step=1, limit=6
    $region2: #{tpu_custom_call.1} parent=1 // loop_pre_header
      _
    $region3: #{tpu_custom_call.1} parent=1 // loop_header
      %s23 = sphi 0, %s27
      %p24 = scmp.ge.s32.totalorder %s23, 6
      %s33 = sphi 0, %s35
      %s36 = sphi 0, %s33
      %s37 = sphi 0, %s36
      %s53 = sphi 0, %s37
      %s59 = sphi 0, %s61
      %s62 = sphi 0, %s59
      %s63 = sphi 0, %s62
      %s79 = sphi 0, %s63
      %s85 = sphi 0, %s87
      %s88 = sphi 0, %s85
      %s89 = sphi 0, %s88
      %s105 = sphi 0, %s89
      %s111 = sphi 0, %s113
      %s114 = sphi 0, %s111
      %s115 = sphi 0, %s114
      %s131 = sphi 0, %s115
      %s135 = sphi 0, %s135
      %s137 = sphi 0, %s135
      %s138 = sphi 0, %s137
      %s152 = sphi 0, %s138
      %s156 = sphi 0, %s156
      %s158 = sphi 0, %s156
      %s159 = sphi 0, %s158
      %s173 = sphi 0, %s159
      %s177 = sphi 0, %s177
      %s179 = sphi 0, %s177
      %s180 = sphi 0, %s179
      %s194 = sphi 0, %s180
      %s198 = sphi 0, %s198
      %s200 = sphi 0, %s198
      %s201 = sphi 0, %s200
      %s215 = sphi 0, %s201
      %s219 = sphi 0, %s219
      %s221 = sphi 0, %s219
      %s222 = sphi 0, %s221
      %s236 = sphi 0, %s222
      %s240 = sphi 0, %s240
      %s242 = sphi 0, %s240
      %s243 = sphi 0, %s242
      %s257 = sphi 0, %s243
      %s261 = sphi 0, %s261
      %s263 = sphi 0, %s261
      %s264 = sphi 0, %s263
      %s278 = sphi 0, %s264
      %s282 = sphi 0, %s282
      %s284 = sphi 0, %s282
      %s285 = sphi 0, %s284
      %s299 = sphi 0, %s285
      %s303 = sphi 0, %s303
      %s305 = sphi 0, %s303
      %s306 = sphi 0, %s305
      %s320 = sphi 0, %s306
      %s324 = sphi 0, %s324
      %s326 = sphi 0, %s324
      %s327 = sphi 0, %s326
      %s341 = sphi 0, %s327
      %s347 = sphi 0, %s349
      %s350 = sphi 0, %s347
      %s351 = sphi 0, %s350
      %s367 = sphi 0, %s351
    $region4: #{tpu_custom_call.1} parent=1 // loop_header_branch
      %26 = sbr.rel (%p24) target = $region8
    $region5: #{tpu_custom_call.1} parent=1 // loop_body
      %s28 = ssub.s32 %s23, 1
      %s29 = ssub.s32 %s23, 2
      %s30 = sadd.s32 %s23, 1
      %s31 = ssub.s32 %s23, %s30
      %p32 = scmp.eq.s32.totalorder %s31, 0
      %s34 = sadd.s32 %s33, 1
      %s35 = scalar_select %p32, %s33, %s34
      %p38 = pneg %p32
      %p39 = scmp.eq.s32.totalorder %s23, 3
      %p40 = por %p38, %p39
      %p41 = scmp.ne.s32.totalorder %s33, %s36
      %p42 = scmp.eq.s32.totalorder %s23, 0
      %p43 = por %p41, %p42
      %p44 = scmp.ne.s32.totalorder %s33, %s36
      %p45 = scmp.eq.s32.totalorder %s28, 3
      %p46 = por %p44, %p45
      %p47 = scmp.ne.s32.totalorder %s36, %s37
      %p48 = scmp.eq.s32.totalorder %s28, 0
      %p49 = por %p47, %p48
      %p50 = scmp.ne.s32.totalorder %s36, %s37
      %p51 = scmp.eq.s32.totalorder %s29, 3
      %p52 = por %p50, %p51
      %p54 = scmp.ne.s32.totalorder %s37, %s53
      %p55 = scmp.eq.s32.totalorder %s29, 0
      %p56 = por %p54, %p55
      %s57 = ssub.s32 %s23, %s30
      %p58 = scmp.eq.s32.totalorder %s57, 0
      %s60 = sadd.s32 %s59, 1
      %s61 = scalar_select %p58, %s59, %s60
      %p64 = pneg %p58
      %p65 = scmp.eq.s32.totalorder %s23, 3
      %p66 = por %p64, %p65
      %p67 = scmp.ne.s32.totalorder %s59, %s62
      %p68 = scmp.eq.s32.totalorder %s23, 0
      %p69 = por %p67, %p68
      %p70 = scmp.ne.s32.totalorder %s59, %s62
      %p71 = scmp.eq.s32.totalorder %s28, 3
      %p72 = por %p70, %p71
      %p73 = scmp.ne.s32.totalorder %s62, %s63
      %p74 = scmp.eq.s32.totalorder %s28, 0
      %p75 = por %p73, %p74
      %p76 = scmp.ne.s32.totalorder %s62, %s63
      %p77 = scmp.eq.s32.totalorder %s29, 3
      %p78 = por %p76, %p77
      %p80 = scmp.ne.s32.totalorder %s63, %s79
      %p81 = scmp.eq.s32.totalorder %s29, 0
      %p82 = por %p80, %p81
      %s83 = ssub.s32 %s23, %s30
      %p84 = scmp.eq.s32.totalorder %s83, 0
      %s86 = sadd.s32 %s85, 1
      %s87 = scalar_select %p84, %s85, %s86
      %p90 = pneg %p84
      %p91 = scmp.eq.s32.totalorder %s23, 3
      %p92 = por %p90, %p91
      %p93 = scmp.ne.s32.totalorder %s85, %s88
      %p94 = scmp.eq.s32.totalorder %s23, 0
      %p95 = por %p93, %p94
      %p96 = scmp.ne.s32.totalorder %s85, %s88
      %p97 = scmp.eq.s32.totalorder %s28, 3
      %p98 = por %p96, %p97
      %p99 = scmp.ne.s32.totalorder %s88, %s89
      %p100 = scmp.eq.s32.totalorder %s28, 0
      %p101 = por %p99, %p100
      %p102 = scmp.ne.s32.totalorder %s88, %s89
      %p103 = scmp.eq.s32.totalorder %s29, 3
      %p104 = por %p102, %p103
      %p106 = scmp.ne.s32.totalorder %s89, %s105
      %p107 = scmp.eq.s32.totalorder %s29, 0
      %p108 = por %p106, %p107
      %s109 = ssub.s32 %s23, %s30
      %p110 = scmp.eq.s32.totalorder %s109, 0
      %s112 = sadd.s32 %s111, 1
      %s113 = scalar_select %p110, %s111, %s112
      %p116 = pneg %p110
      %p117 = scmp.eq.s32.totalorder %s23, 3
      %p118 = por %p116, %p117
      %p119 = scmp.ne.s32.totalorder %s111, %s114
      %p120 = scmp.eq.s32.totalorder %s23, 0
      %p121 = por %p119, %p120
      %p122 = scmp.ne.s32.totalorder %s111, %s114
      %p123 = scmp.eq.s32.totalorder %s28, 3
      %p124 = por %p122, %p123
      %p125 = scmp.ne.s32.totalorder %s114, %s115
      %p126 = scmp.eq.s32.totalorder %s28, 0
      %p127 = por %p125, %p126
      %p128 = scmp.ne.s32.totalorder %s114, %s115
      %p129 = scmp.eq.s32.totalorder %s29, 3
      %p130 = por %p128, %p129
      %p132 = scmp.ne.s32.totalorder %s115, %s131
      %p133 = scmp.eq.s32.totalorder %s29, 0
      %p134 = por %p132, %p133
      %s136 = sadd.s32 %s135, 1
      %p139 = scmp.eq.s32.totalorder %s23, 3
      %p140 = scmp.ne.s32.totalorder %s135, %s137
      %p141 = scmp.eq.s32.totalorder %s23, 0
      %p142 = por %p140, %p141
      %p143 = scmp.ne.s32.totalorder %s135, %s137
      %p144 = scmp.eq.s32.totalorder %s28, 3
      %p145 = por %p143, %p144
      %p146 = scmp.ne.s32.totalorder %s137, %s138
      %p147 = scmp.eq.s32.totalorder %s28, 0
      %p148 = por %p146, %p147
      %p149 = scmp.ne.s32.totalorder %s137, %s138
      %p150 = scmp.eq.s32.totalorder %s29, 3
      %p151 = por %p149, %p150
      %p153 = scmp.ne.s32.totalorder %s138, %s152
      %p154 = scmp.eq.s32.totalorder %s29, 0
      %p155 = por %p153, %p154
      %s157 = sadd.s32 %s156, 1
      %p160 = scmp.eq.s32.totalorder %s23, 3
      %p161 = scmp.ne.s32.totalorder %s156, %s158
      %p162 = scmp.eq.s32.totalorder %s23, 0
      %p163 = por %p161, %p162
      %p164 = scmp.ne.s32.totalorder %s156, %s158
      %p165 = scmp.eq.s32.totalorder %s28, 3
      %p166 = por %p164, %p165
      %p167 = scmp.ne.s32.totalorder %s158, %s159
      %p168 = scmp.eq.s32.totalorder %s28, 0
      %p169 = por %p167, %p168
      %p170 = scmp.ne.s32.totalorder %s158, %s159
      %p171 = scmp.eq.s32.totalorder %s29, 3
      %p172 = por %p170, %p171
      %p174 = scmp.ne.s32.totalorder %s159, %s173
      %p175 = scmp.eq.s32.totalorder %s29, 0
      %p176 = por %p174, %p175
      %s178 = sadd.s32 %s177, 1
      %p181 = scmp.eq.s32.totalorder %s23, 3
      %p182 = scmp.ne.s32.totalorder %s177, %s179
      %p183 = scmp.eq.s32.totalorder %s23, 0
      %p184 = por %p182, %p183
      %p185 = scmp.ne.s32.totalorder %s177, %s179
      %p186 = scmp.eq.s32.totalorder %s28, 3
      %p187 = por %p185, %p186
      %p188 = scmp.ne.s32.totalorder %s179, %s180
      %p189 = scmp.eq.s32.totalorder %s28, 0
      %p190 = por %p188, %p189
      %p191 = scmp.ne.s32.totalorder %s179, %s180
      %p192 = scmp.eq.s32.totalorder %s29, 3
      %p193 = por %p191, %p192
      %p195 = scmp.ne.s32.totalorder %s180, %s194
      %p196 = scmp.eq.s32.totalorder %s29, 0
      %p197 = por %p195, %p196
      %s199 = sadd.s32 %s198, 1
      %p202 = scmp.eq.s32.totalorder %s23, 3
      %p203 = scmp.ne.s32.totalorder %s198, %s200
      %p204 = scmp.eq.s32.totalorder %s23, 0
      %p205 = por %p203, %p204
      %p206 = scmp.ne.s32.totalorder %s198, %s200
      %p207 = scmp.eq.s32.totalorder %s28, 3
      %p208 = por %p206, %p207
      %p209 = scmp.ne.s32.totalorder %s200, %s201
      %p210 = scmp.eq.s32.totalorder %s28, 0
      %p211 = por %p209, %p210
      %p212 = scmp.ne.s32.totalorder %s200, %s201
      %p213 = scmp.eq.s32.totalorder %s29, 3
      %p214 = por %p212, %p213
      %p216 = scmp.ne.s32.totalorder %s201, %s215
      %p217 = scmp.eq.s32.totalorder %s29, 0
      %p218 = por %p216, %p217
      %s220 = sadd.s32 %s219, 1
      %p223 = scmp.eq.s32.totalorder %s23, 3
      %p224 = scmp.ne.s32.totalorder %s219, %s221
      %p225 = scmp.eq.s32.totalorder %s23, 0
      %p226 = por %p224, %p225
      %p227 = scmp.ne.s32.totalorder %s219, %s221
      %p228 = scmp.eq.s32.totalorder %s28, 3
      %p229 = por %p227, %p228
      %p230 = scmp.ne.s32.totalorder %s221, %s222
      %p231 = scmp.eq.s32.totalorder %s28, 0
      %p232 = por %p230, %p231
      %p233 = scmp.ne.s32.totalorder %s221, %s222
      %p234 = scmp.eq.s32.totalorder %s29, 3
      %p235 = por %p233, %p234
      %p237 = scmp.ne.s32.totalorder %s222, %s236
      %p238 = scmp.eq.s32.totalorder %s29, 0
      %p239 = por %p237, %p238
      %s241 = sadd.s32 %s240, 1
      %p244 = scmp.eq.s32.totalorder %s23, 3
      %p245 = scmp.ne.s32.totalorder %s240, %s242
      %p246 = scmp.eq.s32.totalorder %s23, 0
      %p247 = por %p245, %p246
      %p248 = scmp.ne.s32.totalorder %s240, %s242
      %p249 = scmp.eq.s32.totalorder %s28, 3
      %p250 = por %p248, %p249
      %p251 = scmp.ne.s32.totalorder %s242, %s243
      %p252 = scmp.eq.s32.totalorder %s28, 0
      %p253 = por %p251, %p252
      %p254 = scmp.ne.s32.totalorder %s242, %s243
      %p255 = scmp.eq.s32.totalorder %s29, 3
      %p256 = por %p254, %p255
      %p258 = scmp.ne.s32.totalorder %s243, %s257
      %p259 = scmp.eq.s32.totalorder %s29, 0
      %p260 = por %p258, %p259
      %s262 = sadd.s32 %s261, 1
      %p265 = scmp.eq.s32.totalorder %s23, 3
      %p266 = scmp.ne.s32.totalorder %s261, %s263
      %p267 = scmp.eq.s32.totalorder %s23, 0
      %p268 = por %p266, %p267
      %p269 = scmp.ne.s32.totalorder %s261, %s263
      %p270 = scmp.eq.s32.totalorder %s28, 3
      %p271 = por %p269, %p270
      %p272 = scmp.ne.s32.totalorder %s263, %s264
      %p273 = scmp.eq.s32.totalorder %s28, 0
      %p274 = por %p272, %p273
      %p275 = scmp.ne.s32.totalorder %s263, %s264
      %p276 = scmp.eq.s32.totalorder %s29, 3
      %p277 = por %p275, %p276
      %p279 = scmp.ne.s32.totalorder %s264, %s278
      %p280 = scmp.eq.s32.totalorder %s29, 0
      %p281 = por %p279, %p280
      %s283 = sadd.s32 %s282, 1
      %p286 = scmp.eq.s32.totalorder %s23, 3
      %p287 = scmp.ne.s32.totalorder %s282, %s284
      %p288 = scmp.eq.s32.totalorder %s23, 0
      %p289 = por %p287, %p288
      %p290 = scmp.ne.s32.totalorder %s282, %s284
      %p291 = scmp.eq.s32.totalorder %s28, 3
      %p292 = por %p290, %p291
      %p293 = scmp.ne.s32.totalorder %s284, %s285
      %p294 = scmp.eq.s32.totalorder %s28, 0
      %p295 = por %p293, %p294
      %p296 = scmp.ne.s32.totalorder %s284, %s285
      %p297 = scmp.eq.s32.totalorder %s29, 3
      %p298 = por %p296, %p297
      %p300 = scmp.ne.s32.totalorder %s285, %s299
      %p301 = scmp.eq.s32.totalorder %s29, 0
      %p302 = por %p300, %p301
      %s304 = sadd.s32 %s303, 1
      %p307 = scmp.eq.s32.totalorder %s23, 3
      %p308 = scmp.ne.s32.totalorder %s303, %s305
      %p309 = scmp.eq.s32.totalorder %s23, 0
      %p310 = por %p308, %p309
      %p311 = scmp.ne.s32.totalorder %s303, %s305
      %p312 = scmp.eq.s32.totalorder %s28, 3
      %p313 = por %p311, %p312
      %p314 = scmp.ne.s32.totalorder %s305, %s306
      %p315 = scmp.eq.s32.totalorder %s28, 0
      %p316 = por %p314, %p315
      %p317 = scmp.ne.s32.totalorder %s305, %s306
      %p318 = scmp.eq.s32.totalorder %s29, 3
      %p319 = por %p317, %p318
      %p321 = scmp.ne.s32.totalorder %s306, %s320
      %p322 = scmp.eq.s32.totalorder %s29, 0
      %p323 = por %p321, %p322
      %s325 = sadd.s32 %s324, 1
      %p328 = scmp.eq.s32.totalorder %s23, 3
      %p329 = scmp.ne.s32.totalorder %s324, %s326
      %p330 = scmp.eq.s32.totalorder %s23, 0
      %p331 = por %p329, %p330
      %p332 = scmp.ne.s32.totalorder %s324, %s326
      %p333 = scmp.eq.s32.totalorder %s28, 3
      %p334 = por %p332, %p333
      %p335 = scmp.ne.s32.totalorder %s326, %s327
      %p336 = scmp.eq.s32.totalorder %s28, 0
      %p337 = por %p335, %p336
      %p338 = scmp.ne.s32.totalorder %s326, %s327
      %p339 = scmp.eq.s32.totalorder %s29, 3
      %p340 = por %p338, %p339
      %p342 = scmp.ne.s32.totalorder %s327, %s341
      %p343 = scmp.eq.s32.totalorder %s29, 0
      %p344 = por %p342, %p343
      %s345 = ssub.s32 %s23, %s30
      %p346 = scmp.eq.s32.totalorder %s345, 0
      %s348 = sadd.s32 %s347, 1
      %s349 = scalar_select %p346, %s347, %s348
      %p352 = pneg %p346
      %p353 = scmp.eq.s32.totalorder %s23, 3
      %p354 = por %p352, %p353
      %p355 = scmp.ne.s32.totalorder %s347, %s350
      %p356 = scmp.eq.s32.totalorder %s23, 0
      %p357 = por %p355, %p356
      %p358 = scmp.ne.s32.totalorder %s347, %s350
      %p359 = scmp.eq.s32.totalorder %s28, 3
      %p360 = por %p358, %p359
      %p361 = scmp.ne.s32.totalorder %s350, %s351
      %p362 = scmp.eq.s32.totalorder %s28, 0
      %p363 = por %p361, %p362
      %p364 = scmp.ne.s32.totalorder %s350, %s351
      %p365 = scmp.eq.s32.totalorder %s29, 3
      %p366 = por %p364, %p365
      %p368 = scmp.ne.s32.totalorder %s351, %s367
      %p369 = scmp.eq.s32.totalorder %s29, 0
      %p370 = por %p368, %p369
      %p371 = scmp.le.s32.totalorder 1, %s23
      %p372 = scmp.lt.s32.totalorder %s23, 5
      %p373 = pnand %p371, %p372
      %p374 = pneg %p373
      // Predicated region
      $region9: #{tpu_custom_call.1} parent=5 // pred_check
        _
      $region10: #{tpu_custom_call.1} parent=5 // pred_check_branch
        %376 = sbr.rel (%p373) target = $region12
      $region11: #{tpu_custom_call.1} parent=5 // pred_region
        %s377 = ssub.s32 %s23, 1
        // Predicated region
        $region13: #{tpu_custom_call.1} parent=11 // pred_check
          %p378 = pneg %p148
        $region14: #{tpu_custom_call.1} parent=11 // pred_check_branch
          %380 = sbr.rel (%p378) target = $region16
        $region15: #{tpu_custom_call.1} parent=11 // pred_region
          _
        $region16: #{tpu_custom_call.1} parent=11 // pred_fallthru
          _
        // Predicated region
        $region17: #{tpu_custom_call.1} parent=11 // pred_check
          %p381 = pneg %p169
        $region18: #{tpu_custom_call.1} parent=11 // pred_check_branch
          %383 = sbr.rel (%p381) target = $region20
        $region19: #{tpu_custom_call.1} parent=11 // pred_region
          _
        $region20: #{tpu_custom_call.1} parent=11 // pred_fallthru
          _
        // Predicated region
        $region21: #{tpu_custom_call.1} parent=11 // pred_check
          %p384 = pneg %p190
        $region22: #{tpu_custom_call.1} parent=11 // pred_check_branch
          %386 = sbr.rel (%p384) target = $region24
        $region23: #{tpu_custom_call.1} parent=11 // pred_region
          _
        $region24: #{tpu_custom_call.1} parent=11 // pred_fallthru
          _
        // Predicated region
        $region25: #{tpu_custom_call.1} parent=11 // pred_check
          %p387 = pneg %p211
        $region26: #{tpu_custom_call.1} parent=11 // pred_check_branch
          %389 = sbr.rel (%p387) target = $region28
        $region27: #{tpu_custom_call.1} parent=11 // pred_region
          _
        $region28: #{tpu_custom_call.1} parent=11 // pred_fallthru
          _
        // Predicated region
        $region29: #{tpu_custom_call.1} parent=11 // pred_check
          %p390 = pneg %p232
        $region30: #{tpu_custom_call.1} parent=11 // pred_check_branch
          %392 = sbr.rel (%p390) target = $region32
        $region31: #{tpu_custom_call.1} parent=11 // pred_region
          _
        $region32: #{tpu_custom_call.1} parent=11 // pred_fallthru
          _
        // Predicated region
        $region33: #{tpu_custom_call.1} parent=11 // pred_check
          %p393 = pneg %p253
        $region34: #{tpu_custom_call.1} parent=11 // pred_check_branch
          %395 = sbr.rel (%p393) target = $region36
        $region35: #{tpu_custom_call.1} parent=11 // pred_region
          _
        $region36: #{tpu_custom_call.1} parent=11 // pred_fallthru
          _
        // Predicated region
        $region37: #{tpu_custom_call.1} parent=11 // pred_check
          %p396 = pneg %p274
        $region38: #{tpu_custom_call.1} parent=11 // pred_check_branch
          %398 = sbr.rel (%p396) target = $region40
        $region39: #{tpu_custom_call.1} parent=11 // pred_region
          _
        $region40: #{tpu_custom_call.1} parent=11 // pred_fallthru
          _
        // Predicated region
        $region41: #{tpu_custom_call.1} parent=11 // pred_check
          %p399 = pneg %p295
        $region42: #{tpu_custom_call.1} parent=11 // pred_check_branch
          %401 = sbr.rel (%p399) target = $region44
        $region43: #{tpu_custom_call.1} parent=11 // pred_region
          _
        $region44: #{tpu_custom_call.1} parent=11 // pred_fallthru
          _
        // Predicated region
        $region45: #{tpu_custom_call.1} parent=11 // pred_check
          %p402 = pneg %p316
        $region46: #{tpu_custom_call.1} parent=11 // pred_check_branch
          %404 = sbr.rel (%p402) target = $region48
        $region47: #{tpu_custom_call.1} parent=11 // pred_region
          _
        $region48: #{tpu_custom_call.1} parent=11 // pred_fallthru
          _
        // Predicated region
        $region49: #{tpu_custom_call.1} parent=11 // pred_check
          %p405 = pneg %p337
        $region50: #{tpu_custom_call.1} parent=11 // pred_check_branch
          %407 = sbr.rel (%p405) target = $region52
        $region51: #{tpu_custom_call.1} parent=11 // pred_region
          _
        $region52: #{tpu_custom_call.1} parent=11 // pred_fallthru
          _
      $region12: #{tpu_custom_call.1} parent=5 // pred_fallthru
        _
      %p408 = scmp.lt.s32.totalorder %s23, 4
      // Predicated region
      $region53: #{tpu_custom_call.1} parent=5 // pred_check
        %p409 = pneg %p408
      $region54: #{tpu_custom_call.1} parent=5 // pred_check_branch
        %411 = sbr.rel (%p409) target = $region56
      $region55: #{tpu_custom_call.1} parent=5 // pred_region
        // Predicated region
        $region57: #{tpu_custom_call.1} parent=55 // pred_check
          %p412 = pneg %p43
        $region58: #{tpu_custom_call.1} parent=55 // pred_check_branch
          %414 = sbr.rel (%p412) target = $region60
        $region59: #{tpu_custom_call.1} parent=55 // pred_region
          %p415 = scmp.lt.s32.totalorder %s23, 3
          %s416 = scalar_select %p415, %s23, 3
          %s417 = smul.addr %s416, 2
          %s418 = smul.addr %s417, 8
          %s419 = scalar_lea.vmem %s0, %s418
        $region60: #{tpu_custom_call.1} parent=55 // pred_fallthru
          _
        // Predicated region
        $region61: #{tpu_custom_call.1} parent=55 // pred_check
          %p420 = pneg %p69
        $region62: #{tpu_custom_call.1} parent=55 // pred_check_branch
          %422 = sbr.rel (%p420) target = $region64
        $region63: #{tpu_custom_call.1} parent=55 // pred_region
          %p423 = scmp.lt.s32.totalorder %s23, 3
          %s424 = scalar_select %p423, %s23, 3
          %s425 = smul.addr %s424, 2
          %s426 = smul.addr %s425, 8
          %s427 = scalar_lea.vmem %s1, %s426
        $region64: #{tpu_custom_call.1} parent=55 // pred_fallthru
          _
        // Predicated region
        $region65: #{tpu_custom_call.1} parent=55 // pred_check
          %p428 = pneg %p95
        $region66: #{tpu_custom_call.1} parent=55 // pred_check_branch
          %430 = sbr.rel (%p428) target = $region68
        $region67: #{tpu_custom_call.1} parent=55 // pred_region
          %p431 = scmp.lt.s32.totalorder %s23, 3
          %s432 = scalar_select %p431, %s23, 3
          %s433 = smul.addr %s432, 14
          %s434 = smul.addr %s433, 8
          %s435 = scalar_lea.vmem %s2, %s434
        $region68: #{tpu_custom_call.1} parent=55 // pred_fallthru
          _
        // Predicated region
        $region69: #{tpu_custom_call.1} parent=55 // pred_check
          %p436 = pneg %p121
        $region70: #{tpu_custom_call.1} parent=55 // pred_check_branch
          %438 = sbr.rel (%p436) target = $region72
        $region71: #{tpu_custom_call.1} parent=55 // pred_region
          %p439 = scmp.lt.s32.totalorder %s23, 3
          %s440 = scalar_select %p439, %s23, 3
          %s441 = smul.addr %s440, 14
          %s442 = smul.addr %s441, 8
          %s443 = scalar_lea.vmem %s3, %s442
        $region72: #{tpu_custom_call.1} parent=55 // pred_fallthru
          _
      $region56: #{tpu_custom_call.1} parent=5 // pred_fallthru
        _
      %p444 = scmp.le.s32.totalorder 1, %s23
      %p445 = scmp.lt.s32.totalorder %s23, 5
      %p446 = pnand %p444, %p445
      %p447 = pneg %p446
      // Predicated region
      $region73: #{tpu_custom_call.1} parent=5 // pred_check
        _
      $region74: #{tpu_custom_call.1} parent=5 // pred_check_branch
        %449 = sbr.rel (%p446) target = $region76
      $region75: #{tpu_custom_call.1} parent=5 // pred_region
        %s450 = ssub.s32 %s23, 1
        %p451 = scmp.lt.s32.totalorder %s28, 3
        %s452 = scalar_select %p451, %s28, 3
        %s453 = smul.addr %s452, 2
        %s454 = smul.addr %s453, 8
        %s455 = scalar_lea.vmem %s0, %s454
        %p456 = pneg %p49
        %p457 = pneg %p46
        %p458 = scmp.lt.s32.totalorder %s28, 3
        %s459 = scalar_select %p458, %s28, 3
        %s460 = smul.addr %s459, 2
        %s461 = smul.addr %s460, 8
        %s462 = scalar_lea.vmem %s1, %s461
        %p463 = pneg %p75
        %p464 = pneg %p72
        %p465 = scmp.lt.s32.totalorder %s28, 3
        %s466 = scalar_select %p465, %s28, 3
        %s467 = smul.addr %s466, 14
        %s468 = smul.addr %s467, 8
        %s469 = scalar_lea.vmem %s2, %s468
        %p470 = pneg %p101
        %p471 = pneg %p98
        %p472 = scmp.lt.s32.totalorder %s28, 3
        %s473 = scalar_select %p472, %s28, 3
        %s474 = smul.addr %s473, 14
        %s475 = smul.addr %s474, 8
        %s476 = scalar_lea.vmem %s3, %s475
        %p477 = pneg %p127
        %p478 = pneg %p124
        %p479 = pneg %p148
        %p480 = pneg %p145
        %p481 = pneg %p169
        %p482 = pneg %p166
        %p483 = pneg %p190
        %p484 = pneg %p187
        %p485 = pneg %p211
        %p486 = pneg %p208
        %p487 = pneg %p232
        %p488 = pneg %p229
        %p489 = pneg %p253
        %p490 = pneg %p250
        %p491 = pneg %p274
        %p492 = pneg %p271
        %p493 = pneg %p295
        %p494 = pneg %p292
        %p495 = pneg %p316
        %p496 = pneg %p313
        %p497 = pneg %p337
        %p498 = pneg %p334
        %p499 = pneg %p363
        %p500 = pneg %p360
        %s501 = sand.u32 %s350, 1
        %s502 = scalar_lea.sflag [#allocation3], %s501
        %s503 = sand.u32 %s350, 1
        %s504 = smul.addr %s503, 16
        %s505 = scalar_lea.vmem [#allocation2], %s504
        %p506 = scmp.lt.s32.totalorder %s28, 3
        %s507 = scalar_select %p506, %s28, 3
        %s508 = smul.addr %s507, 2
        %s509 = smul.addr %s508, 8
        %s510 = scalar_lea.vmem %s0, %s509
        %p511 = scmp.lt.s32.totalorder %s28, 3
        %s512 = scalar_select %p511, %s28, 3
        %s513 = smul.addr %s512, 2
        %s514 = smul.addr %s513, 8
        %s515 = scalar_lea.vmem %s1, %s514
        %p516 = scmp.lt.s32.totalorder %s28, 3
        %s517 = scalar_select %p516, %s28, 3
        %s518 = smul.addr %s517, 14
        %s519 = smul.addr %s518, 8
        %s520 = scalar_lea.vmem %s2, %s519
        %p521 = scmp.lt.s32.totalorder %s28, 3
        %s522 = scalar_select %p521, %s28, 3
        %s523 = smul.addr %s522, 14
        %s524 = smul.addr %s523, 8
        %s525 = scalar_lea.vmem %s3, %s524
        %v527 = vld [vmem:[%s510] sm:$0xff]
        %v528 = vld [vmem:[%s510 + $0x8] sm:$0xff]
        %v529 = vld [vmem:[%s515] sm:$0xff]
        %v530 = vld [vmem:[%s515 + $0x8] sm:$0xff]
        %v531 = vld [vmem:[%s520] sm:$0xff]
        %v532 = vld [vmem:[%s520 + $0x8] sm:$0xff]
        %v533 = vld [vmem:[%s520 + $0x10] sm:$0xff]
        %v534 = vld [vmem:[%s520 + $0x18] sm:$0xff]
        %v535 = vld [vmem:[%s520 + $0x20] sm:$0xff]
        %v536 = vld [vmem:[%s520 + $0x28] sm:$0xff]
        %v537 = vld [vmem:[%s520 + $0x30] sm:$0xff]
        %v538 = vld [vmem:[%s520 + $0x38] sm:$0xff]
        %v539 = vld [vmem:[%s520 + $0x40] sm:$0xff]
        %v540 = vld [vmem:[%s520 + $0x48] sm:$0xff]
        %v541 = vld [vmem:[%s520 + $0x50] sm:$0xff]
        %v542 = vld [vmem:[%s520 + $0x58] sm:$0xff]
        %v543 = vld [vmem:[%s520 + $0x60] sm:$0xff]
        %v544 = vld [vmem:[%s520 + $0x68] sm:$0xff]
        %v545 = vld [vmem:[%s525] sm:$0xff]
        %v546 = vld [vmem:[%s525 + $0x8] sm:$0xff]
        %v547 = vld [vmem:[%s525 + $0x10] sm:$0xff]
        %v548 = vld [vmem:[%s525 + $0x18] sm:$0xff]
        %v549 = vld [vmem:[%s525 + $0x20] sm:$0xff]
        %v550 = vld [vmem:[%s525 + $0x28] sm:$0xff]
        %v551 = vld [vmem:[%s525 + $0x30] sm:$0xff]
        %v552 = vld [vmem:[%s525 + $0x38] sm:$0xff]
        %v553 = vld [vmem:[%s525 + $0x40] sm:$0xff]
        %v554 = vld [vmem:[%s525 + $0x48] sm:$0xff]
        %v555 = vld [vmem:[%s525 + $0x50] sm:$0xff]
        %v556 = vld [vmem:[%s525 + $0x58] sm:$0xff]
        %v557 = vld [vmem:[%s525 + $0x60] sm:$0xff]
        %v558 = vld [vmem:[%s525 + $0x68] sm:$0xff]
        %v559 = vld [vmem:[%s4] sm:$0x1]
        %v560 = vlaneseq
        %v561 = vand.u32 %v560, 127
        %562 = vset.pattern.permute.xlu0 0
        %563 = vperm.xlu0 %562, %v531
        %v564 = vpop.permute.xlu0 %563
        %565 = vset.pattern.permute.xlu0 0
        %566 = vperm.xlu0 %565, %v532
        %v567 = vpop.permute.xlu0 %566
        %568 = vset.pattern.permute.xlu0 0
        %569 = vperm.xlu0 %568, %v533
        %v570 = vpop.permute.xlu0 %569
        %571 = vset.pattern.permute.xlu0 0
        %572 = vperm.xlu0 %571, %v534
        %v573 = vpop.permute.xlu0 %572
        %574 = vset.pattern.permute.xlu0 0
        %575 = vperm.xlu0 %574, %v535
        %v576 = vpop.permute.xlu0 %575
        %577 = vset.pattern.permute.xlu0 0
        %578 = vperm.xlu0 %577, %v536
        %v579 = vpop.permute.xlu0 %578
        %580 = vset.pattern.permute.xlu0 0
        %581 = vperm.xlu0 %580, %v537
        %v582 = vpop.permute.xlu0 %581
        %583 = vset.pattern.permute.xlu0 0
        %584 = vperm.xlu0 %583, %v538
        %v585 = vpop.permute.xlu0 %584
        %586 = vset.pattern.permute.xlu0 0
        %587 = vperm.xlu0 %586, %v539
        %v588 = vpop.permute.xlu0 %587
        %589 = vset.pattern.permute.xlu0 0
        %590 = vperm.xlu0 %589, %v540
        %v591 = vpop.permute.xlu0 %590
        %592 = vset.pattern.permute.xlu0 0
        %593 = vperm.xlu0 %592, %v541
        %v594 = vpop.permute.xlu0 %593
        %595 = vset.pattern.permute.xlu0 0
        %596 = vperm.xlu0 %595, %v542
        %v597 = vpop.permute.xlu0 %596
        %598 = vset.pattern.permute.xlu0 0
        %599 = vperm.xlu0 %598, %v543
        %v600 = vpop.permute.xlu0 %599
        %601 = vset.pattern.permute.xlu0 0
        %602 = vperm.xlu0 %601, %v544
        %v603 = vpop.permute.xlu0 %602
        %vm604 = vcmp.eq.s32.totalorder %v561, %v564
        %vm605 = vcmp.eq.s32.totalorder %v561, %v567
        %vm606 = vcmp.eq.s32.totalorder %v561, %v570
        %vm607 = vcmp.eq.s32.totalorder %v561, %v573
        %vm608 = vcmp.eq.s32.totalorder %v561, %v576
        %vm609 = vcmp.eq.s32.totalorder %v561, %v579
        %vm610 = vcmp.eq.s32.totalorder %v561, %v582
        %vm611 = vcmp.eq.s32.totalorder %v561, %v585
        %vm612 = vcmp.eq.s32.totalorder %v561, %v588
        %vm613 = vcmp.eq.s32.totalorder %v561, %v591
        %vm614 = vcmp.eq.s32.totalorder %v561, %v594
        %vm615 = vcmp.eq.s32.totalorder %v561, %v597
        %vm616 = vcmp.eq.s32.totalorder %v561, %v600
        %vm617 = vcmp.eq.s32.totalorder %v561, %v603
        %v618 = vsel %vm604, 1, 0
        %v619 = vsel %vm605, 1, 0
        %v620 = vsel %vm606, 1, 0
        %v621 = vsel %vm607, 1, 0
        %v622 = vsel %vm608, 1, 0
        %v623 = vsel %vm609, 1, 0
        %v624 = vsel %vm610, 1, 0
        %v625 = vsel %vm611, 1, 0
        %v626 = vsel %vm612, 1, 0
        %v627 = vsel %vm613, 1, 0
        %v628 = vsel %vm614, 1, 0
        %v629 = vsel %vm615, 1, 0
        %v630 = vsel %vm616, 1, 0
        %v631 = vsel %vm617, 1, 0
        %v632 = vcvt.s32.f32 %v618
        %v633 = vcvt.s32.f32 %v619
        %v634 = vcvt.s32.f32 %v620
        %v635 = vcvt.s32.f32 %v621
        %v636 = vcvt.s32.f32 %v622
        %v637 = vcvt.s32.f32 %v623
        %v638 = vcvt.s32.f32 %v624
        %v639 = vcvt.s32.f32 %v625
        %v640 = vcvt.s32.f32 %v626
        %v641 = vcvt.s32.f32 %v627
        %v642 = vcvt.s32.f32 %v628
        %v643 = vcvt.s32.f32 %v629
        %v644 = vcvt.s32.f32 %v630
        %v645 = vcvt.s32.f32 %v631
        %v646 = vpack.c.bf16 %v633, %v632
        %v647 = vpack.c.bf16 %v635, %v634
        %v648 = vpack.c.bf16 %v637, %v636
        %v649 = vpack.c.bf16 %v638, %v638
        %v650 = vpack.c.bf16 %v640, %v639
        %v651 = vpack.c.bf16 %v642, %v641
        %v652 = vpack.c.bf16 %v644, %v643
        %v653 = vpack.c.bf16 %v645, %v645
        %vm654 = vcmask 64512
        %v656 = vsel %vm654, %v632, 0
        %v659 = vsel %vm654, %v633, 0
        %v662 = vsel %vm654, %v634, 0
        %v665 = vsel %vm654, %v635, 0
        %v668 = vsel %vm654, %v636, 0
        %v671 = vsel %vm654, %v637, 0
        %v674 = vsel %vm654, %v638, 0
        %676 = vmatprep.subr.mxu0 0.0
        %677 = vmatpush1.msra.mxu0 %v527
        %678 = vmatprep.subr.mxu0 0.0
        %679 = vmatpush1.msra.mxu0 0.0
        %680 = vmatprep.subr.mxu0 0.0
        %681 = vmatpush1.msra.mxu0 0.0
        %682 = vmatprep.subr.mxu0 0.0
        %683 = vmatpush1.msra.mxu0 0.0
        %684 = vmatprep.subr.mxu0 0.0
        %685 = vmatpush1.msra.mxu0 0.0
        %686 = vmatprep.subr.mxu0 0.0
        %687 = vmatpush1.msra.mxu0 0.0
        %688 = vmatprep.subr.mxu0 0.0
        %689 = vmatpush1.msra.mxu0 0.0
        %690 = vmatprep.subr.mxu0 0.0
        %691 = vmatpush1.msra.mxu0 0.0
        %692 = vmatprep.subr.mxu0 0.0
        %693 = vmatpush1.msra.mxu0 0.0
        %694 = vmatprep.subr.mxu0 0.0
        %695 = vmatpush1.msra.mxu0 0.0
        %696 = vmatprep.subr.mxu0 0.0
        %697 = vmatpush1.msra.mxu0 0.0
        %698 = vmatprep.subr.mxu0 0.0
        %699 = vmatpush1.msra.mxu0 0.0
        %700 = vmatprep.subr.mxu0 0.0
        %701 = vmatpush1.msra.mxu0 0.0
        %702 = vmatprep.subr.mxu0 0.0
        %703 = vmatpush1.msra.mxu0 0.0
        %704 = vmatprep.subr.mxu0 0.0
        %705 = vmatpush1.msra.mxu0 0.0
        %706 = vmatprep.subr.mxu0 0.0
        %707 = vmatpush1.msra.mxu0 0.0
        %708 = vmatprep.subr.mxu0 0.0
        %709 = vmatpush1.msra.mxu0 0.0
        %710 = vmatprep.subr.mxu0 0.0
        %711 = vmatpush1.msra.mxu0 0.0
        %712 = vmatprep.subr.mxu0 0.0
        %713 = vmatpush1.msra.mxu0 0.0
        %714 = vmatprep.subr.mxu0 0.0
        %715 = vmatpush1.msra.mxu0 0.0
        %716 = vmatprep.subr.mxu0 0.0
        %717 = vmatpush1.msra.mxu0 0.0
        %718 = vmatprep.subr.mxu0 0.0
        %719 = vmatpush1.msra.mxu0 0.0
        %720 = vmatprep.subr.mxu0 0.0
        %721 = vmatpush1.msra.mxu0 0.0
        %722 = vmatprep.subr.mxu0 0.0
        %723 = vmatpush1.msra.mxu0 0.0
        %724 = vmatprep.subr.mxu0 0.0
        %725 = vmatpush1.msra.mxu0 0.0
        %726 = vmatprep.subr.mxu0 0.0
        %727 = vmatpush1.msra.mxu0 0.0
        %728 = vmatprep.subr.mxu0 0.0
        %729 = vmatpush1.msra.mxu0 0.0
        %730 = vmatprep.subr.mxu0 0.0
        %731 = vmatpush1.msra.mxu0 0.0
        %732 = vmatprep.subr.mxu0 0.0
        %733 = vmatpush1.msra.mxu0 0.0
        %734 = vmatprep.subr.mxu0 0.0
        %735 = vmatpush1.msra.mxu0 0.0
        %736 = vmatprep.subr.mxu0 0.0
        %737 = vmatpush1.msra.mxu0 0.0
        %738 = vmatprep.subr.mxu0 0.0
        %739 = vmatpush1.msra.mxu0 0.0
        %740 = vmatprep.mubr.f32.mxu0 0.0
        %741 = vmatmul.mubr.f32.gmra.mrb[0].mxu0 %v656
        %v742 = vpop.f32.mrb[0].mxu0
        %v743 = vadd.f32 0.0, %v742
        %v744 = vpop.f32.mrb[0].mxu0
        %745 = vmatprep.mubr.f32.mxu0 0.0
        %746 = vmatmul.mubr.f32.gmra.mrb[0].mxu0 %v659
        %v747 = vpop.f32.mrb[0].mxu0
        %v748 = vadd.f32 0.0, %v747
        %v749 = vpop.f32.mrb[0].mxu0
        %750 = vmatprep.mubr.f32.mxu0 0.0
        %751 = vmatmul.mubr.f32.gmra.mrb[0].mxu0 %v662
        %v752 = vpop.f32.mrb[0].mxu0
        %v753 = vadd.f32 0.0, %v752
        %v754 = vpop.f32.mrb[0].mxu0
        %755 = vmatprep.mubr.f32.mxu0 0.0
        %756 = vmatmul.mubr.f32.gmra.mrb[0].mxu0 %v665
        %v757 = vpop.f32.mrb[0].mxu0
        %v758 = vadd.f32 0.0, %v757
        %v759 = vpop.f32.mrb[0].mxu0
        %760 = vmatprep.mubr.f32.mxu0 0.0
        %761 = vmatmul.mubr.f32.gmra.mrb[0].mxu0 %v668
        %v762 = vpop.f32.mrb[0].mxu0
        %v763 = vadd.f32 0.0, %v762
        %v764 = vpop.f32.mrb[0].mxu0
        %765 = vmatprep.mubr.f32.mxu0 0.0
        %766 = vmatmul.mubr.f32.gmra.mrb[0].mxu0 %v671
        %v767 = vpop.f32.mrb[0].mxu0
        %v768 = vadd.f32 0.0, %v767
        %v769 = vpop.f32.mrb[0].mxu0
        %770 = vmatprep.mubr.f32.mxu0 0.0
        %771 = vmatmul.mubr.f32.gmra.mrb[0].mxu0 %v674
        %v772 = vpop.f32.mrb[0].mxu0
        %v773 = vadd.f32 0.0, %v772
        %v774 = vpop.f32.mrb[0].mxu0
        %775 = vdwg.mxu0
        %v777 = vsel %vm654, %v639, 0
        %v780 = vsel %vm654, %v640, 0
        %v783 = vsel %vm654, %v641, 0
        %v786 = vsel %vm654, %v642, 0
        %v789 = vsel %vm654, %v643, 0
        %v792 = vsel %vm654, %v644, 0
        %v795 = vsel %vm654, %v645, 0
        %797 = vmatprep.subr.mxu0 0.0
        %798 = vmatpush1.msra.mxu0 %v528
        %799 = vmatprep.subr.mxu0 0.0
        %800 = vmatpush1.msra.mxu0 0.0
        %801 = vmatprep.subr.mxu0 0.0
        %802 = vmatpush1.msra.mxu0 0.0
        %803 = vmatprep.subr.mxu0 0.0
        %804 = vmatpush1.msra.mxu0 0.0
        %805 = vmatprep.subr.mxu0 0.0
        %806 = vmatpush1.msra.mxu0 0.0
        %807 = vmatprep.subr.mxu0 0.0
        %808 = vmatpush1.msra.mxu0 0.0
        %809 = vmatprep.subr.mxu0 0.0
        %810 = vmatpush1.msra.mxu0 0.0
        %811 = vmatprep.subr.mxu0 0.0
        %812 = vmatpush1.msra.mxu0 0.0
        %813 = vmatprep.subr.mxu0 0.0
        %814 = vmatpush1.msra.mxu0 0.0
        %815 = vmatprep.subr.mxu0 0.0
        %816 = vmatpush1.msra.mxu0 0.0
        %817 = vmatprep.subr.mxu0 0.0
        %818 = vmatpush1.msra.mxu0 0.0
        %819 = vmatprep.subr.mxu0 0.0
        %820 = vmatpush1.msra.mxu0 0.0
        %821 = vmatprep.subr.mxu0 0.0
        %822 = vmatpush1.msra.mxu0 0.0
        %823 = vmatprep.subr.mxu0 0.0
        %824 = vmatpush1.msra.mxu0 0.0
        %825 = vmatprep.subr.mxu0 0.0
        %826 = vmatpush1.msra.mxu0 0.0
        %827 = vmatprep.subr.mxu0 0.0
        %828 = vmatpush1.msra.mxu0 0.0
        %829 = vmatprep.subr.mxu0 0.0
        %830 = vmatpush1.msra.mxu0 0.0
        %831 = vmatprep.subr.mxu0 0.0
        %832 = vmatpush1.msra.mxu0 0.0
        %833 = vmatprep.subr.mxu0 0.0
        %834 = vmatpush1.msra.mxu0 0.0
        %835 = vmatprep.subr.mxu0 0.0
        %836 = vmatpush1.msra.mxu0 0.0
        %837 = vmatprep.subr.mxu0 0.0
        %838 = vmatpush1.msra.mxu0 0.0
        %839 = vmatprep.subr.mxu0 0.0
        %840 = vmatpush1.msra.mxu0 0.0
        %841 = vmatprep.subr.mxu0 0.0
        %842 = vmatpush1.msra.mxu0 0.0
        %843 = vmatprep.subr.mxu0 0.0
        %844 = vmatpush1.msra.mxu0 0.0
        %845 = vmatprep.subr.mxu0 0.0
        %846 = vmatpush1.msra.mxu0 0.0
        %847 = vmatprep.subr.mxu0 0.0
        %848 = vmatpush1.msra.mxu0 0.0
        %849 = vmatprep.subr.mxu0 0.0
        %850 = vmatpush1.msra.mxu0 0.0
        %851 = vmatprep.subr.mxu0 0.0
        %852 = vmatpush1.msra.mxu0 0.0
        %853 = vmatprep.subr.mxu0 0.0
        %854 = vmatpush1.msra.mxu0 0.0
        %855 = vmatprep.subr.mxu0 0.0
        %856 = vmatpush1.msra.mxu0 0.0
        %857 = vmatprep.subr.mxu0 0.0
        %858 = vmatpush1.msra.mxu0 0.0
        %859 = vmatprep.subr.mxu0 0.0
        %860 = vmatpush1.msra.mxu0 0.0
        %861 = vmatprep.mubr.f32.mxu0 0.0
        %862 = vmatmul.mubr.f32.gmra.mrb[0].mxu0 %v777
        %v863 = vpop.f32.mrb[0].mxu0
        %v864 = vadd.f32 0.0, %v863
        %v865 = vpop.f32.mrb[0].mxu0
        %866 = vmatprep.mubr.f32.mxu0 0.0
        %867 = vmatmul.mubr.f32.gmra.mrb[0].mxu0 %v780
        %v868 = vpop.f32.mrb[0].mxu0
        %v869 = vadd.f32 0.0, %v868
        %v870 = vpop.f32.mrb[0].mxu0
        %871 = vmatprep.mubr.f32.mxu0 0.0
        %872 = vmatmul.mubr.f32.gmra.mrb[0].mxu0 %v783
        %v873 = vpop.f32.mrb[0].mxu0
        %v874 = vadd.f32 0.0, %v873
        %v875 = vpop.f32.mrb[0].mxu0
        %876 = vmatprep.mubr.f32.mxu0 0.0
        %877 = vmatmul.mubr.f32.gmra.mrb[0].mxu0 %v786
        %v878 = vpop.f32.mrb[0].mxu0
        %v879 = vadd.f32 0.0, %v878
        %v880 = vpop.f32.mrb[0].mxu0
        %881 = vmatprep.mubr.f32.mxu0 0.0
        %882 = vmatmul.mubr.f32.gmra.mrb[0].mxu0 %v789
        %v883 = vpop.f32.mrb[0].mxu0
        %v884 = vadd.f32 0.0, %v883
        %v885 = vpop.f32.mrb[0].mxu0
        %886 = vmatprep.mubr.f32.mxu0 0.0
        %887 = vmatmul.mubr.f32.gmra.mrb[0].mxu0 %v792
        %v888 = vpop.f32.mrb[0].mxu0
        %v889 = vadd.f32 0.0, %v888
        %v890 = vpop.f32.mrb[0].mxu0
        %891 = vmatprep.mubr.f32.mxu0 0.0
        %892 = vmatmul.mubr.f32.gmra.mrb[0].mxu0 %v795
        %v893 = vpop.f32.mrb[0].mxu0
        %v894 = vadd.f32 0.0, %v893
        %v895 = vpop.f32.mrb[0].mxu0
        %896 = vdwg.mxu0
        %v897 = vsub.f32 %v743, %v527
        %v898 = vsub.f32 %v748, %v527
        %v899 = vsub.f32 %v753, %v527
        %v900 = vsub.f32 %v758, %v527
        %v901 = vsub.f32 %v763, %v527
        %v902 = vsub.f32 %v768, %v527
        %v903 = vsub.f32 %v773, %v527
        %v904 = vsub.f32 %v864, %v528
        %v905 = vsub.f32 %v869, %v528
        %v906 = vsub.f32 %v874, %v528
        %v907 = vsub.f32 %v879, %v528
        %v908 = vsub.f32 %v884, %v528
        %v909 = vsub.f32 %v889, %v528
        %v910 = vsub.f32 %v894, %v528
        %v911 = vmul.f32 %v897, %v897
        %v912 = vmul.f32 %v898, %v898
        %v913 = vmul.f32 %v899, %v899
        %v914 = vmul.f32 %v900, %v900
        %v915 = vmul.f32 %v901, %v901
        %v916 = vmul.f32 %v902, %v902
        %v917 = vmul.f32 %v903, %v903
        %v918 = vmul.f32 %v904, %v904
        %v919 = vmul.f32 %v905, %v905
        %v920 = vmul.f32 %v906, %v906
        %v921 = vmul.f32 %v907, %v907
        %v922 = vmul.f32 %v908, %v908
        %v923 = vmul.f32 %v909, %v909
        %v924 = vmul.f32 %v910, %v910
        %939 = vrot.lane.b32.xlu0 %v911, 127
        %v940 = vpop.permute.xlu0 %939
        %941 = vrot.lane.b32.xlu0 %v912, 127
        %v942 = vpop.permute.xlu0 %941
        %943 = vrot.lane.b32.xlu0 %v913, 127
        %v944 = vpop.permute.xlu0 %943
        %945 = vrot.lane.b32.xlu0 %v914, 127
        %v946 = vpop.permute.xlu0 %945
        %947 = vrot.lane.b32.xlu0 %v915, 127
        %v948 = vpop.permute.xlu0 %947
        %949 = vrot.lane.b32.xlu0 %v916, 127
        %v950 = vpop.permute.xlu0 %949
        %951 = vrot.lane.b32.xlu0 %v917, 127
        %v952 = vpop.permute.xlu0 %951
        %953 = vrot.lane.b32.xlu0 %v918, 127
        %v954 = vpop.permute.xlu0 %953
        %955 = vrot.lane.b32.xlu0 %v919, 127
        %v956 = vpop.permute.xlu0 %955
        %957 = vrot.lane.b32.xlu0 %v920, 127
        %v958 = vpop.permute.xlu0 %957
        %959 = vrot.lane.b32.xlu0 %v921, 127
        %v960 = vpop.permute.xlu0 %959
        %961 = vrot.lane.b32.xlu0 %v922, 127
        %v962 = vpop.permute.xlu0 %961
        %963 = vrot.lane.b32.xlu0 %v923, 127
        %v964 = vpop.permute.xlu0 %963
        %965 = vrot.lane.b32.xlu0 %v924, 127
        %v966 = vpop.permute.xlu0 %965
        %v981 = vadd.f32 %v911, %v940
        %v982 = vadd.f32 %v912, %v942
        %v983 = vadd.f32 %v913, %v944
        %v984 = vadd.f32 %v914, %v946
        %v985 = vadd.f32 %v915, %v948
        %v986 = vadd.f32 %v916, %v950
        %v987 = vadd.f32 %v917, %v952
        %v988 = vadd.f32 %v918, %v954
        %v989 = vadd.f32 %v919, %v956
        %v990 = vadd.f32 %v920, %v958
        %v991 = vadd.f32 %v921, %v960
        %v992 = vadd.f32 %v922, %v962
        %v993 = vadd.f32 %v923, %v964
        %v994 = vadd.f32 %v924, %v966
        %995 = vrot.lane.b32.xlu0 %v911, 126
        %v996 = vpop.permute.xlu0 %995
        %997 = vrot.lane.b32.xlu0 %v912, 126
        %v998 = vpop.permute.xlu0 %997
        %999 = vrot.lane.b32.xlu0 %v913, 126
        %v1000 = vpop.permute.xlu0 %999
        %1001 = vrot.lane.b32.xlu0 %v914, 126
        %v1002 = vpop.permute.xlu0 %1001
        %1003 = vrot.lane.b32.xlu0 %v915, 126
        %v1004 = vpop.permute.xlu0 %1003
        %1005 = vrot.lane.b32.xlu0 %v916, 126
        %v1006 = vpop.permute.xlu0 %1005
        %1007 = vrot.lane.b32.xlu0 %v917, 126
        %v1008 = vpop.permute.xlu0 %1007
        %1009 = vrot.lane.b32.xlu0 %v918, 126
        %v1010 = vpop.permute.xlu0 %1009
        %1011 = vrot.lane.b32.xlu0 %v919, 126
        %v1012 = vpop.permute.xlu0 %1011
        %1013 = vrot.lane.b32.xlu0 %v920, 126
        %v1014 = vpop.permute.xlu0 %1013
        %1015 = vrot.lane.b32.xlu0 %v921, 126
        %v1016 = vpop.permute.xlu0 %1015
        %1017 = vrot.lane.b32.xlu0 %v922, 126
        %v1018 = vpop.permute.xlu0 %1017
        %1019 = vrot.lane.b32.xlu0 %v923, 126
        %v1020 = vpop.permute.xlu0 %1019
        %1021 = vrot.lane.b32.xlu0 %v924, 126
        %v1022 = vpop.permute.xlu0 %1021
        %v1037 = vadd.f32 %v981, %v996
        %v1038 = vadd.f32 %v982, %v998
        %v1039 = vadd.f32 %v983, %v1000
        %v1040 = vadd.f32 %v984, %v1002
        %v1041 = vadd.f32 %v985, %v1004
        %v1042 = vadd.f32 %v986, %v1006
        %v1043 = vadd.f32 %v987, %v1008
        %v1044 = vadd.f32 %v988, %v1010
        %v1045 = vadd.f32 %v989, %v1012
        %v1046 = vadd.f32 %v990, %v1014
        %v1047 = vadd.f32 %v991, %v1016
        %v1048 = vadd.f32 %v992, %v1018
        %v1049 = vadd.f32 %v993, %v1020
        %v1050 = vadd.f32 %v994, %v1022
        %vm1051 = vcmp.gt.f32.partialorder %v545, 0.0
        %vm1052 = vcmp.gt.f32.partialorder %v546, 0.0
        %vm1053 = vcmp.gt.f32.partialorder %v547, 0.0
        %vm1054 = vcmp.gt.f32.partialorder %v548, 0.0
        %vm1055 = vcmp.gt.f32.partialorder %v549, 0.0
        %vm1056 = vcmp.gt.f32.partialorder %v550, 0.0
        %vm1057 = vcmp.gt.f32.partialorder %v551, 0.0
        %vm1058 = vcmp.gt.f32.partialorder %v552, 0.0
        %vm1059 = vcmp.gt.f32.partialorder %v553, 0.0
        %vm1060 = vcmp.gt.f32.partialorder %v554, 0.0
        %vm1061 = vcmp.gt.f32.partialorder %v555, 0.0
        %vm1062 = vcmp.gt.f32.partialorder %v556, 0.0
        %vm1063 = vcmp.gt.f32.partialorder %v557, 0.0
        %vm1064 = vcmp.gt.f32.partialorder %v558, 0.0
        %v1065 = vsel %vm1051, %v1037, 1.0
        %v1066 = vsel %vm1052, %v1038, 1.0
        %v1067 = vsel %vm1053, %v1039, 1.0
        %v1068 = vsel %vm1054, %v1040, 1.0
        %v1069 = vsel %vm1055, %v1041, 1.0
        %v1070 = vsel %vm1056, %v1042, 1.0
        %v1071 = vsel %vm1057, %v1043, 1.0
        %v1072 = vsel %vm1058, %v1044, 1.0
        %v1073 = vsel %vm1059, %v1045, 1.0
        %v1074 = vsel %vm1060, %v1046, 1.0
        %v1075 = vsel %vm1061, %v1047, 1.0
        %v1076 = vsel %vm1062, %v1048, 1.0
        %v1077 = vsel %vm1063, %v1049, 1.0
        %v1078 = vsel %vm1064, %v1050, 1.0
        %v1079 = vrsqrt.pop %v1065
        %v1080 = vmul.f32 %v1065, %v1079
        %vm1081 = vcmp.eq.f32.partialorder %v1065, inf
        %v1082 = vsel %vm1081, %v1065, %v1080
        %vm1083 = vcmp.eq.f32.partialorder %v1065, 0.0
        %v1084 = vand.u32 %v1065, 2147483648
        %v1085 = vsel %vm1083, %v1084, %v1082
        %v1086 = vrsqrt.pop %v1066
        %v1087 = vmul.f32 %v1066, %v1086
        %vm1088 = vcmp.eq.f32.partialorder %v1066, inf
        %v1089 = vsel %vm1088, %v1066, %v1087
        %vm1090 = vcmp.eq.f32.partialorder %v1066, 0.0
        %v1091 = vand.u32 %v1066, 2147483648
        %v1092 = vsel %vm1090, %v1091, %v1089
        %v1093 = vrsqrt.pop %v1067
        %v1094 = vmul.f32 %v1067, %v1093
        %vm1095 = vcmp.eq.f32.partialorder %v1067, inf
        %v1096 = vsel %vm1095, %v1067, %v1094
        %vm1097 = vcmp.eq.f32.partialorder %v1067, 0.0
        %v1098 = vand.u32 %v1067, 2147483648
        %v1099 = vsel %vm1097, %v1098, %v1096
        %v1100 = vrsqrt.pop %v1068
        %v1101 = vmul.f32 %v1068, %v1100
        %vm1102 = vcmp.eq.f32.partialorder %v1068, inf
        %v1103 = vsel %vm1102, %v1068, %v1101
        %vm1104 = vcmp.eq.f32.partialorder %v1068, 0.0
        %v1105 = vand.u32 %v1068, 2147483648
        %v1106 = vsel %vm1104, %v1105, %v1103
        %v1107 = vrsqrt.pop %v1069
        %v1108 = vmul.f32 %v1069, %v1107
        %vm1109 = vcmp.eq.f32.partialorder %v1069, inf
        %v1110 = vsel %vm1109, %v1069, %v1108
        %vm1111 = vcmp.eq.f32.partialorder %v1069, 0.0
        %v1112 = vand.u32 %v1069, 2147483648
        %v1113 = vsel %vm1111, %v1112, %v1110
        %v1114 = vrsqrt.pop %v1070
        %v1115 = vmul.f32 %v1070, %v1114
        %vm1116 = vcmp.eq.f32.partialorder %v1070, inf
        %v1117 = vsel %vm1116, %v1070, %v1115
        %vm1118 = vcmp.eq.f32.partialorder %v1070, 0.0
        %v1119 = vand.u32 %v1070, 2147483648
        %v1120 = vsel %vm1118, %v1119, %v1117
        %v1121 = vrsqrt.pop %v1071
        %v1122 = vmul.f32 %v1071, %v1121
        %vm1123 = vcmp.eq.f32.partialorder %v1071, inf
        %v1124 = vsel %vm1123, %v1071, %v1122
        %vm1125 = vcmp.eq.f32.partialorder %v1071, 0.0
        %v1126 = vand.u32 %v1071, 2147483648
        %v1127 = vsel %vm1125, %v1126, %v1124
        %v1128 = vrsqrt.pop %v1072
        %v1129 = vmul.f32 %v1072, %v1128
        %vm1130 = vcmp.eq.f32.partialorder %v1072, inf
        %v1131 = vsel %vm1130, %v1072, %v1129
        %vm1132 = vcmp.eq.f32.partialorder %v1072, 0.0
        %v1133 = vand.u32 %v1072, 2147483648
        %v1134 = vsel %vm1132, %v1133, %v1131
        %v1135 = vrsqrt.pop %v1073
        %v1136 = vmul.f32 %v1073, %v1135
        %vm1137 = vcmp.eq.f32.partialorder %v1073, inf
        %v1138 = vsel %vm1137, %v1073, %v1136
        %vm1139 = vcmp.eq.f32.partialorder %v1073, 0.0
        %v1140 = vand.u32 %v1073, 2147483648
        %v1141 = vsel %vm1139, %v1140, %v1138
        %v1142 = vrsqrt.pop %v1074
        %v1143 = vmul.f32 %v1074, %v1142
        %vm1144 = vcmp.eq.f32.partialorder %v1074, inf
        %v1145 = vsel %vm1144, %v1074, %v1143
        %vm1146 = vcmp.eq.f32.partialorder %v1074, 0.0
        %v1147 = vand.u32 %v1074, 2147483648
        %v1148 = vsel %vm1146, %v1147, %v1145
        %v1149 = vrsqrt.pop %v1075
        %v1150 = vmul.f32 %v1075, %v1149
        %vm1151 = vcmp.eq.f32.partialorder %v1075, inf
        %v1152 = vsel %vm1151, %v1075, %v1150
        %vm1153 = vcmp.eq.f32.partialorder %v1075, 0.0
        %v1154 = vand.u32 %v1075, 2147483648
        %v1155 = vsel %vm1153, %v1154, %v1152
        %v1156 = vrsqrt.pop %v1076
        %v1157 = vmul.f32 %v1076, %v1156
        %vm1158 = vcmp.eq.f32.partialorder %v1076, inf
        %v1159 = vsel %vm1158, %v1076, %v1157
        %vm1160 = vcmp.eq.f32.partialorder %v1076, 0.0
        %v1161 = vand.u32 %v1076, 2147483648
        %v1162 = vsel %vm1160, %v1161, %v1159
        %v1163 = vrsqrt.pop %v1077
        %v1164 = vmul.f32 %v1077, %v1163
        %vm1165 = vcmp.eq.f32.partialorder %v1077, inf
        %v1166 = vsel %vm1165, %v1077, %v1164
        %vm1167 = vcmp.eq.f32.partialorder %v1077, 0.0
        %v1168 = vand.u32 %v1077, 2147483648
        %v1169 = vsel %vm1167, %v1168, %v1166
        %v1170 = vrsqrt.pop %v1078
        %v1171 = vmul.f32 %v1078, %v1170
        %vm1172 = vcmp.eq.f32.partialorder %v1078, inf
        %v1173 = vsel %vm1172, %v1078, %v1171
        %vm1174 = vcmp.eq.f32.partialorder %v1078, 0.0
        %v1175 = vand.u32 %v1078, 2147483648
        %v1176 = vsel %vm1174, %v1175, %v1173
        %v1177 = vsel %vm1051, %v1085, 0.0
        %v1178 = vsel %vm1052, %v1092, 0.0
        %v1179 = vsel %vm1053, %v1099, 0.0
        %v1180 = vsel %vm1054, %v1106, 0.0
        %v1181 = vsel %vm1055, %v1113, 0.0
        %v1182 = vsel %vm1056, %v1120, 0.0
        %v1183 = vsel %vm1057, %v1127, 0.0
        %v1184 = vsel %vm1058, %v1134, 0.0
        %v1185 = vsel %vm1059, %v1141, 0.0
        %v1186 = vsel %vm1060, %v1148, 0.0
        %v1187 = vsel %vm1061, %v1155, 0.0
        %v1188 = vsel %vm1062, %v1162, 0.0
        %v1189 = vsel %vm1063, %v1169, 0.0
        %v1190 = vsel %vm1064, %v1176, 0.0
        %1192 = vset.pattern.permute.xlu0 0
        %1193 = vperm.xlu0 %1192, %v1177
        %v1194 = vpop.permute.xlu0 %1193
        %1197 = vset.pattern.permute.xlu0 0
        %1198 = vperm.xlu0 %1197, %v1178
        %v1199 = vpop.permute.xlu0 %1198
        %1202 = vset.pattern.permute.xlu0 0
        %1203 = vperm.xlu0 %1202, %v1179
        %v1204 = vpop.permute.xlu0 %1203
        %1207 = vset.pattern.permute.xlu0 0
        %1208 = vperm.xlu0 %1207, %v1180
        %v1209 = vpop.permute.xlu0 %1208
        %1212 = vset.pattern.permute.xlu0 0
        %1213 = vperm.xlu0 %1212, %v1181
        %v1214 = vpop.permute.xlu0 %1213
        %1217 = vset.pattern.permute.xlu0 0
        %1218 = vperm.xlu0 %1217, %v1182
        %v1219 = vpop.permute.xlu0 %1218
        %1222 = vset.pattern.permute.xlu0 0
        %1223 = vperm.xlu0 %1222, %v1183
        %v1224 = vpop.permute.xlu0 %1223
        %1227 = vset.pattern.permute.xlu0 0
        %1228 = vperm.xlu0 %1227, %v1184
        %v1229 = vpop.permute.xlu0 %1228
        %1232 = vset.pattern.permute.xlu0 0
        %1233 = vperm.xlu0 %1232, %v1185
        %v1234 = vpop.permute.xlu0 %1233
        %1237 = vset.pattern.permute.xlu0 0
        %1238 = vperm.xlu0 %1237, %v1186
        %v1239 = vpop.permute.xlu0 %1238
        %1242 = vset.pattern.permute.xlu0 0
        %1243 = vperm.xlu0 %1242, %v1187
        %v1244 = vpop.permute.xlu0 %1243
        %1247 = vset.pattern.permute.xlu0 0
        %1248 = vperm.xlu0 %1247, %v1188
        %v1249 = vpop.permute.xlu0 %1248
        %1252 = vset.pattern.permute.xlu0 0
        %1253 = vperm.xlu0 %1252, %v1189
        %v1254 = vpop.permute.xlu0 %1253
        %1257 = vset.pattern.permute.xlu0 0
        %1258 = vperm.xlu0 %1257, %v1190
        %v1259 = vpop.permute.xlu0 %1258
        %v1262 = vlaneseq
        %v1263 = vshrl.u32 %v1262, 7
        %v1264 = vsub.s32 0, %v1263
        %v1265 = vrot.slane %v559, %v1264
        %v1267 = vsub.f32 %v1194, %v1265
        %v1268 = vsub.f32 %v1199, %v1265
        %v1269 = vsub.f32 %v1204, %v1265
        %v1270 = vsub.f32 %v1209, %v1265
        %v1271 = vsub.f32 %v1214, %v1265
        %v1272 = vsub.f32 %v1219, %v1265
        %v1273 = vsub.f32 %v1224, %v1265
        %v1274 = vsub.f32 %v1229, %v1265
        %v1275 = vsub.f32 %v1234, %v1265
        %v1276 = vsub.f32 %v1239, %v1265
        %v1277 = vsub.f32 %v1244, %v1265
        %v1278 = vsub.f32 %v1249, %v1265
        %v1279 = vsub.f32 %v1254, %v1265
        %v1280 = vsub.f32 %v1259, %v1265
        %v1281 = vmul.f32 %v1267, -1.125
        %v1282 = vmul.f32 %v1268, -1.125
        %v1283 = vmul.f32 %v1269, -1.125
        %v1284 = vmul.f32 %v1270, -1.125
        %v1285 = vmul.f32 %v1271, -1.125
        %v1286 = vmul.f32 %v1272, -1.125
        %v1287 = vmul.f32 %v1273, -1.125
        %v1288 = vmul.f32 %v1274, -1.125
        %v1289 = vmul.f32 %v1275, -1.125
        %v1290 = vmul.f32 %v1276, -1.125
        %v1291 = vmul.f32 %v1277, -1.125
        %v1292 = vmul.f32 %v1278, -1.125
        %v1293 = vmul.f32 %v1279, -1.125
        %v1294 = vmul.f32 %v1280, -1.125
        %v1295 = vmul.f32 %v1281, %v1267
        %v1296 = vmul.f32 %v1282, %v1268
        %v1297 = vmul.f32 %v1283, %v1269
        %v1298 = vmul.f32 %v1284, %v1270
        %v1299 = vmul.f32 %v1285, %v1271
        %v1300 = vmul.f32 %v1286, %v1272
        %v1301 = vmul.f32 %v1287, %v1273
        %v1302 = vmul.f32 %v1288, %v1274
        %v1303 = vmul.f32 %v1289, %v1275
        %v1304 = vmul.f32 %v1290, %v1276
        %v1305 = vmul.f32 %v1291, %v1277
        %v1306 = vmul.f32 %v1292, %v1278
        %v1307 = vmul.f32 %v1293, %v1279
        %v1308 = vmul.f32 %v1294, %v1280
        %v1309 = vmul.f32 %v1295, 1.442695
        %v1310 = vpow.pop %v1309
        %v1311 = vmul.f32 %v1296, 1.442695
        %v1312 = vpow.pop %v1311
        %v1313 = vmul.f32 %v1297, 1.442695
        %v1314 = vpow.pop %v1313
        %v1315 = vmul.f32 %v1298, 1.442695
        %v1316 = vpow.pop %v1315
        %v1317 = vmul.f32 %v1299, 1.442695
        %v1318 = vpow.pop %v1317
        %v1319 = vmul.f32 %v1300, 1.442695
        %v1320 = vpow.pop %v1319
        %v1321 = vmul.f32 %v1301, 1.442695
        %v1322 = vpow.pop %v1321
        %v1323 = vmul.f32 %v1302, 1.442695
        %v1324 = vpow.pop %v1323
        %v1325 = vmul.f32 %v1303, 1.442695
        %v1326 = vpow.pop %v1325
        %v1327 = vmul.f32 %v1304, 1.442695
        %v1328 = vpow.pop %v1327
        %v1329 = vmul.f32 %v1305, 1.442695
        %v1330 = vpow.pop %v1329
        %v1331 = vmul.f32 %v1306, 1.442695
        %v1332 = vpow.pop %v1331
        %v1333 = vmul.f32 %v1307, 1.442695
        %v1334 = vpow.pop %v1333
        %v1335 = vmul.f32 %v1308, 1.442695
        %v1336 = vpow.pop %v1335
        %v1337 = vmul.f32 %v1177, 0.31415927
        %v1338 = vmul.f32 %v1178, 0.31415927
        %v1339 = vmul.f32 %v1179, 0.31415927
        %v1340 = vmul.f32 %v1180, 0.31415927
        %v1341 = vmul.f32 %v1181, 0.31415927
        %v1342 = vmul.f32 %v1182, 0.31415927
        %v1343 = vmul.f32 %v1183, 0.31415927
        %v1344 = vmul.f32 %v1184, 0.31415927
        %v1345 = vmul.f32 %v1185, 0.31415927
        %v1346 = vmul.f32 %v1186, 0.31415927
        %v1347 = vmul.f32 %v1187, 0.31415927
        %v1348 = vmul.f32 %v1188, 0.31415927
        %v1349 = vmul.f32 %v1189, 0.31415927
        %v1350 = vmul.f32 %v1190, 0.31415927
        %v1351 = vand.u32 2147483647, %v1337
        %vm1352 = vcmp.le.f32.partialorder %v1351, 0.7853982
        %vm1353 = vcmp.lt.s32.totalorder %v1337, 0
        %v1354 = vand.u32 %v1337, 2139095040
        %v1355 = vshrl.u32 %v1354, 23
        %v1356 = vsub.s32 %v1355, 127
        %v1357 = vand.u32 2147483647, %v1337
        %v1358 = vand.u32 %v1357, 8388607
        %v1359 = vor.u32 %v1358, 8388608
        %v1360 = vsub.s32 0, %v1359
        %v1361 = vadd.s32 %v1356, 1
        %vm1362 = vcmp.gt.s32.totalorder %v1361, 0
        %v1363 = vsel %vm1362, %v1361, 0
        %v1364 = vshrl.u32 %v1363, 5
        %v1365 = vand.u32 %v1363, 31
        %v1366 = vsub.s32 32, %v1365
        %v1367 = vshrl.u32 683565275, %v1366
        %v1368 = vshll.u32 683565275, %v1365
        %v1369 = vshrl.u32 2475754826, %v1366
        %v1370 = vor.u32 %v1368, %v1369
        %v1371 = vshll.u32 2475754826, %v1365
        %v1372 = vshrl.u32 2131351028, %v1366
        %v1373 = vor.u32 %v1371, %v1372
        %v1374 = vshll.u32 2131351028, %v1365
        %v1375 = vshrl.u32 2102212464, %v1366
        %v1376 = vor.u32 %v1374, %v1375
        %v1377 = vshll.u32 2102212464, %v1365
        %v1378 = vshrl.u32 920167782, %v1366
        %v1379 = vor.u32 %v1377, %v1378
        %v1380 = vshll.u32 920167782, %v1365
        %v1381 = vshrl.u32 1326507024, %v1366
        %v1382 = vor.u32 %v1380, %v1381
        %vm1383 = vcmp.lt.s32.totalorder %v1364, 1
        %vm1384 = vcmp.lt.s32.totalorder %v1364, 2
        %vm1385 = vcmp.lt.s32.totalorder %v1364, 3
        %vm1386 = vcmp.lt.s32.totalorder %v1364, 4
        %v1387 = vsel %vm1383, %v1367, %v1370
        %v1388 = vsel %vm1386, %v1376, 2102212464
        %v1389 = vsel %vm1385, %v1373, %v1388
        %v1390 = vsel %vm1384, %v1387, %v1389
        %v1391 = vsel %vm1383, %v1370, %v1373
        %v1392 = vsel %vm1386, %v1379, 920167782
        %v1393 = vsel %vm1385, %v1376, %v1392
        %v1394 = vsel %vm1384, %v1391, %v1393
        %v1395 = vsel %vm1383, %v1373, %v1376
        %v1396 = vsel %vm1386, %v1382, 1326507024
        %v1397 = vsel %vm1385, %v1379, %v1396
        %v1398 = vsel %vm1384, %v1395, %v1397
        %v1399 = vshll.u32 %v1359, 8
        %v1400 = vmul.u32.u64.compose %v1399, %v1398
        %v1401 = vextract.low.u32 %v1400
        %v1402 = vextract.high.u32 %v1400
        %v1403 = vmul.u32.u64.compose %v1399, %v1394
        %v1404 = vextract.low.u32 %v1403
        %v1405 = vextract.high.u32 %v1403
        %v1406 = vmul.u32 %v1399, %v1390
        %v1407 = vadd.s32 %v1402, %v1404
        %vm1408 = vc.u32 %v1402, %v1404
        %v1409 = vadd.s32 %v1405, 1
        %v1410 = vsel %vm1408, %v1409, %v1405
        %v1411 = vadd.s32 %v1406, %v1410
        %v1412 = vadd.s32 %v1411, 536870912
        %v1413 = vshrl.u32 %v1412, 30
        %v1414 = vshll.u32 %v1413, 30
        %v1415 = vsub.s32 %v1411, %v1414
        %vm1416 = vcmp.lt.s32.totalorder %v1415, 0
        %v1417 = vsub.s32 0, %v1415
        %v1418 = vsel %vm1416, %v1417, %v1415
        %v1419 = vclz %v1418
        %v1420 = vsub.s32 %v1419, 2
        %vm1421 = vcmp.gt.s32.totalorder 0, %v1420
        %v1422 = vsel %vm1421, 0, %v1420
        %v1423 = vsub.s32 32, %v1422
        %v1424 = vshll.u32 %v1415, %v1422
        %v1425 = vshrl.u32 %v1407, %v1423
        %v1426 = vor.u32 %v1424, %v1425
        %v1427 = vsub.s32 4294967266, %v1422
        %v1428 = vadd.s32 %v1427, 127
        %v1429 = vshll.u32 %v1428, 23
        %v1430 = vor.u32 4788187, %v1429
        %v1431 = vand.u32 2147483647, %v1430
        %v1433 = vcvt.s32.f32 %v1426
        %v1434 = vmul.f32 %v1433, %v1431
        %v1435 = vxor.u32 %v1434, 2147483648
        %v1436 = vsel %vm1353, %v1435, %v1434
        %v1437 = vsub.s32 4, %v1413
        %v1438 = vsel %vm1353, %v1437, %v1413
        %v1439 = vsel %vm1352, %v1337, %v1436
        %v1440 = vsel %vm1352, 0, %v1438
        %v1441 = vcosq.f32.pop %v1439
        %v1442 = vsinq.f32.pop %v1439
        %vm1443 = vweird.f32 %v1337
        %v1444 = vand.u32 %v1440, 3
        %vm1445 = vcmp.lt.s32.totalorder %v1444, 2
        %vm1446 = vcmp.eq.s32.totalorder %v1444, 0
        %v1447 = vxor.u32 %v1442, 2147483648
        %v1448 = vsel %vm1446, %v1441, %v1447
        %vm1449 = vcmp.eq.s32.totalorder %v1444, 2
        %v1450 = vxor.u32 %v1441, 2147483648
        %v1451 = vsel %vm1449, %v1450, %v1442
        %v1452 = vsel %vm1445, %v1448, %v1451
        %v1453 = vsel %vm1443, nan, %v1452
        %v1454 = vand.u32 2147483647, %v1338
        %vm1455 = vcmp.le.f32.partialorder %v1454, 0.7853982
        %vm1456 = vcmp.lt.s32.totalorder %v1338, 0
        %v1457 = vand.u32 %v1338, 2139095040
        %v1458 = vshrl.u32 %v1457, 23
        %v1459 = vsub.s32 %v1458, 127
        %v1460 = vand.u32 2147483647, %v1338
        %v1461 = vand.u32 %v1460, 8388607
        %v1462 = vor.u32 %v1461, 8388608
        %v1463 = vsub.s32 0, %v1462
        %v1464 = vadd.s32 %v1459, 1
        %vm1465 = vcmp.gt.s32.totalorder %v1464, 0
        %v1466 = vsel %vm1465, %v1464, 0
        %v1467 = vshrl.u32 %v1466, 5
        %v1468 = vand.u32 %v1466, 31
        %v1469 = vsub.s32 32, %v1468
        %v1470 = vshrl.u32 683565275, %v1469
        %v1471 = vshll.u32 683565275, %v1468
        %v1472 = vshrl.u32 2475754826, %v1469
        %v1473 = vor.u32 %v1471, %v1472
        %v1474 = vshll.u32 2475754826, %v1468
        %v1475 = vshrl.u32 2131351028, %v1469
        %v1476 = vor.u32 %v1474, %v1475
        %v1477 = vshll.u32 2131351028, %v1468
        %v1478 = vshrl.u32 2102212464, %v1469
        %v1479 = vor.u32 %v1477, %v1478
        %v1480 = vshll.u32 2102212464, %v1468
        %v1481 = vshrl.u32 920167782, %v1469
        %v1482 = vor.u32 %v1480, %v1481
        %v1483 = vshll.u32 920167782, %v1468
        %v1484 = vshrl.u32 1326507024, %v1469
        %v1485 = vor.u32 %v1483, %v1484
        %vm1486 = vcmp.lt.s32.totalorder %v1467, 1
        %vm1487 = vcmp.lt.s32.totalorder %v1467, 2
        %vm1488 = vcmp.lt.s32.totalorder %v1467, 3
        %vm1489 = vcmp.lt.s32.totalorder %v1467, 4
        %v1490 = vsel %vm1486, %v1470, %v1473
        %v1491 = vsel %vm1489, %v1479, 2102212464
        %v1492 = vsel %vm1488, %v1476, %v1491
        %v1493 = vsel %vm1487, %v1490, %v1492
        %v1494 = vsel %vm1486, %v1473, %v1476
        %v1495 = vsel %vm1489, %v1482, 920167782
        %v1496 = vsel %vm1488, %v1479, %v1495
        %v1497 = vsel %vm1487, %v1494, %v1496
        %v1498 = vsel %vm1486, %v1476, %v1479
        %v1499 = vsel %vm1489, %v1485, 1326507024
        %v1500 = vsel %vm1488, %v1482, %v1499
        %v1501 = vsel %vm1487, %v1498, %v1500
        %v1502 = vshll.u32 %v1462, 8
        %v1503 = vmul.u32.u64.compose %v1502, %v1501
        %v1504 = vextract.low.u32 %v1503
        %v1505 = vextract.high.u32 %v1503
        %v1506 = vmul.u32.u64.compose %v1502, %v1497
        %v1507 = vextract.low.u32 %v1506
        %v1508 = vextract.high.u32 %v1506
        %v1509 = vmul.u32 %v1502, %v1493
        %v1510 = vadd.s32 %v1505, %v1507
        %vm1511 = vc.u32 %v1505, %v1507
        %v1512 = vadd.s32 %v1508, 1
        %v1513 = vsel %vm1511, %v1512, %v1508
        %v1514 = vadd.s32 %v1509, %v1513
        %v1515 = vadd.s32 %v1514, 536870912
        %v1516 = vshrl.u32 %v1515, 30
        %v1517 = vshll.u32 %v1516, 30
        %v1518 = vsub.s32 %v1514, %v1517
        %vm1519 = vcmp.lt.s32.totalorder %v1518, 0
        %v1520 = vsub.s32 0, %v1518
        %v1521 = vsel %vm1519, %v1520, %v1518
        %v1522 = vclz %v1521
        %v1523 = vsub.s32 %v1522, 2
        %vm1524 = vcmp.gt.s32.totalorder 0, %v1523
        %v1525 = vsel %vm1524, 0, %v1523
        %v1526 = vsub.s32 32, %v1525
        %v1527 = vshll.u32 %v1518, %v1525
        %v1528 = vshrl.u32 %v1510, %v1526
        %v1529 = vor.u32 %v1527, %v1528
        %v1530 = vsub.s32 4294967266, %v1525
        %v1531 = vadd.s32 %v1530, 127
        %v1532 = vshll.u32 %v1531, 23
        %v1533 = vor.u32 4788187, %v1532
        %v1534 = vand.u32 2147483647, %v1533
        %v1536 = vcvt.s32.f32 %v1529
        %v1537 = vmul.f32 %v1536, %v1534
        %v1538 = vxor.u32 %v1537, 2147483648
        %v1539 = vsel %vm1456, %v1538, %v1537
        %v1540 = vsub.s32 4, %v1516
        %v1541 = vsel %vm1456, %v1540, %v1516
        %v1542 = vsel %vm1455, %v1338, %v1539
        %v1543 = vsel %vm1455, 0, %v1541
        %v1544 = vcosq.f32.pop %v1542
        %v1545 = vsinq.f32.pop %v1542
        %vm1546 = vweird.f32 %v1338
        %v1547 = vand.u32 %v1543, 3
        %vm1548 = vcmp.lt.s32.totalorder %v1547, 2
        %vm1549 = vcmp.eq.s32.totalorder %v1547, 0
        %v1550 = vxor.u32 %v1545, 2147483648
        %v1551 = vsel %vm1549, %v1544, %v1550
        %vm1552 = vcmp.eq.s32.totalorder %v1547, 2
        %v1553 = vxor.u32 %v1544, 2147483648
        %v1554 = vsel %vm1552, %v1553, %v1545
        %v1555 = vsel %vm1548, %v1551, %v1554
        %v1556 = vsel %vm1546, nan, %v1555
        %v1557 = vand.u32 2147483647, %v1339
        %vm1558 = vcmp.le.f32.partialorder %v1557, 0.7853982
        %vm1559 = vcmp.lt.s32.totalorder %v1339, 0
        %v1560 = vand.u32 %v1339, 2139095040
        %v1561 = vshrl.u32 %v1560, 23
        %v1562 = vsub.s32 %v1561, 127
        %v1563 = vand.u32 2147483647, %v1339
        %v1564 = vand.u32 %v1563, 8388607
        %v1565 = vor.u32 %v1564, 8388608
        %v1566 = vsub.s32 0, %v1565
        %v1567 = vadd.s32 %v1562, 1
        %vm1568 = vcmp.gt.s32.totalorder %v1567, 0
        %v1569 = vsel %vm1568, %v1567, 0
        %v1570 = vshrl.u32 %v1569, 5
        %v1571 = vand.u32 %v1569, 31
        %v1572 = vsub.s32 32, %v1571
        %v1573 = vshrl.u32 683565275, %v1572
        %v1574 = vshll.u32 683565275, %v1571
        %v1575 = vshrl.u32 2475754826, %v1572
        %v1576 = vor.u32 %v1574, %v1575
        %v1577 = vshll.u32 2475754826, %v1571
        %v1578 = vshrl.u32 2131351028, %v1572
        %v1579 = vor.u32 %v1577, %v1578
        %v1580 = vshll.u32 2131351028, %v1571
        %v1581 = vshrl.u32 2102212464, %v1572
        %v1582 = vor.u32 %v1580, %v1581
        %v1583 = vshll.u32 2102212464, %v1571
        %v1584 = vshrl.u32 920167782, %v1572
        %v1585 = vor.u32 %v1583, %v1584
        %v1586 = vshll.u32 920167782, %v1571
        %v1587 = vshrl.u32 1326507024, %v1572
        %v1588 = vor.u32 %v1586, %v1587
        %vm1589 = vcmp.lt.s32.totalorder %v1570, 1
        %vm1590 = vcmp.lt.s32.totalorder %v1570, 2
        %vm1591 = vcmp.lt.s32.totalorder %v1570, 3
        %vm1592 = vcmp.lt.s32.totalorder %v1570, 4
        %v1593 = vsel %vm1589, %v1573, %v1576
        %v1594 = vsel %vm1592, %v1582, 2102212464
        %v1595 = vsel %vm1591, %v1579, %v1594
        %v1596 = vsel %vm1590, %v1593, %v1595
        %v1597 = vsel %vm1589, %v1576, %v1579
        %v1598 = vsel %vm1592, %v1585, 920167782
        %v1599 = vsel %vm1591, %v1582, %v1598
        %v1600 = vsel %vm1590, %v1597, %v1599
        %v1601 = vsel %vm1589, %v1579, %v1582
        %v1602 = vsel %vm1592, %v1588, 1326507024
        %v1603 = vsel %vm1591, %v1585, %v1602
        %v1604 = vsel %vm1590, %v1601, %v1603
        %v1605 = vshll.u32 %v1565, 8
        %v1606 = vmul.u32.u64.compose %v1605, %v1604
        %v1607 = vextract.low.u32 %v1606
        %v1608 = vextract.high.u32 %v1606
        %v1609 = vmul.u32.u64.compose %v1605, %v1600
        %v1610 = vextract.low.u32 %v1609
        %v1611 = vextract.high.u32 %v1609
        %v1612 = vmul.u32 %v1605, %v1596
        %v1613 = vadd.s32 %v1608, %v1610
        %vm1614 = vc.u32 %v1608, %v1610
        %v1615 = vadd.s32 %v1611, 1
        %v1616 = vsel %vm1614, %v1615, %v1611
        %v1617 = vadd.s32 %v1612, %v1616
        %v1618 = vadd.s32 %v1617, 536870912
        %v1619 = vshrl.u32 %v1618, 30
        %v1620 = vshll.u32 %v1619, 30
        %v1621 = vsub.s32 %v1617, %v1620
        %vm1622 = vcmp.lt.s32.totalorder %v1621, 0
        %v1623 = vsub.s32 0, %v1621
        %v1624 = vsel %vm1622, %v1623, %v1621
        %v1625 = vclz %v1624
        %v1626 = vsub.s32 %v1625, 2
        %vm1627 = vcmp.gt.s32.totalorder 0, %v1626
        %v1628 = vsel %vm1627, 0, %v1626
        %v1629 = vsub.s32 32, %v1628
        %v1630 = vshll.u32 %v1621, %v1628
        %v1631 = vshrl.u32 %v1613, %v1629
        %v1632 = vor.u32 %v1630, %v1631
        %v1633 = vsub.s32 4294967266, %v1628
        %v1634 = vadd.s32 %v1633, 127
        %v1635 = vshll.u32 %v1634, 23
        %v1636 = vor.u32 4788187, %v1635
        %v1637 = vand.u32 2147483647, %v1636
        %v1639 = vcvt.s32.f32 %v1632
        %v1640 = vmul.f32 %v1639, %v1637
        %v1641 = vxor.u32 %v1640, 2147483648
        %v1642 = vsel %vm1559, %v1641, %v1640
        %v1643 = vsub.s32 4, %v1619
        %v1644 = vsel %vm1559, %v1643, %v1619
        %v1645 = vsel %vm1558, %v1339, %v1642
        %v1646 = vsel %vm1558, 0, %v1644
        %v1647 = vcosq.f32.pop %v1645
        %v1648 = vsinq.f32.pop %v1645
        %vm1649 = vweird.f32 %v1339
        %v1650 = vand.u32 %v1646, 3
        %vm1651 = vcmp.lt.s32.totalorder %v1650, 2
        %vm1652 = vcmp.eq.s32.totalorder %v1650, 0
        %v1653 = vxor.u32 %v1648, 2147483648
        %v1654 = vsel %vm1652, %v1647, %v1653
        %vm1655 = vcmp.eq.s32.totalorder %v1650, 2
        %v1656 = vxor.u32 %v1647, 2147483648
        %v1657 = vsel %vm1655, %v1656, %v1648
        %v1658 = vsel %vm1651, %v1654, %v1657
        %v1659 = vsel %vm1649, nan, %v1658
        %v1660 = vand.u32 2147483647, %v1340
        %vm1661 = vcmp.le.f32.partialorder %v1660, 0.7853982
        %vm1662 = vcmp.lt.s32.totalorder %v1340, 0
        %v1663 = vand.u32 %v1340, 2139095040
        %v1664 = vshrl.u32 %v1663, 23
        %v1665 = vsub.s32 %v1664, 127
        %v1666 = vand.u32 2147483647, %v1340
        %v1667 = vand.u32 %v1666, 8388607
        %v1668 = vor.u32 %v1667, 8388608
        %v1669 = vsub.s32 0, %v1668
        %v1670 = vadd.s32 %v1665, 1
        %vm1671 = vcmp.gt.s32.totalorder %v1670, 0
        %v1672 = vsel %vm1671, %v1670, 0
        %v1673 = vshrl.u32 %v1672, 5
        %v1674 = vand.u32 %v1672, 31
        %v1675 = vsub.s32 32, %v1674
        %v1676 = vshrl.u32 683565275, %v1675
        %v1677 = vshll.u32 683565275, %v1674
        %v1678 = vshrl.u32 2475754826, %v1675
        %v1679 = vor.u32 %v1677, %v1678
        %v1680 = vshll.u32 2475754826, %v1674
        %v1681 = vshrl.u32 2131351028, %v1675
        %v1682 = vor.u32 %v1680, %v1681
        %v1683 = vshll.u32 2131351028, %v1674
        %v1684 = vshrl.u32 2102212464, %v1675
        %v1685 = vor.u32 %v1683, %v1684
        %v1686 = vshll.u32 2102212464, %v1674
        %v1687 = vshrl.u32 920167782, %v1675
        %v1688 = vor.u32 %v1686, %v1687
        %v1689 = vshll.u32 920167782, %v1674
        %v1690 = vshrl.u32 1326507024, %v1675
        %v1691 = vor.u32 %v1689, %v1690
        %vm1692 = vcmp.lt.s32.totalorder %v1673, 1
        %vm1693 = vcmp.lt.s32.totalorder %v1673, 2
        %vm1694 = vcmp.lt.s32.totalorder %v1673, 3
        %vm1695 = vcmp.lt.s32.totalorder %v1673, 4
        %v1696 = vsel %vm1692, %v1676, %v1679
        %v1697 = vsel %vm1695, %v1685, 2102212464
        %v1698 = vsel %vm1694, %v1682, %v1697
        %v1699 = vsel %vm1693, %v1696, %v1698
        %v1700 = vsel %vm1692, %v1679, %v1682
        %v1701 = vsel %vm1695, %v1688, 920167782
        %v1702 = vsel %vm1694, %v1685, %v1701
        %v1703 = vsel %vm1693, %v1700, %v1702
        %v1704 = vsel %vm1692, %v1682, %v1685
        %v1705 = vsel %vm1695, %v1691, 1326507024
        %v1706 = vsel %vm1694, %v1688, %v1705
        %v1707 = vsel %vm1693, %v1704, %v1706
        %v1708 = vshll.u32 %v1668, 8
        %v1709 = vmul.u32.u64.compose %v1708, %v1707
        %v1710 = vextract.low.u32 %v1709
        %v1711 = vextract.high.u32 %v1709
        %v1712 = vmul.u32.u64.compose %v1708, %v1703
        %v1713 = vextract.low.u32 %v1712
        %v1714 = vextract.high.u32 %v1712
        %v1715 = vmul.u32 %v1708, %v1699
        %v1716 = vadd.s32 %v1711, %v1713
        %vm1717 = vc.u32 %v1711, %v1713
        %v1718 = vadd.s32 %v1714, 1
        %v1719 = vsel %vm1717, %v1718, %v1714
        %v1720 = vadd.s32 %v1715, %v1719
        %v1721 = vadd.s32 %v1720, 536870912
        %v1722 = vshrl.u32 %v1721, 30
        %v1723 = vshll.u32 %v1722, 30
        %v1724 = vsub.s32 %v1720, %v1723
        %vm1725 = vcmp.lt.s32.totalorder %v1724, 0
        %v1726 = vsub.s32 0, %v1724
        %v1727 = vsel %vm1725, %v1726, %v1724
        %v1728 = vclz %v1727
        %v1729 = vsub.s32 %v1728, 2
        %vm1730 = vcmp.gt.s32.totalorder 0, %v1729
        %v1731 = vsel %vm1730, 0, %v1729
        %v1732 = vsub.s32 32, %v1731
        %v1733 = vshll.u32 %v1724, %v1731
        %v1734 = vshrl.u32 %v1716, %v1732
        %v1735 = vor.u32 %v1733, %v1734
        %v1736 = vsub.s32 4294967266, %v1731
        %v1737 = vadd.s32 %v1736, 127
        %v1738 = vshll.u32 %v1737, 23
        %v1739 = vor.u32 4788187, %v1738
        %v1740 = vand.u32 2147483647, %v1739
        %v1742 = vcvt.s32.f32 %v1735
        %v1743 = vmul.f32 %v1742, %v1740
        %v1744 = vxor.u32 %v1743, 2147483648
        %v1745 = vsel %vm1662, %v1744, %v1743
        %v1746 = vsub.s32 4, %v1722
        %v1747 = vsel %vm1662, %v1746, %v1722
        %v1748 = vsel %vm1661, %v1340, %v1745
        %v1749 = vsel %vm1661, 0, %v1747
        %v1750 = vcosq.f32.pop %v1748
        %v1751 = vsinq.f32.pop %v1748
        %vm1752 = vweird.f32 %v1340
        %v1753 = vand.u32 %v1749, 3
        %vm1754 = vcmp.lt.s32.totalorder %v1753, 2
        %vm1755 = vcmp.eq.s32.totalorder %v1753, 0
        %v1756 = vxor.u32 %v1751, 2147483648
        %v1757 = vsel %vm1755, %v1750, %v1756
        %vm1758 = vcmp.eq.s32.totalorder %v1753, 2
        %v1759 = vxor.u32 %v1750, 2147483648
        %v1760 = vsel %vm1758, %v1759, %v1751
        %v1761 = vsel %vm1754, %v1757, %v1760
        %v1762 = vsel %vm1752, nan, %v1761
        %v1763 = vand.u32 2147483647, %v1341
        %vm1764 = vcmp.le.f32.partialorder %v1763, 0.7853982
        %vm1765 = vcmp.lt.s32.totalorder %v1341, 0
        %v1766 = vand.u32 %v1341, 2139095040
        %v1767 = vshrl.u32 %v1766, 23
        %v1768 = vsub.s32 %v1767, 127
        %v1769 = vand.u32 2147483647, %v1341
        %v1770 = vand.u32 %v1769, 8388607
        %v1771 = vor.u32 %v1770, 8388608
        %v1772 = vsub.s32 0, %v1771
        %v1773 = vadd.s32 %v1768, 1
        %vm1774 = vcmp.gt.s32.totalorder %v1773, 0
        %v1775 = vsel %vm1774, %v1773, 0
        %v1776 = vshrl.u32 %v1775, 5
        %v1777 = vand.u32 %v1775, 31
        %v1778 = vsub.s32 32, %v1777
        %v1779 = vshrl.u32 683565275, %v1778
        %v1780 = vshll.u32 683565275, %v1777
        %v1781 = vshrl.u32 2475754826, %v1778
        %v1782 = vor.u32 %v1780, %v1781
        %v1783 = vshll.u32 2475754826, %v1777
        %v1784 = vshrl.u32 2131351028, %v1778
        %v1785 = vor.u32 %v1783, %v1784
        %v1786 = vshll.u32 2131351028, %v1777
        %v1787 = vshrl.u32 2102212464, %v1778
        %v1788 = vor.u32 %v1786, %v1787
        %v1789 = vshll.u32 2102212464, %v1777
        %v1790 = vshrl.u32 920167782, %v1778
        %v1791 = vor.u32 %v1789, %v1790
        %v1792 = vshll.u32 920167782, %v1777
        %v1793 = vshrl.u32 1326507024, %v1778
        %v1794 = vor.u32 %v1792, %v1793
        %vm1795 = vcmp.lt.s32.totalorder %v1776, 1
        %vm1796 = vcmp.lt.s32.totalorder %v1776, 2
        %vm1797 = vcmp.lt.s32.totalorder %v1776, 3
        %vm1798 = vcmp.lt.s32.totalorder %v1776, 4
        %v1799 = vsel %vm1795, %v1779, %v1782
        %v1800 = vsel %vm1798, %v1788, 2102212464
        %v1801 = vsel %vm1797, %v1785, %v1800
        %v1802 = vsel %vm1796, %v1799, %v1801
        %v1803 = vsel %vm1795, %v1782, %v1785
        %v1804 = vsel %vm1798, %v1791, 920167782
        %v1805 = vsel %vm1797, %v1788, %v1804
        %v1806 = vsel %vm1796, %v1803, %v1805
        %v1807 = vsel %vm1795, %v1785, %v1788
        %v1808 = vsel %vm1798, %v1794, 1326507024
        %v1809 = vsel %vm1797, %v1791, %v1808
        %v1810 = vsel %vm1796, %v1807, %v1809
        %v1811 = vshll.u32 %v1771, 8
        %v1812 = vmul.u32.u64.compose %v1811, %v1810
        %v1813 = vextract.low.u32 %v1812
        %v1814 = vextract.high.u32 %v1812
        %v1815 = vmul.u32.u64.compose %v1811, %v1806
        %v1816 = vextract.low.u32 %v1815
        %v1817 = vextract.high.u32 %v1815
        %v1818 = vmul.u32 %v1811, %v1802
        %v1819 = vadd.s32 %v1814, %v1816
        %vm1820 = vc.u32 %v1814, %v1816
        %v1821 = vadd.s32 %v1817, 1
        %v1822 = vsel %vm1820, %v1821, %v1817
        %v1823 = vadd.s32 %v1818, %v1822
        %v1824 = vadd.s32 %v1823, 536870912
        %v1825 = vshrl.u32 %v1824, 30
        %v1826 = vshll.u32 %v1825, 30
        %v1827 = vsub.s32 %v1823, %v1826
        %vm1828 = vcmp.lt.s32.totalorder %v1827, 0
        %v1829 = vsub.s32 0, %v1827
        %v1830 = vsel %vm1828, %v1829, %v1827
        %v1831 = vclz %v1830
        %v1832 = vsub.s32 %v1831, 2
        %vm1833 = vcmp.gt.s32.totalorder 0, %v1832
        %v1834 = vsel %vm1833, 0, %v1832
        %v1835 = vsub.s32 32, %v1834
        %v1836 = vshll.u32 %v1827, %v1834
        %v1837 = vshrl.u32 %v1819, %v1835
        %v1838 = vor.u32 %v1836, %v1837
        %v1839 = vsub.s32 4294967266, %v1834
        %v1840 = vadd.s32 %v1839, 127
        %v1841 = vshll.u32 %v1840, 23
        %v1842 = vor.u32 4788187, %v1841
        %v1843 = vand.u32 2147483647, %v1842
        %v1845 = vcvt.s32.f32 %v1838
        %v1846 = vmul.f32 %v1845, %v1843
        %v1847 = vxor.u32 %v1846, 2147483648
        %v1848 = vsel %vm1765, %v1847, %v1846
        %v1849 = vsub.s32 4, %v1825
        %v1850 = vsel %vm1765, %v1849, %v1825
        %v1851 = vsel %vm1764, %v1341, %v1848
        %v1852 = vsel %vm1764, 0, %v1850
        %v1853 = vcosq.f32.pop %v1851
        %v1854 = vsinq.f32.pop %v1851
        %vm1855 = vweird.f32 %v1341
        %v1856 = vand.u32 %v1852, 3
        %vm1857 = vcmp.lt.s32.totalorder %v1856, 2
        %vm1858 = vcmp.eq.s32.totalorder %v1856, 0
        %v1859 = vxor.u32 %v1854, 2147483648
        %v1860 = vsel %vm1858, %v1853, %v1859
        %vm1861 = vcmp.eq.s32.totalorder %v1856, 2
        %v1862 = vxor.u32 %v1853, 2147483648
        %v1863 = vsel %vm1861, %v1862, %v1854
        %v1864 = vsel %vm1857, %v1860, %v1863
        %v1865 = vsel %vm1855, nan, %v1864
        %v1866 = vand.u32 2147483647, %v1342
        %vm1867 = vcmp.le.f32.partialorder %v1866, 0.7853982
        %vm1868 = vcmp.lt.s32.totalorder %v1342, 0
        %v1869 = vand.u32 %v1342, 2139095040
        %v1870 = vshrl.u32 %v1869, 23
        %v1871 = vsub.s32 %v1870, 127
        %v1872 = vand.u32 2147483647, %v1342
        %v1873 = vand.u32 %v1872, 8388607
        %v1874 = vor.u32 %v1873, 8388608
        %v1875 = vsub.s32 0, %v1874
        %v1876 = vadd.s32 %v1871, 1
        %vm1877 = vcmp.gt.s32.totalorder %v1876, 0
        %v1878 = vsel %vm1877, %v1876, 0
        %v1879 = vshrl.u32 %v1878, 5
        %v1880 = vand.u32 %v1878, 31
        %v1881 = vsub.s32 32, %v1880
        %v1882 = vshrl.u32 683565275, %v1881
        %v1883 = vshll.u32 683565275, %v1880
        %v1884 = vshrl.u32 2475754826, %v1881
        %v1885 = vor.u32 %v1883, %v1884
        %v1886 = vshll.u32 2475754826, %v1880
        %v1887 = vshrl.u32 2131351028, %v1881
        %v1888 = vor.u32 %v1886, %v1887
        %v1889 = vshll.u32 2131351028, %v1880
        %v1890 = vshrl.u32 2102212464, %v1881
        %v1891 = vor.u32 %v1889, %v1890
        %v1892 = vshll.u32 2102212464, %v1880
        %v1893 = vshrl.u32 920167782, %v1881
        %v1894 = vor.u32 %v1892, %v1893
        %v1895 = vshll.u32 920167782, %v1880
        %v1896 = vshrl.u32 1326507024, %v1881
        %v1897 = vor.u32 %v1895, %v1896
        %vm1898 = vcmp.lt.s32.totalorder %v1879, 1
        %vm1899 = vcmp.lt.s32.totalorder %v1879, 2
        %vm1900 = vcmp.lt.s32.totalorder %v1879, 3
        %vm1901 = vcmp.lt.s32.totalorder %v1879, 4
        %v1902 = vsel %vm1898, %v1882, %v1885
        %v1903 = vsel %vm1901, %v1891, 2102212464
        %v1904 = vsel %vm1900, %v1888, %v1903
        %v1905 = vsel %vm1899, %v1902, %v1904
        %v1906 = vsel %vm1898, %v1885, %v1888
        %v1907 = vsel %vm1901, %v1894, 920167782
        %v1908 = vsel %vm1900, %v1891, %v1907
        %v1909 = vsel %vm1899, %v1906, %v1908
        %v1910 = vsel %vm1898, %v1888, %v1891
        %v1911 = vsel %vm1901, %v1897, 1326507024
        %v1912 = vsel %vm1900, %v1894, %v1911
        %v1913 = vsel %vm1899, %v1910, %v1912
        %v1914 = vshll.u32 %v1874, 8
        %v1915 = vmul.u32.u64.compose %v1914, %v1913
        %v1916 = vextract.low.u32 %v1915
        %v1917 = vextract.high.u32 %v1915
        %v1918 = vmul.u32.u64.compose %v1914, %v1909
        %v1919 = vextract.low.u32 %v1918
        %v1920 = vextract.high.u32 %v1918
        %v1921 = vmul.u32 %v1914, %v1905
        %v1922 = vadd.s32 %v1917, %v1919
        %vm1923 = vc.u32 %v1917, %v1919
        %v1924 = vadd.s32 %v1920, 1
        %v1925 = vsel %vm1923, %v1924, %v1920
        %v1926 = vadd.s32 %v1921, %v1925
        %v1927 = vadd.s32 %v1926, 536870912
        %v1928 = vshrl.u32 %v1927, 30
        %v1929 = vshll.u32 %v1928, 30
        %v1930 = vsub.s32 %v1926, %v1929
        %vm1931 = vcmp.lt.s32.totalorder %v1930, 0
        %v1932 = vsub.s32 0, %v1930
        %v1933 = vsel %vm1931, %v1932, %v1930
        %v1934 = vclz %v1933
        %v1935 = vsub.s32 %v1934, 2
        %vm1936 = vcmp.gt.s32.totalorder 0, %v1935
        %v1937 = vsel %vm1936, 0, %v1935
        %v1938 = vsub.s32 32, %v1937
        %v1939 = vshll.u32 %v1930, %v1937
        %v1940 = vshrl.u32 %v1922, %v1938
        %v1941 = vor.u32 %v1939, %v1940
        %v1942 = vsub.s32 4294967266, %v1937
        %v1943 = vadd.s32 %v1942, 127
        %v1944 = vshll.u32 %v1943, 23
        %v1945 = vor.u32 4788187, %v1944
        %v1946 = vand.u32 2147483647, %v1945
        %v1948 = vcvt.s32.f32 %v1941
        %v1949 = vmul.f32 %v1948, %v1946
        %v1950 = vxor.u32 %v1949, 2147483648
        %v1951 = vsel %vm1868, %v1950, %v1949
        %v1952 = vsub.s32 4, %v1928
        %v1953 = vsel %vm1868, %v1952, %v1928
        %v1954 = vsel %vm1867, %v1342, %v1951
        %v1955 = vsel %vm1867, 0, %v1953
        %v1956 = vcosq.f32.pop %v1954
        %v1957 = vsinq.f32.pop %v1954
        %vm1958 = vweird.f32 %v1342
        %v1959 = vand.u32 %v1955, 3
        %vm1960 = vcmp.lt.s32.totalorder %v1959, 2
        %vm1961 = vcmp.eq.s32.totalorder %v1959, 0
        %v1962 = vxor.u32 %v1957, 2147483648
        %v1963 = vsel %vm1961, %v1956, %v1962
        %vm1964 = vcmp.eq.s32.totalorder %v1959, 2
        %v1965 = vxor.u32 %v1956, 2147483648
        %v1966 = vsel %vm1964, %v1965, %v1957
        %v1967 = vsel %vm1960, %v1963, %v1966
        %v1968 = vsel %vm1958, nan, %v1967
        %v1969 = vand.u32 2147483647, %v1343
        %vm1970 = vcmp.le.f32.partialorder %v1969, 0.7853982
        %vm1971 = vcmp.lt.s32.totalorder %v1343, 0
        %v1972 = vand.u32 %v1343, 2139095040
        %v1973 = vshrl.u32 %v1972, 23
        %v1974 = vsub.s32 %v1973, 127
        %v1975 = vand.u32 2147483647, %v1343
        %v1976 = vand.u32 %v1975, 8388607
        %v1977 = vor.u32 %v1976, 8388608
        %v1978 = vsub.s32 0, %v1977
        %v1979 = vadd.s32 %v1974, 1
        %vm1980 = vcmp.gt.s32.totalorder %v1979, 0
        %v1981 = vsel %vm1980, %v1979, 0
        %v1982 = vshrl.u32 %v1981, 5
        %v1983 = vand.u32 %v1981, 31
        %v1984 = vsub.s32 32, %v1983
        %v1985 = vshrl.u32 683565275, %v1984
        %v1986 = vshll.u32 683565275, %v1983
        %v1987 = vshrl.u32 2475754826, %v1984
        %v1988 = vor.u32 %v1986, %v1987
        %v1989 = vshll.u32 2475754826, %v1983
        %v1990 = vshrl.u32 2131351028, %v1984
        %v1991 = vor.u32 %v1989, %v1990
        %v1992 = vshll.u32 2131351028, %v1983
        %v1993 = vshrl.u32 2102212464, %v1984
        %v1994 = vor.u32 %v1992, %v1993
        %v1995 = vshll.u32 2102212464, %v1983
        %v1996 = vshrl.u32 920167782, %v1984
        %v1997 = vor.u32 %v1995, %v1996
        %v1998 = vshll.u32 920167782, %v1983
        %v1999 = vshrl.u32 1326507024, %v1984
        %v2000 = vor.u32 %v1998, %v1999
        %vm2001 = vcmp.lt.s32.totalorder %v1982, 1
        %vm2002 = vcmp.lt.s32.totalorder %v1982, 2
        %vm2003 = vcmp.lt.s32.totalorder %v1982, 3
        %vm2004 = vcmp.lt.s32.totalorder %v1982, 4
        %v2005 = vsel %vm2001, %v1985, %v1988
        %v2006 = vsel %vm2004, %v1994, 2102212464
        %v2007 = vsel %vm2003, %v1991, %v2006
        %v2008 = vsel %vm2002, %v2005, %v2007
        %v2009 = vsel %vm2001, %v1988, %v1991
        %v2010 = vsel %vm2004, %v1997, 920167782
        %v2011 = vsel %vm2003, %v1994, %v2010
        %v2012 = vsel %vm2002, %v2009, %v2011
        %v2013 = vsel %vm2001, %v1991, %v1994
        %v2014 = vsel %vm2004, %v2000, 1326507024
        %v2015 = vsel %vm2003, %v1997, %v2014
        %v2016 = vsel %vm2002, %v2013, %v2015
        %v2017 = vshll.u32 %v1977, 8
        %v2018 = vmul.u32.u64.compose %v2017, %v2016
        %v2019 = vextract.low.u32 %v2018
        %v2020 = vextract.high.u32 %v2018
        %v2021 = vmul.u32.u64.compose %v2017, %v2012
        %v2022 = vextract.low.u32 %v2021
        %v2023 = vextract.high.u32 %v2021
        %v2024 = vmul.u32 %v2017, %v2008
        %v2025 = vadd.s32 %v2020, %v2022
        %vm2026 = vc.u32 %v2020, %v2022
        %v2027 = vadd.s32 %v2023, 1
        %v2028 = vsel %vm2026, %v2027, %v2023
        %v2029 = vadd.s32 %v2024, %v2028
        %v2030 = vadd.s32 %v2029, 536870912
        %v2031 = vshrl.u32 %v2030, 30
        %v2032 = vshll.u32 %v2031, 30
        %v2033 = vsub.s32 %v2029, %v2032
        %vm2034 = vcmp.lt.s32.totalorder %v2033, 0
        %v2035 = vsub.s32 0, %v2033
        %v2036 = vsel %vm2034, %v2035, %v2033
        %v2037 = vclz %v2036
        %v2038 = vsub.s32 %v2037, 2
        %vm2039 = vcmp.gt.s32.totalorder 0, %v2038
        %v2040 = vsel %vm2039, 0, %v2038
        %v2041 = vsub.s32 32, %v2040
        %v2042 = vshll.u32 %v2033, %v2040
        %v2043 = vshrl.u32 %v2025, %v2041
        %v2044 = vor.u32 %v2042, %v2043
        %v2045 = vsub.s32 4294967266, %v2040
        %v2046 = vadd.s32 %v2045, 127
        %v2047 = vshll.u32 %v2046, 23
        %v2048 = vor.u32 4788187, %v2047
        %v2049 = vand.u32 2147483647, %v2048
        %v2051 = vcvt.s32.f32 %v2044
        %v2052 = vmul.f32 %v2051, %v2049
        %v2053 = vxor.u32 %v2052, 2147483648
        %v2054 = vsel %vm1971, %v2053, %v2052
        %v2055 = vsub.s32 4, %v2031
        %v2056 = vsel %vm1971, %v2055, %v2031
        %v2057 = vsel %vm1970, %v1343, %v2054
        %v2058 = vsel %vm1970, 0, %v2056
        %v2059 = vcosq.f32.pop %v2057
        %v2060 = vsinq.f32.pop %v2057
        %vm2061 = vweird.f32 %v1343
        %v2062 = vand.u32 %v2058, 3
        %vm2063 = vcmp.lt.s32.totalorder %v2062, 2
        %vm2064 = vcmp.eq.s32.totalorder %v2062, 0
        %v2065 = vxor.u32 %v2060, 2147483648
        %v2066 = vsel %vm2064, %v2059, %v2065
        %vm2067 = vcmp.eq.s32.totalorder %v2062, 2
        %v2068 = vxor.u32 %v2059, 2147483648
        %v2069 = vsel %vm2067, %v2068, %v2060
        %v2070 = vsel %vm2063, %v2066, %v2069
        %v2071 = vsel %vm2061, nan, %v2070
        %v2072 = vand.u32 2147483647, %v1344
        %vm2073 = vcmp.le.f32.partialorder %v2072, 0.7853982
        %vm2074 = vcmp.lt.s32.totalorder %v1344, 0
        %v2075 = vand.u32 %v1344, 2139095040
        %v2076 = vshrl.u32 %v2075, 23
        %v2077 = vsub.s32 %v2076, 127
        %v2078 = vand.u32 2147483647, %v1344
        %v2079 = vand.u32 %v2078, 8388607
        %v2080 = vor.u32 %v2079, 8388608
        %v2081 = vsub.s32 0, %v2080
        %v2082 = vadd.s32 %v2077, 1
        %vm2083 = vcmp.gt.s32.totalorder %v2082, 0
        %v2084 = vsel %vm2083, %v2082, 0
        %v2085 = vshrl.u32 %v2084, 5
        %v2086 = vand.u32 %v2084, 31
        %v2087 = vsub.s32 32, %v2086
        %v2088 = vshrl.u32 683565275, %v2087
        %v2089 = vshll.u32 683565275, %v2086
        %v2090 = vshrl.u32 2475754826, %v2087
        %v2091 = vor.u32 %v2089, %v2090
        %v2092 = vshll.u32 2475754826, %v2086
        %v2093 = vshrl.u32 2131351028, %v2087
        %v2094 = vor.u32 %v2092, %v2093
        %v2095 = vshll.u32 2131351028, %v2086
        %v2096 = vshrl.u32 2102212464, %v2087
        %v2097 = vor.u32 %v2095, %v2096
        %v2098 = vshll.u32 2102212464, %v2086
        %v2099 = vshrl.u32 920167782, %v2087
        %v2100 = vor.u32 %v2098, %v2099
        %v2101 = vshll.u32 920167782, %v2086
        %v2102 = vshrl.u32 1326507024, %v2087
        %v2103 = vor.u32 %v2101, %v2102
        %vm2104 = vcmp.lt.s32.totalorder %v2085, 1
        %vm2105 = vcmp.lt.s32.totalorder %v2085, 2
        %vm2106 = vcmp.lt.s32.totalorder %v2085, 3
        %vm2107 = vcmp.lt.s32.totalorder %v2085, 4
        %v2108 = vsel %vm2104, %v2088, %v2091
        %v2109 = vsel %vm2107, %v2097, 2102212464
        %v2110 = vsel %vm2106, %v2094, %v2109
        %v2111 = vsel %vm2105, %v2108, %v2110
        %v2112 = vsel %vm2104, %v2091, %v2094
        %v2113 = vsel %vm2107, %v2100, 920167782
        %v2114 = vsel %vm2106, %v2097, %v2113
        %v2115 = vsel %vm2105, %v2112, %v2114
        %v2116 = vsel %vm2104, %v2094, %v2097
        %v2117 = vsel %vm2107, %v2103, 1326507024
        %v2118 = vsel %vm2106, %v2100, %v2117
        %v2119 = vsel %vm2105, %v2116, %v2118
        %v2120 = vshll.u32 %v2080, 8
        %v2121 = vmul.u32.u64.compose %v2120, %v2119
        %v2122 = vextract.low.u32 %v2121
        %v2123 = vextract.high.u32 %v2121
        %v2124 = vmul.u32.u64.compose %v2120, %v2115
        %v2125 = vextract.low.u32 %v2124
        %v2126 = vextract.high.u32 %v2124
        %v2127 = vmul.u32 %v2120, %v2111
        %v2128 = vadd.s32 %v2123, %v2125
        %vm2129 = vc.u32 %v2123, %v2125
        %v2130 = vadd.s32 %v2126, 1
        %v2131 = vsel %vm2129, %v2130, %v2126
        %v2132 = vadd.s32 %v2127, %v2131
        %v2133 = vadd.s32 %v2132, 536870912
        %v2134 = vshrl.u32 %v2133, 30
        %v2135 = vshll.u32 %v2134, 30
        %v2136 = vsub.s32 %v2132, %v2135
        %vm2137 = vcmp.lt.s32.totalorder %v2136, 0
        %v2138 = vsub.s32 0, %v2136
        %v2139 = vsel %vm2137, %v2138, %v2136
        %v2140 = vclz %v2139
        %v2141 = vsub.s32 %v2140, 2
        %vm2142 = vcmp.gt.s32.totalorder 0, %v2141
        %v2143 = vsel %vm2142, 0, %v2141
        %v2144 = vsub.s32 32, %v2143
        %v2145 = vshll.u32 %v2136, %v2143
        %v2146 = vshrl.u32 %v2128, %v2144
        %v2147 = vor.u32 %v2145, %v2146
        %v2148 = vsub.s32 4294967266, %v2143
        %v2149 = vadd.s32 %v2148, 127
        %v2150 = vshll.u32 %v2149, 23
        %v2151 = vor.u32 4788187, %v2150
        %v2152 = vand.u32 2147483647, %v2151
        %v2154 = vcvt.s32.f32 %v2147
        %v2155 = vmul.f32 %v2154, %v2152
        %v2156 = vxor.u32 %v2155, 2147483648
        %v2157 = vsel %vm2074, %v2156, %v2155
        %v2158 = vsub.s32 4, %v2134
        %v2159 = vsel %vm2074, %v2158, %v2134
        %v2160 = vsel %vm2073, %v1344, %v2157
        %v2161 = vsel %vm2073, 0, %v2159
        %v2162 = vcosq.f32.pop %v2160
        %v2163 = vsinq.f32.pop %v2160
        %vm2164 = vweird.f32 %v1344
        %v2165 = vand.u32 %v2161, 3
        %vm2166 = vcmp.lt.s32.totalorder %v2165, 2
        %vm2167 = vcmp.eq.s32.totalorder %v2165, 0
        %v2168 = vxor.u32 %v2163, 2147483648
        %v2169 = vsel %vm2167, %v2162, %v2168
        %vm2170 = vcmp.eq.s32.totalorder %v2165, 2
        %v2171 = vxor.u32 %v2162, 2147483648
        %v2172 = vsel %vm2170, %v2171, %v2163
        %v2173 = vsel %vm2166, %v2169, %v2172
        %v2174 = vsel %vm2164, nan, %v2173
        %v2175 = vand.u32 2147483647, %v1345
        %vm2176 = vcmp.le.f32.partialorder %v2175, 0.7853982
        %vm2177 = vcmp.lt.s32.totalorder %v1345, 0
        %v2178 = vand.u32 %v1345, 2139095040
        %v2179 = vshrl.u32 %v2178, 23
        %v2180 = vsub.s32 %v2179, 127
        %v2181 = vand.u32 2147483647, %v1345
        %v2182 = vand.u32 %v2181, 8388607
        %v2183 = vor.u32 %v2182, 8388608
        %v2184 = vsub.s32 0, %v2183
        %v2185 = vadd.s32 %v2180, 1
        %vm2186 = vcmp.gt.s32.totalorder %v2185, 0
        %v2187 = vsel %vm2186, %v2185, 0
        %v2188 = vshrl.u32 %v2187, 5
        %v2189 = vand.u32 %v2187, 31
        %v2190 = vsub.s32 32, %v2189
        %v2191 = vshrl.u32 683565275, %v2190
        %v2192 = vshll.u32 683565275, %v2189
        %v2193 = vshrl.u32 2475754826, %v2190
        %v2194 = vor.u32 %v2192, %v2193
        %v2195 = vshll.u32 2475754826, %v2189
        %v2196 = vshrl.u32 2131351028, %v2190
        %v2197 = vor.u32 %v2195, %v2196
        %v2198 = vshll.u32 2131351028, %v2189
        %v2199 = vshrl.u32 2102212464, %v2190
        %v2200 = vor.u32 %v2198, %v2199
        %v2201 = vshll.u32 2102212464, %v2189
        %v2202 = vshrl.u32 920167782, %v2190
        %v2203 = vor.u32 %v2201, %v2202
        %v2204 = vshll.u32 920167782, %v2189
        %v2205 = vshrl.u32 1326507024, %v2190
        %v2206 = vor.u32 %v2204, %v2205
        %vm2207 = vcmp.lt.s32.totalorder %v2188, 1
        %vm2208 = vcmp.lt.s32.totalorder %v2188, 2
        %vm2209 = vcmp.lt.s32.totalorder %v2188, 3
        %vm2210 = vcmp.lt.s32.totalorder %v2188, 4
        %v2211 = vsel %vm2207, %v2191, %v2194
        %v2212 = vsel %vm2210, %v2200, 2102212464
        %v2213 = vsel %vm2209, %v2197, %v2212
        %v2214 = vsel %vm2208, %v2211, %v2213
        %v2215 = vsel %vm2207, %v2194, %v2197
        %v2216 = vsel %vm2210, %v2203, 920167782
        %v2217 = vsel %vm2209, %v2200, %v2216
        %v2218 = vsel %vm2208, %v2215, %v2217
        %v2219 = vsel %vm2207, %v2197, %v2200
        %v2220 = vsel %vm2210, %v2206, 1326507024
        %v2221 = vsel %vm2209, %v2203, %v2220
        %v2222 = vsel %vm2208, %v2219, %v2221
        %v2223 = vshll.u32 %v2183, 8
        %v2224 = vmul.u32.u64.compose %v2223, %v2222
        %v2225 = vextract.low.u32 %v2224
        %v2226 = vextract.high.u32 %v2224
        %v2227 = vmul.u32.u64.compose %v2223, %v2218
        %v2228 = vextract.low.u32 %v2227
        %v2229 = vextract.high.u32 %v2227
        %v2230 = vmul.u32 %v2223, %v2214
        %v2231 = vadd.s32 %v2226, %v2228
        %vm2232 = vc.u32 %v2226, %v2228
        %v2233 = vadd.s32 %v2229, 1
        %v2234 = vsel %vm2232, %v2233, %v2229
        %v2235 = vadd.s32 %v2230, %v2234
        %v2236 = vadd.s32 %v2235, 536870912
        %v2237 = vshrl.u32 %v2236, 30
        %v2238 = vshll.u32 %v2237, 30
        %v2239 = vsub.s32 %v2235, %v2238
        %vm2240 = vcmp.lt.s32.totalorder %v2239, 0
        %v2241 = vsub.s32 0, %v2239
        %v2242 = vsel %vm2240, %v2241, %v2239
        %v2243 = vclz %v2242
        %v2244 = vsub.s32 %v2243, 2
        %vm2245 = vcmp.gt.s32.totalorder 0, %v2244
        %v2246 = vsel %vm2245, 0, %v2244
        %v2247 = vsub.s32 32, %v2246
        %v2248 = vshll.u32 %v2239, %v2246
        %v2249 = vshrl.u32 %v2231, %v2247
        %v2250 = vor.u32 %v2248, %v2249
        %v2251 = vsub.s32 4294967266, %v2246
        %v2252 = vadd.s32 %v2251, 127
        %v2253 = vshll.u32 %v2252, 23
        %v2254 = vor.u32 4788187, %v2253
        %v2255 = vand.u32 2147483647, %v2254
        %v2257 = vcvt.s32.f32 %v2250
        %v2258 = vmul.f32 %v2257, %v2255
        %v2259 = vxor.u32 %v2258, 2147483648
        %v2260 = vsel %vm2177, %v2259, %v2258
        %v2261 = vsub.s32 4, %v2237
        %v2262 = vsel %vm2177, %v2261, %v2237
        %v2263 = vsel %vm2176, %v1345, %v2260
        %v2264 = vsel %vm2176, 0, %v2262
        %v2265 = vcosq.f32.pop %v2263
        %v2266 = vsinq.f32.pop %v2263
        %vm2267 = vweird.f32 %v1345
        %v2268 = vand.u32 %v2264, 3
        %vm2269 = vcmp.lt.s32.totalorder %v2268, 2
        %vm2270 = vcmp.eq.s32.totalorder %v2268, 0
        %v2271 = vxor.u32 %v2266, 2147483648
        %v2272 = vsel %vm2270, %v2265, %v2271
        %vm2273 = vcmp.eq.s32.totalorder %v2268, 2
        %v2274 = vxor.u32 %v2265, 2147483648
        %v2275 = vsel %vm2273, %v2274, %v2266
        %v2276 = vsel %vm2269, %v2272, %v2275
        %v2277 = vsel %vm2267, nan, %v2276
        %v2278 = vand.u32 2147483647, %v1346
        %vm2279 = vcmp.le.f32.partialorder %v2278, 0.7853982
        %vm2280 = vcmp.lt.s32.totalorder %v1346, 0
        %v2281 = vand.u32 %v1346, 2139095040
        %v2282 = vshrl.u32 %v2281, 23
        %v2283 = vsub.s32 %v2282, 127
        %v2284 = vand.u32 2147483647, %v1346
        %v2285 = vand.u32 %v2284, 8388607
        %v2286 = vor.u32 %v2285, 8388608
        %v2287 = vsub.s32 0, %v2286
        %v2288 = vadd.s32 %v2283, 1
        %vm2289 = vcmp.gt.s32.totalorder %v2288, 0
        %v2290 = vsel %vm2289, %v2288, 0
        %v2291 = vshrl.u32 %v2290, 5
        %v2292 = vand.u32 %v2290, 31
        %v2293 = vsub.s32 32, %v2292
        %v2294 = vshrl.u32 683565275, %v2293
        %v2295 = vshll.u32 683565275, %v2292
        %v2296 = vshrl.u32 2475754826, %v2293
        %v2297 = vor.u32 %v2295, %v2296
        %v2298 = vshll.u32 2475754826, %v2292
        %v2299 = vshrl.u32 2131351028, %v2293
        %v2300 = vor.u32 %v2298, %v2299
        %v2301 = vshll.u32 2131351028, %v2292
        %v2302 = vshrl.u32 2102212464, %v2293
        %v2303 = vor.u32 %v2301, %v2302
        %v2304 = vshll.u32 2102212464, %v2292
        %v2305 = vshrl.u32 920167782, %v2293
        %v2306 = vor.u32 %v2304, %v2305
        %v2307 = vshll.u32 920167782, %v2292
        %v2308 = vshrl.u32 1326507024, %v2293
        %v2309 = vor.u32 %v2307, %v2308
        %vm2310 = vcmp.lt.s32.totalorder %v2291, 1
        %vm2311 = vcmp.lt.s32.totalorder %v2291, 2
        %vm2312 = vcmp.lt.s32.totalorder %v2291, 3
        %vm2313 = vcmp.lt.s32.totalorder %v2291, 4
        %v2314 = vsel %vm2310, %v2294, %v2297
        %v2315 = vsel %vm2313, %v2303, 2102212464
        %v2316 = vsel %vm2312, %v2300, %v2315
        %v2317 = vsel %vm2311, %v2314, %v2316
        %v2318 = vsel %vm2310, %v2297, %v2300
        %v2319 = vsel %vm2313, %v2306, 920167782
        %v2320 = vsel %vm2312, %v2303, %v2319
        %v2321 = vsel %vm2311, %v2318, %v2320
        %v2322 = vsel %vm2310, %v2300, %v2303
        %v2323 = vsel %vm2313, %v2309, 1326507024
        %v2324 = vsel %vm2312, %v2306, %v2323
        %v2325 = vsel %vm2311, %v2322, %v2324
        %v2326 = vshll.u32 %v2286, 8
        %v2327 = vmul.u32.u64.compose %v2326, %v2325
        %v2328 = vextract.low.u32 %v2327
        %v2329 = vextract.high.u32 %v2327
        %v2330 = vmul.u32.u64.compose %v2326, %v2321
        %v2331 = vextract.low.u32 %v2330
        %v2332 = vextract.high.u32 %v2330
        %v2333 = vmul.u32 %v2326, %v2317
        %v2334 = vadd.s32 %v2329, %v2331
        %vm2335 = vc.u32 %v2329, %v2331
        %v2336 = vadd.s32 %v2332, 1
        %v2337 = vsel %vm2335, %v2336, %v2332
        %v2338 = vadd.s32 %v2333, %v2337
        %v2339 = vadd.s32 %v2338, 536870912
        %v2340 = vshrl.u32 %v2339, 30
        %v2341 = vshll.u32 %v2340, 30
        %v2342 = vsub.s32 %v2338, %v2341
        %vm2343 = vcmp.lt.s32.totalorder %v2342, 0
        %v2344 = vsub.s32 0, %v2342
        %v2345 = vsel %vm2343, %v2344, %v2342
        %v2346 = vclz %v2345
        %v2347 = vsub.s32 %v2346, 2
        %vm2348 = vcmp.gt.s32.totalorder 0, %v2347
        %v2349 = vsel %vm2348, 0, %v2347
        %v2350 = vsub.s32 32, %v2349
        %v2351 = vshll.u32 %v2342, %v2349
        %v2352 = vshrl.u32 %v2334, %v2350
        %v2353 = vor.u32 %v2351, %v2352
        %v2354 = vsub.s32 4294967266, %v2349
        %v2355 = vadd.s32 %v2354, 127
        %v2356 = vshll.u32 %v2355, 23
        %v2357 = vor.u32 4788187, %v2356
        %v2358 = vand.u32 2147483647, %v2357
        %v2360 = vcvt.s32.f32 %v2353
        %v2361 = vmul.f32 %v2360, %v2358
        %v2362 = vxor.u32 %v2361, 2147483648
        %v2363 = vsel %vm2280, %v2362, %v2361
        %v2364 = vsub.s32 4, %v2340
        %v2365 = vsel %vm2280, %v2364, %v2340
        %v2366 = vsel %vm2279, %v1346, %v2363
        %v2367 = vsel %vm2279, 0, %v2365
        %v2368 = vcosq.f32.pop %v2366
        %v2369 = vsinq.f32.pop %v2366
        %vm2370 = vweird.f32 %v1346
        %v2371 = vand.u32 %v2367, 3
        %vm2372 = vcmp.lt.s32.totalorder %v2371, 2
        %vm2373 = vcmp.eq.s32.totalorder %v2371, 0
        %v2374 = vxor.u32 %v2369, 2147483648
        %v2375 = vsel %vm2373, %v2368, %v2374
        %vm2376 = vcmp.eq.s32.totalorder %v2371, 2
        %v2377 = vxor.u32 %v2368, 2147483648
        %v2378 = vsel %vm2376, %v2377, %v2369
        %v2379 = vsel %vm2372, %v2375, %v2378
        %v2380 = vsel %vm2370, nan, %v2379
        %v2381 = vand.u32 2147483647, %v1347
        %vm2382 = vcmp.le.f32.partialorder %v2381, 0.7853982
        %vm2383 = vcmp.lt.s32.totalorder %v1347, 0
        %v2384 = vand.u32 %v1347, 2139095040
        %v2385 = vshrl.u32 %v2384, 23
        %v2386 = vsub.s32 %v2385, 127
        %v2387 = vand.u32 2147483647, %v1347
        %v2388 = vand.u32 %v2387, 8388607
        %v2389 = vor.u32 %v2388, 8388608
        %v2390 = vsub.s32 0, %v2389
        %v2391 = vadd.s32 %v2386, 1
        %vm2392 = vcmp.gt.s32.totalorder %v2391, 0
        %v2393 = vsel %vm2392, %v2391, 0
        %v2394 = vshrl.u32 %v2393, 5
        %v2395 = vand.u32 %v2393, 31
        %v2396 = vsub.s32 32, %v2395
        %v2397 = vshrl.u32 683565275, %v2396
        %v2398 = vshll.u32 683565275, %v2395
        %v2399 = vshrl.u32 2475754826, %v2396
        %v2400 = vor.u32 %v2398, %v2399
        %v2401 = vshll.u32 2475754826, %v2395
        %v2402 = vshrl.u32 2131351028, %v2396
        %v2403 = vor.u32 %v2401, %v2402
        %v2404 = vshll.u32 2131351028, %v2395
        %v2405 = vshrl.u32 2102212464, %v2396
        %v2406 = vor.u32 %v2404, %v2405
        %v2407 = vshll.u32 2102212464, %v2395
        %v2408 = vshrl.u32 920167782, %v2396
        %v2409 = vor.u32 %v2407, %v2408
        %v2410 = vshll.u32 920167782, %v2395
        %v2411 = vshrl.u32 1326507024, %v2396
        %v2412 = vor.u32 %v2410, %v2411
        %vm2413 = vcmp.lt.s32.totalorder %v2394, 1
        %vm2414 = vcmp.lt.s32.totalorder %v2394, 2
        %vm2415 = vcmp.lt.s32.totalorder %v2394, 3
        %vm2416 = vcmp.lt.s32.totalorder %v2394, 4
        %v2417 = vsel %vm2413, %v2397, %v2400
        %v2418 = vsel %vm2416, %v2406, 2102212464
        %v2419 = vsel %vm2415, %v2403, %v2418
        %v2420 = vsel %vm2414, %v2417, %v2419
        %v2421 = vsel %vm2413, %v2400, %v2403
        %v2422 = vsel %vm2416, %v2409, 920167782
        %v2423 = vsel %vm2415, %v2406, %v2422
        %v2424 = vsel %vm2414, %v2421, %v2423
        %v2425 = vsel %vm2413, %v2403, %v2406
        %v2426 = vsel %vm2416, %v2412, 1326507024
        %v2427 = vsel %vm2415, %v2409, %v2426
        %v2428 = vsel %vm2414, %v2425, %v2427
        %v2429 = vshll.u32 %v2389, 8
        %v2430 = vmul.u32.u64.compose %v2429, %v2428
        %v2431 = vextract.low.u32 %v2430
        %v2432 = vextract.high.u32 %v2430
        %v2433 = vmul.u32.u64.compose %v2429, %v2424
        %v2434 = vextract.low.u32 %v2433
        %v2435 = vextract.high.u32 %v2433
        %v2436 = vmul.u32 %v2429, %v2420
        %v2437 = vadd.s32 %v2432, %v2434
        %vm2438 = vc.u32 %v2432, %v2434
        %v2439 = vadd.s32 %v2435, 1
        %v2440 = vsel %vm2438, %v2439, %v2435
        %v2441 = vadd.s32 %v2436, %v2440
        %v2442 = vadd.s32 %v2441, 536870912
        %v2443 = vshrl.u32 %v2442, 30
        %v2444 = vshll.u32 %v2443, 30
        %v2445 = vsub.s32 %v2441, %v2444
        %vm2446 = vcmp.lt.s32.totalorder %v2445, 0
        %v2447 = vsub.s32 0, %v2445
        %v2448 = vsel %vm2446, %v2447, %v2445
        %v2449 = vclz %v2448
        %v2450 = vsub.s32 %v2449, 2
        %vm2451 = vcmp.gt.s32.totalorder 0, %v2450
        %v2452 = vsel %vm2451, 0, %v2450
        %v2453 = vsub.s32 32, %v2452
        %v2454 = vshll.u32 %v2445, %v2452
        %v2455 = vshrl.u32 %v2437, %v2453
        %v2456 = vor.u32 %v2454, %v2455
        %v2457 = vsub.s32 4294967266, %v2452
        %v2458 = vadd.s32 %v2457, 127
        %v2459 = vshll.u32 %v2458, 23
        %v2460 = vor.u32 4788187, %v2459
        %v2461 = vand.u32 2147483647, %v2460
        %v2463 = vcvt.s32.f32 %v2456
        %v2464 = vmul.f32 %v2463, %v2461
        %v2465 = vxor.u32 %v2464, 2147483648
        %v2466 = vsel %vm2383, %v2465, %v2464
        %v2467 = vsub.s32 4, %v2443
        %v2468 = vsel %vm2383, %v2467, %v2443
        %v2469 = vsel %vm2382, %v1347, %v2466
        %v2470 = vsel %vm2382, 0, %v2468
        %v2471 = vcosq.f32.pop %v2469
        %v2472 = vsinq.f32.pop %v2469
        %vm2473 = vweird.f32 %v1347
        %v2474 = vand.u32 %v2470, 3
        %vm2475 = vcmp.lt.s32.totalorder %v2474, 2
        %vm2476 = vcmp.eq.s32.totalorder %v2474, 0
        %v2477 = vxor.u32 %v2472, 2147483648
        %v2478 = vsel %vm2476, %v2471, %v2477
        %vm2479 = vcmp.eq.s32.totalorder %v2474, 2
        %v2480 = vxor.u32 %v2471, 2147483648
        %v2481 = vsel %vm2479, %v2480, %v2472
        %v2482 = vsel %vm2475, %v2478, %v2481
        %v2483 = vsel %vm2473, nan, %v2482
        %v2484 = vand.u32 2147483647, %v1348
        %vm2485 = vcmp.le.f32.partialorder %v2484, 0.7853982
        %vm2486 = vcmp.lt.s32.totalorder %v1348, 0
        %v2487 = vand.u32 %v1348, 2139095040
        %v2488 = vshrl.u32 %v2487, 23
        %v2489 = vsub.s32 %v2488, 127
        %v2490 = vand.u32 2147483647, %v1348
        %v2491 = vand.u32 %v2490, 8388607
        %v2492 = vor.u32 %v2491, 8388608
        %v2493 = vsub.s32 0, %v2492
        %v2494 = vadd.s32 %v2489, 1
        %vm2495 = vcmp.gt.s32.totalorder %v2494, 0
        %v2496 = vsel %vm2495, %v2494, 0
        %v2497 = vshrl.u32 %v2496, 5
        %v2498 = vand.u32 %v2496, 31
        %v2499 = vsub.s32 32, %v2498
        %v2500 = vshrl.u32 683565275, %v2499
        %v2501 = vshll.u32 683565275, %v2498
        %v2502 = vshrl.u32 2475754826, %v2499
        %v2503 = vor.u32 %v2501, %v2502
        %v2504 = vshll.u32 2475754826, %v2498
        %v2505 = vshrl.u32 2131351028, %v2499
        %v2506 = vor.u32 %v2504, %v2505
        %v2507 = vshll.u32 2131351028, %v2498
        %v2508 = vshrl.u32 2102212464, %v2499
        %v2509 = vor.u32 %v2507, %v2508
        %v2510 = vshll.u32 2102212464, %v2498
        %v2511 = vshrl.u32 920167782, %v2499
        %v2512 = vor.u32 %v2510, %v2511
        %v2513 = vshll.u32 920167782, %v2498
        %v2514 = vshrl.u32 1326507024, %v2499
        %v2515 = vor.u32 %v2513, %v2514
        %vm2516 = vcmp.lt.s32.totalorder %v2497, 1
        %vm2517 = vcmp.lt.s32.totalorder %v2497, 2
        %vm2518 = vcmp.lt.s32.totalorder %v2497, 3
        %vm2519 = vcmp.lt.s32.totalorder %v2497, 4
        %v2520 = vsel %vm2516, %v2500, %v2503
        %v2521 = vsel %vm2519, %v2509, 2102212464
        %v2522 = vsel %vm2518, %v2506, %v2521
        %v2523 = vsel %vm2517, %v2520, %v2522
        %v2524 = vsel %vm2516, %v2503, %v2506
        %v2525 = vsel %vm2519, %v2512, 920167782
        %v2526 = vsel %vm2518, %v2509, %v2525
        %v2527 = vsel %vm2517, %v2524, %v2526
        %v2528 = vsel %vm2516, %v2506, %v2509
        %v2529 = vsel %vm2519, %v2515, 1326507024
        %v2530 = vsel %vm2518, %v2512, %v2529
        %v2531 = vsel %vm2517, %v2528, %v2530
        %v2532 = vshll.u32 %v2492, 8
        %v2533 = vmul.u32.u64.compose %v2532, %v2531
        %v2534 = vextract.low.u32 %v2533
        %v2535 = vextract.high.u32 %v2533
        %v2536 = vmul.u32.u64.compose %v2532, %v2527
        %v2537 = vextract.low.u32 %v2536
        %v2538 = vextract.high.u32 %v2536
        %v2539 = vmul.u32 %v2532, %v2523
        %v2540 = vadd.s32 %v2535, %v2537
        %vm2541 = vc.u32 %v2535, %v2537
        %v2542 = vadd.s32 %v2538, 1
        %v2543 = vsel %vm2541, %v2542, %v2538
        %v2544 = vadd.s32 %v2539, %v2543
        %v2545 = vadd.s32 %v2544, 536870912
        %v2546 = vshrl.u32 %v2545, 30
        %v2547 = vshll.u32 %v2546, 30
        %v2548 = vsub.s32 %v2544, %v2547
        %vm2549 = vcmp.lt.s32.totalorder %v2548, 0
        %v2550 = vsub.s32 0, %v2548
        %v2551 = vsel %vm2549, %v2550, %v2548
        %v2552 = vclz %v2551
        %v2553 = vsub.s32 %v2552, 2
        %vm2554 = vcmp.gt.s32.totalorder 0, %v2553
        %v2555 = vsel %vm2554, 0, %v2553
        %v2556 = vsub.s32 32, %v2555
        %v2557 = vshll.u32 %v2548, %v2555
        %v2558 = vshrl.u32 %v2540, %v2556
        %v2559 = vor.u32 %v2557, %v2558
        %v2560 = vsub.s32 4294967266, %v2555
        %v2561 = vadd.s32 %v2560, 127
        %v2562 = vshll.u32 %v2561, 23
        %v2563 = vor.u32 4788187, %v2562
        %v2564 = vand.u32 2147483647, %v2563
        %v2566 = vcvt.s32.f32 %v2559
        %v2567 = vmul.f32 %v2566, %v2564
        %v2568 = vxor.u32 %v2567, 2147483648
        %v2569 = vsel %vm2486, %v2568, %v2567
        %v2570 = vsub.s32 4, %v2546
        %v2571 = vsel %vm2486, %v2570, %v2546
        %v2572 = vsel %vm2485, %v1348, %v2569
        %v2573 = vsel %vm2485, 0, %v2571
        %v2574 = vcosq.f32.pop %v2572
        %v2575 = vsinq.f32.pop %v2572
        %vm2576 = vweird.f32 %v1348
        %v2577 = vand.u32 %v2573, 3
        %vm2578 = vcmp.lt.s32.totalorder %v2577, 2
        %vm2579 = vcmp.eq.s32.totalorder %v2577, 0
        %v2580 = vxor.u32 %v2575, 2147483648
        %v2581 = vsel %vm2579, %v2574, %v2580
        %vm2582 = vcmp.eq.s32.totalorder %v2577, 2
        %v2583 = vxor.u32 %v2574, 2147483648
        %v2584 = vsel %vm2582, %v2583, %v2575
        %v2585 = vsel %vm2578, %v2581, %v2584
        %v2586 = vsel %vm2576, nan, %v2585
        %v2587 = vand.u32 2147483647, %v1349
        %vm2588 = vcmp.le.f32.partialorder %v2587, 0.7853982
        %vm2589 = vcmp.lt.s32.totalorder %v1349, 0
        %v2590 = vand.u32 %v1349, 2139095040
        %v2591 = vshrl.u32 %v2590, 23
        %v2592 = vsub.s32 %v2591, 127
        %v2593 = vand.u32 2147483647, %v1349
        %v2594 = vand.u32 %v2593, 8388607
        %v2595 = vor.u32 %v2594, 8388608
        %v2596 = vsub.s32 0, %v2595
        %v2597 = vadd.s32 %v2592, 1
        %vm2598 = vcmp.gt.s32.totalorder %v2597, 0
        %v2599 = vsel %vm2598, %v2597, 0
        %v2600 = vshrl.u32 %v2599, 5
        %v2601 = vand.u32 %v2599, 31
        %v2602 = vsub.s32 32, %v2601
        %v2603 = vshrl.u32 683565275, %v2602
        %v2604 = vshll.u32 683565275, %v2601
        %v2605 = vshrl.u32 2475754826, %v2602
        %v2606 = vor.u32 %v2604, %v2605
        %v2607 = vshll.u32 2475754826, %v2601
        %v2608 = vshrl.u32 2131351028, %v2602
        %v2609 = vor.u32 %v2607, %v2608
        %v2610 = vshll.u32 2131351028, %v2601
        %v2611 = vshrl.u32 2102212464, %v2602
        %v2612 = vor.u32 %v2610, %v2611
        %v2613 = vshll.u32 2102212464, %v2601
        %v2614 = vshrl.u32 920167782, %v2602
        %v2615 = vor.u32 %v2613, %v2614
        %v2616 = vshll.u32 920167782, %v2601
        %v2617 = vshrl.u32 1326507024, %v2602
        %v2618 = vor.u32 %v2616, %v2617
        %vm2619 = vcmp.lt.s32.totalorder %v2600, 1
        %vm2620 = vcmp.lt.s32.totalorder %v2600, 2
        %vm2621 = vcmp.lt.s32.totalorder %v2600, 3
        %vm2622 = vcmp.lt.s32.totalorder %v2600, 4
        %v2623 = vsel %vm2619, %v2603, %v2606
        %v2624 = vsel %vm2622, %v2612, 2102212464
        %v2625 = vsel %vm2621, %v2609, %v2624
        %v2626 = vsel %vm2620, %v2623, %v2625
        %v2627 = vsel %vm2619, %v2606, %v2609
        %v2628 = vsel %vm2622, %v2615, 920167782
        %v2629 = vsel %vm2621, %v2612, %v2628
        %v2630 = vsel %vm2620, %v2627, %v2629
        %v2631 = vsel %vm2619, %v2609, %v2612
        %v2632 = vsel %vm2622, %v2618, 1326507024
        %v2633 = vsel %vm2621, %v2615, %v2632
        %v2634 = vsel %vm2620, %v2631, %v2633
        %v2635 = vshll.u32 %v2595, 8
        %v2636 = vmul.u32.u64.compose %v2635, %v2634
        %v2637 = vextract.low.u32 %v2636
        %v2638 = vextract.high.u32 %v2636
        %v2639 = vmul.u32.u64.compose %v2635, %v2630
        %v2640 = vextract.low.u32 %v2639
        %v2641 = vextract.high.u32 %v2639
        %v2642 = vmul.u32 %v2635, %v2626
        %v2643 = vadd.s32 %v2638, %v2640
        %vm2644 = vc.u32 %v2638, %v2640
        %v2645 = vadd.s32 %v2641, 1
        %v2646 = vsel %vm2644, %v2645, %v2641
        %v2647 = vadd.s32 %v2642, %v2646
        %v2648 = vadd.s32 %v2647, 536870912
        %v2649 = vshrl.u32 %v2648, 30
        %v2650 = vshll.u32 %v2649, 30
        %v2651 = vsub.s32 %v2647, %v2650
        %vm2652 = vcmp.lt.s32.totalorder %v2651, 0
        %v2653 = vsub.s32 0, %v2651
        %v2654 = vsel %vm2652, %v2653, %v2651
        %v2655 = vclz %v2654
        %v2656 = vsub.s32 %v2655, 2
        %vm2657 = vcmp.gt.s32.totalorder 0, %v2656
        %v2658 = vsel %vm2657, 0, %v2656
        %v2659 = vsub.s32 32, %v2658
        %v2660 = vshll.u32 %v2651, %v2658
        %v2661 = vshrl.u32 %v2643, %v2659
        %v2662 = vor.u32 %v2660, %v2661
        %v2663 = vsub.s32 4294967266, %v2658
        %v2664 = vadd.s32 %v2663, 127
        %v2665 = vshll.u32 %v2664, 23
        %v2666 = vor.u32 4788187, %v2665
        %v2667 = vand.u32 2147483647, %v2666
        %v2669 = vcvt.s32.f32 %v2662
        %v2670 = vmul.f32 %v2669, %v2667
        %v2671 = vxor.u32 %v2670, 2147483648
        %v2672 = vsel %vm2589, %v2671, %v2670
        %v2673 = vsub.s32 4, %v2649
        %v2674 = vsel %vm2589, %v2673, %v2649
        %v2675 = vsel %vm2588, %v1349, %v2672
        %v2676 = vsel %vm2588, 0, %v2674
        %v2677 = vcosq.f32.pop %v2675
        %v2678 = vsinq.f32.pop %v2675
        %vm2679 = vweird.f32 %v1349
        %v2680 = vand.u32 %v2676, 3
        %vm2681 = vcmp.lt.s32.totalorder %v2680, 2
        %vm2682 = vcmp.eq.s32.totalorder %v2680, 0
        %v2683 = vxor.u32 %v2678, 2147483648
        %v2684 = vsel %vm2682, %v2677, %v2683
        %vm2685 = vcmp.eq.s32.totalorder %v2680, 2
        %v2686 = vxor.u32 %v2677, 2147483648
        %v2687 = vsel %vm2685, %v2686, %v2678
        %v2688 = vsel %vm2681, %v2684, %v2687
        %v2689 = vsel %vm2679, nan, %v2688
        %v2690 = vand.u32 2147483647, %v1350
        %vm2691 = vcmp.le.f32.partialorder %v2690, 0.7853982
        %vm2692 = vcmp.lt.s32.totalorder %v1350, 0
        %v2693 = vand.u32 %v1350, 2139095040
        %v2694 = vshrl.u32 %v2693, 23
        %v2695 = vsub.s32 %v2694, 127
        %v2696 = vand.u32 2147483647, %v1350
        %v2697 = vand.u32 %v2696, 8388607
        %v2698 = vor.u32 %v2697, 8388608
        %v2699 = vsub.s32 0, %v2698
        %v2700 = vadd.s32 %v2695, 1
        %vm2701 = vcmp.gt.s32.totalorder %v2700, 0
        %v2702 = vsel %vm2701, %v2700, 0
        %v2703 = vshrl.u32 %v2702, 5
        %v2704 = vand.u32 %v2702, 31
        %v2705 = vsub.s32 32, %v2704
        %v2706 = vshrl.u32 683565275, %v2705
        %v2707 = vshll.u32 683565275, %v2704
        %v2708 = vshrl.u32 2475754826, %v2705
        %v2709 = vor.u32 %v2707, %v2708
        %v2710 = vshll.u32 2475754826, %v2704
        %v2711 = vshrl.u32 2131351028, %v2705
        %v2712 = vor.u32 %v2710, %v2711
        %v2713 = vshll.u32 2131351028, %v2704
        %v2714 = vshrl.u32 2102212464, %v2705
        %v2715 = vor.u32 %v2713, %v2714
        %v2716 = vshll.u32 2102212464, %v2704
        %v2717 = vshrl.u32 920167782, %v2705
        %v2718 = vor.u32 %v2716, %v2717
        %v2719 = vshll.u32 920167782, %v2704
        %v2720 = vshrl.u32 1326507024, %v2705
        %v2721 = vor.u32 %v2719, %v2720
        %vm2722 = vcmp.lt.s32.totalorder %v2703, 1
        %vm2723 = vcmp.lt.s32.totalorder %v2703, 2
        %vm2724 = vcmp.lt.s32.totalorder %v2703, 3
        %vm2725 = vcmp.lt.s32.totalorder %v2703, 4
        %v2726 = vsel %vm2722, %v2706, %v2709
        %v2727 = vsel %vm2725, %v2715, 2102212464
        %v2728 = vsel %vm2724, %v2712, %v2727
        %v2729 = vsel %vm2723, %v2726, %v2728
        %v2730 = vsel %vm2722, %v2709, %v2712
        %v2731 = vsel %vm2725, %v2718, 920167782
        %v2732 = vsel %vm2724, %v2715, %v2731
        %v2733 = vsel %vm2723, %v2730, %v2732
        %v2734 = vsel %vm2722, %v2712, %v2715
        %v2735 = vsel %vm2725, %v2721, 1326507024
        %v2736 = vsel %vm2724, %v2718, %v2735
        %v2737 = vsel %vm2723, %v2734, %v2736
        %v2738 = vshll.u32 %v2698, 8
        %v2739 = vmul.u32.u64.compose %v2738, %v2737
        %v2740 = vextract.low.u32 %v2739
        %v2741 = vextract.high.u32 %v2739
        %v2742 = vmul.u32.u64.compose %v2738, %v2733
        %v2743 = vextract.low.u32 %v2742
        %v2744 = vextract.high.u32 %v2742
        %v2745 = vmul.u32 %v2738, %v2729
        %v2746 = vadd.s32 %v2741, %v2743
        %vm2747 = vc.u32 %v2741, %v2743
        %v2748 = vadd.s32 %v2744, 1
        %v2749 = vsel %vm2747, %v2748, %v2744
        %v2750 = vadd.s32 %v2745, %v2749
        %v2751 = vadd.s32 %v2750, 536870912
        %v2752 = vshrl.u32 %v2751, 30
        %v2753 = vshll.u32 %v2752, 30
        %v2754 = vsub.s32 %v2750, %v2753
        %vm2755 = vcmp.lt.s32.totalorder %v2754, 0
        %v2756 = vsub.s32 0, %v2754
        %v2757 = vsel %vm2755, %v2756, %v2754
        %v2758 = vclz %v2757
        %v2759 = vsub.s32 %v2758, 2
        %vm2760 = vcmp.gt.s32.totalorder 0, %v2759
        %v2761 = vsel %vm2760, 0, %v2759
        %v2762 = vsub.s32 32, %v2761
        %v2763 = vshll.u32 %v2754, %v2761
        %v2764 = vshrl.u32 %v2746, %v2762
        %v2765 = vor.u32 %v2763, %v2764
        %v2766 = vsub.s32 4294967266, %v2761
        %v2767 = vadd.s32 %v2766, 127
        %v2768 = vshll.u32 %v2767, 23
        %v2769 = vor.u32 4788187, %v2768
        %v2770 = vand.u32 2147483647, %v2769
        %v2772 = vcvt.s32.f32 %v2765
        %v2773 = vmul.f32 %v2772, %v2770
        %v2774 = vxor.u32 %v2773, 2147483648
        %v2775 = vsel %vm2692, %v2774, %v2773
        %v2776 = vsub.s32 4, %v2752
        %v2777 = vsel %vm2692, %v2776, %v2752
        %v2778 = vsel %vm2691, %v1350, %v2775
        %v2779 = vsel %vm2691, 0, %v2777
        %v2780 = vcosq.f32.pop %v2778
        %v2781 = vsinq.f32.pop %v2778
        %vm2782 = vweird.f32 %v1350
        %v2783 = vand.u32 %v2779, 3
        %vm2784 = vcmp.lt.s32.totalorder %v2783, 2
        %vm2785 = vcmp.eq.s32.totalorder %v2783, 0
        %v2786 = vxor.u32 %v2781, 2147483648
        %v2787 = vsel %vm2785, %v2780, %v2786
        %vm2788 = vcmp.eq.s32.totalorder %v2783, 2
        %v2789 = vxor.u32 %v2780, 2147483648
        %v2790 = vsel %vm2788, %v2789, %v2781
        %v2791 = vsel %vm2784, %v2787, %v2790
        %v2792 = vsel %vm2782, nan, %v2791
        %v2793 = vadd.f32 %v1453, 1.0
        %v2794 = vadd.f32 %v1556, 1.0
        %v2795 = vadd.f32 %v1659, 1.0
        %v2796 = vadd.f32 %v1762, 1.0
        %v2797 = vadd.f32 %v1865, 1.0
        %v2798 = vadd.f32 %v1968, 1.0
        %v2799 = vadd.f32 %v2071, 1.0
        %v2800 = vadd.f32 %v2174, 1.0
        %v2801 = vadd.f32 %v2277, 1.0
        %v2802 = vadd.f32 %v2380, 1.0
        %v2803 = vadd.f32 %v2483, 1.0
        %v2804 = vadd.f32 %v2586, 1.0
        %v2805 = vadd.f32 %v2689, 1.0
        %v2806 = vadd.f32 %v2792, 1.0
        %v2807 = vmul.f32 %v2793, 0.5
        %v2808 = vmul.f32 %v2794, 0.5
        %v2809 = vmul.f32 %v2795, 0.5
        %v2810 = vmul.f32 %v2796, 0.5
        %v2811 = vmul.f32 %v2797, 0.5
        %v2812 = vmul.f32 %v2798, 0.5
        %v2813 = vmul.f32 %v2799, 0.5
        %v2814 = vmul.f32 %v2800, 0.5
        %v2815 = vmul.f32 %v2801, 0.5
        %v2816 = vmul.f32 %v2802, 0.5
        %v2817 = vmul.f32 %v2803, 0.5
        %v2818 = vmul.f32 %v2804, 0.5
        %v2819 = vmul.f32 %v2805, 0.5
        %v2820 = vmul.f32 %v2806, 0.5
        %vm2821 = vcmp.lt.f32.partialorder %v1177, 10.0
        %vm2822 = vcmp.lt.f32.partialorder %v1178, 10.0
        %vm2823 = vcmp.lt.f32.partialorder %v1179, 10.0
        %vm2824 = vcmp.lt.f32.partialorder %v1180, 10.0
        %vm2825 = vcmp.lt.f32.partialorder %v1181, 10.0
        %vm2826 = vcmp.lt.f32.partialorder %v1182, 10.0
        %vm2827 = vcmp.lt.f32.partialorder %v1183, 10.0
        %vm2828 = vcmp.lt.f32.partialorder %v1184, 10.0
        %vm2829 = vcmp.lt.f32.partialorder %v1185, 10.0
        %vm2830 = vcmp.lt.f32.partialorder %v1186, 10.0
        %vm2831 = vcmp.lt.f32.partialorder %v1187, 10.0
        %vm2832 = vcmp.lt.f32.partialorder %v1188, 10.0
        %vm2833 = vcmp.lt.f32.partialorder %v1189, 10.0
        %vm2834 = vcmp.lt.f32.partialorder %v1190, 10.0
        %vm2835 = vmand %vm1051, %vm2821
        %vm2836 = vmand %vm1052, %vm2822
        %vm2837 = vmand %vm1053, %vm2823
        %vm2838 = vmand %vm1054, %vm2824
        %vm2839 = vmand %vm1055, %vm2825
        %vm2840 = vmand %vm1056, %vm2826
        %vm2841 = vmand %vm1057, %vm2827
        %vm2842 = vmand %vm1058, %vm2828
        %vm2843 = vmand %vm1059, %vm2829
        %vm2844 = vmand %vm1060, %vm2830
        %vm2845 = vmand %vm1061, %vm2831
        %vm2846 = vmand %vm1062, %vm2832
        %vm2847 = vmand %vm1063, %vm2833
        %vm2848 = vmand %vm1064, %vm2834
        %v2849 = vsel %vm2835, %v2807, 0.0
        %v2850 = vsel %vm2836, %v2808, 0.0
        %v2851 = vsel %vm2837, %v2809, 0.0
        %v2852 = vsel %vm2838, %v2810, 0.0
        %v2853 = vsel %vm2839, %v2811, 0.0
        %v2854 = vsel %vm2840, %v2812, 0.0
        %v2855 = vsel %vm2841, %v2813, 0.0
        %v2856 = vsel %vm2842, %v2814, 0.0
        %v2857 = vsel %vm2843, %v2815, 0.0
        %v2858 = vsel %vm2844, %v2816, 0.0
        %v2859 = vsel %vm2845, %v2817, 0.0
        %v2860 = vsel %vm2846, %v2818, 0.0
        %v2861 = vsel %vm2847, %v2819, 0.0
        %v2862 = vsel %vm2848, %v2820, 0.0
        %v2863 = vpack.c.bf16 %v1312, %v1310
        %v2864 = vpack.c.bf16 %v1316, %v1314
        %v2865 = vpack.c.bf16 %v1320, %v1318
        %v2866 = vpack.c.bf16 %v1324, %v1322
        %v2867 = vpack.c.bf16 %v1328, %v1326
        %v2868 = vpack.c.bf16 %v1332, %v1330
        %v2869 = vpack.c.bf16 %v1336, %v1334
        %v2870 = vld [vmem:[%s5] sm:$0xf]
        %v2871 = vld [vmem:[%s5 + $0x4] sm:$0xf]
        %v2872 = vld [vmem:[%s6] sm:$0x1]
        %v2874 = vlaneseq
        %v2875 = vshrl.u32 %v2874, 7
        %v2876 = vsub.s32 0, %v2875
        %v2877 = vrot.slane %v2872, %v2876
        %v2881 = vunpack.c.l.b16 %v2870
        %v2882 = vunpack.c.l.b16 %v2871
        %v2883 = vpack.c.b16 %v2882, %v2881
        %vm2885 = vcmask 130048
        %v2887 = vsel %vm2885, %v2863, 0
        %v2890 = vsel %vm2885, %v2864, 0
        %v2893 = vsel %vm2885, %v2865, 0
        %v2896 = vsel %vm2885, %v2866, 0
        %v2899 = vsel %vm2885, %v2867, 0
        %v2902 = vsel %vm2885, %v2868, 0
        %v2905 = vsel %vm2885, %v2869, 0
        %2907 = vmatprep.subr.bf16.mxu0 0
        %2908 = vmatpush1.bf16.msra.mxu0 %v2883
        %2909 = vmatprep.subr.bf16.mxu0 0
        %2910 = vmatpush1.bf16.msra.mxu0 0
        %2911 = vmatprep.subr.bf16.mxu0 0
        %2912 = vmatpush1.bf16.msra.mxu0 0
        %2913 = vmatprep.subr.bf16.mxu0 0
        %2914 = vmatpush1.bf16.msra.mxu0 0
        %2915 = vmatprep.subr.bf16.mxu0 0
        %2916 = vmatpush1.bf16.msra.mxu0 0
        %2917 = vmatprep.subr.bf16.mxu0 0
        %2918 = vmatpush1.bf16.msra.mxu0 0
        %2919 = vmatprep.subr.bf16.mxu0 0
        %2920 = vmatpush1.bf16.msra.mxu0 0
        %2921 = vmatprep.subr.bf16.mxu0 0
        %2922 = vmatpush1.bf16.msra.mxu0 0
        %2923 = vmatprep.subr.bf16.mxu0 0
        %2924 = vmatpush1.bf16.msra.mxu0 0
        %2925 = vmatprep.subr.bf16.mxu0 0
        %2926 = vmatpush1.bf16.msra.mxu0 0
        %2927 = vmatprep.subr.bf16.mxu0 0
        %2928 = vmatpush1.bf16.msra.mxu0 0
        %2929 = vmatprep.subr.bf16.mxu0 0
        %2930 = vmatpush1.bf16.msra.mxu0 0
        %2931 = vmatprep.subr.bf16.mxu0 0
        %2932 = vmatpush1.bf16.msra.mxu0 0
        %2933 = vmatprep.subr.bf16.mxu0 0
        %2934 = vmatpush1.bf16.msra.mxu0 0
        %2935 = vmatprep.subr.bf16.mxu0 0
        %2936 = vmatpush1.bf16.msra.mxu0 0
        %2937 = vmatprep.subr.bf16.mxu0 0
        %2938 = vmatpush1.bf16.msra.mxu0 0
        %2939 = vmatprep.mubr.bf16.mxu0 0
        %2940 = vmatmul.mubr.bf16.gmra.mrb[0].mxu0 %v2887
        %v2941 = vpop.f32.mrb[0].mxu0
        %v2942 = vadd.f32 %v2877, %v2941
        %v2943 = vpop.f32.mrb[0].mxu0
        %v2944 = vpop.f32.mrb[0].mxu0
        %v2945 = vadd.f32 %v2877, %v2944
        %v2946 = vpop.f32.mrb[0].mxu0
        %2947 = vmatprep.mubr.bf16.mxu0 0
        %2948 = vmatmul.mubr.bf16.gmra.mrb[0].mxu0 %v2890
        %v2949 = vpop.f32.mrb[0].mxu0
        %v2950 = vadd.f32 %v2877, %v2949
        %v2951 = vpop.f32.mrb[0].mxu0
        %v2952 = vpop.f32.mrb[0].mxu0
        %v2953 = vadd.f32 %v2877, %v2952
        %v2954 = vpop.f32.mrb[0].mxu0
        %2955 = vmatprep.mubr.bf16.mxu0 0
        %2956 = vmatmul.mubr.bf16.gmra.mrb[0].mxu0 %v2893
        %v2957 = vpop.f32.mrb[0].mxu0
        %v2958 = vadd.f32 %v2877, %v2957
        %v2959 = vpop.f32.mrb[0].mxu0
        %v2960 = vpop.f32.mrb[0].mxu0
        %v2961 = vadd.f32 %v2877, %v2960
        %v2962 = vpop.f32.mrb[0].mxu0
        %2963 = vmatprep.mubr.bf16.mxu0 0
        %2964 = vmatmul.mubr.bf16.gmra.mrb[0].mxu0 %v2896
        %v2965 = vpop.f32.mrb[0].mxu0
        %v2966 = vadd.f32 %v2877, %v2965
        %v2967 = vpop.f32.mrb[0].mxu0
        %v2968 = vpop.f32.mrb[0].mxu0
        %v2969 = vadd.f32 %v2877, %v2968
        %v2970 = vpop.f32.mrb[0].mxu0
        %2971 = vmatprep.mubr.bf16.mxu0 0
        %2972 = vmatmul.mubr.bf16.gmra.mrb[0].mxu0 %v2899
        %v2973 = vpop.f32.mrb[0].mxu0
        %v2974 = vadd.f32 %v2877, %v2973
        %v2975 = vpop.f32.mrb[0].mxu0
        %v2976 = vpop.f32.mrb[0].mxu0
        %v2977 = vadd.f32 %v2877, %v2976
        %v2978 = vpop.f32.mrb[0].mxu0
        %2979 = vmatprep.mubr.bf16.mxu0 0
        %2980 = vmatmul.mubr.bf16.gmra.mrb[0].mxu0 %v2902
        %v2981 = vpop.f32.mrb[0].mxu0
        %v2982 = vadd.f32 %v2877, %v2981
        %v2983 = vpop.f32.mrb[0].mxu0
        %v2984 = vpop.f32.mrb[0].mxu0
        %v2985 = vadd.f32 %v2877, %v2984
        %v2986 = vpop.f32.mrb[0].mxu0
        %2987 = vmatprep.mubr.bf16.mxu0 0
        %2988 = vmatmul.mubr.bf16.gmra.mrb[0].mxu0 %v2905
        %v2989 = vpop.f32.mrb[0].mxu0
        %v2990 = vadd.f32 %v2877, %v2989
        %v2991 = vpop.f32.mrb[0].mxu0
        %v2992 = vpop.f32.mrb[0].mxu0
        %v2993 = vadd.f32 %v2877, %v2992
        %v2994 = vpop.f32.mrb[0].mxu0
        %2995 = vdwg.mxu0
        %v2996 = vmax.f32 %v2942, 0.0
        %v2997 = vmax.f32 %v2945, 0.0
        %v2998 = vmax.f32 %v2950, 0.0
        %v2999 = vmax.f32 %v2953, 0.0
        %v3000 = vmax.f32 %v2958, 0.0
        %v3001 = vmax.f32 %v2961, 0.0
        %v3002 = vmax.f32 %v2966, 0.0
        %v3003 = vmax.f32 %v2969, 0.0
        %v3004 = vmax.f32 %v2974, 0.0
        %v3005 = vmax.f32 %v2977, 0.0
        %v3006 = vmax.f32 %v2982, 0.0
        %v3007 = vmax.f32 %v2985, 0.0
        %v3008 = vmax.f32 %v2990, 0.0
        %v3009 = vmax.f32 %v2993, 0.0
        %v3010 = vand.u32 2147483647, %v2942
        %v3011 = vand.u32 2147483647, %v2945
        %v3012 = vand.u32 2147483647, %v2950
        %v3013 = vand.u32 2147483647, %v2953
        %v3014 = vand.u32 2147483647, %v2958
        %v3015 = vand.u32 2147483647, %v2961
        %v3016 = vand.u32 2147483647, %v2966
        %v3017 = vand.u32 2147483647, %v2969
        %v3018 = vand.u32 2147483647, %v2974
        %v3019 = vand.u32 2147483647, %v2977
        %v3020 = vand.u32 2147483647, %v2982
        %v3021 = vand.u32 2147483647, %v2985
        %v3022 = vand.u32 2147483647, %v2990
        %v3023 = vand.u32 2147483647, %v2993
        %v3024 = vsub.f32 0.0, %v3010
        %v3025 = vsub.f32 0.0, %v3011
        %v3026 = vsub.f32 0.0, %v3012
        %v3027 = vsub.f32 0.0, %v3013
        %v3028 = vsub.f32 0.0, %v3014
        %v3029 = vsub.f32 0.0, %v3015
        %v3030 = vsub.f32 0.0, %v3016
        %v3031 = vsub.f32 0.0, %v3017
        %v3032 = vsub.f32 0.0, %v3018
        %v3033 = vsub.f32 0.0, %v3019
        %v3034 = vsub.f32 0.0, %v3020
        %v3035 = vsub.f32 0.0, %v3021
        %v3036 = vsub.f32 0.0, %v3022
        %v3037 = vsub.f32 0.0, %v3023
        %v3038 = vmul.f32 %v3024, 1.442695
        %v3039 = vpow.pop %v3038
        %v3040 = vmul.f32 %v3025, 1.442695
        %v3041 = vpow.pop %v3040
        %v3042 = vmul.f32 %v3026, 1.442695
        %v3043 = vpow.pop %v3042
        %v3044 = vmul.f32 %v3027, 1.442695
        %v3045 = vpow.pop %v3044
        %v3046 = vmul.f32 %v3028, 1.442695
        %v3047 = vpow.pop %v3046
        %v3048 = vmul.f32 %v3029, 1.442695
        %v3049 = vpow.pop %v3048
        %v3050 = vmul.f32 %v3030, 1.442695
        %v3051 = vpow.pop %v3050
        %v3052 = vmul.f32 %v3031, 1.442695
        %v3053 = vpow.pop %v3052
        %v3054 = vmul.f32 %v3032, 1.442695
        %v3055 = vpow.pop %v3054
        %v3056 = vmul.f32 %v3033, 1.442695
        %v3057 = vpow.pop %v3056
        %v3058 = vmul.f32 %v3034, 1.442695
        %v3059 = vpow.pop %v3058
        %v3060 = vmul.f32 %v3035, 1.442695
        %v3061 = vpow.pop %v3060
        %v3062 = vmul.f32 %v3036, 1.442695
        %v3063 = vpow.pop %v3062
        %v3064 = vmul.f32 %v3037, 1.442695
        %v3065 = vpow.pop %v3064
        %v3066 = vadd.f32 %v3039, 1.0
        %v3067 = vadd.f32 %v3041, 1.0
        %v3068 = vadd.f32 %v3043, 1.0
        %v3069 = vadd.f32 %v3045, 1.0
        %v3070 = vadd.f32 %v3047, 1.0
        %v3071 = vadd.f32 %v3049, 1.0
        %v3072 = vadd.f32 %v3051, 1.0
        %v3073 = vadd.f32 %v3053, 1.0
        %v3074 = vadd.f32 %v3055, 1.0
        %v3075 = vadd.f32 %v3057, 1.0
        %v3076 = vadd.f32 %v3059, 1.0
        %v3077 = vadd.f32 %v3061, 1.0
        %v3078 = vadd.f32 %v3063, 1.0
        %v3079 = vadd.f32 %v3065, 1.0
        %v3080 = vlog2.pop %v3066
        %v3081 = vmul.f32 %v3080, 0.6931472
        %v3082 = vlog2.pop %v3067
        %v3083 = vmul.f32 %v3082, 0.6931472
        %v3084 = vlog2.pop %v3068
        %v3085 = vmul.f32 %v3084, 0.6931472
        %v3086 = vlog2.pop %v3069
        %v3087 = vmul.f32 %v3086, 0.6931472
        %v3088 = vlog2.pop %v3070
        %v3089 = vmul.f32 %v3088, 0.6931472
        %v3090 = vlog2.pop %v3071
        %v3091 = vmul.f32 %v3090, 0.6931472
        %v3092 = vlog2.pop %v3072
        %v3093 = vmul.f32 %v3092, 0.6931472
        %v3094 = vlog2.pop %v3073
        %v3095 = vmul.f32 %v3094, 0.6931472
        %v3096 = vlog2.pop %v3074
        %v3097 = vmul.f32 %v3096, 0.6931472
        %v3098 = vlog2.pop %v3075
        %v3099 = vmul.f32 %v3098, 0.6931472
        %v3100 = vlog2.pop %v3076
        %v3101 = vmul.f32 %v3100, 0.6931472
        %v3102 = vlog2.pop %v3077
        %v3103 = vmul.f32 %v3102, 0.6931472
        %v3104 = vlog2.pop %v3078
        %v3105 = vmul.f32 %v3104, 0.6931472
        %v3106 = vlog2.pop %v3079
        %v3107 = vmul.f32 %v3106, 0.6931472
        %v3108 = vadd.f32 %v2996, %v3081
        %v3109 = vadd.f32 %v2997, %v3083
        %v3110 = vadd.f32 %v2998, %v3085
        %v3111 = vadd.f32 %v2999, %v3087
        %v3112 = vadd.f32 %v3000, %v3089
        %v3113 = vadd.f32 %v3001, %v3091
        %v3114 = vadd.f32 %v3002, %v3093
        %v3115 = vadd.f32 %v3003, %v3095
        %v3116 = vadd.f32 %v3004, %v3097
        %v3117 = vadd.f32 %v3005, %v3099
        %v3118 = vadd.f32 %v3006, %v3101
        %v3119 = vadd.f32 %v3007, %v3103
        %v3120 = vadd.f32 %v3008, %v3105
        %v3121 = vadd.f32 %v3009, %v3107
        %v3122 = vsub.f32 %v3108, 0.6931472
        %v3123 = vsub.f32 %v3109, 0.6931472
        %v3124 = vsub.f32 %v3110, 0.6931472
        %v3125 = vsub.f32 %v3111, 0.6931472
        %v3126 = vsub.f32 %v3112, 0.6931472
        %v3127 = vsub.f32 %v3113, 0.6931472
        %v3128 = vsub.f32 %v3114, 0.6931472
        %v3129 = vsub.f32 %v3115, 0.6931472
        %v3130 = vsub.f32 %v3116, 0.6931472
        %v3131 = vsub.f32 %v3117, 0.6931472
        %v3132 = vsub.f32 %v3118, 0.6931472
        %v3133 = vsub.f32 %v3119, 0.6931472
        %v3134 = vsub.f32 %v3120, 0.6931472
        %v3135 = vsub.f32 %v3121, 0.6931472
        %v3136 = vpack.c.bf16 %v3123, %v3122
        %v3137 = vpack.c.bf16 %v3125, %v3124
        %v3138 = vpack.c.bf16 %v3127, %v3126
        %v3139 = vpack.c.bf16 %v3129, %v3128
        %v3140 = vpack.c.bf16 %v3131, %v3130
        %v3141 = vpack.c.bf16 %v3133, %v3132
        %v3142 = vpack.c.bf16 %v3135, %v3134
        %v3143 = vld [vmem:[%s7] sm:$0xf]
        %v3144 = vld [vmem:[%s7 + $0x4] sm:$0xf]
        %v3145 = vld [vmem:[%s7 + $0x8] sm:$0xf]
        %v3146 = vld [vmem:[%s7 + $0xc] sm:$0xf]
        %v3147 = vld [vmem:[%s8] sm:$0x1]
        %v3149 = vlaneseq
        %v3150 = vshrl.u32 %v3149, 7
        %v3151 = vsub.s32 0, %v3150
        %v3152 = vrot.slane %v3147, %v3151
        %v3158 = vunpack.c.l.b16 %v3143
        %v3159 = vunpack.c.l.b16 %v3144
        %v3160 = vunpack.c.l.b16 %v3145
        %v3161 = vunpack.c.l.b16 %v3146
        %v3162 = vpack.c.b16 %v3159, %v3158
        %v3163 = vpack.c.b16 %v3161, %v3160
        %vm3166 = vcmask 261120
        %v3168 = vsel %vm3166, %v3136, 0
        %v3171 = vsel %vm3166, %v3137, 0
        %v3174 = vsel %vm3166, %v3138, 0
        %v3177 = vsel %vm3166, %v3139, 0
        %v3180 = vsel %vm3166, %v3140, 0
        %v3183 = vsel %vm3166, %v3141, 0
        %v3186 = vsel %vm3166, %v3142, 0
        %3188 = vmatprep.subr.bf16.mxu0 0
        %3189 = vmatpush1.bf16.msra.mxu0 %v3162
        %3190 = vmatprep.subr.bf16.mxu0 0
        %3191 = vmatpush1.bf16.msra.mxu0 %v3163
        %3192 = vmatprep.subr.bf16.mxu0 0
        %3193 = vmatpush1.bf16.msra.mxu0 0
        %3194 = vmatprep.subr.bf16.mxu0 0
        %3195 = vmatpush1.bf16.msra.mxu0 0
        %3196 = vmatprep.subr.bf16.mxu0 0
        %3197 = vmatpush1.bf16.msra.mxu0 0
        %3198 = vmatprep.subr.bf16.mxu0 0
        %3199 = vmatpush1.bf16.msra.mxu0 0
        %3200 = vmatprep.subr.bf16.mxu0 0
        %3201 = vmatpush1.bf16.msra.mxu0 0
        %3202 = vmatprep.subr.bf16.mxu0 0
        %3203 = vmatpush1.bf16.msra.mxu0 0
        %3204 = vmatprep.subr.bf16.mxu0 0
        %3205 = vmatpush1.bf16.msra.mxu0 0
        %3206 = vmatprep.subr.bf16.mxu0 0
        %3207 = vmatpush1.bf16.msra.mxu0 0
        %3208 = vmatprep.subr.bf16.mxu0 0
        %3209 = vmatpush1.bf16.msra.mxu0 0
        %3210 = vmatprep.subr.bf16.mxu0 0
        %3211 = vmatpush1.bf16.msra.mxu0 0
        %3212 = vmatprep.subr.bf16.mxu0 0
        %3213 = vmatpush1.bf16.msra.mxu0 0
        %3214 = vmatprep.subr.bf16.mxu0 0
        %3215 = vmatpush1.bf16.msra.mxu0 0
        %3216 = vmatprep.subr.bf16.mxu0 0
        %3217 = vmatpush1.bf16.msra.mxu0 0
        %3218 = vmatprep.subr.bf16.mxu0 0
        %3219 = vmatpush1.bf16.msra.mxu0 0
        %3220 = vmatprep.mubr.bf16.mxu0 0
        %3221 = vmatmul.mubr.bf16.gmra.mrb[0].mxu0 %v3168
        %v3222 = vpop.f32.mrb[0].mxu0
        %v3223 = vadd.f32 %v3152, %v3222
        %v3224 = vpop.f32.mrb[0].mxu0
        %v3225 = vpop.f32.mrb[0].mxu0
        %v3226 = vadd.f32 %v3152, %v3225
        %v3227 = vpop.f32.mrb[0].mxu0
        %3228 = vmatprep.mubr.bf16.mxu0 0
        %3229 = vmatmul.mubr.bf16.gmra.mrb[0].mxu0 %v3171
        %v3230 = vpop.f32.mrb[0].mxu0
        %v3231 = vadd.f32 %v3152, %v3230
        %v3232 = vpop.f32.mrb[0].mxu0
        %v3233 = vpop.f32.mrb[0].mxu0
        %v3234 = vadd.f32 %v3152, %v3233
        %v3235 = vpop.f32.mrb[0].mxu0
        %3236 = vmatprep.mubr.bf16.mxu0 0
        %3237 = vmatmul.mubr.bf16.gmra.mrb[0].mxu0 %v3174
        %v3238 = vpop.f32.mrb[0].mxu0
        %v3239 = vadd.f32 %v3152, %v3238
        %v3240 = vpop.f32.mrb[0].mxu0
        %v3241 = vpop.f32.mrb[0].mxu0
        %v3242 = vadd.f32 %v3152, %v3241
        %v3243 = vpop.f32.mrb[0].mxu0
        %3244 = vmatprep.mubr.bf16.mxu0 0
        %3245 = vmatmul.mubr.bf16.gmra.mrb[0].mxu0 %v3177
        %v3246 = vpop.f32.mrb[0].mxu0
        %v3247 = vadd.f32 %v3152, %v3246
        %v3248 = vpop.f32.mrb[0].mxu0
        %v3249 = vpop.f32.mrb[0].mxu0
        %v3250 = vadd.f32 %v3152, %v3249
        %v3251 = vpop.f32.mrb[0].mxu0
        %3252 = vmatprep.mubr.bf16.mxu0 0
        %3253 = vmatmul.mubr.bf16.gmra.mrb[0].mxu0 %v3180
        %v3254 = vpop.f32.mrb[0].mxu0
        %v3255 = vadd.f32 %v3152, %v3254
        %v3256 = vpop.f32.mrb[0].mxu0
        %v3257 = vpop.f32.mrb[0].mxu0
        %v3258 = vadd.f32 %v3152, %v3257
        %v3259 = vpop.f32.mrb[0].mxu0
        %3260 = vmatprep.mubr.bf16.mxu0 0
        %3261 = vmatmul.mubr.bf16.gmra.mrb[0].mxu0 %v3183
        %v3262 = vpop.f32.mrb[0].mxu0
        %v3263 = vadd.f32 %v3152, %v3262
        %v3264 = vpop.f32.mrb[0].mxu0
        %v3265 = vpop.f32.mrb[0].mxu0
        %v3266 = vadd.f32 %v3152, %v3265
        %v3267 = vpop.f32.mrb[0].mxu0
        %3268 = vmatprep.mubr.bf16.mxu0 0
        %3269 = vmatmul.mubr.bf16.gmra.mrb[0].mxu0 %v3186
        %v3270 = vpop.f32.mrb[0].mxu0
        %v3271 = vadd.f32 %v3152, %v3270
        %v3272 = vpop.f32.mrb[0].mxu0
        %v3273 = vpop.f32.mrb[0].mxu0
        %v3274 = vadd.f32 %v3152, %v3273
        %v3275 = vpop.f32.mrb[0].mxu0
        %3276 = vdwg.mxu0
        %3278 = vset.pattern.permute.xlu0 0
        %3279 = vperm.xlu0 %3278, %v2849
        %v3280 = vpop.permute.xlu0 %3279
        %3283 = vset.pattern.permute.xlu0 0
        %3284 = vperm.xlu0 %3283, %v2850
        %v3285 = vpop.permute.xlu0 %3284
        %3288 = vset.pattern.permute.xlu0 0
        %3289 = vperm.xlu0 %3288, %v2851
        %v3290 = vpop.permute.xlu0 %3289
        %3293 = vset.pattern.permute.xlu0 0
        %3294 = vperm.xlu0 %3293, %v2852
        %v3295 = vpop.permute.xlu0 %3294
        %3298 = vset.pattern.permute.xlu0 0
        %3299 = vperm.xlu0 %3298, %v2853
        %v3300 = vpop.permute.xlu0 %3299
        %3303 = vset.pattern.permute.xlu0 0
        %3304 = vperm.xlu0 %3303, %v2854
        %v3305 = vpop.permute.xlu0 %3304
        %3308 = vset.pattern.permute.xlu0 0
        %3309 = vperm.xlu0 %3308, %v2855
        %v3310 = vpop.permute.xlu0 %3309
        %3313 = vset.pattern.permute.xlu0 0
        %3314 = vperm.xlu0 %3313, %v2856
        %v3315 = vpop.permute.xlu0 %3314
        %3318 = vset.pattern.permute.xlu0 0
        %3319 = vperm.xlu0 %3318, %v2857
        %v3320 = vpop.permute.xlu0 %3319
        %3323 = vset.pattern.permute.xlu0 0
        %3324 = vperm.xlu0 %3323, %v2858
        %v3325 = vpop.permute.xlu0 %3324
        %3328 = vset.pattern.permute.xlu0 0
        %3329 = vperm.xlu0 %3328, %v2859
        %v3330 = vpop.permute.xlu0 %3329
        %3333 = vset.pattern.permute.xlu0 0
        %3334 = vperm.xlu0 %3333, %v2860
        %v3335 = vpop.permute.xlu0 %3334
        %3338 = vset.pattern.permute.xlu0 0
        %3339 = vperm.xlu0 %3338, %v2861
        %v3340 = vpop.permute.xlu0 %3339
        %3343 = vset.pattern.permute.xlu0 0
        %3344 = vperm.xlu0 %3343, %v2862
        %v3345 = vpop.permute.xlu0 %3344
        %v3347 = vmul.f32 %v3223, %v3280
        %v3348 = vmul.f32 %v3226, %v3285
        %v3349 = vmul.f32 %v3231, %v3290
        %v3350 = vmul.f32 %v3234, %v3295
        %v3351 = vmul.f32 %v3239, %v3300
        %v3352 = vmul.f32 %v3242, %v3305
        %v3353 = vmul.f32 %v3247, %v3310
        %v3354 = vmul.f32 %v3250, %v3315
        %v3355 = vmul.f32 %v3255, %v3320
        %v3356 = vmul.f32 %v3258, %v3325
        %v3357 = vmul.f32 %v3263, %v3330
        %v3358 = vmul.f32 %v3266, %v3335
        %v3359 = vmul.f32 %v3271, %v3340
        %v3360 = vmul.f32 %v3274, %v3345
        %v3361 = vpack.c.bf16 %v530, %v529
        %v3362 = vld [vmem:[%s9] sm:$0xf]
        %v3363 = vld [vmem:[%s9 + $0x4] sm:$0xf]
        %v3364 = vld [vmem:[%s9 + $0x8] sm:$0xf]
        %v3365 = vld [vmem:[%s9 + $0xc] sm:$0xf]
        %v3370 = vunpack.c.l.b16 %v3362
        %v3371 = vunpack.c.l.b16 %v3363
        %v3372 = vunpack.c.l.b16 %v3364
        %v3373 = vunpack.c.l.b16 %v3365
        %v3374 = vpack.c.b16 %v3371, %v3370
        %v3375 = vpack.c.b16 %v3373, %v3372
        %v3379 = vsel %vm3166, %v3361, 0
        %3381 = vmatprep.subr.bf16.mxu0 0
        %3382 = vmatpush1.bf16.msra.mxu0 %v3374
        %3383 = vmatprep.subr.bf16.mxu0 0
        %3384 = vmatpush1.bf16.msra.mxu0 %v3375
        %3385 = vmatprep.subr.bf16.mxu0 0
        %3386 = vmatpush1.bf16.msra.mxu0 0
        %3387 = vmatprep.subr.bf16.mxu0 0
        %3388 = vmatpush1.bf16.msra.mxu0 0
        %3389 = vmatprep.subr.bf16.mxu0 0
        %3390 = vmatpush1.bf16.msra.mxu0 0
        %3391 = vmatprep.subr.bf16.mxu0 0
        %3392 = vmatpush1.bf16.msra.mxu0 0
        %3393 = vmatprep.subr.bf16.mxu0 0
        %3394 = vmatpush1.bf16.msra.mxu0 0
        %3395 = vmatprep.subr.bf16.mxu0 0
        %3396 = vmatpush1.bf16.msra.mxu0 0
        %3397 = vmatprep.subr.bf16.mxu0 0
        %3398 = vmatpush1.bf16.msra.mxu0 0
        %3399 = vmatprep.subr.bf16.mxu0 0
        %3400 = vmatpush1.bf16.msra.mxu0 0
        %3401 = vmatprep.subr.bf16.mxu0 0
        %3402 = vmatpush1.bf16.msra.mxu0 0
        %3403 = vmatprep.subr.bf16.mxu0 0
        %3404 = vmatpush1.bf16.msra.mxu0 0
        %3405 = vmatprep.subr.bf16.mxu0 0
        %3406 = vmatpush1.bf16.msra.mxu0 0
        %3407 = vmatprep.subr.bf16.mxu0 0
        %3408 = vmatpush1.bf16.msra.mxu0 0
        %3409 = vmatprep.subr.bf16.mxu0 0
        %3410 = vmatpush1.bf16.msra.mxu0 0
        %3411 = vmatprep.subr.bf16.mxu0 0
        %3412 = vmatpush1.bf16.msra.mxu0 0
        %3413 = vmatprep.mubr.bf16.mxu0 0
        %3414 = vmatmul.mubr.bf16.gmra.mrb[0].mxu0 %v3379
        %v3415 = vpop.f32.mrb[0].mxu0
        %v3416 = vadd.f32 0.0, %v3415
        %v3417 = vpop.f32.mrb[0].mxu0
        %v3418 = vpop.f32.mrb[0].mxu0
        %v3419 = vadd.f32 0.0, %v3418
        %v3420 = vpop.f32.mrb[0].mxu0
        %3421 = vdwg.mxu0
        %v3422 = vpack.c.bf16 %v3419, %v3416
        %v3424 = vunpack.c.l.b16 %v3422
        %v3425 = vunpack.c.h.b16 %v3422
        %v3426 = vpack.c.b16 %v3424, %v3424
        %v3427 = vpack.c.b16 %v3425, %v3425
        %v3429 = vsel %vm654, %v646, 0
        %v3432 = vsel %vm654, %v647, 0
        %v3435 = vsel %vm654, %v648, 0
        %v3438 = vsel %vm654, %v649, 0
        %vm3440 = vcmask 1043456
        %v3442 = vsel %vm3440, %v3426, 0
        %3444 = vmatprep.subr.bf16.mxu0 0
        %3445 = vmatpush1.bf16.msra.mxu0 %v3442
        %3446 = vmatprep.subr.bf16.mxu0 0
        %3447 = vmatpush1.bf16.msra.mxu0 0
        %3448 = vmatprep.subr.bf16.mxu0 0
        %3449 = vmatpush1.bf16.msra.mxu0 0
        %3450 = vmatprep.subr.bf16.mxu0 0
        %3451 = vmatpush1.bf16.msra.mxu0 0
        %3452 = vmatprep.subr.bf16.mxu0 0
        %3453 = vmatpush1.bf16.msra.mxu0 0
        %3454 = vmatprep.subr.bf16.mxu0 0
        %3455 = vmatpush1.bf16.msra.mxu0 0
        %3456 = vmatprep.subr.bf16.mxu0 0
        %3457 = vmatpush1.bf16.msra.mxu0 0
        %3458 = vmatprep.subr.bf16.mxu0 0
        %3459 = vmatpush1.bf16.msra.mxu0 0
        %3460 = vmatprep.subr.bf16.mxu0 0
        %3461 = vmatpush1.bf16.msra.mxu0 0
        %3462 = vmatprep.subr.bf16.mxu0 0
        %3463 = vmatpush1.bf16.msra.mxu0 0
        %3464 = vmatprep.subr.bf16.mxu0 0
        %3465 = vmatpush1.bf16.msra.mxu0 0
        %3466 = vmatprep.subr.bf16.mxu0 0
        %3467 = vmatpush1.bf16.msra.mxu0 0
        %3468 = vmatprep.subr.bf16.mxu0 0
        %3469 = vmatpush1.bf16.msra.mxu0 0
        %3470 = vmatprep.subr.bf16.mxu0 0
        %3471 = vmatpush1.bf16.msra.mxu0 0
        %3472 = vmatprep.subr.bf16.mxu0 0
        %3473 = vmatpush1.bf16.msra.mxu0 0
        %3474 = vmatprep.subr.bf16.mxu0 0
        %3475 = vmatpush1.bf16.msra.mxu0 0
        %3476 = vmatprep.mubr.bf16.mxu0 0
        %3477 = vmatmul.mubr.bf16.gmra.mrb[0].mxu0 %v3429
        %v3478 = vpop.f32.mrb[0].mxu0
        %v3479 = vadd.f32 0.0, %v3478
        %v3480 = vpop.f32.mrb[0].mxu0
        %v3481 = vpop.f32.mrb[0].mxu0
        %v3482 = vadd.f32 0.0, %v3481
        %v3483 = vpop.f32.mrb[0].mxu0
        %3484 = vmatprep.mubr.bf16.mxu0 0
        %3485 = vmatmul.mubr.bf16.gmra.mrb[0].mxu0 %v3432
        %v3486 = vpop.f32.mrb[0].mxu0
        %v3487 = vadd.f32 0.0, %v3486
        %v3488 = vpop.f32.mrb[0].mxu0
        %v3489 = vpop.f32.mrb[0].mxu0
        %v3490 = vadd.f32 0.0, %v3489
        %v3491 = vpop.f32.mrb[0].mxu0
        %3492 = vmatprep.mubr.bf16.mxu0 0
        %3493 = vmatmul.mubr.bf16.gmra.mrb[0].mxu0 %v3435
        %v3494 = vpop.f32.mrb[0].mxu0
        %v3495 = vadd.f32 0.0, %v3494
        %v3496 = vpop.f32.mrb[0].mxu0
        %v3497 = vpop.f32.mrb[0].mxu0
        %v3498 = vadd.f32 0.0, %v3497
        %v3499 = vpop.f32.mrb[0].mxu0
        %3500 = vmatprep.mubr.bf16.mxu0 0
        %3501 = vmatmul.mubr.bf16.gmra.mrb[0].mxu0 %v3438
        %v3502 = vpop.f32.mrb[0].mxu0
        %v3503 = vadd.f32 0.0, %v3502
        %v3504 = vpop.f32.mrb[0].mxu0
        %v3505 = vpop.f32.mrb[0].mxu0
        %v3506 = vpop.f32.mrb[0].mxu0
        %3507 = vdwg.mxu0
        %v3509 = vsel %vm654, %v650, 0
        %v3512 = vsel %vm654, %v651, 0
        %v3515 = vsel %vm654, %v652, 0
        %v3518 = vsel %vm654, %v653, 0
        %v3521 = vsel %vm3440, %v3427, 0
        %3523 = vmatprep.subr.bf16.mxu0 0
        %3524 = vmatpush1.bf16.msra.mxu0 %v3521
        %3525 = vmatprep.subr.bf16.mxu0 0
        %3526 = vmatpush1.bf16.msra.mxu0 0
        %3527 = vmatprep.subr.bf16.mxu0 0
        %3528 = vmatpush1.bf16.msra.mxu0 0
        %3529 = vmatprep.subr.bf16.mxu0 0
        %3530 = vmatpush1.bf16.msra.mxu0 0
        %3531 = vmatprep.subr.bf16.mxu0 0
        %3532 = vmatpush1.bf16.msra.mxu0 0
        %3533 = vmatprep.subr.bf16.mxu0 0
        %3534 = vmatpush1.bf16.msra.mxu0 0
        %3535 = vmatprep.subr.bf16.mxu0 0
        %3536 = vmatpush1.bf16.msra.mxu0 0
        %3537 = vmatprep.subr.bf16.mxu0 0
        %3538 = vmatpush1.bf16.msra.mxu0 0
        %3539 = vmatprep.subr.bf16.mxu0 0
        %3540 = vmatpush1.bf16.msra.mxu0 0
        %3541 = vmatprep.subr.bf16.mxu0 0
        %3542 = vmatpush1.bf16.msra.mxu0 0
        %3543 = vmatprep.subr.bf16.mxu0 0
        %3544 = vmatpush1.bf16.msra.mxu0 0
        %3545 = vmatprep.subr.bf16.mxu0 0
        %3546 = vmatpush1.bf16.msra.mxu0 0
        %3547 = vmatprep.subr.bf16.mxu0 0
        %3548 = vmatpush1.bf16.msra.mxu0 0
        %3549 = vmatprep.subr.bf16.mxu0 0
        %3550 = vmatpush1.bf16.msra.mxu0 0
        %3551 = vmatprep.subr.bf16.mxu0 0
        %3552 = vmatpush1.bf16.msra.mxu0 0
        %3553 = vmatprep.subr.bf16.mxu0 0
        %3554 = vmatpush1.bf16.msra.mxu0 0
        %3555 = vmatprep.mubr.bf16.mxu0 0
        %3556 = vmatmul.mubr.bf16.gmra.mrb[0].mxu0 %v3509
        %v3557 = vpop.f32.mrb[0].mxu0
        %v3558 = vadd.f32 0.0, %v3557
        %v3559 = vpop.f32.mrb[0].mxu0
        %v3560 = vpop.f32.mrb[0].mxu0
        %v3561 = vadd.f32 0.0, %v3560
        %v3562 = vpop.f32.mrb[0].mxu0
        %3563 = vmatprep.mubr.bf16.mxu0 0
        %3564 = vmatmul.mubr.bf16.gmra.mrb[0].mxu0 %v3512
        %v3565 = vpop.f32.mrb[0].mxu0
        %v3566 = vadd.f32 0.0, %v3565
        %v3567 = vpop.f32.mrb[0].mxu0
        %v3568 = vpop.f32.mrb[0].mxu0
        %v3569 = vadd.f32 0.0, %v3568
        %v3570 = vpop.f32.mrb[0].mxu0
        %3571 = vmatprep.mubr.bf16.mxu0 0
        %3572 = vmatmul.mubr.bf16.gmra.mrb[0].mxu0 %v3515
        %v3573 = vpop.f32.mrb[0].mxu0
        %v3574 = vadd.f32 0.0, %v3573
        %v3575 = vpop.f32.mrb[0].mxu0
        %v3576 = vpop.f32.mrb[0].mxu0
        %v3577 = vadd.f32 0.0, %v3576
        %v3578 = vpop.f32.mrb[0].mxu0
        %3579 = vmatprep.mubr.bf16.mxu0 0
        %3580 = vmatmul.mubr.bf16.gmra.mrb[0].mxu0 %v3518
        %v3581 = vpop.f32.mrb[0].mxu0
        %v3582 = vadd.f32 0.0, %v3581
        %v3583 = vpop.f32.mrb[0].mxu0
        %v3584 = vpop.f32.mrb[0].mxu0
        %v3585 = vpop.f32.mrb[0].mxu0
        %3586 = vdwg.mxu0
        %v3587 = vmul.f32 %v3479, %v3347
        %v3588 = vmul.f32 %v3482, %v3348
        %v3589 = vmul.f32 %v3487, %v3349
        %v3590 = vmul.f32 %v3490, %v3350
        %v3591 = vmul.f32 %v3495, %v3351
        %v3592 = vmul.f32 %v3498, %v3352
        %v3593 = vmul.f32 %v3503, %v3353
        %v3594 = vmul.f32 %v3558, %v3354
        %v3595 = vmul.f32 %v3561, %v3355
        %v3596 = vmul.f32 %v3566, %v3356
        %v3597 = vmul.f32 %v3569, %v3357
        %v3598 = vmul.f32 %v3574, %v3358
        %v3599 = vmul.f32 %v3577, %v3359
        %v3600 = vmul.f32 %v3582, %v3360
        %v3601 = vsel %vm3166, %v3587, 0.0
        %v3602 = vsel %vm3166, %v3588, 0.0
        %v3603 = vadd.f32 %v3601, %v3602
        %v3604 = vsel %vm3166, %v3589, 0.0
        %v3605 = vadd.f32 %v3603, %v3604
        %v3606 = vsel %vm3166, %v3590, 0.0
        %v3607 = vadd.f32 %v3605, %v3606
        %v3608 = vsel %vm3166, %v3591, 0.0
        %v3609 = vadd.f32 %v3607, %v3608
        %v3610 = vsel %vm3166, %v3592, 0.0
        %v3611 = vadd.f32 %v3609, %v3610
        %v3612 = vsel %vm3166, %v3593, 0.0
        %v3613 = vadd.f32 %v3611, %v3612
        %v3614 = vsel %vm3166, %v3594, 0.0
        %v3615 = vsel %vm3166, %v3595, 0.0
        %v3616 = vadd.f32 %v3614, %v3615
        %v3617 = vsel %vm3166, %v3596, 0.0
        %v3618 = vadd.f32 %v3616, %v3617
        %v3619 = vsel %vm3166, %v3597, 0.0
        %v3620 = vadd.f32 %v3618, %v3619
        %v3621 = vsel %vm3166, %v3598, 0.0
        %v3622 = vadd.f32 %v3620, %v3621
        %v3623 = vsel %vm3166, %v3599, 0.0
        %v3624 = vadd.f32 %v3622, %v3623
        %v3625 = vsel %vm3166, %v3600, 0.0
        %v3626 = vadd.f32 %v3624, %v3625
        %v3627 = vpack.c.bf16 %v3626, %v3613
        %v3628 = vld [vmem:[%s10] sm:$0xf]
        %v3629 = vld [vmem:[%s10 + $0x4] sm:$0xf]
        %v3630 = vld [vmem:[%s10 + $0x8] sm:$0xf]
        %v3631 = vld [vmem:[%s10 + $0xc] sm:$0xf]
        %v3632 = vld [vmem:[%s11] sm:$0x1]
        %v3634 = vlaneseq
        %v3635 = vshrl.u32 %v3634, 7
        %v3636 = vsub.s32 0, %v3635
        %v3637 = vrot.slane %v3632, %v3636
        %v3643 = vunpack.c.l.b16 %v3628
        %v3644 = vunpack.c.l.b16 %v3629
        %v3645 = vunpack.c.l.b16 %v3630
        %v3646 = vunpack.c.l.b16 %v3631
        %v3647 = vpack.c.b16 %v3644, %v3643
        %v3648 = vpack.c.b16 %v3646, %v3645
        %v3652 = vsel %vm3166, %v3627, 0
        %3654 = vmatprep.subr.bf16.mxu0 0
        %3655 = vmatpush1.bf16.msra.mxu0 %v3647
        %3656 = vmatprep.subr.bf16.mxu0 0
        %3657 = vmatpush1.bf16.msra.mxu0 %v3648
        %3658 = vmatprep.subr.bf16.mxu0 0
        %3659 = vmatpush1.bf16.msra.mxu0 0
        %3660 = vmatprep.subr.bf16.mxu0 0
        %3661 = vmatpush1.bf16.msra.mxu0 0
        %3662 = vmatprep.subr.bf16.mxu0 0
        %3663 = vmatpush1.bf16.msra.mxu0 0
        %3664 = vmatprep.subr.bf16.mxu0 0
        %3665 = vmatpush1.bf16.msra.mxu0 0
        %3666 = vmatprep.subr.bf16.mxu0 0
        %3667 = vmatpush1.bf16.msra.mxu0 0
        %3668 = vmatprep.subr.bf16.mxu0 0
        %3669 = vmatpush1.bf16.msra.mxu0 0
        %3670 = vmatprep.subr.bf16.mxu0 0
        %3671 = vmatpush1.bf16.msra.mxu0 0
        %3672 = vmatprep.subr.bf16.mxu0 0
        %3673 = vmatpush1.bf16.msra.mxu0 0
        %3674 = vmatprep.subr.bf16.mxu0 0
        %3675 = vmatpush1.bf16.msra.mxu0 0
        %3676 = vmatprep.subr.bf16.mxu0 0
        %3677 = vmatpush1.bf16.msra.mxu0 0
        %3678 = vmatprep.subr.bf16.mxu0 0
        %3679 = vmatpush1.bf16.msra.mxu0 0
        %3680 = vmatprep.subr.bf16.mxu0 0
        %3681 = vmatpush1.bf16.msra.mxu0 0
        %3682 = vmatprep.subr.bf16.mxu0 0
        %3683 = vmatpush1.bf16.msra.mxu0 0
        %3684 = vmatprep.subr.bf16.mxu0 0
        %3685 = vmatpush1.bf16.msra.mxu0 0
        %3686 = vmatprep.mubr.bf16.mxu0 0
        %3687 = vmatmul.mubr.bf16.gmra.mrb[0].mxu0 %v3652
        %v3688 = vpop.f32.mrb[0].mxu0
        %v3689 = vadd.f32 %v3637, %v3688
        %v3690 = vpop.f32.mrb[0].mxu0
        %v3691 = vpop.f32.mrb[0].mxu0
        %v3692 = vadd.f32 %v3637, %v3691
        %v3693 = vpop.f32.mrb[0].mxu0
        %3694 = vdwg.mxu0
        %v3695 = vmax.f32 %v3689, 0.0
        %v3696 = vmax.f32 %v3692, 0.0
        %v3697 = vand.u32 2147483647, %v3689
        %v3698 = vand.u32 2147483647, %v3692
        %v3699 = vsub.f32 0.0, %v3697
        %v3700 = vsub.f32 0.0, %v3698
        %v3701 = vmul.f32 %v3699, 1.442695
        %v3702 = vpow.pop %v3701
        %v3703 = vmul.f32 %v3700, 1.442695
        %v3704 = vpow.pop %v3703
        %v3705 = vadd.f32 %v3702, 1.0
        %v3706 = vadd.f32 %v3704, 1.0
        %v3707 = vlog2.pop %v3705
        %v3708 = vmul.f32 %v3707, 0.6931472
        %v3709 = vlog2.pop %v3706
        %v3710 = vmul.f32 %v3709, 0.6931472
        %v3711 = vadd.f32 %v3695, %v3708
        %v3712 = vadd.f32 %v3696, %v3710
        %v3713 = vsub.f32 %v3711, 0.6931472
        %v3714 = vsub.f32 %v3712, 0.6931472
        %v3715 = vpack.c.bf16 %v3714, %v3713
        %v3716 = vld [vmem:[%s12] sm:$0xf]
        %v3717 = vld [vmem:[%s12 + $0x4] sm:$0xf]
        %v3718 = vld [vmem:[%s12 + $0x8] sm:$0xf]
        %v3719 = vld [vmem:[%s12 + $0xc] sm:$0xf]
        %v3720 = vld [vmem:[%s13] sm:$0x1]
        %v3722 = vlaneseq
        %v3723 = vshrl.u32 %v3722, 7
        %v3724 = vsub.s32 0, %v3723
        %v3725 = vrot.slane %v3720, %v3724
        %v3731 = vunpack.c.l.b16 %v3716
        %v3732 = vunpack.c.l.b16 %v3717
        %v3733 = vunpack.c.l.b16 %v3718
        %v3734 = vunpack.c.l.b16 %v3719
        %v3735 = vpack.c.b16 %v3732, %v3731
        %v3736 = vpack.c.b16 %v3734, %v3733
        %v3740 = vsel %vm3166, %v3715, 0
        %3742 = vmatprep.subr.bf16.mxu0 0
        %3743 = vmatpush1.bf16.msra.mxu0 %v3735
        %3744 = vmatprep.subr.bf16.mxu0 0
        %3745 = vmatpush1.bf16.msra.mxu0 %v3736
        %3746 = vmatprep.subr.bf16.mxu0 0
        %3747 = vmatpush1.bf16.msra.mxu0 0
        %3748 = vmatprep.subr.bf16.mxu0 0
        %3749 = vmatpush1.bf16.msra.mxu0 0
        %3750 = vmatprep.subr.bf16.mxu0 0
        %3751 = vmatpush1.bf16.msra.mxu0 0
        %3752 = vmatprep.subr.bf16.mxu0 0
        %3753 = vmatpush1.bf16.msra.mxu0 0
        %3754 = vmatprep.subr.bf16.mxu0 0
        %3755 = vmatpush1.bf16.msra.mxu0 0
        %3756 = vmatprep.subr.bf16.mxu0 0
        %3757 = vmatpush1.bf16.msra.mxu0 0
        %3758 = vmatprep.subr.bf16.mxu0 0
        %3759 = vmatpush1.bf16.msra.mxu0 0
        %3760 = vmatprep.subr.bf16.mxu0 0
        %3761 = vmatpush1.bf16.msra.mxu0 0
        %3762 = vmatprep.subr.bf16.mxu0 0
        %3763 = vmatpush1.bf16.msra.mxu0 0
        %3764 = vmatprep.subr.bf16.mxu0 0
        %3765 = vmatpush1.bf16.msra.mxu0 0
        %3766 = vmatprep.subr.bf16.mxu0 0
        %3767 = vmatpush1.bf16.msra.mxu0 0
        %3768 = vmatprep.subr.bf16.mxu0 0
        %3769 = vmatpush1.bf16.msra.mxu0 0
        %3770 = vmatprep.subr.bf16.mxu0 0
        %3771 = vmatpush1.bf16.msra.mxu0 0
        %3772 = vmatprep.subr.bf16.mxu0 0
        %3773 = vmatpush1.bf16.msra.mxu0 0
        %3774 = vmatprep.mubr.bf16.mxu0 0
        %3775 = vmatmul.mubr.bf16.gmra.mrb[0].mxu0 %v3740
        %v3776 = vpop.f32.mrb[0].mxu0
        %v3777 = vadd.f32 %v3725, %v3776
        %v3778 = vpop.f32.mrb[0].mxu0
        %v3779 = vpop.f32.mrb[0].mxu0
        %v3780 = vadd.f32 %v3725, %v3779
        %v3781 = vpop.f32.mrb[0].mxu0
        %3782 = vdwg.mxu0
        %v3783 = vadd.f32 %v529, %v3777
        %v3784 = vadd.f32 %v530, %v3780
        %s3785 = scalar_lea.vmem %s7, 16
        %v3786 = vld [vmem:[%s3785] sm:$0xf]
        %v3787 = vld [vmem:[%s3785 + $0x4] sm:$0xf]
        %v3788 = vld [vmem:[%s3785 + $0x8] sm:$0xf]
        %v3789 = vld [vmem:[%s3785 + $0xc] sm:$0xf]
        %s3790 = scalar_lea.vmem %s8, 1
        %v3791 = vld [vmem:[%s3790] sm:$0x1]
        %v3793 = vlaneseq
        %v3794 = vshrl.u32 %v3793, 7
        %v3795 = vsub.s32 0, %v3794
        %v3796 = vrot.slane %v3791, %v3795
        %3805 = vrot.lane.b32.xlu0 %v3136, 96
        %v3806 = vpop.permute.xlu0 %3805
        %3807 = vrot.lane.b32.xlu0 %v3137, 96
        %v3808 = vpop.permute.xlu0 %3807
        %3809 = vrot.lane.b32.xlu0 %v3138, 96
        %v3810 = vpop.permute.xlu0 %3809
        %3811 = vrot.lane.b32.xlu0 %v3139, 96
        %v3812 = vpop.permute.xlu0 %3811
        %3813 = vrot.lane.b32.xlu0 %v3140, 96
        %v3814 = vpop.permute.xlu0 %3813
        %3815 = vrot.lane.b32.xlu0 %v3141, 96
        %v3816 = vpop.permute.xlu0 %3815
        %3817 = vrot.lane.b32.xlu0 %v3142, 96
        %v3818 = vpop.permute.xlu0 %3817
        %v3823 = vunpack.c.l.b16 %v3786
        %v3824 = vunpack.c.l.b16 %v3787
        %v3825 = vunpack.c.l.b16 %v3788
        %v3826 = vunpack.c.l.b16 %v3789
        %v3827 = vpack.c.b16 %v3824, %v3823
        %v3828 = vpack.c.b16 %v3826, %v3825
        %v3832 = vsel %vm3166, %v3806, 0
        %v3835 = vsel %vm3166, %v3808, 0
        %v3838 = vsel %vm3166, %v3810, 0
        %v3841 = vsel %vm3166, %v3812, 0
        %v3844 = vsel %vm3166, %v3814, 0
        %v3847 = vsel %vm3166, %v3816, 0
        %v3850 = vsel %vm3166, %v3818, 0
        %3852 = vmatprep.subr.bf16.mxu0 0
        %3853 = vmatpush1.bf16.msra.mxu0 %v3827
        %3854 = vmatprep.subr.bf16.mxu0 0
        %3855 = vmatpush1.bf16.msra.mxu0 %v3828
        %3856 = vmatprep.subr.bf16.mxu0 0
        %3857 = vmatpush1.bf16.msra.mxu0 0
        %3858 = vmatprep.subr.bf16.mxu0 0
        %3859 = vmatpush1.bf16.msra.mxu0 0
        %3860 = vmatprep.subr.bf16.mxu0 0
        %3861 = vmatpush1.bf16.msra.mxu0 0
        %3862 = vmatprep.subr.bf16.mxu0 0
        %3863 = vmatpush1.bf16.msra.mxu0 0
        %3864 = vmatprep.subr.bf16.mxu0 0
        %3865 = vmatpush1.bf16.msra.mxu0 0
        %3866 = vmatprep.subr.bf16.mxu0 0
        %3867 = vmatpush1.bf16.msra.mxu0 0
        %3868 = vmatprep.subr.bf16.mxu0 0
        %3869 = vmatpush1.bf16.msra.mxu0 0
        %3870 = vmatprep.subr.bf16.mxu0 0
        %3871 = vmatpush1.bf16.msra.mxu0 0
        %3872 = vmatprep.subr.bf16.mxu0 0
        %3873 = vmatpush1.bf16.msra.mxu0 0
        %3874 = vmatprep.subr.bf16.mxu0 0
        %3875 = vmatpush1.bf16.msra.mxu0 0
        %3876 = vmatprep.subr.bf16.mxu0 0
        %3877 = vmatpush1.bf16.msra.mxu0 0
        %3878 = vmatprep.subr.bf16.mxu0 0
        %3879 = vmatpush1.bf16.msra.mxu0 0
        %3880 = vmatprep.subr.bf16.mxu0 0
        %3881 = vmatpush1.bf16.msra.mxu0 0
        %3882 = vmatprep.subr.bf16.mxu0 0
        %3883 = vmatpush1.bf16.msra.mxu0 0
        %3884 = vmatprep.mubr.bf16.mxu0 0
        %3885 = vmatmul.mubr.bf16.gmra.mrb[0].mxu0 %v3832
        %v3886 = vpop.f32.mrb[0].mxu0
        %v3887 = vadd.f32 %v3796, %v3886
        %v3888 = vpop.f32.mrb[0].mxu0
        %v3889 = vpop.f32.mrb[0].mxu0
        %v3890 = vadd.f32 %v3796, %v3889
        %v3891 = vpop.f32.mrb[0].mxu0
        %3892 = vmatprep.mubr.bf16.mxu0 0
        %3893 = vmatmul.mubr.bf16.gmra.mrb[0].mxu0 %v3835
        %v3894 = vpop.f32.mrb[0].mxu0
        %v3895 = vadd.f32 %v3796, %v3894
        %v3896 = vpop.f32.mrb[0].mxu0
        %v3897 = vpop.f32.mrb[0].mxu0
        %v3898 = vadd.f32 %v3796, %v3897
        %v3899 = vpop.f32.mrb[0].mxu0
        %3900 = vmatprep.mubr.bf16.mxu0 0
        %3901 = vmatmul.mubr.bf16.gmra.mrb[0].mxu0 %v3838
        %v3902 = vpop.f32.mrb[0].mxu0
        %v3903 = vadd.f32 %v3796, %v3902
        %v3904 = vpop.f32.mrb[0].mxu0
        %v3905 = vpop.f32.mrb[0].mxu0
        %v3906 = vadd.f32 %v3796, %v3905
        %v3907 = vpop.f32.mrb[0].mxu0
        %3908 = vmatprep.mubr.bf16.mxu0 0
        %3909 = vmatmul.mubr.bf16.gmra.mrb[0].mxu0 %v3841
        %v3910 = vpop.f32.mrb[0].mxu0
        %v3911 = vadd.f32 %v3796, %v3910
        %v3912 = vpop.f32.mrb[0].mxu0
        %v3913 = vpop.f32.mrb[0].mxu0
        %v3914 = vadd.f32 %v3796, %v3913
        %v3915 = vpop.f32.mrb[0].mxu0
        %3916 = vmatprep.mubr.bf16.mxu0 0
        %3917 = vmatmul.mubr.bf16.gmra.mrb[0].mxu0 %v3844
        %v3918 = vpop.f32.mrb[0].mxu0
        %v3919 = vadd.f32 %v3796, %v3918
        %v3920 = vpop.f32.mrb[0].mxu0
        %v3921 = vpop.f32.mrb[0].mxu0
        %v3922 = vadd.f32 %v3796, %v3921
        %v3923 = vpop.f32.mrb[0].mxu0
        %3924 = vmatprep.mubr.bf16.mxu0 0
        %3925 = vmatmul.mubr.bf16.gmra.mrb[0].mxu0 %v3847
        %v3926 = vpop.f32.mrb[0].mxu0
        %v3927 = vadd.f32 %v3796, %v3926
        %v3928 = vpop.f32.mrb[0].mxu0
        %v3929 = vpop.f32.mrb[0].mxu0
        %v3930 = vadd.f32 %v3796, %v3929
        %v3931 = vpop.f32.mrb[0].mxu0
        %3932 = vmatprep.mubr.bf16.mxu0 0
        %3933 = vmatmul.mubr.bf16.gmra.mrb[0].mxu0 %v3850
        %v3934 = vpop.f32.mrb[0].mxu0
        %v3935 = vadd.f32 %v3796, %v3934
        %v3936 = vpop.f32.mrb[0].mxu0
        %v3937 = vpop.f32.mrb[0].mxu0
        %v3938 = vadd.f32 %v3796, %v3937
        %v3939 = vpop.f32.mrb[0].mxu0
        %3940 = vdwg.mxu0
        %v3941 = vmul.f32 %v3887, %v3280
        %v3942 = vmul.f32 %v3890, %v3285
        %v3943 = vmul.f32 %v3895, %v3290
        %v3944 = vmul.f32 %v3898, %v3295
        %v3945 = vmul.f32 %v3903, %v3300
        %v3946 = vmul.f32 %v3906, %v3305
        %v3947 = vmul.f32 %v3911, %v3310
        %v3948 = vmul.f32 %v3914, %v3315
        %v3949 = vmul.f32 %v3919, %v3320
        %v3950 = vmul.f32 %v3922, %v3325
        %v3951 = vmul.f32 %v3927, %v3330
        %v3952 = vmul.f32 %v3930, %v3335
        %v3953 = vmul.f32 %v3935, %v3340
        %v3954 = vmul.f32 %v3938, %v3345
        %v3955 = vpack.c.bf16 %v3784, %v3783
        %s3956 = scalar_lea.vmem %s9, 16
        %v3957 = vld [vmem:[%s3956] sm:$0xf]
        %v3958 = vld [vmem:[%s3956 + $0x4] sm:$0xf]
        %v3959 = vld [vmem:[%s3956 + $0x8] sm:$0xf]
        %v3960 = vld [vmem:[%s3956 + $0xc] sm:$0xf]
        %v3965 = vunpack.c.l.b16 %v3957
        %v3966 = vunpack.c.l.b16 %v3958
        %v3967 = vunpack.c.l.b16 %v3959
        %v3968 = vunpack.c.l.b16 %v3960
        %v3969 = vpack.c.b16 %v3966, %v3965
        %v3970 = vpack.c.b16 %v3968, %v3967
        %v3974 = vsel %vm3166, %v3955, 0
        %3976 = vmatprep.subr.bf16.mxu0 0
        %3977 = vmatpush1.bf16.msra.mxu0 %v3969
        %3978 = vmatprep.subr.bf16.mxu0 0
        %3979 = vmatpush1.bf16.msra.mxu0 %v3970
        %3980 = vmatprep.subr.bf16.mxu0 0
        %3981 = vmatpush1.bf16.msra.mxu0 0
        %3982 = vmatprep.subr.bf16.mxu0 0
        %3983 = vmatpush1.bf16.msra.mxu0 0
        %3984 = vmatprep.subr.bf16.mxu0 0
        %3985 = vmatpush1.bf16.msra.mxu0 0
        %3986 = vmatprep.subr.bf16.mxu0 0
        %3987 = vmatpush1.bf16.msra.mxu0 0
        %3988 = vmatprep.subr.bf16.mxu0 0
        %3989 = vmatpush1.bf16.msra.mxu0 0
        %3990 = vmatprep.subr.bf16.mxu0 0
        %3991 = vmatpush1.bf16.msra.mxu0 0
        %3992 = vmatprep.subr.bf16.mxu0 0
        %3993 = vmatpush1.bf16.msra.mxu0 0
        %3994 = vmatprep.subr.bf16.mxu0 0
        %3995 = vmatpush1.bf16.msra.mxu0 0
        %3996 = vmatprep.subr.bf16.mxu0 0
        %3997 = vmatpush1.bf16.msra.mxu0 0
        %3998 = vmatprep.subr.bf16.mxu0 0
        %3999 = vmatpush1.bf16.msra.mxu0 0
        %4000 = vmatprep.subr.bf16.mxu0 0
        %4001 = vmatpush1.bf16.msra.mxu0 0
        %4002 = vmatprep.subr.bf16.mxu0 0
        %4003 = vmatpush1.bf16.msra.mxu0 0
        %4004 = vmatprep.subr.bf16.mxu0 0
        %4005 = vmatpush1.bf16.msra.mxu0 0
        %4006 = vmatprep.subr.bf16.mxu0 0
        %4007 = vmatpush1.bf16.msra.mxu0 0
        %4008 = vmatprep.mubr.bf16.mxu0 0
        %4009 = vmatmul.mubr.bf16.gmra.mrb[0].mxu0 %v3974
        %v4010 = vpop.f32.mrb[0].mxu0
        %v4011 = vadd.f32 0.0, %v4010
        %v4012 = vpop.f32.mrb[0].mxu0
        %v4013 = vpop.f32.mrb[0].mxu0
        %v4014 = vadd.f32 0.0, %v4013
        %v4015 = vpop.f32.mrb[0].mxu0
        %4016 = vdwg.mxu0
        %v4017 = vpack.c.bf16 %v4014, %v4011
        %v4019 = vunpack.c.l.b16 %v4017
        %v4020 = vunpack.c.h.b16 %v4017
        %v4021 = vpack.c.b16 %v4019, %v4019
        %v4022 = vpack.c.b16 %v4020, %v4020
        %v4024 = vsel %vm3440, %v4021, 0
        %4026 = vmatprep.subr.bf16.mxu0 0
        %4027 = vmatpush1.bf16.msra.mxu0 %v4024
        %4028 = vmatprep.subr.bf16.mxu0 0
        %4029 = vmatpush1.bf16.msra.mxu0 0
        %4030 = vmatprep.subr.bf16.mxu0 0
        %4031 = vmatpush1.bf16.msra.mxu0 0
        %4032 = vmatprep.subr.bf16.mxu0 0
        %4033 = vmatpush1.bf16.msra.mxu0 0
        %4034 = vmatprep.subr.bf16.mxu0 0
        %4035 = vmatpush1.bf16.msra.mxu0 0
        %4036 = vmatprep.subr.bf16.mxu0 0
        %4037 = vmatpush1.bf16.msra.mxu0 0
        %4038 = vmatprep.subr.bf16.mxu0 0
        %4039 = vmatpush1.bf16.msra.mxu0 0
        %4040 = vmatprep.subr.bf16.mxu0 0
        %4041 = vmatpush1.bf16.msra.mxu0 0
        %4042 = vmatprep.subr.bf16.mxu0 0
        %4043 = vmatpush1.bf16.msra.mxu0 0
        %4044 = vmatprep.subr.bf16.mxu0 0
        %4045 = vmatpush1.bf16.msra.mxu0 0
        %4046 = vmatprep.subr.bf16.mxu0 0
        %4047 = vmatpush1.bf16.msra.mxu0 0
        %4048 = vmatprep.subr.bf16.mxu0 0
        %4049 = vmatpush1.bf16.msra.mxu0 0
        %4050 = vmatprep.subr.bf16.mxu0 0
        %4051 = vmatpush1.bf16.msra.mxu0 0
        %4052 = vmatprep.subr.bf16.mxu0 0
        %4053 = vmatpush1.bf16.msra.mxu0 0
        %4054 = vmatprep.subr.bf16.mxu0 0
        %4055 = vmatpush1.bf16.msra.mxu0 0
        %4056 = vmatprep.subr.bf16.mxu0 0
        %4057 = vmatpush1.bf16.msra.mxu0 0
        %4058 = vmatprep.mubr.bf16.mxu0 0
        %4059 = vmatmul.mubr.bf16.gmra.mrb[0].mxu0 %v3429
        %v4060 = vpop.f32.mrb[0].mxu0
        %v4061 = vadd.f32 0.0, %v4060
        %v4062 = vpop.f32.mrb[0].mxu0
        %v4063 = vpop.f32.mrb[0].mxu0
        %v4064 = vadd.f32 0.0, %v4063
        %v4065 = vpop.f32.mrb[0].mxu0
        %4066 = vmatprep.mubr.bf16.mxu0 0
        %4067 = vmatmul.mubr.bf16.gmra.mrb[0].mxu0 %v3432
        %v4068 = vpop.f32.mrb[0].mxu0
        %v4069 = vadd.f32 0.0, %v4068
        %v4070 = vpop.f32.mrb[0].mxu0
        %v4071 = vpop.f32.mrb[0].mxu0
        %v4072 = vadd.f32 0.0, %v4071
        %v4073 = vpop.f32.mrb[0].mxu0
        %4074 = vmatprep.mubr.bf16.mxu0 0
        %4075 = vmatmul.mubr.bf16.gmra.mrb[0].mxu0 %v3435
        %v4076 = vpop.f32.mrb[0].mxu0
        %v4077 = vadd.f32 0.0, %v4076
        %v4078 = vpop.f32.mrb[0].mxu0
        %v4079 = vpop.f32.mrb[0].mxu0
        %v4080 = vadd.f32 0.0, %v4079
        %v4081 = vpop.f32.mrb[0].mxu0
        %4082 = vmatprep.mubr.bf16.mxu0 0
        %4083 = vmatmul.mubr.bf16.gmra.mrb[0].mxu0 %v3438
        %v4084 = vpop.f32.mrb[0].mxu0
        %v4085 = vadd.f32 0.0, %v4084
        %v4086 = vpop.f32.mrb[0].mxu0
        %v4087 = vpop.f32.mrb[0].mxu0
        %v4088 = vpop.f32.mrb[0].mxu0
        %4089 = vdwg.mxu0
        %v4091 = vsel %vm3440, %v4022, 0
        %4093 = vmatprep.subr.bf16.mxu0 0
        %4094 = vmatpush1.bf16.msra.mxu0 %v4091
        %4095 = vmatprep.subr.bf16.mxu0 0
        %4096 = vmatpush1.bf16.msra.mxu0 0
        %4097 = vmatprep.subr.bf16.mxu0 0
        %4098 = vmatpush1.bf16.msra.mxu0 0
        %4099 = vmatprep.subr.bf16.mxu0 0
        %4100 = vmatpush1.bf16.msra.mxu0 0
        %4101 = vmatprep.subr.bf16.mxu0 0
        %4102 = vmatpush1.bf16.msra.mxu0 0
        %4103 = vmatprep.subr.bf16.mxu0 0
        %4104 = vmatpush1.bf16.msra.mxu0 0
        %4105 = vmatprep.subr.bf16.mxu0 0
        %4106 = vmatpush1.bf16.msra.mxu0 0
        %4107 = vmatprep.subr.bf16.mxu0 0
        %4108 = vmatpush1.bf16.msra.mxu0 0
        %4109 = vmatprep.subr.bf16.mxu0 0
        %4110 = vmatpush1.bf16.msra.mxu0 0
        %4111 = vmatprep.subr.bf16.mxu0 0
        %4112 = vmatpush1.bf16.msra.mxu0 0
        %4113 = vmatprep.subr.bf16.mxu0 0
        %4114 = vmatpush1.bf16.msra.mxu0 0
        %4115 = vmatprep.subr.bf16.mxu0 0
        %4116 = vmatpush1.bf16.msra.mxu0 0
        %4117 = vmatprep.subr.bf16.mxu0 0
        %4118 = vmatpush1.bf16.msra.mxu0 0
        %4119 = vmatprep.subr.bf16.mxu0 0
        %4120 = vmatpush1.bf16.msra.mxu0 0
        %4121 = vmatprep.subr.bf16.mxu0 0
        %4122 = vmatpush1.bf16.msra.mxu0 0
        %4123 = vmatprep.subr.bf16.mxu0 0
        %4124 = vmatpush1.bf16.msra.mxu0 0
        %4125 = vmatprep.mubr.bf16.mxu0 0
        %4126 = vmatmul.mubr.bf16.gmra.mrb[0].mxu0 %v3509
        %v4127 = vpop.f32.mrb[0].mxu0
        %v4128 = vadd.f32 0.0, %v4127
        %v4129 = vpop.f32.mrb[0].mxu0
        %v4130 = vpop.f32.mrb[0].mxu0
        %v4131 = vadd.f32 0.0, %v4130
        %v4132 = vpop.f32.mrb[0].mxu0
        %4133 = vmatprep.mubr.bf16.mxu0 0
        %4134 = vmatmul.mubr.bf16.gmra.mrb[0].mxu0 %v3512
        %v4135 = vpop.f32.mrb[0].mxu0
        %v4136 = vadd.f32 0.0, %v4135
        %v4137 = vpop.f32.mrb[0].mxu0
        %v4138 = vpop.f32.mrb[0].mxu0
        %v4139 = vadd.f32 0.0, %v4138
        %v4140 = vpop.f32.mrb[0].mxu0
        %4141 = vmatprep.mubr.bf16.mxu0 0
        %4142 = vmatmul.mubr.bf16.gmra.mrb[0].mxu0 %v3515
        %v4143 = vpop.f32.mrb[0].mxu0
        %v4144 = vadd.f32 0.0, %v4143
        %v4145 = vpop.f32.mrb[0].mxu0
        %v4146 = vpop.f32.mrb[0].mxu0
        %v4147 = vadd.f32 0.0, %v4146
        %v4148 = vpop.f32.mrb[0].mxu0
        %4149 = vmatprep.mubr.bf16.mxu0 0
        %4150 = vmatmul.mubr.bf16.gmra.mrb[0].mxu0 %v3518
        %v4151 = vpop.f32.mrb[0].mxu0
        %v4152 = vadd.f32 0.0, %v4151
        %v4153 = vpop.f32.mrb[0].mxu0
        %v4154 = vpop.f32.mrb[0].mxu0
        %v4155 = vpop.f32.mrb[0].mxu0
        %4156 = vdwg.mxu0
        %v4157 = vmul.f32 %v4061, %v3941
        %v4158 = vmul.f32 %v4064, %v3942
        %v4159 = vmul.f32 %v4069, %v3943
        %v4160 = vmul.f32 %v4072, %v3944
        %v4161 = vmul.f32 %v4077, %v3945
        %v4162 = vmul.f32 %v4080, %v3946
        %v4163 = vmul.f32 %v4085, %v3947
        %v4164 = vmul.f32 %v4128, %v3948
        %v4165 = vmul.f32 %v4131, %v3949
        %v4166 = vmul.f32 %v4136, %v3950
        %v4167 = vmul.f32 %v4139, %v3951
        %v4168 = vmul.f32 %v4144, %v3952
        %v4169 = vmul.f32 %v4147, %v3953
        %v4170 = vmul.f32 %v4152, %v3954
        %v4171 = vsel %vm3166, %v4157, 0.0
        %v4172 = vsel %vm3166, %v4158, 0.0
        %v4173 = vadd.f32 %v4171, %v4172
        %v4174 = vsel %vm3166, %v4159, 0.0
        %v4175 = vadd.f32 %v4173, %v4174
        %v4176 = vsel %vm3166, %v4160, 0.0
        %v4177 = vadd.f32 %v4175, %v4176
        %v4178 = vsel %vm3166, %v4161, 0.0
        %v4179 = vadd.f32 %v4177, %v4178
        %v4180 = vsel %vm3166, %v4162, 0.0
        %v4181 = vadd.f32 %v4179, %v4180
        %v4182 = vsel %vm3166, %v4163, 0.0
        %v4183 = vadd.f32 %v4181, %v4182
        %v4184 = vsel %vm3166, %v4164, 0.0
        %v4185 = vsel %vm3166, %v4165, 0.0
        %v4186 = vadd.f32 %v4184, %v4185
        %v4187 = vsel %vm3166, %v4166, 0.0
        %v4188 = vadd.f32 %v4186, %v4187
        %v4189 = vsel %vm3166, %v4167, 0.0
        %v4190 = vadd.f32 %v4188, %v4189
        %v4191 = vsel %vm3166, %v4168, 0.0
        %v4192 = vadd.f32 %v4190, %v4191
        %v4193 = vsel %vm3166, %v4169, 0.0
        %v4194 = vadd.f32 %v4192, %v4193
        %v4195 = vsel %vm3166, %v4170, 0.0
        %v4196 = vadd.f32 %v4194, %v4195
        %v4197 = vpack.c.bf16 %v4196, %v4183
        %s4198 = scalar_lea.vmem %s10, 16
        %v4199 = vld [vmem:[%s4198] sm:$0xf]
        %v4200 = vld [vmem:[%s4198 + $0x4] sm:$0xf]
        %v4201 = vld [vmem:[%s4198 + $0x8] sm:$0xf]
        %v4202 = vld [vmem:[%s4198 + $0xc] sm:$0xf]
        %s4203 = scalar_lea.vmem %s11, 1
        %v4204 = vld [vmem:[%s4203] sm:$0x1]
        %v4206 = vlaneseq
        %v4207 = vshrl.u32 %v4206, 7
        %v4208 = vsub.s32 0, %v4207
        %v4209 = vrot.slane %v4204, %v4208
        %v4215 = vunpack.c.l.b16 %v4199
        %v4216 = vunpack.c.l.b16 %v4200
        %v4217 = vunpack.c.l.b16 %v4201
        %v4218 = vunpack.c.l.b16 %v4202
        %v4219 = vpack.c.b16 %v4216, %v4215
        %v4220 = vpack.c.b16 %v4218, %v4217
        %v4224 = vsel %vm3166, %v4197, 0
        %4226 = vmatprep.subr.bf16.mxu0 0
        %4227 = vmatpush1.bf16.msra.mxu0 %v4219
        %4228 = vmatprep.subr.bf16.mxu0 0
        %4229 = vmatpush1.bf16.msra.mxu0 %v4220
        %4230 = vmatprep.subr.bf16.mxu0 0
        %4231 = vmatpush1.bf16.msra.mxu0 0
        %4232 = vmatprep.subr.bf16.mxu0 0
        %4233 = vmatpush1.bf16.msra.mxu0 0
        %4234 = vmatprep.subr.bf16.mxu0 0
        %4235 = vmatpush1.bf16.msra.mxu0 0
        %4236 = vmatprep.subr.bf16.mxu0 0
        %4237 = vmatpush1.bf16.msra.mxu0 0
        %4238 = vmatprep.subr.bf16.mxu0 0
        %4239 = vmatpush1.bf16.msra.mxu0 0
        %4240 = vmatprep.subr.bf16.mxu0 0
        %4241 = vmatpush1.bf16.msra.mxu0 0
        %4242 = vmatprep.subr.bf16.mxu0 0
        %4243 = vmatpush1.bf16.msra.mxu0 0
        %4244 = vmatprep.subr.bf16.mxu0 0
        %4245 = vmatpush1.bf16.msra.mxu0 0
        %4246 = vmatprep.subr.bf16.mxu0 0
        %4247 = vmatpush1.bf16.msra.mxu0 0
        %4248 = vmatprep.subr.bf16.mxu0 0
        %4249 = vmatpush1.bf16.msra.mxu0 0
        %4250 = vmatprep.subr.bf16.mxu0 0
        %4251 = vmatpush1.bf16.msra.mxu0 0
        %4252 = vmatprep.subr.bf16.mxu0 0
        %4253 = vmatpush1.bf16.msra.mxu0 0
        %4254 = vmatprep.subr.bf16.mxu0 0
        %4255 = vmatpush1.bf16.msra.mxu0 0
        %4256 = vmatprep.subr.bf16.mxu0 0
        %4257 = vmatpush1.bf16.msra.mxu0 0
        %4258 = vmatprep.mubr.bf16.mxu0 0
        %4259 = vmatmul.mubr.bf16.gmra.mrb[0].mxu0 %v4224
        %v4260 = vpop.f32.mrb[0].mxu0
        %v4261 = vadd.f32 %v4209, %v4260
        %v4262 = vpop.f32.mrb[0].mxu0
        %v4263 = vpop.f32.mrb[0].mxu0
        %v4264 = vadd.f32 %v4209, %v4263
        %v4265 = vpop.f32.mrb[0].mxu0
        %4266 = vdwg.mxu0
        %v4267 = vmax.f32 %v4261, 0.0
        %v4268 = vmax.f32 %v4264, 0.0
        %v4269 = vand.u32 2147483647, %v4261
        %v4270 = vand.u32 2147483647, %v4264
        %v4271 = vsub.f32 0.0, %v4269
        %v4272 = vsub.f32 0.0, %v4270
        %v4273 = vmul.f32 %v4271, 1.442695
        %v4274 = vpow.pop %v4273
        %v4275 = vmul.f32 %v4272, 1.442695
        %v4276 = vpow.pop %v4275
        %v4277 = vadd.f32 %v4274, 1.0
        %v4278 = vadd.f32 %v4276, 1.0
        %v4279 = vlog2.pop %v4277
        %v4280 = vmul.f32 %v4279, 0.6931472
        %v4281 = vlog2.pop %v4278
        %v4282 = vmul.f32 %v4281, 0.6931472
        %v4283 = vadd.f32 %v4267, %v4280
        %v4284 = vadd.f32 %v4268, %v4282
        %v4285 = vsub.f32 %v4283, 0.6931472
        %v4286 = vsub.f32 %v4284, 0.6931472
        %v4287 = vpack.c.bf16 %v4286, %v4285
        %s4288 = scalar_lea.vmem %s12, 16
        %v4289 = vld [vmem:[%s4288] sm:$0xf]
        %v4290 = vld [vmem:[%s4288 + $0x4] sm:$0xf]
        %v4291 = vld [vmem:[%s4288 + $0x8] sm:$0xf]
        %v4292 = vld [vmem:[%s4288 + $0xc] sm:$0xf]
        %s4293 = scalar_lea.vmem %s13, 1
        %v4294 = vld [vmem:[%s4293] sm:$0x1]
        %v4296 = vlaneseq
        %v4297 = vshrl.u32 %v4296, 7
        %v4298 = vsub.s32 0, %v4297
        %v4299 = vrot.slane %v4294, %v4298
        %v4305 = vunpack.c.l.b16 %v4289
        %v4306 = vunpack.c.l.b16 %v4290
        %v4307 = vunpack.c.l.b16 %v4291
        %v4308 = vunpack.c.l.b16 %v4292
        %v4309 = vpack.c.b16 %v4306, %v4305
        %v4310 = vpack.c.b16 %v4308, %v4307
        %v4314 = vsel %vm3166, %v4287, 0
        %4316 = vmatprep.subr.bf16.mxu0 0
        %4317 = vmatpush1.bf16.msra.mxu0 %v4309
        %4318 = vmatprep.subr.bf16.mxu0 0
        %4319 = vmatpush1.bf16.msra.mxu0 %v4310
        %4320 = vmatprep.subr.bf16.mxu0 0
        %4321 = vmatpush1.bf16.msra.mxu0 0
        %4322 = vmatprep.subr.bf16.mxu0 0
        %4323 = vmatpush1.bf16.msra.mxu0 0
        %4324 = vmatprep.subr.bf16.mxu0 0
        %4325 = vmatpush1.bf16.msra.mxu0 0
        %4326 = vmatprep.subr.bf16.mxu0 0
        %4327 = vmatpush1.bf16.msra.mxu0 0
        %4328 = vmatprep.subr.bf16.mxu0 0
        %4329 = vmatpush1.bf16.msra.mxu0 0
        %4330 = vmatprep.subr.bf16.mxu0 0
        %4331 = vmatpush1.bf16.msra.mxu0 0
        %4332 = vmatprep.subr.bf16.mxu0 0
        %4333 = vmatpush1.bf16.msra.mxu0 0
        %4334 = vmatprep.subr.bf16.mxu0 0
        %4335 = vmatpush1.bf16.msra.mxu0 0
        %4336 = vmatprep.subr.bf16.mxu0 0
        %4337 = vmatpush1.bf16.msra.mxu0 0
        %4338 = vmatprep.subr.bf16.mxu0 0
        %4339 = vmatpush1.bf16.msra.mxu0 0
        %4340 = vmatprep.subr.bf16.mxu0 0
        %4341 = vmatpush1.bf16.msra.mxu0 0
        %4342 = vmatprep.subr.bf16.mxu0 0
        %4343 = vmatpush1.bf16.msra.mxu0 0
        %4344 = vmatprep.subr.bf16.mxu0 0
        %4345 = vmatpush1.bf16.msra.mxu0 0
        %4346 = vmatprep.subr.bf16.mxu0 0
        %4347 = vmatpush1.bf16.msra.mxu0 0
        %4348 = vmatprep.mubr.bf16.mxu0 0
        %4349 = vmatmul.mubr.bf16.gmra.mrb[0].mxu0 %v4314
        %v4350 = vpop.f32.mrb[0].mxu0
        %v4351 = vadd.f32 %v4299, %v4350
        %v4352 = vpop.f32.mrb[0].mxu0
        %v4353 = vpop.f32.mrb[0].mxu0
        %v4354 = vadd.f32 %v4299, %v4353
        %v4355 = vpop.f32.mrb[0].mxu0
        %4356 = vdwg.mxu0
        %v4357 = vadd.f32 %v3783, %v4351
        %v4358 = vadd.f32 %v3784, %v4354
        %4359 = vst.msk [vmem:[%s505] sm:$0xff] %vm3166, %v4357
        %4360 = vst.msk [vmem:[%s505 + $0x8] sm:$0xff] %vm3166, %v4358
        %s4361 = sand.u32 %s350, 1
        %s4362 = scalar_lea.sflag [#allocation3], %s4361
        %s4363 = sand.u32 %s350, 1
        %s4364 = smul.addr %s4363, 16
        %s4365 = scalar_lea.vmem [#allocation2], %s4364
        // Predicated region
        $region77: #{tpu_custom_call.1} parent=75 // pred_check
          %p4366 = pneg %p360
        $region78: #{tpu_custom_call.1} parent=75 // pred_check_branch
          %4368 = sbr.rel (%p4366) target = $region80
        $region79: #{tpu_custom_call.1} parent=75 // pred_region
          %s4370 = ssub.s32 256, 256
          %4371 = vsyncadd %s4362, %s4370
          %s4372 = smul.addr %s28, 2
          %s4373 = smul.addr %s4372, 128
          %s4374 = scalar_lea.hbm %s14, %s4373
          %s4375 = sshll.u32 %s4365, 4
          %s4376 = int_to_ptr.vmem [resolvable:$true] %s4375
          %4381 = dma.vmem_to_hbm [thread:$0]  %s4376, 256, %s4374, %s4362, 128, 128, 8
        $region80: #{tpu_custom_call.1} parent=75 // pred_fallthru
          _
      $region76: #{tpu_custom_call.1} parent=5 // pred_fallthru
        _
      %p4382 = scmp.le.s32.totalorder 2, %s23
      // Predicated region
      $region81: #{tpu_custom_call.1} parent=5 // pred_check
        %p4383 = pneg %p4382
      $region82: #{tpu_custom_call.1} parent=5 // pred_check_branch
        %4385 = sbr.rel (%p4383) target = $region84
      $region83: #{tpu_custom_call.1} parent=5 // pred_region
        %s4386 = ssub.s32 %s23, 2
        // Predicated region
        $region85: #{tpu_custom_call.1} parent=83 // pred_check
          %p4387 = pneg %p366
        $region86: #{tpu_custom_call.1} parent=83 // pred_check_branch
          %4389 = sbr.rel (%p4387) target = $region88
        $region87: #{tpu_custom_call.1} parent=83 // pred_region
          %s4390 = sand.u32 %s351, 1
          %s4391 = scalar_lea.sflag [#allocation3], %s4390
          %s4392 = sand.u32 %s351, 1
          %s4393 = smul.addr %s4392, 16
          %s4394 = scalar_lea.vmem [#allocation2], %s4393
          %4395 = dma.done %s4391, 256
        $region88: #{tpu_custom_call.1} parent=83 // pred_fallthru
          _
      $region84: #{tpu_custom_call.1} parent=5 // pred_fallthru
        _
    $region6: #{tpu_custom_call.1} parent=1 // loop_footer
      %s27 = sadd.s32 1, %s23
    $region7: #{tpu_custom_call.1} parent=1 // loop_footer_branch
      %22 = sbr.rel target = $region3
    $region8: #{tpu_custom_call.1} parent=1 // loop_exit
      _
    %4396 = vsyncpa [#allocation3], 1
    %s4397 = scalar_lea.sflag [#allocation3], 1
    %4398 = vsyncpa %s4397, 1

</llo_original>
